<compile_context>
chip_gen: v7x
topology: tpu7x:2x2x1
jax: 0.10.0
libtpu: 0.0.40
codegen_flags: <defaults>
</compile_context>

<pallas_src>
import jax
import jax.numpy as jnp
from jax.experimental import pallas as pl
from jax.experimental.pallas import tpu as pltpu

METHOD_DIM = 768
REDUCED_DIM = 32
CATEGORY_DIM = 64
DURATION_DIM = 64
D_MODEL = REDUCED_DIM + CATEGORY_DIM + DURATION_DIM   # 160
NUM_HEADS = 4
HEAD_DIM = D_MODEL // NUM_HEADS                       # 40
HEAD_PAD = 128                                        # lane-aligned padded head width
FF_DIM = 2048                                         # nn.TransformerEncoderLayer default
NUM_CLASSES = 1
OUT_PAD = 128                                         # lane-dense output block width
MAX_SEQ_LEN = 32
LN_EPS = 1e-5
DEFAULT_BLOCK_B = 16                                  # batch elements per grid step
NEG_INF = -1e30


def _layernorm(x, g, b):
    mu = jnp.mean(x, axis=-1, keepdims=True)
    var = jnp.mean((x - mu) * (x - mu), axis=-1, keepdims=True)
    return (x - mu) * jax.lax.rsqrt(var + LN_EPS) * g + b


def transformer_kernel(me_ref, ce_ref, de_ref,
                       wr1, br1, wr2, br2,
                       hdr, pe, attn_bias,
                       wqkv, bqkv, wo, bo,
                       ln1g, ln1b,
                       wff1, bff1, wff2, bff2,
                       ln2g, ln2b,
                       wfc1, bfc1, wfc2, bfc2,
                       out_ref, x_ref):
    f32 = jnp.float32
    b_blk, S, _ = me_ref.shape          # best when S % 8 == 0 (example uses S=8)
    Lp = x_ref.shape[1]                 # padded sequence rows (multiple of 8)
    L = S + 1
    Ms = b_blk * S
    M = b_blk * Lp

    # --- method_reducer: Linear -> ReLU -> Linear -> ReLU, flattened over batch*seq ---
    me2 = me_ref[...].reshape(Ms, METHOD_DIM)
    h = jnp.maximum(jnp.dot(me2, wr1[...], preferred_element_type=f32) + br1[...], 0.0)
    m = jnp.maximum(jnp.dot(h, wr2[...], preferred_element_type=f32) + br2[...], 0.0)

    # --- assemble residual stream x = [header ; m|cat|dur] + pos_enc in VMEM scratch ---
    comb = jnp.concatenate(
        [m.reshape(b_blk, S, REDUCED_DIM), ce_ref[...], de_ref[...]], axis=-1)
    x_ref[:, 0:1, :] = jnp.broadcast_to(
        hdr[...].reshape(1, 1, D_MODEL), (b_blk, 1, D_MODEL))
    x_ref[:, 1:L, :] = comb
    if Lp > L:
        x_ref[:, L:, :] = jnp.zeros((b_blk, Lp - L, D_MODEL), f32)
    x = (x_ref[...] + pe[...]).reshape(M, D_MODEL)

    # --- self-attention: heads padded to 128 lanes, block-diagonal additive bias ---
    qkvp = jnp.dot(x, wqkv[...], preferred_element_type=f32) + bqkv[...]   # (M, 3*H*128)
    bias = attn_bias[...]                                                   # (M, M)
    scale = 1.0 / (HEAD_DIM ** 0.5)
    attn = jnp.zeros((M, D_MODEL), f32)
    for hd in range(NUM_HEADS):
        q = qkvp[:, hd * HEAD_PAD:(hd + 1) * HEAD_PAD]
        k = qkvp[:, (NUM_HEADS + hd) * HEAD_PAD:(NUM_HEADS + hd + 1) * HEAD_PAD]
        v = qkvp[:, (2 * NUM_HEADS + hd) * HEAD_PAD:(2 * NUM_HEADS + hd + 1) * HEAD_PAD]
        s = jax.lax.dot_general(q, k, (((1,), (1,)), ((), ())),
                                preferred_element_type=f32) * scale + bias
        s = s - jnp.max(s, axis=-1, keepdims=True)
        p = jnp.exp(s)
        p = p * pl.reciprocal(jnp.sum(p, axis=-1, keepdims=True), approx=True)
        o = jnp.dot(p, v, preferred_element_type=f32)                       # (M, 128)
        attn = attn + jnp.dot(o, wo[hd * HEAD_PAD:(hd + 1) * HEAD_PAD, :],
                              preferred_element_type=f32)
    attn = attn + bo[...]

    # --- post-norm encoder layer (dropout = identity at inference) ---
    xa = _layernorm(x + attn, ln1g[...], ln1b[...])
    f = jnp.maximum(jnp.dot(xa, wff1[...], preferred_element_type=f32) + bff1[...], 0.0)
    f = jnp.dot(f, wff2[...], preferred_element_type=f32) + bff2[...]
    xo = _layernorm(xa + f, ln2g[...], ln2b[...])

    # --- classification head on the header token (position 0 of every sequence) ---
    h0 = xo.reshape(b_blk, Lp, D_MODEL)[:, 0, :]                            # (b_blk, D)
    p1 = jnp.dot(h0, wfc1[...], preferred_element_type=f32) + bfc1[...]
    out_ref[...] = jnp.dot(p1, wfc2[...], preferred_element_type=f32) + bfc2[...]


def _full_spec(shape):
    n = len(shape)
    return pl.BlockSpec(tuple(int(d) for d in shape), lambda b, _n=n: (0,) * _n)


def transformer_forward(params, method_embeddings, category_embeddings,
                        duration_embeddings, attention_mask=None,
                        block_b=DEFAULT_BLOCK_B):
    # TODO(synk): src_key_padding_mask path not implemented (module default is None).
    assert attention_mask is None

    me = jnp.squeeze(method_embeddings, axis=1).astype(jnp.float32)   # (B, S, 768)
    ce = jnp.squeeze(category_embeddings, axis=1).astype(jnp.float32) # (B, S, 64)
    de = jnp.squeeze(duration_embeddings, axis=1).astype(jnp.float32) # (B, S, 64)
    B, S, _ = me.shape
    L = S + 1
    Lp = -(-L // 8) * 8                      # sequence rows padded to a sublane multiple
    b_blk = max(1, min(block_b, B))          # batch elements per grid step
    n_blocks = -(-B // b_blk)
    B_pad = n_blocks * b_blk
    if B_pad != B:
        pad = ((0, B_pad - B), (0, 0), (0, 0))
        me, ce, de = jnp.pad(me, pad), jnp.pad(ce, pad), jnp.pad(de, pad)
    M = b_blk * Lp
    D = D_MODEL

    # --- derived (exactly equivalent) lane-aligned weight layouts ---
    def pad_heads_cols(w, b):
        w = jnp.pad(w.reshape(D, NUM_HEADS, HEAD_DIM),
                    ((0, 0), (0, 0), (0, HEAD_PAD - HEAD_DIM)))
        b = jnp.pad(b.reshape(1, NUM_HEADS, HEAD_DIM),
                    ((0, 0), (0, 0), (0, HEAD_PAD - HEAD_DIM)))
        return w.reshape(D, NUM_HEADS * HEAD_PAD), b.reshape(1, NUM_HEADS * HEAD_PAD)

    wqkv, bqkv = params["wqkv"], params["bqkv"]
    wq, bq = pad_heads_cols(wqkv[:, :D], bqkv[:, :D])
    wk, bk = pad_heads_cols(wqkv[:, D:2 * D], bqkv[:, D:2 * D])
    wv, bv = pad_heads_cols(wqkv[:, 2 * D:], bqkv[:, 2 * D:])
    wqkv_pad = jnp.concatenate([wq, wk, wv], axis=1)            # (D, 3*H*128)
    bqkv_pad = jnp.concatenate([bq, bk, bv], axis=1)            # (1, 3*H*128)
    wo_pad = jnp.pad(params["wo"].reshape(NUM_HEADS, HEAD_DIM, D),
                     ((0, 0), (0, HEAD_PAD - HEAD_DIM), (0, 0))
                     ).reshape(NUM_HEADS * HEAD_PAD, D)         # (H*128, D)
    wfc2_pad = jnp.pad(params["wfc2"], ((0, 0), (0, OUT_PAD - NUM_CLASSES)))
    bfc2_pad = jnp.pad(params["bfc2"], ((0, 0), (0, OUT_PAD - NUM_CLASSES)))
    pe_pad = jnp.pad(params["pos_enc"][0, :L, :], ((0, Lp - L), (0, 0)))   # (Lp, D)
    hdr = params["header"][0]                                   # (1, D)

    # additive attention bias: 0 within the same batch element & real key rows,
    # NEG_INF across batch elements / padded key rows.
    idx = jnp.arange(M, dtype=jnp.int32)
    same_elem = (idx[:, None] // Lp) == (idx[None, :] // Lp)
    key_valid = (idx[None, :] - (idx[None, :] // Lp) * Lp) < L
    attn_bias = jnp.where(same_elem & key_valid, 0.0, NEG_INF).astype(jnp.float32)

    weights = [
        params["wr1"], params["br1"], params["wr2"], params["br2"],
        hdr, pe_pad, attn_bias,
        wqkv_pad, bqkv_pad, wo_pad, params["bo"],
        params["ln1g"], params["ln1b"],
        params["wff1"], params["bff1"], params["wff2"], params["bff2"],
        params["ln2g"], params["ln2b"],
        params["wfc1"], params["bfc1"], wfc2_pad, bfc2_pad,
    ]

    in_specs = [
        pl.BlockSpec((b_blk, S, METHOD_DIM), lambda b: (b, 0, 0)),
        pl.BlockSpec((b_blk, S, CATEGORY_DIM), lambda b: (b, 0, 0)),
        pl.BlockSpec((b_blk, S, DURATION_DIM), lambda b: (b, 0, 0)),
    ] + [_full_spec(w.shape) for w in weights]

    out = pl.pallas_call(
        transformer_kernel,
        out_shape=jax.ShapeDtypeStruct((B_pad, OUT_PAD), jnp.float32),
        grid_spec=pltpu.PrefetchScalarGridSpec(
            num_scalar_prefetch=0,
            grid=(n_blocks,),
            in_specs=in_specs,
            out_specs=pl.BlockSpec((b_blk, OUT_PAD), lambda b: (b, 0)),
            scratch_shapes=[pltpu.VMEM((b_blk, Lp, D_MODEL), jnp.float32)],
        ),
        compiler_params=pltpu.CompilerParams(
            dimension_semantics=("parallel",),
            vmem_limit_bytes=32 * 1024 * 1024,
        ),
    )(me, ce, de, *weights)
    return out[:B, :NUM_CLASSES]


def init_params(key):
    ks = jax.random.split(key, 18)

    def rn(k, shape, scale=0.05):
        return (scale * jax.random.normal(k, shape)).astype(jnp.float32)

    D = D_MODEL
    return dict(
        # method_reducer (weights stored as (in, out))
        wr1=rn(ks[0], (METHOD_DIM, METHOD_DIM // 2)),
        br1=rn(ks[1], (1, METHOD_DIM // 2)),
        wr2=rn(ks[2], (METHOD_DIM // 2, REDUCED_DIM)),
        br2=rn(ks[3], (1, REDUCED_DIM)),
        # learned positional encoding / header token (zeros in torch init; random here)
        pos_enc=rn(ks[4], (1, MAX_SEQ_LEN + 1, D)),
        header=rn(ks[5], (1, 1, D)),
        # multi-head self-attention (in_proj packed q|k|v, out_proj)
        wqkv=rn(ks[6], (D, 3 * D)),
        bqkv=rn(ks[7], (1, 3 * D)),
        wo=rn(ks[8], (D, D)),
        bo=rn(ks[9], (1, D)),
        ln1g=jnp.ones((1, D), jnp.float32),
        ln1b=jnp.zeros((1, D), jnp.float32),
        # feed-forward
        wff1=rn(ks[10], (D, FF_DIM)),
        bff1=rn(ks[11], (1, FF_DIM)),
        wff2=rn(ks[12], (FF_DIM, D)),
        bff2=rn(ks[13], (1, D)),
        ln2g=jnp.ones((1, D), jnp.float32),
        ln2b=jnp.zeros((1, D), jnp.float32),
        # classification head
        wfc1=rn(ks[14], (D, D // 2)),
        bfc1=rn(ks[15], (1, D // 2)),
        wfc2=rn(ks[16], (D // 2, NUM_CLASSES)),
        bfc2=rn(ks[17], (1, NUM_CLASSES)),
    )


def reference_forward(params, me4, ce4, de4):
    """Pure-JAX reference mirroring the PyTorch forward (inference)."""
    me = jnp.squeeze(me4, 1)
    ce = jnp.squeeze(ce4, 1)
    de = jnp.squeeze(de4, 1)
    h = jax.nn.relu(me @ params["wr1"] + params["br1"])
    m = jax.nn.relu(h @ params["wr2"] + params["br2"])
    comb = jnp.concatenate([m, ce, de], axis=-1)            # (B, S, D)
    B, S, D = comb.shape
    hdr = jnp.broadcast_to(params["header"], (B, 1, D))
    x = jnp.concatenate([hdr, comb], axis=1)                # (B, L, D)
    L = S + 1
    x = x + params["pos_enc"][:, :L, :]
    qkv = x @ params["wqkv"] + params["bqkv"]
    q, k, v = jnp.split(qkv, 3, axis=-1)
    q = q.reshape(B, L, NUM_HEADS, HEAD_DIM).transpose(0, 2, 1, 3)
    k = k.reshape(B, L, NUM_HEADS, HEAD_DIM).transpose(0, 2, 1, 3)
    v = v.reshape(B, L, NUM_HEADS, HEAD_DIM).transpose(0, 2, 1, 3)
    s = jnp.einsum("bhqd,bhkd->bhqk", q, k) / (HEAD_DIM ** 0.5)
    p = jax.nn.softmax(s, axis=-1)
    a = jnp.einsum("bhqk,bhkd->bhqd", p, v).transpose(0, 2, 1, 3).reshape(B, L, D)
    a = a @ params["wo"] + params["bo"]

    def ln(y, g, b):
        mu = y.mean(-1, keepdims=True)
        var = ((y - mu) ** 2).mean(-1, keepdims=True)
        return (y - mu) / jnp.sqrt(var + LN_EPS) * g + b

    x = ln(x + a, params["ln1g"], params["ln1b"])
    f = jax.nn.relu(x @ params["wff1"] + params["bff1"]) @ params["wff2"] + params["bff2"]
    x = ln(x + f, params["ln2g"], params["ln2b"])
    h0 = x[:, 0, :]
    p1 = h0 @ params["wfc1"] + params["bfc1"]
    return p1 @ params["wfc2"] + params["bfc2"]


if __name__ == "__main__":
    key = jax.random.PRNGKey(0)
    params = init_params(key)

    # (batch=2: single partially-filled block) and (batch=20: multi-step grid + padding)
    for B, S in ((2, 8), (20, 8)):
        km, kc, kd = jax.random.split(jax.random.fold_in(key, B), 3)
        method_embeddings = jax.random.normal(km, (B, 1, S, METHOD_DIM), jnp.float32)
        category_embeddings = jax.random.normal(kc, (B, 1, S, CATEGORY_DIM), jnp.float32)
        duration_embeddings = jax.random.normal(kd, (B, 1, S, DURATION_DIM), jnp.float32)

        out = transformer_forward(params, method_embeddings, category_embeddings,
                                  duration_embeddings)
        out = jax.block_until_ready(out)
        assert out.shape == (B, NUM_CLASSES)

        ref = reference_forward(params, method_embeddings, category_embeddings,
                                duration_embeddings)
        # tolerance loosened slightly vs exact f32 because the softmax denominator
        # uses the EUP approximate reciprocal (pl.reciprocal(approx=True)).
        assert jnp.allclose(out, ref, atol=2e-3, rtol=2e-3), (B, out, ref)

    print("KERNEL_OK")
</pallas_src>

<mosaic_0001>
module attributes {stable_mosaic.version = 11 : i64} {
  func.func @transformer_kernel(%arg0: i32, %arg1: memref<2x8x768xf32, #tpu.memory_space<vmem>>, %arg2: memref<2x8x64xf32, #tpu.memory_space<vmem>>, %arg3: memref<2x8x64xf32, #tpu.memory_space<vmem>>, %arg4: memref<768x384xf32, #tpu.memory_space<vmem>>, %arg5: memref<1x384xf32, #tpu.memory_space<vmem>>, %arg6: memref<384x32xf32, #tpu.memory_space<vmem>>, %arg7: memref<1x32xf32, #tpu.memory_space<vmem>>, %arg8: memref<1x160xf32, #tpu.memory_space<vmem>>, %arg9: memref<16x160xf32, #tpu.memory_space<vmem>>, %arg10: memref<32x32xf32, #tpu.memory_space<vmem>>, %arg11: memref<160x1536xf32, #tpu.memory_space<vmem>>, %arg12: memref<1x1536xf32, #tpu.memory_space<vmem>>, %arg13: memref<512x160xf32, #tpu.memory_space<vmem>>, %arg14: memref<1x160xf32, #tpu.memory_space<vmem>>, %arg15: memref<1x160xf32, #tpu.memory_space<vmem>>, %arg16: memref<1x160xf32, #tpu.memory_space<vmem>>, %arg17: memref<160x2048xf32, #tpu.memory_space<vmem>>, %arg18: memref<1x2048xf32, #tpu.memory_space<vmem>>, %arg19: memref<2048x160xf32, #tpu.memory_space<vmem>>, %arg20: memref<1x160xf32, #tpu.memory_space<vmem>>, %arg21: memref<1x160xf32, #tpu.memory_space<vmem>>, %arg22: memref<1x160xf32, #tpu.memory_space<vmem>>, %arg23: memref<160x80xf32, #tpu.memory_space<vmem>>, %arg24: memref<1x80xf32, #tpu.memory_space<vmem>>, %arg25: memref<80x128xf32, #tpu.memory_space<vmem>>, %arg26: memref<1x128xf32, #tpu.memory_space<vmem>>, %arg27: memref<2x128xf32, #tpu.memory_space<vmem>>, %arg28: memref<2x16x160xf32, #tpu.memory_space<vmem>>) attributes {dimension_semantics = [#tpu.dimension_semantics<parallel>], iteration_bounds = array<i64: 1>, scalar_prefetch = 0 : i64, scratch_operands = 1 : i64, tpu.core_type = #tpu.core_type<tc>, window_params = [{transform_indices = @transform_0, window_bounds = array<i64: 2, 8, 768>}, {transform_indices = @transform_1, window_bounds = array<i64: 2, 8, 64>}, {transform_indices = @transform_2, window_bounds = array<i64: 2, 8, 64>}, {pipeline_mode = #tpu.pipeline_mode<synchronous>, transform_indices = @transform_3, window_bounds = array<i64: 768, 384>}, {pipeline_mode = #tpu.pipeline_mode<synchronous>, transform_indices = @transform_4, window_bounds = array<i64: 1, 384>}, {pipeline_mode = #tpu.pipeline_mode<synchronous>, transform_indices = @transform_5, window_bounds = array<i64: 384, 32>}, {pipeline_mode = #tpu.pipeline_mode<synchronous>, transform_indices = @transform_6, window_bounds = array<i64: 1, 32>}, {pipeline_mode = #tpu.pipeline_mode<synchronous>, transform_indices = @transform_7, window_bounds = array<i64: 1, 160>}, {pipeline_mode = #tpu.pipeline_mode<synchronous>, transform_indices = @transform_8, window_bounds = array<i64: 16, 160>}, {pipeline_mode = #tpu.pipeline_mode<synchronous>, transform_indices = @transform_9, window_bounds = array<i64: 32, 32>}, {pipeline_mode = #tpu.pipeline_mode<synchronous>, transform_indices = @transform_10, window_bounds = array<i64: 160, 1536>}, {pipeline_mode = #tpu.pipeline_mode<synchronous>, transform_indices = @transform_11, window_bounds = array<i64: 1, 1536>}, {pipeline_mode = #tpu.pipeline_mode<synchronous>, transform_indices = @transform_12, window_bounds = array<i64: 512, 160>}, {pipeline_mode = #tpu.pipeline_mode<synchronous>, transform_indices = @transform_13, window_bounds = array<i64: 1, 160>}, {pipeline_mode = #tpu.pipeline_mode<synchronous>, transform_indices = @transform_14, window_bounds = array<i64: 1, 160>}, {pipeline_mode = #tpu.pipeline_mode<synchronous>, transform_indices = @transform_15, window_bounds = array<i64: 1, 160>}, {pipeline_mode = #tpu.pipeline_mode<synchronous>, transform_indices = @transform_16, window_bounds = array<i64: 160, 2048>}, {pipeline_mode = #tpu.pipeline_mode<synchronous>, transform_indices = @transform_17, window_bounds = array<i64: 1, 2048>}, {pipeline_mode = #tpu.pipeline_mode<synchronous>, transform_indices = @transform_18, window_bounds = array<i64: 2048, 160>}, {pipeline_mode = #tpu.pipeline_mode<synchronous>, transform_indices = @transform_19, window_bounds = array<i64: 1, 160>}, {pipeline_mode = #tpu.pipeline_mode<synchronous>, transform_indices = @transform_20, window_bounds = array<i64: 1, 160>}, {pipeline_mode = #tpu.pipeline_mode<synchronous>, transform_indices = @transform_21, window_bounds = array<i64: 1, 160>}, {pipeline_mode = #tpu.pipeline_mode<synchronous>, transform_indices = @transform_22, window_bounds = array<i64: 160, 80>}, {pipeline_mode = #tpu.pipeline_mode<synchronous>, transform_indices = @transform_23, window_bounds = array<i64: 1, 80>}, {pipeline_mode = #tpu.pipeline_mode<synchronous>, transform_indices = @transform_24, window_bounds = array<i64: 80, 128>}, {pipeline_mode = #tpu.pipeline_mode<synchronous>, transform_indices = @transform_25, window_bounds = array<i64: 1, 128>}, {transform_indices = @transform_26, window_bounds = array<i64: 2, 128>}]} {
    %c0 = arith.constant 0 : index
    %c0_0 = arith.constant 0 : index
    %c0_1 = arith.constant 0 : index
    %0 = vector.load %arg1[%c0, %c0_0, %c0_1] : memref<2x8x768xf32, #tpu.memory_space<vmem>>, vector<2x8x768xf32>
    %1 = vector.shape_cast %0 : vector<2x8x768xf32> to vector<16x768xf32>
    %c0_2 = arith.constant 0 : index
    %c0_3 = arith.constant 0 : index
    %2 = vector.load %arg4[%c0_2, %c0_3] : memref<768x384xf32, #tpu.memory_space<vmem>>, vector<768x384xf32>
    %cst = arith.constant dense<0.000000e+00> : vector<16x384xf32>
    %3 = tpu.matmul %1, %2, %cst {dimension_numbers = #tpu.dot_dimension_numbers<[1], [0], [0], [1], [0, 0, 1, 1], [], []>} : vector<16x768xf32>, vector<768x384xf32>, vector<16x384xf32> -> vector<16x384xf32>
    %c0_4 = arith.constant 0 : index
    %c0_5 = arith.constant 0 : index
    %4 = vector.load %arg5[%c0_4, %c0_5] : memref<1x384xf32, #tpu.memory_space<vmem>>, vector<1x384xf32>
    %5 = vector.broadcast %4 : vector<1x384xf32> to vector<16x384xf32>
    %6 = arith.addf %3, %5 : vector<16x384xf32>
    %cst_6 = arith.constant 0.000000e+00 : f32
    %7 = vector.broadcast %cst_6 : f32 to vector<16x384xf32>
    %8 = arith.maximumf %6, %7 : vector<16x384xf32>
    %c0_7 = arith.constant 0 : index
    %c0_8 = arith.constant 0 : index
    %9 = vector.load %arg6[%c0_7, %c0_8] : memref<384x32xf32, #tpu.memory_space<vmem>>, vector<384x32xf32>
    %cst_9 = arith.constant dense<0.000000e+00> : vector<16x32xf32>
    %10 = tpu.matmul %8, %9, %cst_9 {dimension_numbers = #tpu.dot_dimension_numbers<[1], [0], [0], [1], [0, 0, 1, 1], [], []>} : vector<16x384xf32>, vector<384x32xf32>, vector<16x32xf32> -> vector<16x32xf32>
    %c0_10 = arith.constant 0 : index
    %c0_11 = arith.constant 0 : index
    %11 = vector.load %arg7[%c0_10, %c0_11] : memref<1x32xf32, #tpu.memory_space<vmem>>, vector<1x32xf32>
    %12 = vector.broadcast %11 : vector<1x32xf32> to vector<16x32xf32>
    %13 = arith.addf %10, %12 : vector<16x32xf32>
    %cst_12 = arith.constant 0.000000e+00 : f32
    %14 = vector.broadcast %cst_12 : f32 to vector<16x32xf32>
    %15 = arith.maximumf %13, %14 : vector<16x32xf32>
    %16 = vector.shape_cast %15 : vector<16x32xf32> to vector<2x8x32xf32>
    %c0_13 = arith.constant 0 : index
    %c0_14 = arith.constant 0 : index
    %c0_15 = arith.constant 0 : index
    %17 = vector.load %arg2[%c0_13, %c0_14, %c0_15] : memref<2x8x64xf32, #tpu.memory_space<vmem>>, vector<2x8x64xf32>
    %c0_16 = arith.constant 0 : index
    %c0_17 = arith.constant 0 : index
    %c0_18 = arith.constant 0 : index
    %18 = vector.load %arg3[%c0_16, %c0_17, %c0_18] : memref<2x8x64xf32, #tpu.memory_space<vmem>>, vector<2x8x64xf32>
    %19 = tpu.concatenate %16, %17, %18 in 2 : vector<2x8x32xf32>, vector<2x8x64xf32>, vector<2x8x64xf32> -> vector<2x8x160xf32>
    %c0_19 = arith.constant 0 : index
    %c0_20 = arith.constant 0 : index
    %20 = vector.load %arg8[%c0_19, %c0_20] : memref<1x160xf32, #tpu.memory_space<vmem>>, vector<1x160xf32>
    %21 = vector.shape_cast %20 : vector<1x160xf32> to vector<1x1x160xf32>
    %22 = vector.shape_cast %21 : vector<1x1x160xf32> to vector<1x1x160xf32>
    %23 = vector.broadcast %22 : vector<1x1x160xf32> to vector<2x1x160xf32>
    %c0_21 = arith.constant 0 : index
    %c0_22 = arith.constant 0 : index
    %c0_23 = arith.constant 0 : index
    %24 = vector.load %arg28[%c0_21, %c0_22, %c0_23] : memref<2x16x160xf32, #tpu.memory_space<vmem>>, vector<2x1x160xf32>
    tpu.vector_store %arg28[%c0_21, %c0_22, %c0_23], %23 {strides = array<i32>} : memref<2x16x160xf32, #tpu.memory_space<vmem>>, vector<2x1x160xf32>,
    %c0_24 = arith.constant 0 : index
    %c1 = arith.constant 1 : index
    %c0_25 = arith.constant 0 : index
    %25 = vector.load %arg28[%c0_24, %c1, %c0_25] : memref<2x16x160xf32, #tpu.memory_space<vmem>>, vector<2x8x160xf32>
    tpu.vector_store %arg28[%c0_24, %c1, %c0_25], %19 {strides = array<i32>} : memref<2x16x160xf32, #tpu.memory_space<vmem>>, vector<2x8x160xf32>,
    %cst_26 = arith.constant 0.000000e+00 : f32
    %26 = vector.broadcast %cst_26 : f32 to vector<2x7x160xf32>
    %c0_27 = arith.constant 0 : index
    %c9 = arith.constant 9 : index
    %c0_28 = arith.constant 0 : index
    %27 = vector.load %arg28[%c0_27, %c9, %c0_28] : memref<2x16x160xf32, #tpu.memory_space<vmem>>, vector<2x7x160xf32>
    tpu.vector_store %arg28[%c0_27, %c9, %c0_28], %26 {strides = array<i32>} : memref<2x16x160xf32, #tpu.memory_space<vmem>>, vector<2x7x160xf32>,
    %c0_29 = arith.constant 0 : index
    %c0_30 = arith.constant 0 : index
    %c0_31 = arith.constant 0 : index
    %28 = vector.load %arg28[%c0_29, %c0_30, %c0_31] : memref<2x16x160xf32, #tpu.memory_space<vmem>>, vector<2x16x160xf32>
    %c0_32 = arith.constant 0 : index
    %c0_33 = arith.constant 0 : index
    %29 = vector.load %arg9[%c0_32, %c0_33] : memref<16x160xf32, #tpu.memory_space<vmem>>, vector<16x160xf32>
    %30 = vector.shape_cast %29 : vector<16x160xf32> to vector<1x16x160xf32>
    %31 = vector.broadcast %30 : vector<1x16x160xf32> to vector<2x16x160xf32>
    %32 = arith.addf %28, %31 : vector<2x16x160xf32>
    %33 = vector.shape_cast %32 : vector<2x16x160xf32> to vector<32x160xf32>
    %c0_34 = arith.constant 0 : index
    %c0_35 = arith.constant 0 : index
    %34 = vector.load %arg11[%c0_34, %c0_35] : memref<160x1536xf32, #tpu.memory_space<vmem>>, vector<160x1536xf32>
    %cst_36 = arith.constant dense<0.000000e+00> : vector<32x1536xf32>
    %35 = tpu.matmul %33, %34, %cst_36 {dimension_numbers = #tpu.dot_dimension_numbers<[1], [0], [0], [1], [0, 0, 1, 1], [], []>} : vector<32x160xf32>, vector<160x1536xf32>, vector<32x1536xf32> -> vector<32x1536xf32>
    %c0_37 = arith.constant 0 : index
    %c0_38 = arith.constant 0 : index
    %36 = vector.load %arg12[%c0_37, %c0_38] : memref<1x1536xf32, #tpu.memory_space<vmem>>, vector<1x1536xf32>
    %37 = vector.broadcast %36 : vector<1x1536xf32> to vector<32x1536xf32>
    %38 = arith.addf %35, %37 : vector<32x1536xf32>
    %c0_39 = arith.constant 0 : index
    %c0_40 = arith.constant 0 : index
    %39 = vector.load %arg10[%c0_39, %c0_40] : memref<32x32xf32, #tpu.memory_space<vmem>>, vector<32x32xf32>
    %cst_41 = arith.constant 0.000000e+00 : f32
    %40 = vector.broadcast %cst_41 : f32 to vector<32x160xf32>
    %41 = vector.extract_strided_slice %38 {offsets = [0, 0], sizes = [32, 128], strides = [1, 1]} : vector<32x1536xf32> to vector<32x128xf32>
    %42 = vector.extract_strided_slice %38 {offsets = [0, 512], sizes = [32, 128], strides = [1, 1]} : vector<32x1536xf32> to vector<32x128xf32>
    %43 = vector.extract_strided_slice %38 {offsets = [0, 1024], sizes = [32, 128], strides = [1, 1]} : vector<32x1536xf32> to vector<32x128xf32>
    %cst_42 = arith.constant dense<0.000000e+00> : vector<32x32xf32>
    %44 = tpu.matmul %41, %42, %cst_42 {dimension_numbers = #tpu.dot_dimension_numbers<[1], [1], [0], [0], [0, 0, 1, 0], [], []>} : vector<32x128xf32>, vector<32x128xf32>, vector<32x32xf32> -> vector<32x32xf32>
    %cst_43 = arith.constant 0.158113882 : f32
    %45 = vector.broadcast %cst_43 : f32 to vector<32x32xf32>
    %46 = arith.mulf %44, %45 : vector<32x32xf32>
    %47 = arith.addf %46, %39 : vector<32x32xf32>
    %cst_44 = arith.constant dense<0xFF800000> : vector<32xf32>
    %48 = vector.multi_reduction <maximumf>, %47, %cst_44 [1] : vector<32x32xf32> to vector<32xf32>
    %49 = vector.shape_cast %48 : vector<32xf32> to vector<32x1xf32>
    %50 = vector.broadcast %49 : vector<32x1xf32> to vector<32x32xf32>
    %51 = arith.subf %47, %50 : vector<32x32xf32>
    %52 = math.exp %51 : vector<32x32xf32>
    %cst_45 = arith.constant dense<0.000000e+00> : vector<32xf32>
    %53 = vector.multi_reduction <add>, %52, %cst_45 [1] : vector<32x32xf32> to vector<32xf32>
    %54 = vector.shape_cast %53 : vector<32xf32> to vector<32x1xf32>
    %55 = tpu.reciprocal %54 {approx = true} : vector<32x1xf32> -> vector<32x1xf32>
    %56 = vector.broadcast %55 : vector<32x1xf32> to vector<32x32xf32>
    %57 = arith.mulf %52, %56 : vector<32x32xf32>
    %cst_46 = arith.constant dense<0.000000e+00> : vector<32x128xf32>
    %58 = tpu.matmul %57, %43, %cst_46 {dimension_numbers = #tpu.dot_dimension_numbers<[1], [0], [0], [1], [0, 0, 1, 1], [], []>} : vector<32x32xf32>, vector<32x128xf32>, vector<32x128xf32> -> vector<32x128xf32>
    %c0_47 = arith.constant 0 : index
    %c0_48 = arith.constant 0 : index
    %59 = vector.load %arg13[%c0_47, %c0_48] : memref<512x160xf32, #tpu.memory_space<vmem>>, vector<128x160xf32>
    %cst_49 = arith.constant dense<0.000000e+00> : vector<32x160xf32>
    %60 = tpu.matmul %58, %59, %cst_49 {dimension_numbers = #tpu.dot_dimension_numbers<[1], [0], [0], [1], [0, 0, 1, 1], [], []>} : vector<32x128xf32>, vector<128x160xf32>, vector<32x160xf32> -> vector<32x160xf32>
    %61 = arith.addf %40, %60 : vector<32x160xf32>
    %62 = vector.extract_strided_slice %38 {offsets = [0, 128], sizes = [32, 128], strides = [1, 1]} : vector<32x1536xf32> to vector<32x128xf32>
    %63 = vector.extract_strided_slice %38 {offsets = [0, 640], sizes = [32, 128], strides = [1, 1]} : vector<32x1536xf32> to vector<32x128xf32>
    %64 = vector.extract_strided_slice %38 {offsets = [0, 1152], sizes = [32, 128], strides = [1, 1]} : vector<32x1536xf32> to vector<32x128xf32>
    %cst_50 = arith.constant dense<0.000000e+00> : vector<32x32xf32>
    %65 = tpu.matmul %62, %63, %cst_50 {dimension_numbers = #tpu.dot_dimension_numbers<[1], [1], [0], [0], [0, 0, 1, 0], [], []>} : vector<32x128xf32>, vector<32x128xf32>, vector<32x32xf32> -> vector<32x32xf32>
    %cst_51 = arith.constant 0.158113882 : f32
    %66 = vector.broadcast %cst_51 : f32 to vector<32x32xf32>
    %67 = arith.mulf %65, %66 : vector<32x32xf32>
    %68 = arith.addf %67, %39 : vector<32x32xf32>
    %cst_52 = arith.constant dense<0xFF800000> : vector<32xf32>
    %69 = vector.multi_reduction <maximumf>, %68, %cst_52 [1] : vector<32x32xf32> to vector<32xf32>
    %70 = vector.shape_cast %69 : vector<32xf32> to vector<32x1xf32>
    %71 = vector.broadcast %70 : vector<32x1xf32> to vector<32x32xf32>
    %72 = arith.subf %68, %71 : vector<32x32xf32>
    %73 = math.exp %72 : vector<32x32xf32>
    %cst_53 = arith.constant dense<0.000000e+00> : vector<32xf32>
    %74 = vector.multi_reduction <add>, %73, %cst_53 [1] : vector<32x32xf32> to vector<32xf32>
    %75 = vector.shape_cast %74 : vector<32xf32> to vector<32x1xf32>
    %76 = tpu.reciprocal %75 {approx = true} : vector<32x1xf32> -> vector<32x1xf32>
    %77 = vector.broadcast %76 : vector<32x1xf32> to vector<32x32xf32>
    %78 = arith.mulf %73, %77 : vector<32x32xf32>
    %cst_54 = arith.constant dense<0.000000e+00> : vector<32x128xf32>
    %79 = tpu.matmul %78, %64, %cst_54 {dimension_numbers = #tpu.dot_dimension_numbers<[1], [0], [0], [1], [0, 0, 1, 1], [], []>} : vector<32x32xf32>, vector<32x128xf32>, vector<32x128xf32> -> vector<32x128xf32>
    %c128 = arith.constant 128 : index
    %c0_55 = arith.constant 0 : index
    %80 = vector.load %arg13[%c128, %c0_55] : memref<512x160xf32, #tpu.memory_space<vmem>>, vector<128x160xf32>
    %cst_56 = arith.constant dense<0.000000e+00> : vector<32x160xf32>
    %81 = tpu.matmul %79, %80, %cst_56 {dimension_numbers = #tpu.dot_dimension_numbers<[1], [0], [0], [1], [0, 0, 1, 1], [], []>} : vector<32x128xf32>, vector<128x160xf32>, vector<32x160xf32> -> vector<32x160xf32>
    %82 = arith.addf %61, %81 : vector<32x160xf32>
    %83 = vector.extract_strided_slice %38 {offsets = [0, 256], sizes = [32, 128], strides = [1, 1]} : vector<32x1536xf32> to vector<32x128xf32>
    %84 = vector.extract_strided_slice %38 {offsets = [0, 768], sizes = [32, 128], strides = [1, 1]} : vector<32x1536xf32> to vector<32x128xf32>
    %85 = vector.extract_strided_slice %38 {offsets = [0, 1280], sizes = [32, 128], strides = [1, 1]} : vector<32x1536xf32> to vector<32x128xf32>
    %cst_57 = arith.constant dense<0.000000e+00> : vector<32x32xf32>
    %86 = tpu.matmul %83, %84, %cst_57 {dimension_numbers = #tpu.dot_dimension_numbers<[1], [1], [0], [0], [0, 0, 1, 0], [], []>} : vector<32x128xf32>, vector<32x128xf32>, vector<32x32xf32> -> vector<32x32xf32>
    %cst_58 = arith.constant 0.158113882 : f32
    %87 = vector.broadcast %cst_58 : f32 to vector<32x32xf32>
    %88 = arith.mulf %86, %87 : vector<32x32xf32>
    %89 = arith.addf %88, %39 : vector<32x32xf32>
    %cst_59 = arith.constant dense<0xFF800000> : vector<32xf32>
    %90 = vector.multi_reduction <maximumf>, %89, %cst_59 [1] : vector<32x32xf32> to vector<32xf32>
    %91 = vector.shape_cast %90 : vector<32xf32> to vector<32x1xf32>
    %92 = vector.broadcast %91 : vector<32x1xf32> to vector<32x32xf32>
    %93 = arith.subf %89, %92 : vector<32x32xf32>
    %94 = math.exp %93 : vector<32x32xf32>
    %cst_60 = arith.constant dense<0.000000e+00> : vector<32xf32>
    %95 = vector.multi_reduction <add>, %94, %cst_60 [1] : vector<32x32xf32> to vector<32xf32>
    %96 = vector.shape_cast %95 : vector<32xf32> to vector<32x1xf32>
    %97 = tpu.reciprocal %96 {approx = true} : vector<32x1xf32> -> vector<32x1xf32>
    %98 = vector.broadcast %97 : vector<32x1xf32> to vector<32x32xf32>
    %99 = arith.mulf %94, %98 : vector<32x32xf32>
    %cst_61 = arith.constant dense<0.000000e+00> : vector<32x128xf32>
    %100 = tpu.matmul %99, %85, %cst_61 {dimension_numbers = #tpu.dot_dimension_numbers<[1], [0], [0], [1], [0, 0, 1, 1], [], []>} : vector<32x32xf32>, vector<32x128xf32>, vector<32x128xf32> -> vector<32x128xf32>
    %c256 = arith.constant 256 : index
    %c0_62 = arith.constant 0 : index
    %101 = vector.load %arg13[%c256, %c0_62] : memref<512x160xf32, #tpu.memory_space<vmem>>, vector<128x160xf32>
    %cst_63 = arith.constant dense<0.000000e+00> : vector<32x160xf32>
    %102 = tpu.matmul %100, %101, %cst_63 {dimension_numbers = #tpu.dot_dimension_numbers<[1], [0], [0], [1], [0, 0, 1, 1], [], []>} : vector<32x128xf32>, vector<128x160xf32>, vector<32x160xf32> -> vector<32x160xf32>
    %103 = arith.addf %82, %102 : vector<32x160xf32>
    %104 = vector.extract_strided_slice %38 {offsets = [0, 384], sizes = [32, 128], strides = [1, 1]} : vector<32x1536xf32> to vector<32x128xf32>
    %105 = vector.extract_strided_slice %38 {offsets = [0, 896], sizes = [32, 128], strides = [1, 1]} : vector<32x1536xf32> to vector<32x128xf32>
    %106 = vector.extract_strided_slice %38 {offsets = [0, 1408], sizes = [32, 128], strides = [1, 1]} : vector<32x1536xf32> to vector<32x128xf32>
    %cst_64 = arith.constant dense<0.000000e+00> : vector<32x32xf32>
    %107 = tpu.matmul %104, %105, %cst_64 {dimension_numbers = #tpu.dot_dimension_numbers<[1], [1], [0], [0], [0, 0, 1, 0], [], []>} : vector<32x128xf32>, vector<32x128xf32>, vector<32x32xf32> -> vector<32x32xf32>
    %cst_65 = arith.constant 0.158113882 : f32
    %108 = vector.broadcast %cst_65 : f32 to vector<32x32xf32>
    %109 = arith.mulf %107, %108 : vector<32x32xf32>
    %110 = arith.addf %109, %39 : vector<32x32xf32>
    %cst_66 = arith.constant dense<0xFF800000> : vector<32xf32>
    %111 = vector.multi_reduction <maximumf>, %110, %cst_66 [1] : vector<32x32xf32> to vector<32xf32>
    %112 = vector.shape_cast %111 : vector<32xf32> to vector<32x1xf32>
    %113 = vector.broadcast %112 : vector<32x1xf32> to vector<32x32xf32>
    %114 = arith.subf %110, %113 : vector<32x32xf32>
    %115 = math.exp %114 : vector<32x32xf32>
    %cst_67 = arith.constant dense<0.000000e+00> : vector<32xf32>
    %116 = vector.multi_reduction <add>, %115, %cst_67 [1] : vector<32x32xf32> to vector<32xf32>
    %117 = vector.shape_cast %116 : vector<32xf32> to vector<32x1xf32>
    %118 = tpu.reciprocal %117 {approx = true} : vector<32x1xf32> -> vector<32x1xf32>
    %119 = vector.broadcast %118 : vector<32x1xf32> to vector<32x32xf32>
    %120 = arith.mulf %115, %119 : vector<32x32xf32>
    %cst_68 = arith.constant dense<0.000000e+00> : vector<32x128xf32>
    %121 = tpu.matmul %120, %106, %cst_68 {dimension_numbers = #tpu.dot_dimension_numbers<[1], [0], [0], [1], [0, 0, 1, 1], [], []>} : vector<32x32xf32>, vector<32x128xf32>, vector<32x128xf32> -> vector<32x128xf32>
    %c384 = arith.constant 384 : index
    %c0_69 = arith.constant 0 : index
    %122 = vector.load %arg13[%c384, %c0_69] : memref<512x160xf32, #tpu.memory_space<vmem>>, vector<128x160xf32>
    %cst_70 = arith.constant dense<0.000000e+00> : vector<32x160xf32>
    %123 = tpu.matmul %121, %122, %cst_70 {dimension_numbers = #tpu.dot_dimension_numbers<[1], [0], [0], [1], [0, 0, 1, 1], [], []>} : vector<32x128xf32>, vector<128x160xf32>, vector<32x160xf32> -> vector<32x160xf32>
    %124 = arith.addf %103, %123 : vector<32x160xf32>
    %c0_71 = arith.constant 0 : index
    %c0_72 = arith.constant 0 : index
    %125 = vector.load %arg14[%c0_71, %c0_72] : memref<1x160xf32, #tpu.memory_space<vmem>>, vector<1x160xf32>
    %126 = vector.broadcast %125 : vector<1x160xf32> to vector<32x160xf32>
    %127 = arith.addf %124, %126 : vector<32x160xf32>
    %128 = arith.addf %33, %127 : vector<32x160xf32>
    %c0_73 = arith.constant 0 : index
    %c0_74 = arith.constant 0 : index
    %129 = vector.load %arg15[%c0_73, %c0_74] : memref<1x160xf32, #tpu.memory_space<vmem>>, vector<1x160xf32>
    %c0_75 = arith.constant 0 : index
    %c0_76 = arith.constant 0 : index
    %130 = vector.load %arg16[%c0_75, %c0_76] : memref<1x160xf32, #tpu.memory_space<vmem>>, vector<1x160xf32>
    %cst_77 = arith.constant dense<0.000000e+00> : vector<32xf32>
    %131 = vector.multi_reduction <add>, %128, %cst_77 [1] : vector<32x160xf32> to vector<32xf32>
    %132 = vector.shape_cast %131 : vector<32xf32> to vector<32x1xf32>
    %cst_78 = arith.constant 1.600000e+02 : f32
    %133 = vector.broadcast %cst_78 : f32 to vector<32x1xf32>
    %134 = arith.divf %132, %133 : vector<32x1xf32>
    %135 = vector.broadcast %134 : vector<32x1xf32> to vector<32x160xf32>
    %136 = arith.subf %128, %135 : vector<32x160xf32>
    %137 = vector.broadcast %134 : vector<32x1xf32> to vector<32x160xf32>
    %138 = arith.subf %128, %137 : vector<32x160xf32>
    %139 = arith.mulf %136, %138 : vector<32x160xf32>
    %cst_79 = arith.constant dense<0.000000e+00> : vector<32xf32>
    %140 = vector.multi_reduction <add>, %139, %cst_79 [1] : vector<32x160xf32> to vector<32xf32>
    %141 = vector.shape_cast %140 : vector<32xf32> to vector<32x1xf32>
    %cst_80 = arith.constant 1.600000e+02 : f32
    %142 = vector.broadcast %cst_80 : f32 to vector<32x1xf32>
    %143 = arith.divf %141, %142 : vector<32x1xf32>
    %144 = vector.broadcast %134 : vector<32x1xf32> to vector<32x160xf32>
    %145 = arith.subf %128, %144 : vector<32x160xf32>
    %cst_81 = arith.constant 9.99999974E-6 : f32
    %146 = vector.broadcast %cst_81 : f32 to vector<32x1xf32>
    %147 = arith.addf %143, %146 : vector<32x1xf32>
    %148 = math.rsqrt %147 : vector<32x1xf32>
    %149 = vector.broadcast %148 : vector<32x1xf32> to vector<32x160xf32>
    %150 = arith.mulf %145, %149 : vector<32x160xf32>
    %151 = vector.broadcast %129 : vector<1x160xf32> to vector<32x160xf32>
    %152 = arith.mulf %150, %151 : vector<32x160xf32>
    %153 = vector.broadcast %130 : vector<1x160xf32> to vector<32x160xf32>
    %154 = arith.addf %152, %153 : vector<32x160xf32>
    %c0_82 = arith.constant 0 : index
    %c0_83 = arith.constant 0 : index
    %155 = vector.load %arg17[%c0_82, %c0_83] : memref<160x2048xf32, #tpu.memory_space<vmem>>, vector<160x2048xf32>
    %cst_84 = arith.constant dense<0.000000e+00> : vector<32x2048xf32>
    %156 = tpu.matmul %154, %155, %cst_84 {dimension_numbers = #tpu.dot_dimension_numbers<[1], [0], [0], [1], [0, 0, 1, 1], [], []>} : vector<32x160xf32>, vector<160x2048xf32>, vector<32x2048xf32> -> vector<32x2048xf32>
    %c0_85 = arith.constant 0 : index
    %c0_86 = arith.constant 0 : index
    %157 = vector.load %arg18[%c0_85, %c0_86] : memref<1x2048xf32, #tpu.memory_space<vmem>>, vector<1x2048xf32>
    %158 = vector.broadcast %157 : vector<1x2048xf32> to vector<32x2048xf32>
    %159 = arith.addf %156, %158 : vector<32x2048xf32>
    %cst_87 = arith.constant 0.000000e+00 : f32
    %160 = vector.broadcast %cst_87 : f32 to vector<32x2048xf32>
    %161 = arith.maximumf %159, %160 : vector<32x2048xf32>
    %c0_88 = arith.constant 0 : index
    %c0_89 = arith.constant 0 : index
    %162 = vector.load %arg19[%c0_88, %c0_89] : memref<2048x160xf32, #tpu.memory_space<vmem>>, vector<2048x160xf32>
    %cst_90 = arith.constant dense<0.000000e+00> : vector<32x160xf32>
    %163 = tpu.matmul %161, %162, %cst_90 {dimension_numbers = #tpu.dot_dimension_numbers<[1], [0], [0], [1], [0, 0, 1, 1], [], []>} : vector<32x2048xf32>, vector<2048x160xf32>, vector<32x160xf32> -> vector<32x160xf32>
    %c0_91 = arith.constant 0 : index
    %c0_92 = arith.constant 0 : index
    %164 = vector.load %arg20[%c0_91, %c0_92] : memref<1x160xf32, #tpu.memory_space<vmem>>, vector<1x160xf32>
    %165 = vector.broadcast %164 : vector<1x160xf32> to vector<32x160xf32>
    %166 = arith.addf %163, %165 : vector<32x160xf32>
    %167 = arith.addf %154, %166 : vector<32x160xf32>
    %c0_93 = arith.constant 0 : index
    %c0_94 = arith.constant 0 : index
    %168 = vector.load %arg21[%c0_93, %c0_94] : memref<1x160xf32, #tpu.memory_space<vmem>>, vector<1x160xf32>
    %c0_95 = arith.constant 0 : index
    %c0_96 = arith.constant 0 : index
    %169 = vector.load %arg22[%c0_95, %c0_96] : memref<1x160xf32, #tpu.memory_space<vmem>>, vector<1x160xf32>
    %cst_97 = arith.constant dense<0.000000e+00> : vector<32xf32>
    %170 = vector.multi_reduction <add>, %167, %cst_97 [1] : vector<32x160xf32> to vector<32xf32>
    %171 = vector.shape_cast %170 : vector<32xf32> to vector<32x1xf32>
    %cst_98 = arith.constant 1.600000e+02 : f32
    %172 = vector.broadcast %cst_98 : f32 to vector<32x1xf32>
    %173 = arith.divf %171, %172 : vector<32x1xf32>
    %174 = vector.broadcast %173 : vector<32x1xf32> to vector<32x160xf32>
    %175 = arith.subf %167, %174 : vector<32x160xf32>
    %176 = vector.broadcast %173 : vector<32x1xf32> to vector<32x160xf32>
    %177 = arith.subf %167, %176 : vector<32x160xf32>
    %178 = arith.mulf %175, %177 : vector<32x160xf32>
    %cst_99 = arith.constant dense<0.000000e+00> : vector<32xf32>
    %179 = vector.multi_reduction <add>, %178, %cst_99 [1] : vector<32x160xf32> to vector<32xf32>
    %180 = vector.shape_cast %179 : vector<32xf32> to vector<32x1xf32>
    %cst_100 = arith.constant 1.600000e+02 : f32
    %181 = vector.broadcast %cst_100 : f32 to vector<32x1xf32>
    %182 = arith.divf %180, %181 : vector<32x1xf32>
    %183 = vector.broadcast %173 : vector<32x1xf32> to vector<32x160xf32>
    %184 = arith.subf %167, %183 : vector<32x160xf32>
    %cst_101 = arith.constant 9.99999974E-6 : f32
    %185 = vector.broadcast %cst_101 : f32 to vector<32x1xf32>
    %186 = arith.addf %182, %185 : vector<32x1xf32>
    %187 = math.rsqrt %186 : vector<32x1xf32>
    %188 = vector.broadcast %187 : vector<32x1xf32> to vector<32x160xf32>
    %189 = arith.mulf %184, %188 : vector<32x160xf32>
    %190 = vector.broadcast %168 : vector<1x160xf32> to vector<32x160xf32>
    %191 = arith.mulf %189, %190 : vector<32x160xf32>
    %192 = vector.broadcast %169 : vector<1x160xf32> to vector<32x160xf32>
    %193 = arith.addf %191, %192 : vector<32x160xf32>
    %194 = vector.shape_cast %193 : vector<32x160xf32> to vector<2x16x160xf32>
    %195 = vector.extract_strided_slice %194 {offsets = [0, 0, 0], sizes = [2, 1, 160], strides = [1, 1, 1]} : vector<2x16x160xf32> to vector<2x1x160xf32>
    %196 = vector.shape_cast %195 : vector<2x1x160xf32> to vector<2x160xf32>
    %c0_102 = arith.constant 0 : index
    %c0_103 = arith.constant 0 : index
    %197 = vector.load %arg23[%c0_102, %c0_103] : memref<160x80xf32, #tpu.memory_space<vmem>>, vector<160x80xf32>
    %cst_104 = arith.constant dense<0.000000e+00> : vector<2x80xf32>
    %198 = tpu.matmul %196, %197, %cst_104 {dimension_numbers = #tpu.dot_dimension_numbers<[1], [0], [0], [1], [0, 0, 1, 1], [], []>} : vector<2x160xf32>, vector<160x80xf32>, vector<2x80xf32> -> vector<2x80xf32>
    %c0_105 = arith.constant 0 : index
    %c0_106 = arith.constant 0 : index
    %199 = vector.load %arg24[%c0_105, %c0_106] : memref<1x80xf32, #tpu.memory_space<vmem>>, vector<1x80xf32>
    %200 = vector.broadcast %199 : vector<1x80xf32> to vector<2x80xf32>
    %201 = arith.addf %198, %200 : vector<2x80xf32>
    %c0_107 = arith.constant 0 : index
    %c0_108 = arith.constant 0 : index
    %202 = vector.load %arg25[%c0_107, %c0_108] : memref<80x128xf32, #tpu.memory_space<vmem>>, vector<80x128xf32>
    %cst_109 = arith.constant dense<0.000000e+00> : vector<2x128xf32>
    %203 = tpu.matmul %201, %202, %cst_109 {dimension_numbers = #tpu.dot_dimension_numbers<[1], [0], [0], [1], [0, 0, 1, 1], [], []>} : vector<2x80xf32>, vector<80x128xf32>, vector<2x128xf32> -> vector<2x128xf32>
    %c0_110 = arith.constant 0 : index
    %c0_111 = arith.constant 0 : index
    %204 = vector.load %arg26[%c0_110, %c0_111] : memref<1x128xf32, #tpu.memory_space<vmem>>, vector<1x128xf32>
    %205 = vector.broadcast %204 : vector<1x128xf32> to vector<2x128xf32>
    %206 = arith.addf %203, %205 : vector<2x128xf32>
    %c0_112 = arith.constant 0 : index
    %c0_113 = arith.constant 0 : index
    %207 = vector.load %arg27[%c0_112, %c0_113] : memref<2x128xf32, #tpu.memory_space<vmem>>, vector<2x128xf32>
    tpu.vector_store %arg27[%c0_112, %c0_113], %206 {strides = array<i32>} : memref<2x128xf32, #tpu.memory_space<vmem>>, vector<2x128xf32>,
    return
  }
  func.func @transform_0(%arg0: i32) -> (i32, i32, i32) {
    %c0_i32 = arith.constant 0 : i32
    %c0_i32_0 = arith.constant 0 : i32
    %c0_i32_1 = arith.constant 0 : i32
    return %arg0, %c0_i32, %c0_i32_0 : i32, i32, i32
  }
  func.func @transform_1(%arg0: i32) -> (i32, i32, i32) {
    %c0_i32 = arith.constant 0 : i32
    %c0_i32_0 = arith.constant 0 : i32
    %c0_i32_1 = arith.constant 0 : i32
    return %arg0, %c0_i32, %c0_i32_0 : i32, i32, i32
  }
  func.func @transform_2(%arg0: i32) -> (i32, i32, i32) {
    %c0_i32 = arith.constant 0 : i32
    %c0_i32_0 = arith.constant 0 : i32
    %c0_i32_1 = arith.constant 0 : i32
    return %arg0, %c0_i32, %c0_i32_0 : i32, i32, i32
  }
  func.func @transform_3(%arg0: i32) -> (i32, i32) {
    %c0_i32 = arith.constant 0 : i32
    %c0_i32_0 = arith.constant 0 : i32
    %c0_i32_1 = arith.constant 0 : i32
    return %c0_i32, %c0_i32_0 : i32, i32
  }
  func.func @transform_4(%arg0: i32) -> (i32, i32) {
    %c0_i32 = arith.constant 0 : i32
    %c0_i32_0 = arith.constant 0 : i32
    %c0_i32_1 = arith.constant 0 : i32
    return %c0_i32, %c0_i32_0 : i32, i32
  }
  func.func @transform_5(%arg0: i32) -> (i32, i32) {
    %c0_i32 = arith.constant 0 : i32
    %c0_i32_0 = arith.constant 0 : i32
    %c0_i32_1 = arith.constant 0 : i32
    return %c0_i32, %c0_i32_0 : i32, i32
  }
  func.func @transform_6(%arg0: i32) -> (i32, i32) {
    %c0_i32 = arith.constant 0 : i32
    %c0_i32_0 = arith.constant 0 : i32
    %c0_i32_1 = arith.constant 0 : i32
    return %c0_i32, %c0_i32_0 : i32, i32
  }
  func.func @transform_7(%arg0: i32) -> (i32, i32) {
    %c0_i32 = arith.constant 0 : i32
    %c0_i32_0 = arith.constant 0 : i32
    %c0_i32_1 = arith.constant 0 : i32
    return %c0_i32, %c0_i32_0 : i32, i32
  }
  func.func @transform_8(%arg0: i32) -> (i32, i32) {
    %c0_i32 = arith.constant 0 : i32
    %c0_i32_0 = arith.constant 0 : i32
    %c0_i32_1 = arith.constant 0 : i32
    return %c0_i32, %c0_i32_0 : i32, i32
  }
  func.func @transform_9(%arg0: i32) -> (i32, i32) {
    %c0_i32 = arith.constant 0 : i32
    %c0_i32_0 = arith.constant 0 : i32
    %c0_i32_1 = arith.constant 0 : i32
    return %c0_i32, %c0_i32_0 : i32, i32
  }
  func.func @transform_10(%arg0: i32) -> (i32, i32) {
    %c0_i32 = arith.constant 0 : i32
    %c0_i32_0 = arith.constant 0 : i32
    %c0_i32_1 = arith.constant 0 : i32
    return %c0_i32, %c0_i32_0 : i32, i32
  }
  func.func @transform_11(%arg0: i32) -> (i32, i32) {
    %c0_i32 = arith.constant 0 : i32
    %c0_i32_0 = arith.constant 0 : i32
    %c0_i32_1 = arith.constant 0 : i32
    return %c0_i32, %c0_i32_0 : i32, i32
  }
  func.func @transform_12(%arg0: i32) -> (i32, i32) {
    %c0_i32 = arith.constant 0 : i32
    %c0_i32_0 = arith.constant 0 : i32
    %c0_i32_1 = arith.constant 0 : i32
    return %c0_i32, %c0_i32_0 : i32, i32
  }
  func.func @transform_13(%arg0: i32) -> (i32, i32) {
    %c0_i32 = arith.constant 0 : i32
    %c0_i32_0 = arith.constant 0 : i32
    %c0_i32_1 = arith.constant 0 : i32
    return %c0_i32, %c0_i32_0 : i32, i32
  }
  func.func @transform_14(%arg0: i32) -> (i32, i32) {
    %c0_i32 = arith.constant 0 : i32
    %c0_i32_0 = arith.constant 0 : i32
    %c0_i32_1 = arith.constant 0 : i32
    return %c0_i32, %c0_i32_0 : i32, i32
  }
  func.func @transform_15(%arg0: i32) -> (i32, i32) {
    %c0_i32 = arith.constant 0 : i32
    %c0_i32_0 = arith.constant 0 : i32
    %c0_i32_1 = arith.constant 0 : i32
    return %c0_i32, %c0_i32_0 : i32, i32
  }
  func.func @transform_16(%arg0: i32) -> (i32, i32) {
    %c0_i32 = arith.constant 0 : i32
    %c0_i32_0 = arith.constant 0 : i32
    %c0_i32_1 = arith.constant 0 : i32
    return %c0_i32, %c0_i32_0 : i32, i32
  }
  func.func @transform_17(%arg0: i32) -> (i32, i32) {
    %c0_i32 = arith.constant 0 : i32
    %c0_i32_0 = arith.constant 0 : i32
    %c0_i32_1 = arith.constant 0 : i32
    return %c0_i32, %c0_i32_0 : i32, i32
  }
  func.func @transform_18(%arg0: i32) -> (i32, i32) {
    %c0_i32 = arith.constant 0 : i32
    %c0_i32_0 = arith.constant 0 : i32
    %c0_i32_1 = arith.constant 0 : i32
    return %c0_i32, %c0_i32_0 : i32, i32
  }
  func.func @transform_19(%arg0: i32) -> (i32, i32) {
    %c0_i32 = arith.constant 0 : i32
    %c0_i32_0 = arith.constant 0 : i32
    %c0_i32_1 = arith.constant 0 : i32
    return %c0_i32, %c0_i32_0 : i32, i32
  }
  func.func @transform_20(%arg0: i32) -> (i32, i32) {
    %c0_i32 = arith.constant 0 : i32
    %c0_i32_0 = arith.constant 0 : i32
    %c0_i32_1 = arith.constant 0 : i32
    return %c0_i32, %c0_i32_0 : i32, i32
  }
  func.func @transform_21(%arg0: i32) -> (i32, i32) {
    %c0_i32 = arith.constant 0 : i32
    %c0_i32_0 = arith.constant 0 : i32
    %c0_i32_1 = arith.constant 0 : i32
    return %c0_i32, %c0_i32_0 : i32, i32
  }
  func.func @transform_22(%arg0: i32) -> (i32, i32) {
    %c0_i32 = arith.constant 0 : i32
    %c0_i32_0 = arith.constant 0 : i32
    %c0_i32_1 = arith.constant 0 : i32
    return %c0_i32, %c0_i32_0 : i32, i32
  }
  func.func @transform_23(%arg0: i32) -> (i32, i32) {
    %c0_i32 = arith.constant 0 : i32
    %c0_i32_0 = arith.constant 0 : i32
    %c0_i32_1 = arith.constant 0 : i32
    return %c0_i32, %c0_i32_0 : i32, i32
  }
  func.func @transform_24(%arg0: i32) -> (i32, i32) {
    %c0_i32 = arith.constant 0 : i32
    %c0_i32_0 = arith.constant 0 : i32
    %c0_i32_1 = arith.constant 0 : i32
    return %c0_i32, %c0_i32_0 : i32, i32
  }
  func.func @transform_25(%arg0: i32) -> (i32, i32) {
    %c0_i32 = arith.constant 0 : i32
    %c0_i32_0 = arith.constant 0 : i32
    %c0_i32_1 = arith.constant 0 : i32
    return %c0_i32, %c0_i32_0 : i32, i32
  }
  func.func @transform_26(%arg0: i32) -> (i32, i32) {
    %c0_i32 = arith.constant 0 : i32
    %c0_i32_0 = arith.constant 0 : i32
    return %arg0, %c0_i32 : i32, i32
  }
}

</mosaic_0001>

<llo_original>
// kernel: tpu_custom_call.1
$region0: #{tpu_custom_call.1}
  #allocation0 [shape = 'u32[]', space=smem, size = 0x4, offset = 0x4, fixed_abs, tag = 'smem constant byte address 0x4 - core index']
  #allocation1 [shape = 'u32[144,128]{1,0:T(1,128)}', space=vmem, size = 0x12000, scoped, tag = 'internal scratch']
  #allocation2 [shape = 'f32[2,16,160]{2,1,0:T(8,128)}', space=vmem, size = 0x8000, scoped, tag = 'scratch operand']
  %s0 = inlined_call_operand.vmem [shape: f32[2,8,768], index: 0, kind: input, shape index: {}]
  %s1 = inlined_call_operand.vmem [shape: f32[2,8,64], index: 1, kind: input, shape index: {}]
  %s2 = inlined_call_operand.vmem [shape: f32[2,8,64], index: 2, kind: input, shape index: {}]
  %s3 = inlined_call_operand.vmem [shape: f32[768,384], index: 3, kind: input, shape index: {}]
  %s4 = inlined_call_operand.vmem [shape: f32[1,384], index: 4, kind: input, shape index: {}]
  %s5 = inlined_call_operand.vmem [shape: f32[384,32], index: 5, kind: input, shape index: {}]
  %s6 = inlined_call_operand.vmem [shape: f32[1,32], index: 6, kind: input, shape index: {}]
  %s7 = inlined_call_operand.vmem [shape: f32[1,160], index: 7, kind: input, shape index: {}]
  %s8 = inlined_call_operand.vmem [shape: f32[16,160], index: 8, kind: input, shape index: {}]
  %s9 = inlined_call_operand.vmem [shape: f32[32,32], index: 9, kind: input, shape index: {}]
  %s10 = inlined_call_operand.vmem [shape: f32[160,1536], index: 10, kind: input, shape index: {}]
  %s11 = inlined_call_operand.vmem [shape: f32[1,1536], index: 11, kind: input, shape index: {}]
  %s12 = inlined_call_operand.vmem [shape: f32[512,160], index: 12, kind: input, shape index: {}]
  %s13 = inlined_call_operand.vmem [shape: f32[1,160], index: 13, kind: input, shape index: {}]
  %s14 = inlined_call_operand.vmem [shape: f32[1,160], index: 14, kind: input, shape index: {}]
  %s15 = inlined_call_operand.vmem [shape: f32[1,160], index: 15, kind: input, shape index: {}]
  %s16 = inlined_call_operand.vmem [shape: f32[160,2048], index: 16, kind: input, shape index: {}]
  %s17 = inlined_call_operand.vmem [shape: f32[1,2048], index: 17, kind: input, shape index: {}]
  %s18 = inlined_call_operand.vmem [shape: f32[2048,160], index: 18, kind: input, shape index: {}]
  %s19 = inlined_call_operand.vmem [shape: f32[1,160], index: 19, kind: input, shape index: {}]
  %s20 = inlined_call_operand.vmem [shape: f32[1,160], index: 20, kind: input, shape index: {}]
  %s21 = inlined_call_operand.vmem [shape: f32[1,160], index: 21, kind: input, shape index: {}]
  %s22 = inlined_call_operand.vmem [shape: f32[160,80], index: 22, kind: input, shape index: {}]
  %s23 = inlined_call_operand.vmem [shape: f32[1,80], index: 23, kind: input, shape index: {}]
  %s24 = inlined_call_operand.vmem [shape: f32[80,128], index: 24, kind: input, shape index: {}]
  %s25 = inlined_call_operand.vmem [shape: f32[1,128], index: 25, kind: input, shape index: {}]
  %s26 = inlined_call_operand.hbm [shape: f32[2,128], index: 26, kind: output, shape index: {}]
  %s27 = sld [smem:[#allocation0]]
  $region114: #{tpu_custom_call.1} parent=0
    _
  %s29 = ssub.s32 1, %s27
  %s30 = scalar_select 0, %s29, %s27
  $region1: #{tpu_custom_call.1} parent=0
    #allocation3 [shape = 'u8[1024]{0}', space=vmem, size = 0x400, scoped, tag = 'output window, operand 0, single buffered']
    #allocation4 [shape = 's32[1]{0}', space=sflag, size = 0x4, scoped, tag = 'scoped memory for tpu_custom_call.1']
    %31 = vsyncpa [#allocation4], 0
    // Predicated region
    $region2: #{tpu_custom_call.1} parent=1 // pred_check
      _
    $region3: #{tpu_custom_call.1} parent=1 // pred_check_branch
      %33 = sbr.rel (0) target = $region5
    $region4: #{tpu_custom_call.1} parent=1 // pred_region
      _
    $region5: #{tpu_custom_call.1} parent=1 // pred_fallthru
      _
    // Predicated region
    $region6: #{tpu_custom_call.1} parent=1 // pred_check
      _
    $region7: #{tpu_custom_call.1} parent=1 // pred_check_branch
      %35 = sbr.rel (0) target = $region9
    $region8: #{tpu_custom_call.1} parent=1 // pred_region
      _
    $region9: #{tpu_custom_call.1} parent=1 // pred_fallthru
      _
    // Predicated region
    $region10: #{tpu_custom_call.1} parent=1 // pred_check
      _
    $region11: #{tpu_custom_call.1} parent=1 // pred_check_branch
      %37 = sbr.rel (0) target = $region13
    $region12: #{tpu_custom_call.1} parent=1 // pred_region
      _
    $region13: #{tpu_custom_call.1} parent=1 // pred_fallthru
      _
    // Predicated region
    $region14: #{tpu_custom_call.1} parent=1 // pred_check
      _
    $region15: #{tpu_custom_call.1} parent=1 // pred_check_branch
      %39 = sbr.rel (0) target = $region17
    $region16: #{tpu_custom_call.1} parent=1 // pred_region
      _
    $region17: #{tpu_custom_call.1} parent=1 // pred_fallthru
      _
    // Predicated region
    $region18: #{tpu_custom_call.1} parent=1 // pred_check
      _
    $region19: #{tpu_custom_call.1} parent=1 // pred_check_branch
      %41 = sbr.rel (0) target = $region21
    $region20: #{tpu_custom_call.1} parent=1 // pred_region
      _
    $region21: #{tpu_custom_call.1} parent=1 // pred_fallthru
      _
    // Predicated region
    $region22: #{tpu_custom_call.1} parent=1 // pred_check
      _
    $region23: #{tpu_custom_call.1} parent=1 // pred_check_branch
      %43 = sbr.rel (0) target = $region25
    $region24: #{tpu_custom_call.1} parent=1 // pred_region
      _
    $region25: #{tpu_custom_call.1} parent=1 // pred_fallthru
      _
    // Predicated region
    $region26: #{tpu_custom_call.1} parent=1 // pred_check
      _
    $region27: #{tpu_custom_call.1} parent=1 // pred_check_branch
      %45 = sbr.rel (0) target = $region29
    $region28: #{tpu_custom_call.1} parent=1 // pred_region
      _
    $region29: #{tpu_custom_call.1} parent=1 // pred_fallthru
      _
    // Predicated region
    $region30: #{tpu_custom_call.1} parent=1 // pred_check
      _
    $region31: #{tpu_custom_call.1} parent=1 // pred_check_branch
      %47 = sbr.rel (0) target = $region33
    $region32: #{tpu_custom_call.1} parent=1 // pred_region
      _
    $region33: #{tpu_custom_call.1} parent=1 // pred_fallthru
      _
    // Predicated region
    $region34: #{tpu_custom_call.1} parent=1 // pred_check
      _
    $region35: #{tpu_custom_call.1} parent=1 // pred_check_branch
      %49 = sbr.rel (0) target = $region37
    $region36: #{tpu_custom_call.1} parent=1 // pred_region
      _
    $region37: #{tpu_custom_call.1} parent=1 // pred_fallthru
      _
    // Predicated region
    $region38: #{tpu_custom_call.1} parent=1 // pred_check
      _
    $region39: #{tpu_custom_call.1} parent=1 // pred_check_branch
      %51 = sbr.rel (0) target = $region41
    $region40: #{tpu_custom_call.1} parent=1 // pred_region
      _
    $region41: #{tpu_custom_call.1} parent=1 // pred_fallthru
      _
    // Predicated region
    $region42: #{tpu_custom_call.1} parent=1 // pred_check
      _
    $region43: #{tpu_custom_call.1} parent=1 // pred_check_branch
      %53 = sbr.rel (0) target = $region45
    $region44: #{tpu_custom_call.1} parent=1 // pred_region
      _
    $region45: #{tpu_custom_call.1} parent=1 // pred_fallthru
      _
    // Predicated region
    $region46: #{tpu_custom_call.1} parent=1 // pred_check
      _
    $region47: #{tpu_custom_call.1} parent=1 // pred_check_branch
      %55 = sbr.rel (0) target = $region49
    $region48: #{tpu_custom_call.1} parent=1 // pred_region
      _
    $region49: #{tpu_custom_call.1} parent=1 // pred_fallthru
      _
    // Predicated region
    $region50: #{tpu_custom_call.1} parent=1 // pred_check
      _
    $region51: #{tpu_custom_call.1} parent=1 // pred_check_branch
      %57 = sbr.rel (0) target = $region53
    $region52: #{tpu_custom_call.1} parent=1 // pred_region
      _
    $region53: #{tpu_custom_call.1} parent=1 // pred_fallthru
      _
    // Predicated region
    $region54: #{tpu_custom_call.1} parent=1 // pred_check
      _
    $region55: #{tpu_custom_call.1} parent=1 // pred_check_branch
      %59 = sbr.rel (0) target = $region57
    $region56: #{tpu_custom_call.1} parent=1 // pred_region
      _
    $region57: #{tpu_custom_call.1} parent=1 // pred_fallthru
      _
    // Predicated region
    $region58: #{tpu_custom_call.1} parent=1 // pred_check
      _
    $region59: #{tpu_custom_call.1} parent=1 // pred_check_branch
      %61 = sbr.rel (0) target = $region61
    $region60: #{tpu_custom_call.1} parent=1 // pred_region
      _
    $region61: #{tpu_custom_call.1} parent=1 // pred_fallthru
      _
    // Predicated region
    $region62: #{tpu_custom_call.1} parent=1 // pred_check
      _
    $region63: #{tpu_custom_call.1} parent=1 // pred_check_branch
      %63 = sbr.rel (0) target = $region65
    $region64: #{tpu_custom_call.1} parent=1 // pred_region
      _
    $region65: #{tpu_custom_call.1} parent=1 // pred_fallthru
      _
    // Predicated region
    $region66: #{tpu_custom_call.1} parent=1 // pred_check
      _
    $region67: #{tpu_custom_call.1} parent=1 // pred_check_branch
      %65 = sbr.rel (0) target = $region69
    $region68: #{tpu_custom_call.1} parent=1 // pred_region
      _
    $region69: #{tpu_custom_call.1} parent=1 // pred_fallthru
      _
    // Predicated region
    $region70: #{tpu_custom_call.1} parent=1 // pred_check
      _
    $region71: #{tpu_custom_call.1} parent=1 // pred_check_branch
      %67 = sbr.rel (0) target = $region73
    $region72: #{tpu_custom_call.1} parent=1 // pred_region
      _
    $region73: #{tpu_custom_call.1} parent=1 // pred_fallthru
      _
    // Predicated region
    $region74: #{tpu_custom_call.1} parent=1 // pred_check
      _
    $region75: #{tpu_custom_call.1} parent=1 // pred_check_branch
      %69 = sbr.rel (0) target = $region77
    $region76: #{tpu_custom_call.1} parent=1 // pred_region
      _
    $region77: #{tpu_custom_call.1} parent=1 // pred_fallthru
      _
    // Predicated region
    $region78: #{tpu_custom_call.1} parent=1 // pred_check
      _
    $region79: #{tpu_custom_call.1} parent=1 // pred_check_branch
      %71 = sbr.rel (0) target = $region81
    $region80: #{tpu_custom_call.1} parent=1 // pred_region
      _
    $region81: #{tpu_custom_call.1} parent=1 // pred_fallthru
      _
    // Predicated region
    $region82: #{tpu_custom_call.1} parent=1 // pred_check
      _
    $region83: #{tpu_custom_call.1} parent=1 // pred_check_branch
      %73 = sbr.rel (0) target = $region85
    $region84: #{tpu_custom_call.1} parent=1 // pred_region
      _
    $region85: #{tpu_custom_call.1} parent=1 // pred_fallthru
      _
    // Predicated region
    $region86: #{tpu_custom_call.1} parent=1 // pred_check
      _
    $region87: #{tpu_custom_call.1} parent=1 // pred_check_branch
      %75 = sbr.rel (0) target = $region89
    $region88: #{tpu_custom_call.1} parent=1 // pred_region
      _
    $region89: #{tpu_custom_call.1} parent=1 // pred_fallthru
      _
    // Predicated region
    $region90: #{tpu_custom_call.1} parent=1 // pred_check
      _
    $region91: #{tpu_custom_call.1} parent=1 // pred_check_branch
      %77 = sbr.rel (0) target = $region93
    $region92: #{tpu_custom_call.1} parent=1 // pred_region
      _
    $region93: #{tpu_custom_call.1} parent=1 // pred_fallthru
      _
    // Predicated region
    $region94: #{tpu_custom_call.1} parent=1 // pred_check
      _
    $region95: #{tpu_custom_call.1} parent=1 // pred_check_branch
      %79 = sbr.rel (0) target = $region97
    $region96: #{tpu_custom_call.1} parent=1 // pred_region
      _
    $region97: #{tpu_custom_call.1} parent=1 // pred_fallthru
      _
    // Predicated region
    $region98: #{tpu_custom_call.1} parent=1 // pred_check
      _
    $region99: #{tpu_custom_call.1} parent=1 // pred_check_branch
      %81 = sbr.rel (0) target = $region101
    $region100: #{tpu_custom_call.1} parent=1 // pred_region
      _
    $region101: #{tpu_custom_call.1} parent=1 // pred_fallthru
      _
    // Predicated region
    $region102: #{tpu_custom_call.1} parent=1 // pred_check
      _
    $region103: #{tpu_custom_call.1} parent=1 // pred_check_branch
      %83 = sbr.rel (0) target = $region105
    $region104: #{tpu_custom_call.1} parent=1 // pred_region
      _
    $region105: #{tpu_custom_call.1} parent=1 // pred_fallthru
      _
    %v84 = vld [vmem:[%s0] sm:$0xff]
    %v85 = vld [vmem:[%s0 + $0x8] sm:$0xff]
    %v86 = vld [vmem:[%s0 + $0x10] sm:$0xff]
    %v87 = vld [vmem:[%s0 + $0x18] sm:$0xff]
    %v88 = vld [vmem:[%s0 + $0x20] sm:$0xff]
    %v89 = vld [vmem:[%s0 + $0x28] sm:$0xff]
    %v90 = vld [vmem:[%s0 + $0x30] sm:$0xff]
    %v91 = vld [vmem:[%s0 + $0x38] sm:$0xff]
    %v92 = vld [vmem:[%s0 + $0x40] sm:$0xff]
    %v93 = vld [vmem:[%s0 + $0x48] sm:$0xff]
    %v94 = vld [vmem:[%s0 + $0x50] sm:$0xff]
    %v95 = vld [vmem:[%s0 + $0x58] sm:$0xff]
    %v96 = vld [vmem:[%s3] sm:$0xff]
    %v97 = vld [vmem:[%s3 + $0x8] sm:$0xff]
    %v98 = vld [vmem:[%s3 + $0x10] sm:$0xff]
    %v99 = vld [vmem:[%s3 + $0x18] sm:$0xff]
    %v100 = vld [vmem:[%s3 + $0x20] sm:$0xff]
    %v101 = vld [vmem:[%s3 + $0x28] sm:$0xff]
    %v102 = vld [vmem:[%s3 + $0x30] sm:$0xff]
    %v103 = vld [vmem:[%s3 + $0x38] sm:$0xff]
    %v104 = vld [vmem:[%s3 + $0x40] sm:$0xff]
    %v105 = vld [vmem:[%s3 + $0x48] sm:$0xff]
    %v106 = vld [vmem:[%s3 + $0x50] sm:$0xff]
    %v107 = vld [vmem:[%s3 + $0x58] sm:$0xff]
    %v108 = vld [vmem:[%s3 + $0x60] sm:$0xff]
    %v109 = vld [vmem:[%s3 + $0x68] sm:$0xff]
    %v110 = vld [vmem:[%s3 + $0x70] sm:$0xff]
    %v111 = vld [vmem:[%s3 + $0x78] sm:$0xff]
    %v112 = vld [vmem:[%s3 + $0x80] sm:$0xff]
    %v113 = vld [vmem:[%s3 + $0x88] sm:$0xff]
    %v114 = vld [vmem:[%s3 + $0x90] sm:$0xff]
    %v115 = vld [vmem:[%s3 + $0x98] sm:$0xff]
    %v116 = vld [vmem:[%s3 + $0xa0] sm:$0xff]
    %v117 = vld [vmem:[%s3 + $0xa8] sm:$0xff]
    %v118 = vld [vmem:[%s3 + $0xb0] sm:$0xff]
    %v119 = vld [vmem:[%s3 + $0xb8] sm:$0xff]
    %v120 = vld [vmem:[%s3 + $0xc0] sm:$0xff]
    %v121 = vld [vmem:[%s3 + $0xc8] sm:$0xff]
    %v122 = vld [vmem:[%s3 + $0xd0] sm:$0xff]
    %v123 = vld [vmem:[%s3 + $0xd8] sm:$0xff]
    %v124 = vld [vmem:[%s3 + $0xe0] sm:$0xff]
    %v125 = vld [vmem:[%s3 + $0xe8] sm:$0xff]
    %v126 = vld [vmem:[%s3 + $0xf0] sm:$0xff]
    %v127 = vld [vmem:[%s3 + $0xf8] sm:$0xff]
    %v128 = vld [vmem:[%s3 + $0x100] sm:$0xff]
    %v129 = vld [vmem:[%s3 + $0x108] sm:$0xff]
    %v130 = vld [vmem:[%s3 + $0x110] sm:$0xff]
    %v131 = vld [vmem:[%s3 + $0x118] sm:$0xff]
    %v132 = vld [vmem:[%s3 + $0x120] sm:$0xff]
    %v133 = vld [vmem:[%s3 + $0x128] sm:$0xff]
    %v134 = vld [vmem:[%s3 + $0x130] sm:$0xff]
    %v135 = vld [vmem:[%s3 + $0x138] sm:$0xff]
    %v136 = vld [vmem:[%s3 + $0x140] sm:$0xff]
    %v137 = vld [vmem:[%s3 + $0x148] sm:$0xff]
    %v138 = vld [vmem:[%s3 + $0x150] sm:$0xff]
    %v139 = vld [vmem:[%s3 + $0x158] sm:$0xff]
    %v140 = vld [vmem:[%s3 + $0x160] sm:$0xff]
    %v141 = vld [vmem:[%s3 + $0x168] sm:$0xff]
    %v142 = vld [vmem:[%s3 + $0x170] sm:$0xff]
    %v143 = vld [vmem:[%s3 + $0x178] sm:$0xff]
    %v144 = vld [vmem:[%s3 + $0x180] sm:$0xff]
    %v145 = vld [vmem:[%s3 + $0x188] sm:$0xff]
    %v146 = vld [vmem:[%s3 + $0x190] sm:$0xff]
    %v147 = vld [vmem:[%s3 + $0x198] sm:$0xff]
    %v148 = vld [vmem:[%s3 + $0x1a0] sm:$0xff]
    %v149 = vld [vmem:[%s3 + $0x1a8] sm:$0xff]
    %v150 = vld [vmem:[%s3 + $0x1b0] sm:$0xff]
    %v151 = vld [vmem:[%s3 + $0x1b8] sm:$0xff]
    %v152 = vld [vmem:[%s3 + $0x1c0] sm:$0xff]
    %v153 = vld [vmem:[%s3 + $0x1c8] sm:$0xff]
    %v154 = vld [vmem:[%s3 + $0x1d0] sm:$0xff]
    %v155 = vld [vmem:[%s3 + $0x1d8] sm:$0xff]
    %v156 = vld [vmem:[%s3 + $0x1e0] sm:$0xff]
    %v157 = vld [vmem:[%s3 + $0x1e8] sm:$0xff]
    %v158 = vld [vmem:[%s3 + $0x1f0] sm:$0xff]
    %v159 = vld [vmem:[%s3 + $0x1f8] sm:$0xff]
    %v160 = vld [vmem:[%s3 + $0x200] sm:$0xff]
    %v161 = vld [vmem:[%s3 + $0x208] sm:$0xff]
    %v162 = vld [vmem:[%s3 + $0x210] sm:$0xff]
    %v163 = vld [vmem:[%s3 + $0x218] sm:$0xff]
    %v164 = vld [vmem:[%s3 + $0x220] sm:$0xff]
    %v165 = vld [vmem:[%s3 + $0x228] sm:$0xff]
    %v166 = vld [vmem:[%s3 + $0x230] sm:$0xff]
    %v167 = vld [vmem:[%s3 + $0x238] sm:$0xff]
    %v168 = vld [vmem:[%s3 + $0x240] sm:$0xff]
    %v169 = vld [vmem:[%s3 + $0x248] sm:$0xff]
    %v170 = vld [vmem:[%s3 + $0x250] sm:$0xff]
    %v171 = vld [vmem:[%s3 + $0x258] sm:$0xff]
    %v172 = vld [vmem:[%s3 + $0x260] sm:$0xff]
    %v173 = vld [vmem:[%s3 + $0x268] sm:$0xff]
    %v174 = vld [vmem:[%s3 + $0x270] sm:$0xff]
    %v175 = vld [vmem:[%s3 + $0x278] sm:$0xff]
    %v176 = vld [vmem:[%s3 + $0x280] sm:$0xff]
    %v177 = vld [vmem:[%s3 + $0x288] sm:$0xff]
    %v178 = vld [vmem:[%s3 + $0x290] sm:$0xff]
    %v179 = vld [vmem:[%s3 + $0x298] sm:$0xff]
    %v180 = vld [vmem:[%s3 + $0x2a0] sm:$0xff]
    %v181 = vld [vmem:[%s3 + $0x2a8] sm:$0xff]
    %v182 = vld [vmem:[%s3 + $0x2b0] sm:$0xff]
    %v183 = vld [vmem:[%s3 + $0x2b8] sm:$0xff]
    %v184 = vld [vmem:[%s3 + $0x2c0] sm:$0xff]
    %v185 = vld [vmem:[%s3 + $0x2c8] sm:$0xff]
    %v186 = vld [vmem:[%s3 + $0x2d0] sm:$0xff]
    %v187 = vld [vmem:[%s3 + $0x2d8] sm:$0xff]
    %v188 = vld [vmem:[%s3 + $0x2e0] sm:$0xff]
    %v189 = vld [vmem:[%s3 + $0x2e8] sm:$0xff]
    %v190 = vld [vmem:[%s3 + $0x2f0] sm:$0xff]
    %v191 = vld [vmem:[%s3 + $0x2f8] sm:$0xff]
    %v192 = vld [vmem:[%s3 + $0x300] sm:$0xff]
    %v193 = vld [vmem:[%s3 + $0x308] sm:$0xff]
    %v194 = vld [vmem:[%s3 + $0x310] sm:$0xff]
    %v195 = vld [vmem:[%s3 + $0x318] sm:$0xff]
    %v196 = vld [vmem:[%s3 + $0x320] sm:$0xff]
    %v197 = vld [vmem:[%s3 + $0x328] sm:$0xff]
    %v198 = vld [vmem:[%s3 + $0x330] sm:$0xff]
    %v199 = vld [vmem:[%s3 + $0x338] sm:$0xff]
    %v200 = vld [vmem:[%s3 + $0x340] sm:$0xff]
    %v201 = vld [vmem:[%s3 + $0x348] sm:$0xff]
    %v202 = vld [vmem:[%s3 + $0x350] sm:$0xff]
    %v203 = vld [vmem:[%s3 + $0x358] sm:$0xff]
    %v204 = vld [vmem:[%s3 + $0x360] sm:$0xff]
    %v205 = vld [vmem:[%s3 + $0x368] sm:$0xff]
    %v206 = vld [vmem:[%s3 + $0x370] sm:$0xff]
    %v207 = vld [vmem:[%s3 + $0x378] sm:$0xff]
    %v208 = vld [vmem:[%s3 + $0x380] sm:$0xff]
    %v209 = vld [vmem:[%s3 + $0x388] sm:$0xff]
    %v210 = vld [vmem:[%s3 + $0x390] sm:$0xff]
    %v211 = vld [vmem:[%s3 + $0x398] sm:$0xff]
    %v212 = vld [vmem:[%s3 + $0x3a0] sm:$0xff]
    %v213 = vld [vmem:[%s3 + $0x3a8] sm:$0xff]
    %v214 = vld [vmem:[%s3 + $0x3b0] sm:$0xff]
    %v215 = vld [vmem:[%s3 + $0x3b8] sm:$0xff]
    %v216 = vld [vmem:[%s3 + $0x3c0] sm:$0xff]
    %v217 = vld [vmem:[%s3 + $0x3c8] sm:$0xff]
    %v218 = vld [vmem:[%s3 + $0x3d0] sm:$0xff]
    %v219 = vld [vmem:[%s3 + $0x3d8] sm:$0xff]
    %v220 = vld [vmem:[%s3 + $0x3e0] sm:$0xff]
    %v221 = vld [vmem:[%s3 + $0x3e8] sm:$0xff]
    %v222 = vld [vmem:[%s3 + $0x3f0] sm:$0xff]
    %v223 = vld [vmem:[%s3 + $0x3f8] sm:$0xff]
    %v224 = vld [vmem:[%s3 + $0x400] sm:$0xff]
    %v225 = vld [vmem:[%s3 + $0x408] sm:$0xff]
    %v226 = vld [vmem:[%s3 + $0x410] sm:$0xff]
    %v227 = vld [vmem:[%s3 + $0x418] sm:$0xff]
    %v228 = vld [vmem:[%s3 + $0x420] sm:$0xff]
    %v229 = vld [vmem:[%s3 + $0x428] sm:$0xff]
    %v230 = vld [vmem:[%s3 + $0x430] sm:$0xff]
    %v231 = vld [vmem:[%s3 + $0x438] sm:$0xff]
    %v232 = vld [vmem:[%s3 + $0x440] sm:$0xff]
    %v233 = vld [vmem:[%s3 + $0x448] sm:$0xff]
    %v234 = vld [vmem:[%s3 + $0x450] sm:$0xff]
    %v235 = vld [vmem:[%s3 + $0x458] sm:$0xff]
    %v236 = vld [vmem:[%s3 + $0x460] sm:$0xff]
    %v237 = vld [vmem:[%s3 + $0x468] sm:$0xff]
    %v238 = vld [vmem:[%s3 + $0x470] sm:$0xff]
    %v239 = vld [vmem:[%s3 + $0x478] sm:$0xff]
    %v240 = vld [vmem:[%s3 + $0x480] sm:$0xff]
    %v241 = vld [vmem:[%s3 + $0x488] sm:$0xff]
    %v242 = vld [vmem:[%s3 + $0x490] sm:$0xff]
    %v243 = vld [vmem:[%s3 + $0x498] sm:$0xff]
    %v244 = vld [vmem:[%s3 + $0x4a0] sm:$0xff]
    %v245 = vld [vmem:[%s3 + $0x4a8] sm:$0xff]
    %v246 = vld [vmem:[%s3 + $0x4b0] sm:$0xff]
    %v247 = vld [vmem:[%s3 + $0x4b8] sm:$0xff]
    %v248 = vld [vmem:[%s3 + $0x4c0] sm:$0xff]
    %v249 = vld [vmem:[%s3 + $0x4c8] sm:$0xff]
    %v250 = vld [vmem:[%s3 + $0x4d0] sm:$0xff]
    %v251 = vld [vmem:[%s3 + $0x4d8] sm:$0xff]
    %v252 = vld [vmem:[%s3 + $0x4e0] sm:$0xff]
    %v253 = vld [vmem:[%s3 + $0x4e8] sm:$0xff]
    %v254 = vld [vmem:[%s3 + $0x4f0] sm:$0xff]
    %v255 = vld [vmem:[%s3 + $0x4f8] sm:$0xff]
    %v256 = vld [vmem:[%s3 + $0x500] sm:$0xff]
    %v257 = vld [vmem:[%s3 + $0x508] sm:$0xff]
    %v258 = vld [vmem:[%s3 + $0x510] sm:$0xff]
    %v259 = vld [vmem:[%s3 + $0x518] sm:$0xff]
    %v260 = vld [vmem:[%s3 + $0x520] sm:$0xff]
    %v261 = vld [vmem:[%s3 + $0x528] sm:$0xff]
    %v262 = vld [vmem:[%s3 + $0x530] sm:$0xff]
    %v263 = vld [vmem:[%s3 + $0x538] sm:$0xff]
    %v264 = vld [vmem:[%s3 + $0x540] sm:$0xff]
    %v265 = vld [vmem:[%s3 + $0x548] sm:$0xff]
    %v266 = vld [vmem:[%s3 + $0x550] sm:$0xff]
    %v267 = vld [vmem:[%s3 + $0x558] sm:$0xff]
    %v268 = vld [vmem:[%s3 + $0x560] sm:$0xff]
    %v269 = vld [vmem:[%s3 + $0x568] sm:$0xff]
    %v270 = vld [vmem:[%s3 + $0x570] sm:$0xff]
    %v271 = vld [vmem:[%s3 + $0x578] sm:$0xff]
    %v272 = vld [vmem:[%s3 + $0x580] sm:$0xff]
    %v273 = vld [vmem:[%s3 + $0x588] sm:$0xff]
    %v274 = vld [vmem:[%s3 + $0x590] sm:$0xff]
    %v275 = vld [vmem:[%s3 + $0x598] sm:$0xff]
    %v276 = vld [vmem:[%s3 + $0x5a0] sm:$0xff]
    %v277 = vld [vmem:[%s3 + $0x5a8] sm:$0xff]
    %v278 = vld [vmem:[%s3 + $0x5b0] sm:$0xff]
    %v279 = vld [vmem:[%s3 + $0x5b8] sm:$0xff]
    %v280 = vld [vmem:[%s3 + $0x5c0] sm:$0xff]
    %v281 = vld [vmem:[%s3 + $0x5c8] sm:$0xff]
    %v282 = vld [vmem:[%s3 + $0x5d0] sm:$0xff]
    %v283 = vld [vmem:[%s3 + $0x5d8] sm:$0xff]
    %v284 = vld [vmem:[%s3 + $0x5e0] sm:$0xff]
    %v285 = vld [vmem:[%s3 + $0x5e8] sm:$0xff]
    %v286 = vld [vmem:[%s3 + $0x5f0] sm:$0xff]
    %v287 = vld [vmem:[%s3 + $0x5f8] sm:$0xff]
    %v288 = vld [vmem:[%s3 + $0x600] sm:$0xff]
    %v289 = vld [vmem:[%s3 + $0x608] sm:$0xff]
    %v290 = vld [vmem:[%s3 + $0x610] sm:$0xff]
    %v291 = vld [vmem:[%s3 + $0x618] sm:$0xff]
    %v292 = vld [vmem:[%s3 + $0x620] sm:$0xff]
    %v293 = vld [vmem:[%s3 + $0x628] sm:$0xff]
    %v294 = vld [vmem:[%s3 + $0x630] sm:$0xff]
    %v295 = vld [vmem:[%s3 + $0x638] sm:$0xff]
    %v296 = vld [vmem:[%s3 + $0x640] sm:$0xff]
    %v297 = vld [vmem:[%s3 + $0x648] sm:$0xff]
    %v298 = vld [vmem:[%s3 + $0x650] sm:$0xff]
    %v299 = vld [vmem:[%s3 + $0x658] sm:$0xff]
    %v300 = vld [vmem:[%s3 + $0x660] sm:$0xff]
    %v301 = vld [vmem:[%s3 + $0x668] sm:$0xff]
    %v302 = vld [vmem:[%s3 + $0x670] sm:$0xff]
    %v303 = vld [vmem:[%s3 + $0x678] sm:$0xff]
    %v304 = vld [vmem:[%s3 + $0x680] sm:$0xff]
    %v305 = vld [vmem:[%s3 + $0x688] sm:$0xff]
    %v306 = vld [vmem:[%s3 + $0x690] sm:$0xff]
    %v307 = vld [vmem:[%s3 + $0x698] sm:$0xff]
    %v308 = vld [vmem:[%s3 + $0x6a0] sm:$0xff]
    %v309 = vld [vmem:[%s3 + $0x6a8] sm:$0xff]
    %v310 = vld [vmem:[%s3 + $0x6b0] sm:$0xff]
    %v311 = vld [vmem:[%s3 + $0x6b8] sm:$0xff]
    %v312 = vld [vmem:[%s3 + $0x6c0] sm:$0xff]
    %v313 = vld [vmem:[%s3 + $0x6c8] sm:$0xff]
    %v314 = vld [vmem:[%s3 + $0x6d0] sm:$0xff]
    %v315 = vld [vmem:[%s3 + $0x6d8] sm:$0xff]
    %v316 = vld [vmem:[%s3 + $0x6e0] sm:$0xff]
    %v317 = vld [vmem:[%s3 + $0x6e8] sm:$0xff]
    %v318 = vld [vmem:[%s3 + $0x6f0] sm:$0xff]
    %v319 = vld [vmem:[%s3 + $0x6f8] sm:$0xff]
    %v320 = vld [vmem:[%s3 + $0x700] sm:$0xff]
    %v321 = vld [vmem:[%s3 + $0x708] sm:$0xff]
    %v322 = vld [vmem:[%s3 + $0x710] sm:$0xff]
    %v323 = vld [vmem:[%s3 + $0x718] sm:$0xff]
    %v324 = vld [vmem:[%s3 + $0x720] sm:$0xff]
    %v325 = vld [vmem:[%s3 + $0x728] sm:$0xff]
    %v326 = vld [vmem:[%s3 + $0x730] sm:$0xff]
    %v327 = vld [vmem:[%s3 + $0x738] sm:$0xff]
    %v328 = vld [vmem:[%s3 + $0x740] sm:$0xff]
    %v329 = vld [vmem:[%s3 + $0x748] sm:$0xff]
    %v330 = vld [vmem:[%s3 + $0x750] sm:$0xff]
    %v331 = vld [vmem:[%s3 + $0x758] sm:$0xff]
    %v332 = vld [vmem:[%s3 + $0x760] sm:$0xff]
    %v333 = vld [vmem:[%s3 + $0x768] sm:$0xff]
    %v334 = vld [vmem:[%s3 + $0x770] sm:$0xff]
    %v335 = vld [vmem:[%s3 + $0x778] sm:$0xff]
    %v336 = vld [vmem:[%s3 + $0x780] sm:$0xff]
    %v337 = vld [vmem:[%s3 + $0x788] sm:$0xff]
    %v338 = vld [vmem:[%s3 + $0x790] sm:$0xff]
    %v339 = vld [vmem:[%s3 + $0x798] sm:$0xff]
    %v340 = vld [vmem:[%s3 + $0x7a0] sm:$0xff]
    %v341 = vld [vmem:[%s3 + $0x7a8] sm:$0xff]
    %v342 = vld [vmem:[%s3 + $0x7b0] sm:$0xff]
    %v343 = vld [vmem:[%s3 + $0x7b8] sm:$0xff]
    %v344 = vld [vmem:[%s3 + $0x7c0] sm:$0xff]
    %v345 = vld [vmem:[%s3 + $0x7c8] sm:$0xff]
    %v346 = vld [vmem:[%s3 + $0x7d0] sm:$0xff]
    %v347 = vld [vmem:[%s3 + $0x7d8] sm:$0xff]
    %v348 = vld [vmem:[%s3 + $0x7e0] sm:$0xff]
    %v349 = vld [vmem:[%s3 + $0x7e8] sm:$0xff]
    %v350 = vld [vmem:[%s3 + $0x7f0] sm:$0xff]
    %v351 = vld [vmem:[%s3 + $0x7f8] sm:$0xff]
    %v352 = vld [vmem:[%s3 + $0x800] sm:$0xff]
    %v353 = vld [vmem:[%s3 + $0x808] sm:$0xff]
    %v354 = vld [vmem:[%s3 + $0x810] sm:$0xff]
    %v355 = vld [vmem:[%s3 + $0x818] sm:$0xff]
    %v356 = vld [vmem:[%s3 + $0x820] sm:$0xff]
    %v357 = vld [vmem:[%s3 + $0x828] sm:$0xff]
    %v358 = vld [vmem:[%s3 + $0x830] sm:$0xff]
    %v359 = vld [vmem:[%s3 + $0x838] sm:$0xff]
    %v360 = vld [vmem:[%s3 + $0x840] sm:$0xff]
    %v361 = vld [vmem:[%s3 + $0x848] sm:$0xff]
    %v362 = vld [vmem:[%s3 + $0x850] sm:$0xff]
    %v363 = vld [vmem:[%s3 + $0x858] sm:$0xff]
    %v364 = vld [vmem:[%s3 + $0x860] sm:$0xff]
    %v365 = vld [vmem:[%s3 + $0x868] sm:$0xff]
    %v366 = vld [vmem:[%s3 + $0x870] sm:$0xff]
    %v367 = vld [vmem:[%s3 + $0x878] sm:$0xff]
    %v368 = vld [vmem:[%s3 + $0x880] sm:$0xff]
    %v369 = vld [vmem:[%s3 + $0x888] sm:$0xff]
    %v370 = vld [vmem:[%s3 + $0x890] sm:$0xff]
    %v371 = vld [vmem:[%s3 + $0x898] sm:$0xff]
    %v372 = vld [vmem:[%s3 + $0x8a0] sm:$0xff]
    %v373 = vld [vmem:[%s3 + $0x8a8] sm:$0xff]
    %v374 = vld [vmem:[%s3 + $0x8b0] sm:$0xff]
    %v375 = vld [vmem:[%s3 + $0x8b8] sm:$0xff]
    %v376 = vld [vmem:[%s3 + $0x8c0] sm:$0xff]
    %v377 = vld [vmem:[%s3 + $0x8c8] sm:$0xff]
    %v378 = vld [vmem:[%s3 + $0x8d0] sm:$0xff]
    %v379 = vld [vmem:[%s3 + $0x8d8] sm:$0xff]
    %v380 = vld [vmem:[%s3 + $0x8e0] sm:$0xff]
    %v381 = vld [vmem:[%s3 + $0x8e8] sm:$0xff]
    %v382 = vld [vmem:[%s3 + $0x8f0] sm:$0xff]
    %v383 = vld [vmem:[%s3 + $0x8f8] sm:$0xff]
    %v384 = vld [vmem:[%s4] sm:$0x7]
    %v386 = vlaneseq
    %v387 = vshrl.u32 %v386, 7
    %v388 = vsub.s32 0, %v387
    %v389 = vrot.slane %v384, %v388
    %v390 = vlaneseq
    %v391 = vshrl.u32 %v390, 7
    %v392 = vsub.s32 1, %v391
    %v393 = vrot.slane %v384, %v392
    %v394 = vlaneseq
    %v395 = vshrl.u32 %v394, 7
    %v396 = vsub.s32 2, %v395
    %v397 = vrot.slane %v384, %v396
    %401 = vmatprep.subr.mxu0 %v97
    %402 = vmatpush1.msra.mxu0 %v96
    %403 = vmatprep.subr.mxu0 %v100
    %404 = vmatpush1.msra.mxu0 %v99
    %405 = vmatprep.subr.mxu0 %v103
    %406 = vmatpush1.msra.mxu0 %v102
    %407 = vmatprep.subr.mxu0 %v106
    %408 = vmatpush1.msra.mxu0 %v105
    %409 = vmatprep.subr.mxu0 %v109
    %410 = vmatpush1.msra.mxu0 %v108
    %411 = vmatprep.subr.mxu0 %v112
    %412 = vmatpush1.msra.mxu0 %v111
    %413 = vmatprep.subr.mxu0 %v115
    %414 = vmatpush1.msra.mxu0 %v114
    %415 = vmatprep.subr.mxu0 %v118
    %416 = vmatpush1.msra.mxu0 %v117
    %417 = vmatprep.subr.mxu0 %v121
    %418 = vmatpush1.msra.mxu0 %v120
    %419 = vmatprep.subr.mxu0 %v124
    %420 = vmatpush1.msra.mxu0 %v123
    %421 = vmatprep.subr.mxu0 %v127
    %422 = vmatpush1.msra.mxu0 %v126
    %423 = vmatprep.subr.mxu0 %v130
    %424 = vmatpush1.msra.mxu0 %v129
    %425 = vmatprep.subr.mxu0 %v133
    %426 = vmatpush1.msra.mxu0 %v132
    %427 = vmatprep.subr.mxu0 %v136
    %428 = vmatpush1.msra.mxu0 %v135
    %429 = vmatprep.subr.mxu0 %v139
    %430 = vmatpush1.msra.mxu0 %v138
    %431 = vmatprep.subr.mxu0 %v142
    %432 = vmatpush1.msra.mxu0 %v141
    %433 = vmatprep.subr.mxu0 %v145
    %434 = vmatpush1.msra.mxu0 %v144
    %435 = vmatprep.subr.mxu0 %v148
    %436 = vmatpush1.msra.mxu0 %v147
    %437 = vmatprep.subr.mxu0 %v151
    %438 = vmatpush1.msra.mxu0 %v150
    %439 = vmatprep.subr.mxu0 %v154
    %440 = vmatpush1.msra.mxu0 %v153
    %441 = vmatprep.subr.mxu0 %v157
    %442 = vmatpush1.msra.mxu0 %v156
    %443 = vmatprep.subr.mxu0 %v160
    %444 = vmatpush1.msra.mxu0 %v159
    %445 = vmatprep.subr.mxu0 %v163
    %446 = vmatpush1.msra.mxu0 %v162
    %447 = vmatprep.subr.mxu0 %v166
    %448 = vmatpush1.msra.mxu0 %v165
    %449 = vmatprep.subr.mxu0 %v169
    %450 = vmatpush1.msra.mxu0 %v168
    %451 = vmatprep.subr.mxu0 %v172
    %452 = vmatpush1.msra.mxu0 %v171
    %453 = vmatprep.subr.mxu0 %v175
    %454 = vmatpush1.msra.mxu0 %v174
    %455 = vmatprep.subr.mxu0 %v178
    %456 = vmatpush1.msra.mxu0 %v177
    %457 = vmatprep.subr.mxu0 %v181
    %458 = vmatpush1.msra.mxu0 %v180
    %459 = vmatprep.subr.mxu0 %v184
    %460 = vmatpush1.msra.mxu0 %v183
    %461 = vmatprep.subr.mxu0 %v187
    %462 = vmatpush1.msra.mxu0 %v186
    %463 = vmatprep.subr.mxu0 %v190
    %464 = vmatpush1.msra.mxu0 %v189
    %465 = vmatprep.mubr.f32.mxu0 %v85
    %466 = vmatmul.mubr.f32.gmra.mrb[0].mxu0 %v84
    %v467 = vpop.f32.mrb[0].mxu0
    %v468 = vadd.f32 %v389, %v467
    %v469 = vpop.f32.mrb[0].mxu0
    %v470 = vadd.f32 %v393, %v469
    %471 = vmatprep.mubr.f32.mxu0 %v91
    %472 = vmatmul.mubr.f32.gmra.mrb[0].mxu0 %v90
    %v473 = vpop.f32.mrb[0].mxu0
    %v474 = vadd.f32 %v389, %v473
    %v475 = vpop.f32.mrb[0].mxu0
    %v476 = vadd.f32 %v393, %v475
    %477 = vdwg.mxu0
    %478 = vmatprep.subr.mxu0 %v193
    %479 = vmatpush1.msra.mxu0 %v192
    %480 = vmatprep.subr.mxu0 %v196
    %481 = vmatpush1.msra.mxu0 %v195
    %482 = vmatprep.subr.mxu0 %v199
    %483 = vmatpush1.msra.mxu0 %v198
    %484 = vmatprep.subr.mxu0 %v202
    %485 = vmatpush1.msra.mxu0 %v201
    %486 = vmatprep.subr.mxu0 %v205
    %487 = vmatpush1.msra.mxu0 %v204
    %488 = vmatprep.subr.mxu0 %v208
    %489 = vmatpush1.msra.mxu0 %v207
    %490 = vmatprep.subr.mxu0 %v211
    %491 = vmatpush1.msra.mxu0 %v210
    %492 = vmatprep.subr.mxu0 %v214
    %493 = vmatpush1.msra.mxu0 %v213
    %494 = vmatprep.subr.mxu0 %v217
    %495 = vmatpush1.msra.mxu0 %v216
    %496 = vmatprep.subr.mxu0 %v220
    %497 = vmatpush1.msra.mxu0 %v219
    %498 = vmatprep.subr.mxu0 %v223
    %499 = vmatpush1.msra.mxu0 %v222
    %500 = vmatprep.subr.mxu0 %v226
    %501 = vmatpush1.msra.mxu0 %v225
    %502 = vmatprep.subr.mxu0 %v229
    %503 = vmatpush1.msra.mxu0 %v228
    %504 = vmatprep.subr.mxu0 %v232
    %505 = vmatpush1.msra.mxu0 %v231
    %506 = vmatprep.subr.mxu0 %v235
    %507 = vmatpush1.msra.mxu0 %v234
    %508 = vmatprep.subr.mxu0 %v238
    %509 = vmatpush1.msra.mxu0 %v237
    %510 = vmatprep.subr.mxu0 %v241
    %511 = vmatpush1.msra.mxu0 %v240
    %512 = vmatprep.subr.mxu0 %v244
    %513 = vmatpush1.msra.mxu0 %v243
    %514 = vmatprep.subr.mxu0 %v247
    %515 = vmatpush1.msra.mxu0 %v246
    %516 = vmatprep.subr.mxu0 %v250
    %517 = vmatpush1.msra.mxu0 %v249
    %518 = vmatprep.subr.mxu0 %v253
    %519 = vmatpush1.msra.mxu0 %v252
    %520 = vmatprep.subr.mxu0 %v256
    %521 = vmatpush1.msra.mxu0 %v255
    %522 = vmatprep.subr.mxu0 %v259
    %523 = vmatpush1.msra.mxu0 %v258
    %524 = vmatprep.subr.mxu0 %v262
    %525 = vmatpush1.msra.mxu0 %v261
    %526 = vmatprep.subr.mxu0 %v265
    %527 = vmatpush1.msra.mxu0 %v264
    %528 = vmatprep.subr.mxu0 %v268
    %529 = vmatpush1.msra.mxu0 %v267
    %530 = vmatprep.subr.mxu0 %v271
    %531 = vmatpush1.msra.mxu0 %v270
    %532 = vmatprep.subr.mxu0 %v274
    %533 = vmatpush1.msra.mxu0 %v273
    %534 = vmatprep.subr.mxu0 %v277
    %535 = vmatpush1.msra.mxu0 %v276
    %536 = vmatprep.subr.mxu0 %v280
    %537 = vmatpush1.msra.mxu0 %v279
    %538 = vmatprep.subr.mxu0 %v283
    %539 = vmatpush1.msra.mxu0 %v282
    %540 = vmatprep.subr.mxu0 %v286
    %541 = vmatpush1.msra.mxu0 %v285
    %542 = vmatprep.mubr.f32.mxu0 %v87
    %543 = vmatmul.mubr.f32.gmra.mrb[0].mxu0 %v86
    %v544 = vpop.f32.mrb[0].mxu0
    %v545 = vadd.f32 %v468, %v544
    %v546 = vpop.f32.mrb[0].mxu0
    %v547 = vadd.f32 %v470, %v546
    %548 = vmatprep.mubr.f32.mxu0 %v93
    %549 = vmatmul.mubr.f32.gmra.mrb[0].mxu0 %v92
    %v550 = vpop.f32.mrb[0].mxu0
    %v551 = vadd.f32 %v474, %v550
    %v552 = vpop.f32.mrb[0].mxu0
    %v553 = vadd.f32 %v476, %v552
    %554 = vdwg.mxu0
    %555 = vmatprep.subr.mxu0 %v289
    %556 = vmatpush1.msra.mxu0 %v288
    %557 = vmatprep.subr.mxu0 %v292
    %558 = vmatpush1.msra.mxu0 %v291
    %559 = vmatprep.subr.mxu0 %v295
    %560 = vmatpush1.msra.mxu0 %v294
    %561 = vmatprep.subr.mxu0 %v298
    %562 = vmatpush1.msra.mxu0 %v297
    %563 = vmatprep.subr.mxu0 %v301
    %564 = vmatpush1.msra.mxu0 %v300
    %565 = vmatprep.subr.mxu0 %v304
    %566 = vmatpush1.msra.mxu0 %v303
    %567 = vmatprep.subr.mxu0 %v307
    %568 = vmatpush1.msra.mxu0 %v306
    %569 = vmatprep.subr.mxu0 %v310
    %570 = vmatpush1.msra.mxu0 %v309
    %571 = vmatprep.subr.mxu0 %v313
    %572 = vmatpush1.msra.mxu0 %v312
    %573 = vmatprep.subr.mxu0 %v316
    %574 = vmatpush1.msra.mxu0 %v315
    %575 = vmatprep.subr.mxu0 %v319
    %576 = vmatpush1.msra.mxu0 %v318
    %577 = vmatprep.subr.mxu0 %v322
    %578 = vmatpush1.msra.mxu0 %v321
    %579 = vmatprep.subr.mxu0 %v325
    %580 = vmatpush1.msra.mxu0 %v324
    %581 = vmatprep.subr.mxu0 %v328
    %582 = vmatpush1.msra.mxu0 %v327
    %583 = vmatprep.subr.mxu0 %v331
    %584 = vmatpush1.msra.mxu0 %v330
    %585 = vmatprep.subr.mxu0 %v334
    %586 = vmatpush1.msra.mxu0 %v333
    %587 = vmatprep.subr.mxu0 %v337
    %588 = vmatpush1.msra.mxu0 %v336
    %589 = vmatprep.subr.mxu0 %v340
    %590 = vmatpush1.msra.mxu0 %v339
    %591 = vmatprep.subr.mxu0 %v343
    %592 = vmatpush1.msra.mxu0 %v342
    %593 = vmatprep.subr.mxu0 %v346
    %594 = vmatpush1.msra.mxu0 %v345
    %595 = vmatprep.subr.mxu0 %v349
    %596 = vmatpush1.msra.mxu0 %v348
    %597 = vmatprep.subr.mxu0 %v352
    %598 = vmatpush1.msra.mxu0 %v351
    %599 = vmatprep.subr.mxu0 %v355
    %600 = vmatpush1.msra.mxu0 %v354
    %601 = vmatprep.subr.mxu0 %v358
    %602 = vmatpush1.msra.mxu0 %v357
    %603 = vmatprep.subr.mxu0 %v361
    %604 = vmatpush1.msra.mxu0 %v360
    %605 = vmatprep.subr.mxu0 %v364
    %606 = vmatpush1.msra.mxu0 %v363
    %607 = vmatprep.subr.mxu0 %v367
    %608 = vmatpush1.msra.mxu0 %v366
    %609 = vmatprep.subr.mxu0 %v370
    %610 = vmatpush1.msra.mxu0 %v369
    %611 = vmatprep.subr.mxu0 %v373
    %612 = vmatpush1.msra.mxu0 %v372
    %613 = vmatprep.subr.mxu0 %v376
    %614 = vmatpush1.msra.mxu0 %v375
    %615 = vmatprep.subr.mxu0 %v379
    %616 = vmatpush1.msra.mxu0 %v378
    %617 = vmatprep.subr.mxu0 %v382
    %618 = vmatpush1.msra.mxu0 %v381
    %619 = vmatprep.mubr.f32.mxu0 %v89
    %620 = vmatmul.mubr.f32.gmra.mrb[0].mxu0 %v88
    %v621 = vpop.f32.mrb[0].mxu0
    %v622 = vadd.f32 %v545, %v621
    %v623 = vpop.f32.mrb[0].mxu0
    %v624 = vadd.f32 %v547, %v623
    %625 = vmatprep.mubr.f32.mxu0 %v95
    %626 = vmatmul.mubr.f32.gmra.mrb[0].mxu0 %v94
    %v627 = vpop.f32.mrb[0].mxu0
    %v628 = vadd.f32 %v551, %v627
    %v629 = vpop.f32.mrb[0].mxu0
    %v630 = vadd.f32 %v553, %v629
    %631 = vdwg.mxu0
    %632 = vmatprep.subr.mxu0 0.0
    %633 = vmatpush1.msra.mxu0 %v98
    %634 = vmatprep.subr.mxu0 0.0
    %635 = vmatpush1.msra.mxu0 %v101
    %636 = vmatprep.subr.mxu0 0.0
    %637 = vmatpush1.msra.mxu0 %v104
    %638 = vmatprep.subr.mxu0 0.0
    %639 = vmatpush1.msra.mxu0 %v107
    %640 = vmatprep.subr.mxu0 0.0
    %641 = vmatpush1.msra.mxu0 %v110
    %642 = vmatprep.subr.mxu0 0.0
    %643 = vmatpush1.msra.mxu0 %v113
    %644 = vmatprep.subr.mxu0 0.0
    %645 = vmatpush1.msra.mxu0 %v116
    %646 = vmatprep.subr.mxu0 0.0
    %647 = vmatpush1.msra.mxu0 %v119
    %648 = vmatprep.subr.mxu0 0.0
    %649 = vmatpush1.msra.mxu0 %v122
    %650 = vmatprep.subr.mxu0 0.0
    %651 = vmatpush1.msra.mxu0 %v125
    %652 = vmatprep.subr.mxu0 0.0
    %653 = vmatpush1.msra.mxu0 %v128
    %654 = vmatprep.subr.mxu0 0.0
    %655 = vmatpush1.msra.mxu0 %v131
    %656 = vmatprep.subr.mxu0 0.0
    %657 = vmatpush1.msra.mxu0 %v134
    %658 = vmatprep.subr.mxu0 0.0
    %659 = vmatpush1.msra.mxu0 %v137
    %660 = vmatprep.subr.mxu0 0.0
    %661 = vmatpush1.msra.mxu0 %v140
    %662 = vmatprep.subr.mxu0 0.0
    %663 = vmatpush1.msra.mxu0 %v143
    %664 = vmatprep.subr.mxu0 0.0
    %665 = vmatpush1.msra.mxu0 %v146
    %666 = vmatprep.subr.mxu0 0.0
    %667 = vmatpush1.msra.mxu0 %v149
    %668 = vmatprep.subr.mxu0 0.0
    %669 = vmatpush1.msra.mxu0 %v152
    %670 = vmatprep.subr.mxu0 0.0
    %671 = vmatpush1.msra.mxu0 %v155
    %672 = vmatprep.subr.mxu0 0.0
    %673 = vmatpush1.msra.mxu0 %v158
    %674 = vmatprep.subr.mxu0 0.0
    %675 = vmatpush1.msra.mxu0 %v161
    %676 = vmatprep.subr.mxu0 0.0
    %677 = vmatpush1.msra.mxu0 %v164
    %678 = vmatprep.subr.mxu0 0.0
    %679 = vmatpush1.msra.mxu0 %v167
    %680 = vmatprep.subr.mxu0 0.0
    %681 = vmatpush1.msra.mxu0 %v170
    %682 = vmatprep.subr.mxu0 0.0
    %683 = vmatpush1.msra.mxu0 %v173
    %684 = vmatprep.subr.mxu0 0.0
    %685 = vmatpush1.msra.mxu0 %v176
    %686 = vmatprep.subr.mxu0 0.0
    %687 = vmatpush1.msra.mxu0 %v179
    %688 = vmatprep.subr.mxu0 0.0
    %689 = vmatpush1.msra.mxu0 %v182
    %690 = vmatprep.subr.mxu0 0.0
    %691 = vmatpush1.msra.mxu0 %v185
    %692 = vmatprep.subr.mxu0 0.0
    %693 = vmatpush1.msra.mxu0 %v188
    %694 = vmatprep.subr.mxu0 0.0
    %695 = vmatpush1.msra.mxu0 %v191
    %696 = vmatprep.mubr.f32.mxu0 %v85
    %697 = vmatmul.mubr.f32.gmra.mrb[0].mxu0 %v84
    %v698 = vpop.f32.mrb[0].mxu0
    %v699 = vadd.f32 %v397, %v698
    %v700 = vpop.f32.mrb[0].mxu0
    %701 = vmatprep.mubr.f32.mxu0 %v91
    %702 = vmatmul.mubr.f32.gmra.mrb[0].mxu0 %v90
    %v703 = vpop.f32.mrb[0].mxu0
    %v704 = vadd.f32 %v397, %v703
    %v705 = vpop.f32.mrb[0].mxu0
    %706 = vdwg.mxu0
    %707 = vmatprep.subr.mxu0 0.0
    %708 = vmatpush1.msra.mxu0 %v194
    %709 = vmatprep.subr.mxu0 0.0
    %710 = vmatpush1.msra.mxu0 %v197
    %711 = vmatprep.subr.mxu0 0.0
    %712 = vmatpush1.msra.mxu0 %v200
    %713 = vmatprep.subr.mxu0 0.0
    %714 = vmatpush1.msra.mxu0 %v203
    %715 = vmatprep.subr.mxu0 0.0
    %716 = vmatpush1.msra.mxu0 %v206
    %717 = vmatprep.subr.mxu0 0.0
    %718 = vmatpush1.msra.mxu0 %v209
    %719 = vmatprep.subr.mxu0 0.0
    %720 = vmatpush1.msra.mxu0 %v212
    %721 = vmatprep.subr.mxu0 0.0
    %722 = vmatpush1.msra.mxu0 %v215
    %723 = vmatprep.subr.mxu0 0.0
    %724 = vmatpush1.msra.mxu0 %v218
    %725 = vmatprep.subr.mxu0 0.0
    %726 = vmatpush1.msra.mxu0 %v221
    %727 = vmatprep.subr.mxu0 0.0
    %728 = vmatpush1.msra.mxu0 %v224
    %729 = vmatprep.subr.mxu0 0.0
    %730 = vmatpush1.msra.mxu0 %v227
    %731 = vmatprep.subr.mxu0 0.0
    %732 = vmatpush1.msra.mxu0 %v230
    %733 = vmatprep.subr.mxu0 0.0
    %734 = vmatpush1.msra.mxu0 %v233
    %735 = vmatprep.subr.mxu0 0.0
    %736 = vmatpush1.msra.mxu0 %v236
    %737 = vmatprep.subr.mxu0 0.0
    %738 = vmatpush1.msra.mxu0 %v239
    %739 = vmatprep.subr.mxu0 0.0
    %740 = vmatpush1.msra.mxu0 %v242
    %741 = vmatprep.subr.mxu0 0.0
    %742 = vmatpush1.msra.mxu0 %v245
    %743 = vmatprep.subr.mxu0 0.0
    %744 = vmatpush1.msra.mxu0 %v248
    %745 = vmatprep.subr.mxu0 0.0
    %746 = vmatpush1.msra.mxu0 %v251
    %747 = vmatprep.subr.mxu0 0.0
    %748 = vmatpush1.msra.mxu0 %v254
    %749 = vmatprep.subr.mxu0 0.0
    %750 = vmatpush1.msra.mxu0 %v257
    %751 = vmatprep.subr.mxu0 0.0
    %752 = vmatpush1.msra.mxu0 %v260
    %753 = vmatprep.subr.mxu0 0.0
    %754 = vmatpush1.msra.mxu0 %v263
    %755 = vmatprep.subr.mxu0 0.0
    %756 = vmatpush1.msra.mxu0 %v266
    %757 = vmatprep.subr.mxu0 0.0
    %758 = vmatpush1.msra.mxu0 %v269
    %759 = vmatprep.subr.mxu0 0.0
    %760 = vmatpush1.msra.mxu0 %v272
    %761 = vmatprep.subr.mxu0 0.0
    %762 = vmatpush1.msra.mxu0 %v275
    %763 = vmatprep.subr.mxu0 0.0
    %764 = vmatpush1.msra.mxu0 %v278
    %765 = vmatprep.subr.mxu0 0.0
    %766 = vmatpush1.msra.mxu0 %v281
    %767 = vmatprep.subr.mxu0 0.0
    %768 = vmatpush1.msra.mxu0 %v284
    %769 = vmatprep.subr.mxu0 0.0
    %770 = vmatpush1.msra.mxu0 %v287
    %771 = vmatprep.mubr.f32.mxu0 %v87
    %772 = vmatmul.mubr.f32.gmra.mrb[0].mxu0 %v86
    %v773 = vpop.f32.mrb[0].mxu0
    %v774 = vadd.f32 %v699, %v773
    %v775 = vpop.f32.mrb[0].mxu0
    %776 = vmatprep.mubr.f32.mxu0 %v93
    %777 = vmatmul.mubr.f32.gmra.mrb[0].mxu0 %v92
    %v778 = vpop.f32.mrb[0].mxu0
    %v779 = vadd.f32 %v704, %v778
    %v780 = vpop.f32.mrb[0].mxu0
    %781 = vdwg.mxu0
    %782 = vmatprep.subr.mxu0 0.0
    %783 = vmatpush1.msra.mxu0 %v290
    %784 = vmatprep.subr.mxu0 0.0
    %785 = vmatpush1.msra.mxu0 %v293
    %786 = vmatprep.subr.mxu0 0.0
    %787 = vmatpush1.msra.mxu0 %v296
    %788 = vmatprep.subr.mxu0 0.0
    %789 = vmatpush1.msra.mxu0 %v299
    %790 = vmatprep.subr.mxu0 0.0
    %791 = vmatpush1.msra.mxu0 %v302
    %792 = vmatprep.subr.mxu0 0.0
    %793 = vmatpush1.msra.mxu0 %v305
    %794 = vmatprep.subr.mxu0 0.0
    %795 = vmatpush1.msra.mxu0 %v308
    %796 = vmatprep.subr.mxu0 0.0
    %797 = vmatpush1.msra.mxu0 %v311
    %798 = vmatprep.subr.mxu0 0.0
    %799 = vmatpush1.msra.mxu0 %v314
    %800 = vmatprep.subr.mxu0 0.0
    %801 = vmatpush1.msra.mxu0 %v317
    %802 = vmatprep.subr.mxu0 0.0
    %803 = vmatpush1.msra.mxu0 %v320
    %804 = vmatprep.subr.mxu0 0.0
    %805 = vmatpush1.msra.mxu0 %v323
    %806 = vmatprep.subr.mxu0 0.0
    %807 = vmatpush1.msra.mxu0 %v326
    %808 = vmatprep.subr.mxu0 0.0
    %809 = vmatpush1.msra.mxu0 %v329
    %810 = vmatprep.subr.mxu0 0.0
    %811 = vmatpush1.msra.mxu0 %v332
    %812 = vmatprep.subr.mxu0 0.0
    %813 = vmatpush1.msra.mxu0 %v335
    %814 = vmatprep.subr.mxu0 0.0
    %815 = vmatpush1.msra.mxu0 %v338
    %816 = vmatprep.subr.mxu0 0.0
    %817 = vmatpush1.msra.mxu0 %v341
    %818 = vmatprep.subr.mxu0 0.0
    %819 = vmatpush1.msra.mxu0 %v344
    %820 = vmatprep.subr.mxu0 0.0
    %821 = vmatpush1.msra.mxu0 %v347
    %822 = vmatprep.subr.mxu0 0.0
    %823 = vmatpush1.msra.mxu0 %v350
    %824 = vmatprep.subr.mxu0 0.0
    %825 = vmatpush1.msra.mxu0 %v353
    %826 = vmatprep.subr.mxu0 0.0
    %827 = vmatpush1.msra.mxu0 %v356
    %828 = vmatprep.subr.mxu0 0.0
    %829 = vmatpush1.msra.mxu0 %v359
    %830 = vmatprep.subr.mxu0 0.0
    %831 = vmatpush1.msra.mxu0 %v362
    %832 = vmatprep.subr.mxu0 0.0
    %833 = vmatpush1.msra.mxu0 %v365
    %834 = vmatprep.subr.mxu0 0.0
    %835 = vmatpush1.msra.mxu0 %v368
    %836 = vmatprep.subr.mxu0 0.0
    %837 = vmatpush1.msra.mxu0 %v371
    %838 = vmatprep.subr.mxu0 0.0
    %839 = vmatpush1.msra.mxu0 %v374
    %840 = vmatprep.subr.mxu0 0.0
    %841 = vmatpush1.msra.mxu0 %v377
    %842 = vmatprep.subr.mxu0 0.0
    %843 = vmatpush1.msra.mxu0 %v380
    %844 = vmatprep.subr.mxu0 0.0
    %845 = vmatpush1.msra.mxu0 %v383
    %846 = vmatprep.mubr.f32.mxu0 %v89
    %847 = vmatmul.mubr.f32.gmra.mrb[0].mxu0 %v88
    %v848 = vpop.f32.mrb[0].mxu0
    %v849 = vadd.f32 %v774, %v848
    %v850 = vpop.f32.mrb[0].mxu0
    %851 = vmatprep.mubr.f32.mxu0 %v95
    %852 = vmatmul.mubr.f32.gmra.mrb[0].mxu0 %v94
    %v853 = vpop.f32.mrb[0].mxu0
    %v854 = vadd.f32 %v779, %v853
    %v855 = vpop.f32.mrb[0].mxu0
    %856 = vdwg.mxu0
    %v857 = vmax.f32 %v622, 0.0
    %v858 = vmax.f32 %v624, 0.0
    %v859 = vmax.f32 %v849, 0.0
    %v860 = vmax.f32 %v628, 0.0
    %v861 = vmax.f32 %v630, 0.0
    %v862 = vmax.f32 %v854, 0.0
    %v863 = vld [vmem:[%s5] sm:$0xff]
    %v864 = vld [vmem:[%s5 + $0x8] sm:$0xff]
    %v865 = vld [vmem:[%s5 + $0x10] sm:$0xff]
    %v866 = vld [vmem:[%s5 + $0x18] sm:$0xff]
    %v867 = vld [vmem:[%s5 + $0x20] sm:$0xff]
    %v868 = vld [vmem:[%s5 + $0x28] sm:$0xff]
    %v869 = vld [vmem:[%s5 + $0x30] sm:$0xff]
    %v870 = vld [vmem:[%s5 + $0x38] sm:$0xff]
    %v871 = vld [vmem:[%s5 + $0x40] sm:$0xff]
    %v872 = vld [vmem:[%s5 + $0x48] sm:$0xff]
    %v873 = vld [vmem:[%s5 + $0x50] sm:$0xff]
    %v874 = vld [vmem:[%s5 + $0x58] sm:$0xff]
    %v875 = vld [vmem:[%s5 + $0x60] sm:$0xff]
    %v876 = vld [vmem:[%s5 + $0x68] sm:$0xff]
    %v877 = vld [vmem:[%s5 + $0x70] sm:$0xff]
    %v878 = vld [vmem:[%s5 + $0x78] sm:$0xff]
    %v879 = vld [vmem:[%s5 + $0x80] sm:$0xff]
    %v880 = vld [vmem:[%s5 + $0x88] sm:$0xff]
    %v881 = vld [vmem:[%s5 + $0x90] sm:$0xff]
    %v882 = vld [vmem:[%s5 + $0x98] sm:$0xff]
    %v883 = vld [vmem:[%s5 + $0xa0] sm:$0xff]
    %v884 = vld [vmem:[%s5 + $0xa8] sm:$0xff]
    %v885 = vld [vmem:[%s5 + $0xb0] sm:$0xff]
    %v886 = vld [vmem:[%s5 + $0xb8] sm:$0xff]
    %v887 = vld [vmem:[%s5 + $0xc0] sm:$0xff]
    %v888 = vld [vmem:[%s5 + $0xc8] sm:$0xff]
    %v889 = vld [vmem:[%s5 + $0xd0] sm:$0xff]
    %v890 = vld [vmem:[%s5 + $0xd8] sm:$0xff]
    %v891 = vld [vmem:[%s5 + $0xe0] sm:$0xff]
    %v892 = vld [vmem:[%s5 + $0xe8] sm:$0xff]
    %v893 = vld [vmem:[%s5 + $0xf0] sm:$0xff]
    %v894 = vld [vmem:[%s5 + $0xf8] sm:$0xff]
    %v895 = vld [vmem:[%s5 + $0x100] sm:$0xff]
    %v896 = vld [vmem:[%s5 + $0x108] sm:$0xff]
    %v897 = vld [vmem:[%s5 + $0x110] sm:$0xff]
    %v898 = vld [vmem:[%s5 + $0x118] sm:$0xff]
    %v899 = vld [vmem:[%s5 + $0x120] sm:$0xff]
    %v900 = vld [vmem:[%s5 + $0x128] sm:$0xff]
    %v901 = vld [vmem:[%s5 + $0x130] sm:$0xff]
    %v902 = vld [vmem:[%s5 + $0x138] sm:$0xff]
    %v903 = vld [vmem:[%s5 + $0x140] sm:$0xff]
    %v904 = vld [vmem:[%s5 + $0x148] sm:$0xff]
    %v905 = vld [vmem:[%s5 + $0x150] sm:$0xff]
    %v906 = vld [vmem:[%s5 + $0x158] sm:$0xff]
    %v907 = vld [vmem:[%s5 + $0x160] sm:$0xff]
    %v908 = vld [vmem:[%s5 + $0x168] sm:$0xff]
    %v909 = vld [vmem:[%s5 + $0x170] sm:$0xff]
    %v910 = vld [vmem:[%s5 + $0x178] sm:$0xff]
    %v911 = vld [vmem:[%s6] sm:$0x1]
    %v913 = vlaneseq
    %v914 = vshrl.u32 %v913, 7
    %v915 = vsub.s32 0, %v914
    %v916 = vrot.slane %v911, %v915
    %918 = vmatprep.subr.mxu0 0.0
    %919 = vmatpush1.msra.mxu0 %v863
    %920 = vmatprep.subr.mxu0 0.0
    %921 = vmatpush1.msra.mxu0 %v864
    %922 = vmatprep.subr.mxu0 0.0
    %923 = vmatpush1.msra.mxu0 %v865
    %924 = vmatprep.subr.mxu0 0.0
    %925 = vmatpush1.msra.mxu0 %v866
    %926 = vmatprep.subr.mxu0 0.0
    %927 = vmatpush1.msra.mxu0 %v867
    %928 = vmatprep.subr.mxu0 0.0
    %929 = vmatpush1.msra.mxu0 %v868
    %930 = vmatprep.subr.mxu0 0.0
    %931 = vmatpush1.msra.mxu0 %v869
    %932 = vmatprep.subr.mxu0 0.0
    %933 = vmatpush1.msra.mxu0 %v870
    %934 = vmatprep.subr.mxu0 0.0
    %935 = vmatpush1.msra.mxu0 %v871
    %936 = vmatprep.subr.mxu0 0.0
    %937 = vmatpush1.msra.mxu0 %v872
    %938 = vmatprep.subr.mxu0 0.0
    %939 = vmatpush1.msra.mxu0 %v873
    %940 = vmatprep.subr.mxu0 0.0
    %941 = vmatpush1.msra.mxu0 %v874
    %942 = vmatprep.subr.mxu0 0.0
    %943 = vmatpush1.msra.mxu0 %v875
    %944 = vmatprep.subr.mxu0 0.0
    %945 = vmatpush1.msra.mxu0 %v876
    %946 = vmatprep.subr.mxu0 0.0
    %947 = vmatpush1.msra.mxu0 %v877
    %948 = vmatprep.subr.mxu0 0.0
    %949 = vmatpush1.msra.mxu0 %v878
    %950 = vmatprep.subr.mxu0 0.0
    %951 = vmatpush1.msra.mxu0 %v879
    %952 = vmatprep.subr.mxu0 0.0
    %953 = vmatpush1.msra.mxu0 %v880
    %954 = vmatprep.subr.mxu0 0.0
    %955 = vmatpush1.msra.mxu0 %v881
    %956 = vmatprep.subr.mxu0 0.0
    %957 = vmatpush1.msra.mxu0 %v882
    %958 = vmatprep.subr.mxu0 0.0
    %959 = vmatpush1.msra.mxu0 %v883
    %960 = vmatprep.subr.mxu0 0.0
    %961 = vmatpush1.msra.mxu0 %v884
    %962 = vmatprep.subr.mxu0 0.0
    %963 = vmatpush1.msra.mxu0 %v885
    %964 = vmatprep.subr.mxu0 0.0
    %965 = vmatpush1.msra.mxu0 %v886
    %966 = vmatprep.subr.mxu0 0.0
    %967 = vmatpush1.msra.mxu0 %v887
    %968 = vmatprep.subr.mxu0 0.0
    %969 = vmatpush1.msra.mxu0 %v888
    %970 = vmatprep.subr.mxu0 0.0
    %971 = vmatpush1.msra.mxu0 %v889
    %972 = vmatprep.subr.mxu0 0.0
    %973 = vmatpush1.msra.mxu0 %v890
    %974 = vmatprep.subr.mxu0 0.0
    %975 = vmatpush1.msra.mxu0 %v891
    %976 = vmatprep.subr.mxu0 0.0
    %977 = vmatpush1.msra.mxu0 %v892
    %978 = vmatprep.subr.mxu0 0.0
    %979 = vmatpush1.msra.mxu0 %v893
    %980 = vmatprep.subr.mxu0 0.0
    %981 = vmatpush1.msra.mxu0 %v894
    %982 = vmatprep.mubr.f32.mxu0 %v858
    %983 = vmatmul.mubr.f32.gmra.mrb[0].mxu0 %v857
    %v984 = vpop.f32.mrb[0].mxu0
    %v985 = vadd.f32 %v916, %v984
    %v986 = vpop.f32.mrb[0].mxu0
    %987 = vmatprep.mubr.f32.mxu0 %v861
    %988 = vmatmul.mubr.f32.gmra.mrb[0].mxu0 %v860
    %v989 = vpop.f32.mrb[0].mxu0
    %v990 = vadd.f32 %v916, %v989
    %v991 = vpop.f32.mrb[0].mxu0
    %992 = vdwg.mxu0
    %993 = vmatprep.subr.mxu0 0.0
    %994 = vmatpush1.msra.mxu0 %v895
    %995 = vmatprep.subr.mxu0 0.0
    %996 = vmatpush1.msra.mxu0 %v896
    %997 = vmatprep.subr.mxu0 0.0
    %998 = vmatpush1.msra.mxu0 %v897
    %999 = vmatprep.subr.mxu0 0.0
    %1000 = vmatpush1.msra.mxu0 %v898
    %1001 = vmatprep.subr.mxu0 0.0
    %1002 = vmatpush1.msra.mxu0 %v899
    %1003 = vmatprep.subr.mxu0 0.0
    %1004 = vmatpush1.msra.mxu0 %v900
    %1005 = vmatprep.subr.mxu0 0.0
    %1006 = vmatpush1.msra.mxu0 %v901
    %1007 = vmatprep.subr.mxu0 0.0
    %1008 = vmatpush1.msra.mxu0 %v902
    %1009 = vmatprep.subr.mxu0 0.0
    %1010 = vmatpush1.msra.mxu0 %v903
    %1011 = vmatprep.subr.mxu0 0.0
    %1012 = vmatpush1.msra.mxu0 %v904
    %1013 = vmatprep.subr.mxu0 0.0
    %1014 = vmatpush1.msra.mxu0 %v905
    %1015 = vmatprep.subr.mxu0 0.0
    %1016 = vmatpush1.msra.mxu0 %v906
    %1017 = vmatprep.subr.mxu0 0.0
    %1018 = vmatpush1.msra.mxu0 %v907
    %1019 = vmatprep.subr.mxu0 0.0
    %1020 = vmatpush1.msra.mxu0 %v908
    %1021 = vmatprep.subr.mxu0 0.0
    %1022 = vmatpush1.msra.mxu0 %v909
    %1023 = vmatprep.subr.mxu0 0.0
    %1024 = vmatpush1.msra.mxu0 %v910
    %1025 = vmatprep.subr.mxu0 0.0
    %1026 = vmatpush1.msra.mxu0 0.0
    %1027 = vmatprep.subr.mxu0 0.0
    %1028 = vmatpush1.msra.mxu0 0.0
    %1029 = vmatprep.subr.mxu0 0.0
    %1030 = vmatpush1.msra.mxu0 0.0
    %1031 = vmatprep.subr.mxu0 0.0
    %1032 = vmatpush1.msra.mxu0 0.0
    %1033 = vmatprep.subr.mxu0 0.0
    %1034 = vmatpush1.msra.mxu0 0.0
    %1035 = vmatprep.subr.mxu0 0.0
    %1036 = vmatpush1.msra.mxu0 0.0
    %1037 = vmatprep.subr.mxu0 0.0
    %1038 = vmatpush1.msra.mxu0 0.0
    %1039 = vmatprep.subr.mxu0 0.0
    %1040 = vmatpush1.msra.mxu0 0.0
    %1041 = vmatprep.subr.mxu0 0.0
    %1042 = vmatpush1.msra.mxu0 0.0
    %1043 = vmatprep.subr.mxu0 0.0
    %1044 = vmatpush1.msra.mxu0 0.0
    %1045 = vmatprep.subr.mxu0 0.0
    %1046 = vmatpush1.msra.mxu0 0.0
    %1047 = vmatprep.subr.mxu0 0.0
    %1048 = vmatpush1.msra.mxu0 0.0
    %1049 = vmatprep.subr.mxu0 0.0
    %1050 = vmatpush1.msra.mxu0 0.0
    %1051 = vmatprep.subr.mxu0 0.0
    %1052 = vmatpush1.msra.mxu0 0.0
    %1053 = vmatprep.subr.mxu0 0.0
    %1054 = vmatpush1.msra.mxu0 0.0
    %1055 = vmatprep.subr.mxu0 0.0
    %1056 = vmatpush1.msra.mxu0 0.0
    %1057 = vmatprep.mubr.f32.mxu0 0.0
    %1058 = vmatmul.mubr.f32.gmra.mrb[0].mxu0 %v859
    %v1059 = vpop.f32.mrb[0].mxu0
    %v1060 = vadd.f32 %v985, %v1059
    %v1061 = vpop.f32.mrb[0].mxu0
    %1062 = vmatprep.mubr.f32.mxu0 0.0
    %1063 = vmatmul.mubr.f32.gmra.mrb[0].mxu0 %v862
    %v1064 = vpop.f32.mrb[0].mxu0
    %v1065 = vadd.f32 %v990, %v1064
    %v1066 = vpop.f32.mrb[0].mxu0
    %1067 = vdwg.mxu0
    %v1068 = vmax.f32 %v1060, 0.0
    %v1069 = vmax.f32 %v1065, 0.0
    %v1070 = vld [vmem:[%s1] sm:$0xff]
    %v1071 = vld [vmem:[%s1 + $0x8] sm:$0xff]
    %v1072 = vld [vmem:[%s2] sm:$0xff]
    %v1073 = vld [vmem:[%s2 + $0x8] sm:$0xff]
    %1076 = vrot.lane.b32.xlu0 %v1070, 32
    %v1077 = vpop.permute.xlu0 %1076
    %1078 = vrot.lane.b32.xlu0 %v1071, 32
    %v1079 = vpop.permute.xlu0 %1078
    %1084 = vrot.lane.b32.xlu0 %v1072, 96
    %v1085 = vpop.permute.xlu0 %1084
    %1086 = vrot.lane.b32.xlu0 %v1073, 96
    %v1087 = vpop.permute.xlu0 %1086
    %vm1090 = vcmask 261120
    %v1091 = vsel %vm1090, %v1068, %v1077
    %v1092 = vsel %vm1090, %v1069, %v1079
    %vm1093 = vcmask 785408
    %v1094 = vsel %vm1093, %v1091, %v1085
    %v1095 = vsel %vm1093, %v1092, %v1087
    %v1096 = vld [vmem:[%s7] sm:$0x3]
    %v1097 = vlaneseq
    %vm1098 = vcmp.ge.s32.totalorder %v1097, 0
    %vm1099 = vcmp.lt.s32.totalorder %v1097, 160
    %vm1100 = vmand %vm1098, %vm1099
    %1101 = vst.msk [vmem:[#allocation2] ss:$8 sm:$0x3] %vm1100, %v1096
    %1102 = vst.msk [vmem:[#allocation2] ss:$8 sm:$0x0] %vm1100, %v1096
    %s1103 = scalar_lea.vmem [#allocation2], 32
    %1104 = vst.msk [vmem:[%s1103] ss:$8 sm:$0x3] %vm1100, %v1096
    %1105 = vst.msk [vmem:[%s1103] ss:$8 sm:$0x0] %vm1100, %v1096
    %v1108 = vrot.slane %v1094, 7
    %v1109 = vrot.slane %v1085, 7
    %v1110 = vrot.slane %v1095, 7
    %v1111 = vrot.slane %v1087, 7
    %1116 = vst [vmem:[#allocation2] sm:$0xfe] %v1108
    %vm1117 = vcmask 261121
    %1118 = vst.msk [vmem:[#allocation2 + $0x8] sm:$0xfe] %vm1117, %v1109
    %1119 = vst [vmem:[#allocation2 + $0x10] sm:$0x1] %v1108
    %vm1120 = vcmask 253952
    %1121 = vst.msk [vmem:[#allocation2 + $0x18] sm:$0x1] %vm1120, %v1109
    %1122 = vst [vmem:[#allocation2 + $0x20] sm:$0xfe] %v1110
    %1123 = vst.msk [vmem:[#allocation2 + $0x28] sm:$0xfe] %vm1117, %v1111
    %1124 = vst [vmem:[#allocation2 + $0x30] sm:$0x1] %v1110
    %1125 = vst.msk [vmem:[#allocation2 + $0x38] sm:$0x1] %vm1120, %v1111
    %1126 = vst [vmem:[#allocation2 + $0x10] sm:$0xfe] 0.0
    %1127 = vst.msk [vmem:[#allocation2 + $0x18] sm:$0xfe] %vm1117, 0.0
    %1128 = vst [vmem:[#allocation2 + $0x30] sm:$0xfe] 0.0
    %1129 = vst.msk [vmem:[#allocation2 + $0x38] sm:$0xfe] %vm1117, 0.0
    %v1130 = vld [vmem:[#allocation2] sm:$0xff]
    %v1131 = vld [vmem:[#allocation2 + $0x8] sm:$0xff]
    %v1132 = vld [vmem:[#allocation2 + $0x10] sm:$0xff]
    %v1133 = vld [vmem:[#allocation2 + $0x18] sm:$0xff]
    %v1134 = vld [vmem:[#allocation2 + $0x20] sm:$0xff]
    %v1135 = vld [vmem:[#allocation2 + $0x28] sm:$0xff]
    %v1136 = vld [vmem:[#allocation2 + $0x30] sm:$0xff]
    %v1137 = vld [vmem:[#allocation2 + $0x38] sm:$0xff]
    %v1138 = vld [vmem:[%s8] sm:$0xff]
    %v1139 = vld [vmem:[%s8 + $0x8] sm:$0xff]
    %v1140 = vld [vmem:[%s8 + $0x10] sm:$0xff]
    %v1141 = vld [vmem:[%s8 + $0x18] sm:$0xff]
    %v1142 = vadd.f32 %v1130, %v1138
    %v1143 = vadd.f32 %v1131, %v1139
    %v1144 = vadd.f32 %v1132, %v1140
    %v1145 = vadd.f32 %v1133, %v1141
    %v1146 = vadd.f32 %v1134, %v1138
    %v1147 = vadd.f32 %v1135, %v1139
    %v1148 = vadd.f32 %v1136, %v1140
    %v1149 = vadd.f32 %v1137, %v1141
    %v1150 = vld [vmem:[%s10] sm:$0xff]
    %v1151 = vld [vmem:[%s10 + $0x8] sm:$0xff]
    %v1152 = vld [vmem:[%s10 + $0x10] sm:$0xff]
    %v1153 = vld [vmem:[%s10 + $0x18] sm:$0xff]
    %v1154 = vld [vmem:[%s10 + $0x20] sm:$0xff]
    %v1155 = vld [vmem:[%s10 + $0x28] sm:$0xff]
    %v1156 = vld [vmem:[%s10 + $0x30] sm:$0xff]
    %v1157 = vld [vmem:[%s10 + $0x38] sm:$0xff]
    %v1158 = vld [vmem:[%s10 + $0x40] sm:$0xff]
    %v1159 = vld [vmem:[%s10 + $0x48] sm:$0xff]
    %v1160 = vld [vmem:[%s10 + $0x50] sm:$0xff]
    %v1161 = vld [vmem:[%s10 + $0x58] sm:$0xff]
    %v1162 = vld [vmem:[%s10 + $0x60] sm:$0xff]
    %v1163 = vld [vmem:[%s10 + $0x68] sm:$0xff]
    %v1164 = vld [vmem:[%s10 + $0x70] sm:$0xff]
    %v1165 = vld [vmem:[%s10 + $0x78] sm:$0xff]
    %v1166 = vld [vmem:[%s10 + $0x80] sm:$0xff]
    %v1167 = vld [vmem:[%s10 + $0x88] sm:$0xff]
    %v1168 = vld [vmem:[%s10 + $0x90] sm:$0xff]
    %v1169 = vld [vmem:[%s10 + $0x98] sm:$0xff]
    %v1170 = vld [vmem:[%s10 + $0xa0] sm:$0xff]
    %v1171 = vld [vmem:[%s10 + $0xa8] sm:$0xff]
    %v1172 = vld [vmem:[%s10 + $0xb0] sm:$0xff]
    %v1173 = vld [vmem:[%s10 + $0xb8] sm:$0xff]
    %v1174 = vld [vmem:[%s10 + $0xc0] sm:$0xff]
    %v1175 = vld [vmem:[%s10 + $0xc8] sm:$0xff]
    %v1176 = vld [vmem:[%s10 + $0xd0] sm:$0xff]
    %v1177 = vld [vmem:[%s10 + $0xd8] sm:$0xff]
    %v1178 = vld [vmem:[%s10 + $0xe0] sm:$0xff]
    %v1179 = vld [vmem:[%s10 + $0xe8] sm:$0xff]
    %v1180 = vld [vmem:[%s10 + $0xf0] sm:$0xff]
    %v1181 = vld [vmem:[%s10 + $0xf8] sm:$0xff]
    %v1182 = vld [vmem:[%s10 + $0x100] sm:$0xff]
    %v1183 = vld [vmem:[%s10 + $0x108] sm:$0xff]
    %v1184 = vld [vmem:[%s10 + $0x110] sm:$0xff]
    %v1185 = vld [vmem:[%s10 + $0x118] sm:$0xff]
    %v1186 = vld [vmem:[%s10 + $0x120] sm:$0xff]
    %v1187 = vld [vmem:[%s10 + $0x128] sm:$0xff]
    %v1188 = vld [vmem:[%s10 + $0x130] sm:$0xff]
    %v1189 = vld [vmem:[%s10 + $0x138] sm:$0xff]
    %v1190 = vld [vmem:[%s10 + $0x140] sm:$0xff]
    %v1191 = vld [vmem:[%s10 + $0x148] sm:$0xff]
    %v1192 = vld [vmem:[%s10 + $0x150] sm:$0xff]
    %v1193 = vld [vmem:[%s10 + $0x158] sm:$0xff]
    %v1194 = vld [vmem:[%s10 + $0x160] sm:$0xff]
    %v1195 = vld [vmem:[%s10 + $0x168] sm:$0xff]
    %v1196 = vld [vmem:[%s10 + $0x170] sm:$0xff]
    %v1197 = vld [vmem:[%s10 + $0x178] sm:$0xff]
    %v1198 = vld [vmem:[%s10 + $0x180] sm:$0xff]
    %v1199 = vld [vmem:[%s10 + $0x188] sm:$0xff]
    %v1200 = vld [vmem:[%s10 + $0x190] sm:$0xff]
    %v1201 = vld [vmem:[%s10 + $0x198] sm:$0xff]
    %v1202 = vld [vmem:[%s10 + $0x1a0] sm:$0xff]
    %v1203 = vld [vmem:[%s10 + $0x1a8] sm:$0xff]
    %v1204 = vld [vmem:[%s10 + $0x1b0] sm:$0xff]
    %v1205 = vld [vmem:[%s10 + $0x1b8] sm:$0xff]
    %v1206 = vld [vmem:[%s10 + $0x1c0] sm:$0xff]
    %v1207 = vld [vmem:[%s10 + $0x1c8] sm:$0xff]
    %v1208 = vld [vmem:[%s10 + $0x1d0] sm:$0xff]
    %v1209 = vld [vmem:[%s10 + $0x1d8] sm:$0xff]
    %v1210 = vld [vmem:[%s10 + $0x1e0] sm:$0xff]
    %v1211 = vld [vmem:[%s10 + $0x1e8] sm:$0xff]
    %v1212 = vld [vmem:[%s10 + $0x1f0] sm:$0xff]
    %v1213 = vld [vmem:[%s10 + $0x1f8] sm:$0xff]
    %v1214 = vld [vmem:[%s10 + $0x200] sm:$0xff]
    %v1215 = vld [vmem:[%s10 + $0x208] sm:$0xff]
    %v1216 = vld [vmem:[%s10 + $0x210] sm:$0xff]
    %v1217 = vld [vmem:[%s10 + $0x218] sm:$0xff]
    %v1218 = vld [vmem:[%s10 + $0x220] sm:$0xff]
    %v1219 = vld [vmem:[%s10 + $0x228] sm:$0xff]
    %v1220 = vld [vmem:[%s10 + $0x230] sm:$0xff]
    %v1221 = vld [vmem:[%s10 + $0x238] sm:$0xff]
    %v1222 = vld [vmem:[%s10 + $0x240] sm:$0xff]
    %v1223 = vld [vmem:[%s10 + $0x248] sm:$0xff]
    %v1224 = vld [vmem:[%s10 + $0x250] sm:$0xff]
    %v1225 = vld [vmem:[%s10 + $0x258] sm:$0xff]
    %v1226 = vld [vmem:[%s10 + $0x260] sm:$0xff]
    %v1227 = vld [vmem:[%s10 + $0x268] sm:$0xff]
    %v1228 = vld [vmem:[%s10 + $0x270] sm:$0xff]
    %v1229 = vld [vmem:[%s10 + $0x278] sm:$0xff]
    %v1230 = vld [vmem:[%s10 + $0x280] sm:$0xff]
    %v1231 = vld [vmem:[%s10 + $0x288] sm:$0xff]
    %v1232 = vld [vmem:[%s10 + $0x290] sm:$0xff]
    %v1233 = vld [vmem:[%s10 + $0x298] sm:$0xff]
    %v1234 = vld [vmem:[%s10 + $0x2a0] sm:$0xff]
    %v1235 = vld [vmem:[%s10 + $0x2a8] sm:$0xff]
    %v1236 = vld [vmem:[%s10 + $0x2b0] sm:$0xff]
    %v1237 = vld [vmem:[%s10 + $0x2b8] sm:$0xff]
    %v1238 = vld [vmem:[%s10 + $0x2c0] sm:$0xff]
    %v1239 = vld [vmem:[%s10 + $0x2c8] sm:$0xff]
    %v1240 = vld [vmem:[%s10 + $0x2d0] sm:$0xff]
    %v1241 = vld [vmem:[%s10 + $0x2d8] sm:$0xff]
    %v1242 = vld [vmem:[%s10 + $0x2e0] sm:$0xff]
    %v1243 = vld [vmem:[%s10 + $0x2e8] sm:$0xff]
    %v1244 = vld [vmem:[%s10 + $0x2f0] sm:$0xff]
    %v1245 = vld [vmem:[%s10 + $0x2f8] sm:$0xff]
    %v1246 = vld [vmem:[%s10 + $0x300] sm:$0xff]
    %v1247 = vld [vmem:[%s10 + $0x308] sm:$0xff]
    %v1248 = vld [vmem:[%s10 + $0x310] sm:$0xff]
    %v1249 = vld [vmem:[%s10 + $0x318] sm:$0xff]
    %v1250 = vld [vmem:[%s10 + $0x320] sm:$0xff]
    %v1251 = vld [vmem:[%s10 + $0x328] sm:$0xff]
    %v1252 = vld [vmem:[%s10 + $0x330] sm:$0xff]
    %v1253 = vld [vmem:[%s10 + $0x338] sm:$0xff]
    %v1254 = vld [vmem:[%s10 + $0x340] sm:$0xff]
    %v1255 = vld [vmem:[%s10 + $0x348] sm:$0xff]
    %v1256 = vld [vmem:[%s10 + $0x350] sm:$0xff]
    %v1257 = vld [vmem:[%s10 + $0x358] sm:$0xff]
    %v1258 = vld [vmem:[%s10 + $0x360] sm:$0xff]
    %v1259 = vld [vmem:[%s10 + $0x368] sm:$0xff]
    %v1260 = vld [vmem:[%s10 + $0x370] sm:$0xff]
    %v1261 = vld [vmem:[%s10 + $0x378] sm:$0xff]
    %v1262 = vld [vmem:[%s10 + $0x380] sm:$0xff]
    %v1263 = vld [vmem:[%s10 + $0x388] sm:$0xff]
    %v1264 = vld [vmem:[%s10 + $0x390] sm:$0xff]
    %v1265 = vld [vmem:[%s10 + $0x398] sm:$0xff]
    %v1266 = vld [vmem:[%s10 + $0x3a0] sm:$0xff]
    %v1267 = vld [vmem:[%s10 + $0x3a8] sm:$0xff]
    %v1268 = vld [vmem:[%s10 + $0x3b0] sm:$0xff]
    %v1269 = vld [vmem:[%s10 + $0x3b8] sm:$0xff]
    %v1270 = vld [vmem:[%s10 + $0x3c0] sm:$0xff]
    %v1271 = vld [vmem:[%s10 + $0x3c8] sm:$0xff]
    %v1272 = vld [vmem:[%s10 + $0x3d0] sm:$0xff]
    %v1273 = vld [vmem:[%s10 + $0x3d8] sm:$0xff]
    %v1274 = vld [vmem:[%s10 + $0x3e0] sm:$0xff]
    %v1275 = vld [vmem:[%s10 + $0x3e8] sm:$0xff]
    %v1276 = vld [vmem:[%s10 + $0x3f0] sm:$0xff]
    %v1277 = vld [vmem:[%s10 + $0x3f8] sm:$0xff]
    %v1278 = vld [vmem:[%s10 + $0x400] sm:$0xff]
    %v1279 = vld [vmem:[%s10 + $0x408] sm:$0xff]
    %v1280 = vld [vmem:[%s10 + $0x410] sm:$0xff]
    %v1281 = vld [vmem:[%s10 + $0x418] sm:$0xff]
    %v1282 = vld [vmem:[%s10 + $0x420] sm:$0xff]
    %v1283 = vld [vmem:[%s10 + $0x428] sm:$0xff]
    %v1284 = vld [vmem:[%s10 + $0x430] sm:$0xff]
    %v1285 = vld [vmem:[%s10 + $0x438] sm:$0xff]
    %v1286 = vld [vmem:[%s10 + $0x440] sm:$0xff]
    %v1287 = vld [vmem:[%s10 + $0x448] sm:$0xff]
    %v1288 = vld [vmem:[%s10 + $0x450] sm:$0xff]
    %v1289 = vld [vmem:[%s10 + $0x458] sm:$0xff]
    %v1290 = vld [vmem:[%s10 + $0x460] sm:$0xff]
    %v1291 = vld [vmem:[%s10 + $0x468] sm:$0xff]
    %v1292 = vld [vmem:[%s10 + $0x470] sm:$0xff]
    %v1293 = vld [vmem:[%s10 + $0x478] sm:$0xff]
    %v1294 = vld [vmem:[%s10 + $0x480] sm:$0xff]
    %v1295 = vld [vmem:[%s10 + $0x488] sm:$0xff]
    %v1296 = vld [vmem:[%s10 + $0x490] sm:$0xff]
    %v1297 = vld [vmem:[%s10 + $0x498] sm:$0xff]
    %v1298 = vld [vmem:[%s10 + $0x4a0] sm:$0xff]
    %v1299 = vld [vmem:[%s10 + $0x4a8] sm:$0xff]
    %v1300 = vld [vmem:[%s10 + $0x4b0] sm:$0xff]
    %v1301 = vld [vmem:[%s10 + $0x4b8] sm:$0xff]
    %v1302 = vld [vmem:[%s10 + $0x4c0] sm:$0xff]
    %v1303 = vld [vmem:[%s10 + $0x4c8] sm:$0xff]
    %v1304 = vld [vmem:[%s10 + $0x4d0] sm:$0xff]
    %v1305 = vld [vmem:[%s10 + $0x4d8] sm:$0xff]
    %v1306 = vld [vmem:[%s10 + $0x4e0] sm:$0xff]
    %v1307 = vld [vmem:[%s10 + $0x4e8] sm:$0xff]
    %v1308 = vld [vmem:[%s10 + $0x4f0] sm:$0xff]
    %v1309 = vld [vmem:[%s10 + $0x4f8] sm:$0xff]
    %v1310 = vld [vmem:[%s10 + $0x500] sm:$0xff]
    %v1311 = vld [vmem:[%s10 + $0x508] sm:$0xff]
    %v1312 = vld [vmem:[%s10 + $0x510] sm:$0xff]
    %v1313 = vld [vmem:[%s10 + $0x518] sm:$0xff]
    %v1314 = vld [vmem:[%s10 + $0x520] sm:$0xff]
    %v1315 = vld [vmem:[%s10 + $0x528] sm:$0xff]
    %v1316 = vld [vmem:[%s10 + $0x530] sm:$0xff]
    %v1317 = vld [vmem:[%s10 + $0x538] sm:$0xff]
    %v1318 = vld [vmem:[%s10 + $0x540] sm:$0xff]
    %v1319 = vld [vmem:[%s10 + $0x548] sm:$0xff]
    %v1320 = vld [vmem:[%s10 + $0x550] sm:$0xff]
    %v1321 = vld [vmem:[%s10 + $0x558] sm:$0xff]
    %v1322 = vld [vmem:[%s10 + $0x560] sm:$0xff]
    %v1323 = vld [vmem:[%s10 + $0x568] sm:$0xff]
    %v1324 = vld [vmem:[%s10 + $0x570] sm:$0xff]
    %v1325 = vld [vmem:[%s10 + $0x578] sm:$0xff]
    %v1326 = vld [vmem:[%s10 + $0x580] sm:$0xff]
    %v1327 = vld [vmem:[%s10 + $0x588] sm:$0xff]
    %v1328 = vld [vmem:[%s10 + $0x590] sm:$0xff]
    %v1329 = vld [vmem:[%s10 + $0x598] sm:$0xff]
    %v1330 = vld [vmem:[%s10 + $0x5a0] sm:$0xff]
    %v1331 = vld [vmem:[%s10 + $0x5a8] sm:$0xff]
    %v1332 = vld [vmem:[%s10 + $0x5b0] sm:$0xff]
    %v1333 = vld [vmem:[%s10 + $0x5b8] sm:$0xff]
    %v1334 = vld [vmem:[%s10 + $0x5c0] sm:$0xff]
    %v1335 = vld [vmem:[%s10 + $0x5c8] sm:$0xff]
    %v1336 = vld [vmem:[%s10 + $0x5d0] sm:$0xff]
    %v1337 = vld [vmem:[%s10 + $0x5d8] sm:$0xff]
    %v1338 = vld [vmem:[%s10 + $0x5e0] sm:$0xff]
    %v1339 = vld [vmem:[%s10 + $0x5e8] sm:$0xff]
    %v1340 = vld [vmem:[%s10 + $0x5f0] sm:$0xff]
    %v1341 = vld [vmem:[%s10 + $0x5f8] sm:$0xff]
    %v1342 = vld [vmem:[%s10 + $0x600] sm:$0xff]
    %v1343 = vld [vmem:[%s10 + $0x608] sm:$0xff]
    %v1344 = vld [vmem:[%s10 + $0x610] sm:$0xff]
    %v1345 = vld [vmem:[%s10 + $0x618] sm:$0xff]
    %v1346 = vld [vmem:[%s10 + $0x620] sm:$0xff]
    %v1347 = vld [vmem:[%s10 + $0x628] sm:$0xff]
    %v1348 = vld [vmem:[%s10 + $0x630] sm:$0xff]
    %v1349 = vld [vmem:[%s10 + $0x638] sm:$0xff]
    %v1350 = vld [vmem:[%s10 + $0x640] sm:$0xff]
    %v1351 = vld [vmem:[%s10 + $0x648] sm:$0xff]
    %v1352 = vld [vmem:[%s10 + $0x650] sm:$0xff]
    %v1353 = vld [vmem:[%s10 + $0x658] sm:$0xff]
    %v1354 = vld [vmem:[%s10 + $0x660] sm:$0xff]
    %v1355 = vld [vmem:[%s10 + $0x668] sm:$0xff]
    %v1356 = vld [vmem:[%s10 + $0x670] sm:$0xff]
    %v1357 = vld [vmem:[%s10 + $0x678] sm:$0xff]
    %v1358 = vld [vmem:[%s10 + $0x680] sm:$0xff]
    %v1359 = vld [vmem:[%s10 + $0x688] sm:$0xff]
    %v1360 = vld [vmem:[%s10 + $0x690] sm:$0xff]
    %v1361 = vld [vmem:[%s10 + $0x698] sm:$0xff]
    %v1362 = vld [vmem:[%s10 + $0x6a0] sm:$0xff]
    %v1363 = vld [vmem:[%s10 + $0x6a8] sm:$0xff]
    %v1364 = vld [vmem:[%s10 + $0x6b0] sm:$0xff]
    %v1365 = vld [vmem:[%s10 + $0x6b8] sm:$0xff]
    %v1366 = vld [vmem:[%s10 + $0x6c0] sm:$0xff]
    %v1367 = vld [vmem:[%s10 + $0x6c8] sm:$0xff]
    %v1368 = vld [vmem:[%s10 + $0x6d0] sm:$0xff]
    %v1369 = vld [vmem:[%s10 + $0x6d8] sm:$0xff]
    %v1370 = vld [vmem:[%s10 + $0x6e0] sm:$0xff]
    %v1371 = vld [vmem:[%s10 + $0x6e8] sm:$0xff]
    %v1372 = vld [vmem:[%s10 + $0x6f0] sm:$0xff]
    %v1373 = vld [vmem:[%s10 + $0x6f8] sm:$0xff]
    %v1374 = vld [vmem:[%s10 + $0x700] sm:$0xff]
    %v1375 = vld [vmem:[%s10 + $0x708] sm:$0xff]
    %v1376 = vld [vmem:[%s10 + $0x710] sm:$0xff]
    %v1377 = vld [vmem:[%s10 + $0x718] sm:$0xff]
    %v1378 = vld [vmem:[%s10 + $0x720] sm:$0xff]
    %v1379 = vld [vmem:[%s10 + $0x728] sm:$0xff]
    %v1380 = vld [vmem:[%s10 + $0x730] sm:$0xff]
    %v1381 = vld [vmem:[%s10 + $0x738] sm:$0xff]
    %v1382 = vld [vmem:[%s10 + $0x740] sm:$0xff]
    %v1383 = vld [vmem:[%s10 + $0x748] sm:$0xff]
    %v1384 = vld [vmem:[%s10 + $0x750] sm:$0xff]
    %v1385 = vld [vmem:[%s10 + $0x758] sm:$0xff]
    %v1386 = vld [vmem:[%s10 + $0x760] sm:$0xff]
    %v1387 = vld [vmem:[%s10 + $0x768] sm:$0xff]
    %v1388 = vld [vmem:[%s10 + $0x770] sm:$0xff]
    %v1389 = vld [vmem:[%s10 + $0x778] sm:$0xff]
    %v1390 = vld [vmem:[%s11] sm:$0xff]
    %v1391 = vld [vmem:[%s11 + $0x8] sm:$0xf]
    %v1394 = vlaneseq
    %v1395 = vshrl.u32 %v1394, 7
    %v1396 = vsub.s32 0, %v1395
    %v1397 = vrot.slane %v1390, %v1396
    %v1398 = vlaneseq
    %v1399 = vshrl.u32 %v1398, 7
    %v1400 = vsub.s32 1, %v1399
    %v1401 = vrot.slane %v1390, %v1400
    %v1402 = vlaneseq
    %v1403 = vshrl.u32 %v1402, 7
    %v1404 = vsub.s32 2, %v1403
    %v1405 = vrot.slane %v1390, %v1404
    %v1406 = vlaneseq
    %v1407 = vshrl.u32 %v1406, 7
    %v1408 = vsub.s32 3, %v1407
    %v1409 = vrot.slane %v1390, %v1408
    %v1410 = vlaneseq
    %v1411 = vshrl.u32 %v1410, 7
    %v1412 = vsub.s32 4, %v1411
    %v1413 = vrot.slane %v1390, %v1412
    %v1414 = vlaneseq
    %v1415 = vshrl.u32 %v1414, 7
    %v1416 = vsub.s32 5, %v1415
    %v1417 = vrot.slane %v1390, %v1416
    %v1418 = vlaneseq
    %v1419 = vshrl.u32 %v1418, 7
    %v1420 = vsub.s32 6, %v1419
    %v1421 = vrot.slane %v1390, %v1420
    %v1422 = vlaneseq
    %v1423 = vshrl.u32 %v1422, 7
    %v1424 = vsub.s32 7, %v1423
    %v1425 = vrot.slane %v1390, %v1424
    %v1426 = vlaneseq
    %v1427 = vshrl.u32 %v1426, 7
    %v1428 = vsub.s32 0, %v1427
    %v1429 = vrot.slane %v1391, %v1428
    %v1430 = vlaneseq
    %v1431 = vshrl.u32 %v1430, 7
    %v1432 = vsub.s32 1, %v1431
    %v1433 = vrot.slane %v1391, %v1432
    %v1434 = vlaneseq
    %v1435 = vshrl.u32 %v1434, 7
    %v1436 = vsub.s32 2, %v1435
    %v1437 = vrot.slane %v1391, %v1436
    %v1438 = vlaneseq
    %v1439 = vshrl.u32 %v1438, 7
    %v1440 = vsub.s32 3, %v1439
    %v1441 = vrot.slane %v1391, %v1440
    %v1455 = vsel %vm1090, %v1143, 0
    %v1458 = vsel %vm1090, %v1145, 0
    %v1461 = vsel %vm1090, %v1147, 0
    %v1464 = vsel %vm1090, %v1149, 0
    %1466 = vmatprep.subr.mxu0 %v1151
    %1467 = vmatpush1.msra.mxu0 %v1150
    %1468 = vmatprep.subr.mxu0 %v1163
    %1469 = vmatpush1.msra.mxu0 %v1162
    %1470 = vmatprep.subr.mxu0 %v1175
    %1471 = vmatpush1.msra.mxu0 %v1174
    %1472 = vmatprep.subr.mxu0 %v1187
    %1473 = vmatpush1.msra.mxu0 %v1186
    %1474 = vmatprep.subr.mxu0 %v1199
    %1475 = vmatpush1.msra.mxu0 %v1198
    %1476 = vmatprep.subr.mxu0 %v1211
    %1477 = vmatpush1.msra.mxu0 %v1210
    %1478 = vmatprep.subr.mxu0 %v1223
    %1479 = vmatpush1.msra.mxu0 %v1222
    %1480 = vmatprep.subr.mxu0 %v1235
    %1481 = vmatpush1.msra.mxu0 %v1234
    %1482 = vmatprep.subr.mxu0 %v1247
    %1483 = vmatpush1.msra.mxu0 %v1246
    %1484 = vmatprep.subr.mxu0 %v1259
    %1485 = vmatpush1.msra.mxu0 %v1258
    %1486 = vmatprep.subr.mxu0 %v1271
    %1487 = vmatpush1.msra.mxu0 %v1270
    %1488 = vmatprep.subr.mxu0 %v1283
    %1489 = vmatpush1.msra.mxu0 %v1282
    %1490 = vmatprep.subr.mxu0 %v1295
    %1491 = vmatpush1.msra.mxu0 %v1294
    %1492 = vmatprep.subr.mxu0 %v1307
    %1493 = vmatpush1.msra.mxu0 %v1306
    %1494 = vmatprep.subr.mxu0 %v1319
    %1495 = vmatpush1.msra.mxu0 %v1318
    %1496 = vmatprep.subr.mxu0 %v1331
    %1497 = vmatpush1.msra.mxu0 %v1330
    %1498 = vmatprep.subr.mxu0 %v1343
    %1499 = vmatpush1.msra.mxu0 %v1342
    %1500 = vmatprep.subr.mxu0 %v1355
    %1501 = vmatpush1.msra.mxu0 %v1354
    %1502 = vmatprep.subr.mxu0 %v1367
    %1503 = vmatpush1.msra.mxu0 %v1366
    %1504 = vmatprep.subr.mxu0 %v1379
    %1505 = vmatpush1.msra.mxu0 %v1378
    %1506 = vmatprep.subr.mxu0 0.0
    %1507 = vmatpush1.msra.mxu0 0.0
    %1508 = vmatprep.subr.mxu0 0.0
    %1509 = vmatpush1.msra.mxu0 0.0
    %1510 = vmatprep.subr.mxu0 0.0
    %1511 = vmatpush1.msra.mxu0 0.0
    %1512 = vmatprep.subr.mxu0 0.0
    %1513 = vmatpush1.msra.mxu0 0.0
    %1514 = vmatprep.subr.mxu0 0.0
    %1515 = vmatpush1.msra.mxu0 0.0
    %1516 = vmatprep.subr.mxu0 0.0
    %1517 = vmatpush1.msra.mxu0 0.0
    %1518 = vmatprep.subr.mxu0 0.0
    %1519 = vmatpush1.msra.mxu0 0.0
    %1520 = vmatprep.subr.mxu0 0.0
    %1521 = vmatpush1.msra.mxu0 0.0
    %1522 = vmatprep.subr.mxu0 0.0
    %1523 = vmatpush1.msra.mxu0 0.0
    %1524 = vmatprep.subr.mxu0 0.0
    %1525 = vmatpush1.msra.mxu0 0.0
    %1526 = vmatprep.subr.mxu0 0.0
    %1527 = vmatpush1.msra.mxu0 0.0
    %1528 = vmatprep.subr.mxu0 0.0
    %1529 = vmatpush1.msra.mxu0 0.0
    %1530 = vmatprep.mubr.f32.mxu0 %v1455
    %1531 = vmatmul.mubr.f32.gmra.mrb[0].mxu0 %v1142
    %v1532 = vpop.f32.mrb[0].mxu0
    %v1533 = vadd.f32 %v1397, %v1532
    %v1534 = vpop.f32.mrb[0].mxu0
    %v1535 = vadd.f32 %v1401, %v1534
    %1536 = vmatprep.mubr.f32.mxu0 %v1458
    %1537 = vmatmul.mubr.f32.gmra.mrb[0].mxu0 %v1144
    %v1538 = vpop.f32.mrb[0].mxu0
    %v1539 = vadd.f32 %v1397, %v1538
    %v1540 = vpop.f32.mrb[0].mxu0
    %v1541 = vadd.f32 %v1401, %v1540
    %1542 = vmatprep.mubr.f32.mxu0 %v1461
    %1543 = vmatmul.mubr.f32.gmra.mrb[0].mxu0 %v1146
    %v1544 = vpop.f32.mrb[0].mxu0
    %v1545 = vadd.f32 %v1397, %v1544
    %v1546 = vpop.f32.mrb[0].mxu0
    %v1547 = vadd.f32 %v1401, %v1546
    %1548 = vmatprep.mubr.f32.mxu0 %v1464
    %1549 = vmatmul.mubr.f32.gmra.mrb[0].mxu0 %v1148
    %v1550 = vpop.f32.mrb[0].mxu0
    %v1551 = vadd.f32 %v1397, %v1550
    %v1552 = vpop.f32.mrb[0].mxu0
    %v1553 = vadd.f32 %v1401, %v1552
    %1554 = vdwg.mxu0
    %1555 = vmatprep.subr.mxu0 %v1153
    %1556 = vmatpush1.msra.mxu0 %v1152
    %1557 = vmatprep.subr.mxu0 %v1165
    %1558 = vmatpush1.msra.mxu0 %v1164
    %1559 = vmatprep.subr.mxu0 %v1177
    %1560 = vmatpush1.msra.mxu0 %v1176
    %1561 = vmatprep.subr.mxu0 %v1189
    %1562 = vmatpush1.msra.mxu0 %v1188
    %1563 = vmatprep.subr.mxu0 %v1201
    %1564 = vmatpush1.msra.mxu0 %v1200
    %1565 = vmatprep.subr.mxu0 %v1213
    %1566 = vmatpush1.msra.mxu0 %v1212
    %1567 = vmatprep.subr.mxu0 %v1225
    %1568 = vmatpush1.msra.mxu0 %v1224
    %1569 = vmatprep.subr.mxu0 %v1237
    %1570 = vmatpush1.msra.mxu0 %v1236
    %1571 = vmatprep.subr.mxu0 %v1249
    %1572 = vmatpush1.msra.mxu0 %v1248
    %1573 = vmatprep.subr.mxu0 %v1261
    %1574 = vmatpush1.msra.mxu0 %v1260
    %1575 = vmatprep.subr.mxu0 %v1273
    %1576 = vmatpush1.msra.mxu0 %v1272
    %1577 = vmatprep.subr.mxu0 %v1285
    %1578 = vmatpush1.msra.mxu0 %v1284
    %1579 = vmatprep.subr.mxu0 %v1297
    %1580 = vmatpush1.msra.mxu0 %v1296
    %1581 = vmatprep.subr.mxu0 %v1309
    %1582 = vmatpush1.msra.mxu0 %v1308
    %1583 = vmatprep.subr.mxu0 %v1321
    %1584 = vmatpush1.msra.mxu0 %v1320
    %1585 = vmatprep.subr.mxu0 %v1333
    %1586 = vmatpush1.msra.mxu0 %v1332
    %1587 = vmatprep.subr.mxu0 %v1345
    %1588 = vmatpush1.msra.mxu0 %v1344
    %1589 = vmatprep.subr.mxu0 %v1357
    %1590 = vmatpush1.msra.mxu0 %v1356
    %1591 = vmatprep.subr.mxu0 %v1369
    %1592 = vmatpush1.msra.mxu0 %v1368
    %1593 = vmatprep.subr.mxu0 %v1381
    %1594 = vmatpush1.msra.mxu0 %v1380
    %1595 = vmatprep.subr.mxu0 0.0
    %1596 = vmatpush1.msra.mxu0 0.0
    %1597 = vmatprep.subr.mxu0 0.0
    %1598 = vmatpush1.msra.mxu0 0.0
    %1599 = vmatprep.subr.mxu0 0.0
    %1600 = vmatpush1.msra.mxu0 0.0
    %1601 = vmatprep.subr.mxu0 0.0
    %1602 = vmatpush1.msra.mxu0 0.0
    %1603 = vmatprep.subr.mxu0 0.0
    %1604 = vmatpush1.msra.mxu0 0.0
    %1605 = vmatprep.subr.mxu0 0.0
    %1606 = vmatpush1.msra.mxu0 0.0
    %1607 = vmatprep.subr.mxu0 0.0
    %1608 = vmatpush1.msra.mxu0 0.0
    %1609 = vmatprep.subr.mxu0 0.0
    %1610 = vmatpush1.msra.mxu0 0.0
    %1611 = vmatprep.subr.mxu0 0.0
    %1612 = vmatpush1.msra.mxu0 0.0
    %1613 = vmatprep.subr.mxu0 0.0
    %1614 = vmatpush1.msra.mxu0 0.0
    %1615 = vmatprep.subr.mxu0 0.0
    %1616 = vmatpush1.msra.mxu0 0.0
    %1617 = vmatprep.subr.mxu0 0.0
    %1618 = vmatpush1.msra.mxu0 0.0
    %1619 = vmatprep.mubr.f32.mxu0 %v1455
    %1620 = vmatmul.mubr.f32.gmra.mrb[0].mxu0 %v1142
    %v1621 = vpop.f32.mrb[0].mxu0
    %v1622 = vadd.f32 %v1405, %v1621
    %v1623 = vpop.f32.mrb[0].mxu0
    %v1624 = vadd.f32 %v1409, %v1623
    %1625 = vmatprep.mubr.f32.mxu0 %v1458
    %1626 = vmatmul.mubr.f32.gmra.mrb[0].mxu0 %v1144
    %v1627 = vpop.f32.mrb[0].mxu0
    %v1628 = vadd.f32 %v1405, %v1627
    %v1629 = vpop.f32.mrb[0].mxu0
    %v1630 = vadd.f32 %v1409, %v1629
    %1631 = vmatprep.mubr.f32.mxu0 %v1461
    %1632 = vmatmul.mubr.f32.gmra.mrb[0].mxu0 %v1146
    %v1633 = vpop.f32.mrb[0].mxu0
    %v1634 = vadd.f32 %v1405, %v1633
    %v1635 = vpop.f32.mrb[0].mxu0
    %v1636 = vadd.f32 %v1409, %v1635
    %1637 = vmatprep.mubr.f32.mxu0 %v1464
    %1638 = vmatmul.mubr.f32.gmra.mrb[0].mxu0 %v1148
    %v1639 = vpop.f32.mrb[0].mxu0
    %v1640 = vadd.f32 %v1405, %v1639
    %v1641 = vpop.f32.mrb[0].mxu0
    %v1642 = vadd.f32 %v1409, %v1641
    %1643 = vdwg.mxu0
    %1644 = vmatprep.subr.mxu0 %v1155
    %1645 = vmatpush1.msra.mxu0 %v1154
    %1646 = vmatprep.subr.mxu0 %v1167
    %1647 = vmatpush1.msra.mxu0 %v1166
    %1648 = vmatprep.subr.mxu0 %v1179
    %1649 = vmatpush1.msra.mxu0 %v1178
    %1650 = vmatprep.subr.mxu0 %v1191
    %1651 = vmatpush1.msra.mxu0 %v1190
    %1652 = vmatprep.subr.mxu0 %v1203
    %1653 = vmatpush1.msra.mxu0 %v1202
    %1654 = vmatprep.subr.mxu0 %v1215
    %1655 = vmatpush1.msra.mxu0 %v1214
    %1656 = vmatprep.subr.mxu0 %v1227
    %1657 = vmatpush1.msra.mxu0 %v1226
    %1658 = vmatprep.subr.mxu0 %v1239
    %1659 = vmatpush1.msra.mxu0 %v1238
    %1660 = vmatprep.subr.mxu0 %v1251
    %1661 = vmatpush1.msra.mxu0 %v1250
    %1662 = vmatprep.subr.mxu0 %v1263
    %1663 = vmatpush1.msra.mxu0 %v1262
    %1664 = vmatprep.subr.mxu0 %v1275
    %1665 = vmatpush1.msra.mxu0 %v1274
    %1666 = vmatprep.subr.mxu0 %v1287
    %1667 = vmatpush1.msra.mxu0 %v1286
    %1668 = vmatprep.subr.mxu0 %v1299
    %1669 = vmatpush1.msra.mxu0 %v1298
    %1670 = vmatprep.subr.mxu0 %v1311
    %1671 = vmatpush1.msra.mxu0 %v1310
    %1672 = vmatprep.subr.mxu0 %v1323
    %1673 = vmatpush1.msra.mxu0 %v1322
    %1674 = vmatprep.subr.mxu0 %v1335
    %1675 = vmatpush1.msra.mxu0 %v1334
    %1676 = vmatprep.subr.mxu0 %v1347
    %1677 = vmatpush1.msra.mxu0 %v1346
    %1678 = vmatprep.subr.mxu0 %v1359
    %1679 = vmatpush1.msra.mxu0 %v1358
    %1680 = vmatprep.subr.mxu0 %v1371
    %1681 = vmatpush1.msra.mxu0 %v1370
    %1682 = vmatprep.subr.mxu0 %v1383
    %1683 = vmatpush1.msra.mxu0 %v1382
    %1684 = vmatprep.subr.mxu0 0.0
    %1685 = vmatpush1.msra.mxu0 0.0
    %1686 = vmatprep.subr.mxu0 0.0
    %1687 = vmatpush1.msra.mxu0 0.0
    %1688 = vmatprep.subr.mxu0 0.0
    %1689 = vmatpush1.msra.mxu0 0.0
    %1690 = vmatprep.subr.mxu0 0.0
    %1691 = vmatpush1.msra.mxu0 0.0
    %1692 = vmatprep.subr.mxu0 0.0
    %1693 = vmatpush1.msra.mxu0 0.0
    %1694 = vmatprep.subr.mxu0 0.0
    %1695 = vmatpush1.msra.mxu0 0.0
    %1696 = vmatprep.subr.mxu0 0.0
    %1697 = vmatpush1.msra.mxu0 0.0
    %1698 = vmatprep.subr.mxu0 0.0
    %1699 = vmatpush1.msra.mxu0 0.0
    %1700 = vmatprep.subr.mxu0 0.0
    %1701 = vmatpush1.msra.mxu0 0.0
    %1702 = vmatprep.subr.mxu0 0.0
    %1703 = vmatpush1.msra.mxu0 0.0
    %1704 = vmatprep.subr.mxu0 0.0
    %1705 = vmatpush1.msra.mxu0 0.0
    %1706 = vmatprep.subr.mxu0 0.0
    %1707 = vmatpush1.msra.mxu0 0.0
    %1708 = vmatprep.mubr.f32.mxu0 %v1455
    %1709 = vmatmul.mubr.f32.gmra.mrb[0].mxu0 %v1142
    %v1710 = vpop.f32.mrb[0].mxu0
    %v1711 = vadd.f32 %v1413, %v1710
    %v1712 = vpop.f32.mrb[0].mxu0
    %v1713 = vadd.f32 %v1417, %v1712
    %1714 = vmatprep.mubr.f32.mxu0 %v1458
    %1715 = vmatmul.mubr.f32.gmra.mrb[0].mxu0 %v1144
    %v1716 = vpop.f32.mrb[0].mxu0
    %v1717 = vadd.f32 %v1413, %v1716
    %v1718 = vpop.f32.mrb[0].mxu0
    %v1719 = vadd.f32 %v1417, %v1718
    %1720 = vmatprep.mubr.f32.mxu0 %v1461
    %1721 = vmatmul.mubr.f32.gmra.mrb[0].mxu0 %v1146
    %v1722 = vpop.f32.mrb[0].mxu0
    %v1723 = vadd.f32 %v1413, %v1722
    %v1724 = vpop.f32.mrb[0].mxu0
    %v1725 = vadd.f32 %v1417, %v1724
    %1726 = vmatprep.mubr.f32.mxu0 %v1464
    %1727 = vmatmul.mubr.f32.gmra.mrb[0].mxu0 %v1148
    %v1728 = vpop.f32.mrb[0].mxu0
    %v1729 = vadd.f32 %v1413, %v1728
    %v1730 = vpop.f32.mrb[0].mxu0
    %v1731 = vadd.f32 %v1417, %v1730
    %1732 = vdwg.mxu0
    %1733 = vmatprep.subr.mxu0 %v1157
    %1734 = vmatpush1.msra.mxu0 %v1156
    %1735 = vmatprep.subr.mxu0 %v1169
    %1736 = vmatpush1.msra.mxu0 %v1168
    %1737 = vmatprep.subr.mxu0 %v1181
    %1738 = vmatpush1.msra.mxu0 %v1180
    %1739 = vmatprep.subr.mxu0 %v1193
    %1740 = vmatpush1.msra.mxu0 %v1192
    %1741 = vmatprep.subr.mxu0 %v1205
    %1742 = vmatpush1.msra.mxu0 %v1204
    %1743 = vmatprep.subr.mxu0 %v1217
    %1744 = vmatpush1.msra.mxu0 %v1216
    %1745 = vmatprep.subr.mxu0 %v1229
    %1746 = vmatpush1.msra.mxu0 %v1228
    %1747 = vmatprep.subr.mxu0 %v1241
    %1748 = vmatpush1.msra.mxu0 %v1240
    %1749 = vmatprep.subr.mxu0 %v1253
    %1750 = vmatpush1.msra.mxu0 %v1252
    %1751 = vmatprep.subr.mxu0 %v1265
    %1752 = vmatpush1.msra.mxu0 %v1264
    %1753 = vmatprep.subr.mxu0 %v1277
    %1754 = vmatpush1.msra.mxu0 %v1276
    %1755 = vmatprep.subr.mxu0 %v1289
    %1756 = vmatpush1.msra.mxu0 %v1288
    %1757 = vmatprep.subr.mxu0 %v1301
    %1758 = vmatpush1.msra.mxu0 %v1300
    %1759 = vmatprep.subr.mxu0 %v1313
    %1760 = vmatpush1.msra.mxu0 %v1312
    %1761 = vmatprep.subr.mxu0 %v1325
    %1762 = vmatpush1.msra.mxu0 %v1324
    %1763 = vmatprep.subr.mxu0 %v1337
    %1764 = vmatpush1.msra.mxu0 %v1336
    %1765 = vmatprep.subr.mxu0 %v1349
    %1766 = vmatpush1.msra.mxu0 %v1348
    %1767 = vmatprep.subr.mxu0 %v1361
    %1768 = vmatpush1.msra.mxu0 %v1360
    %1769 = vmatprep.subr.mxu0 %v1373
    %1770 = vmatpush1.msra.mxu0 %v1372
    %1771 = vmatprep.subr.mxu0 %v1385
    %1772 = vmatpush1.msra.mxu0 %v1384
    %1773 = vmatprep.subr.mxu0 0.0
    %1774 = vmatpush1.msra.mxu0 0.0
    %1775 = vmatprep.subr.mxu0 0.0
    %1776 = vmatpush1.msra.mxu0 0.0
    %1777 = vmatprep.subr.mxu0 0.0
    %1778 = vmatpush1.msra.mxu0 0.0
    %1779 = vmatprep.subr.mxu0 0.0
    %1780 = vmatpush1.msra.mxu0 0.0
    %1781 = vmatprep.subr.mxu0 0.0
    %1782 = vmatpush1.msra.mxu0 0.0
    %1783 = vmatprep.subr.mxu0 0.0
    %1784 = vmatpush1.msra.mxu0 0.0
    %1785 = vmatprep.subr.mxu0 0.0
    %1786 = vmatpush1.msra.mxu0 0.0
    %1787 = vmatprep.subr.mxu0 0.0
    %1788 = vmatpush1.msra.mxu0 0.0
    %1789 = vmatprep.subr.mxu0 0.0
    %1790 = vmatpush1.msra.mxu0 0.0
    %1791 = vmatprep.subr.mxu0 0.0
    %1792 = vmatpush1.msra.mxu0 0.0
    %1793 = vmatprep.subr.mxu0 0.0
    %1794 = vmatpush1.msra.mxu0 0.0
    %1795 = vmatprep.subr.mxu0 0.0
    %1796 = vmatpush1.msra.mxu0 0.0
    %1797 = vmatprep.mubr.f32.mxu0 %v1455
    %1798 = vmatmul.mubr.f32.gmra.mrb[0].mxu0 %v1142
    %v1799 = vpop.f32.mrb[0].mxu0
    %v1800 = vadd.f32 %v1421, %v1799
    %v1801 = vpop.f32.mrb[0].mxu0
    %v1802 = vadd.f32 %v1425, %v1801
    %1803 = vmatprep.mubr.f32.mxu0 %v1458
    %1804 = vmatmul.mubr.f32.gmra.mrb[0].mxu0 %v1144
    %v1805 = vpop.f32.mrb[0].mxu0
    %v1806 = vadd.f32 %v1421, %v1805
    %v1807 = vpop.f32.mrb[0].mxu0
    %v1808 = vadd.f32 %v1425, %v1807
    %1809 = vmatprep.mubr.f32.mxu0 %v1461
    %1810 = vmatmul.mubr.f32.gmra.mrb[0].mxu0 %v1146
    %v1811 = vpop.f32.mrb[0].mxu0
    %v1812 = vadd.f32 %v1421, %v1811
    %v1813 = vpop.f32.mrb[0].mxu0
    %v1814 = vadd.f32 %v1425, %v1813
    %1815 = vmatprep.mubr.f32.mxu0 %v1464
    %1816 = vmatmul.mubr.f32.gmra.mrb[0].mxu0 %v1148
    %v1817 = vpop.f32.mrb[0].mxu0
    %v1818 = vadd.f32 %v1421, %v1817
    %v1819 = vpop.f32.mrb[0].mxu0
    %v1820 = vadd.f32 %v1425, %v1819
    %1821 = vdwg.mxu0
    %1822 = vmatprep.subr.mxu0 %v1159
    %1823 = vmatpush1.msra.mxu0 %v1158
    %1824 = vmatprep.subr.mxu0 %v1171
    %1825 = vmatpush1.msra.mxu0 %v1170
    %1826 = vmatprep.subr.mxu0 %v1183
    %1827 = vmatpush1.msra.mxu0 %v1182
    %1828 = vmatprep.subr.mxu0 %v1195
    %1829 = vmatpush1.msra.mxu0 %v1194
    %1830 = vmatprep.subr.mxu0 %v1207
    %1831 = vmatpush1.msra.mxu0 %v1206
    %1832 = vmatprep.subr.mxu0 %v1219
    %1833 = vmatpush1.msra.mxu0 %v1218
    %1834 = vmatprep.subr.mxu0 %v1231
    %1835 = vmatpush1.msra.mxu0 %v1230
    %1836 = vmatprep.subr.mxu0 %v1243
    %1837 = vmatpush1.msra.mxu0 %v1242
    %1838 = vmatprep.subr.mxu0 %v1255
    %1839 = vmatpush1.msra.mxu0 %v1254
    %1840 = vmatprep.subr.mxu0 %v1267
    %1841 = vmatpush1.msra.mxu0 %v1266
    %1842 = vmatprep.subr.mxu0 %v1279
    %1843 = vmatpush1.msra.mxu0 %v1278
    %1844 = vmatprep.subr.mxu0 %v1291
    %1845 = vmatpush1.msra.mxu0 %v1290
    %1846 = vmatprep.subr.mxu0 %v1303
    %1847 = vmatpush1.msra.mxu0 %v1302
    %1848 = vmatprep.subr.mxu0 %v1315
    %1849 = vmatpush1.msra.mxu0 %v1314
    %1850 = vmatprep.subr.mxu0 %v1327
    %1851 = vmatpush1.msra.mxu0 %v1326
    %1852 = vmatprep.subr.mxu0 %v1339
    %1853 = vmatpush1.msra.mxu0 %v1338
    %1854 = vmatprep.subr.mxu0 %v1351
    %1855 = vmatpush1.msra.mxu0 %v1350
    %1856 = vmatprep.subr.mxu0 %v1363
    %1857 = vmatpush1.msra.mxu0 %v1362
    %1858 = vmatprep.subr.mxu0 %v1375
    %1859 = vmatpush1.msra.mxu0 %v1374
    %1860 = vmatprep.subr.mxu0 %v1387
    %1861 = vmatpush1.msra.mxu0 %v1386
    %1862 = vmatprep.subr.mxu0 0.0
    %1863 = vmatpush1.msra.mxu0 0.0
    %1864 = vmatprep.subr.mxu0 0.0
    %1865 = vmatpush1.msra.mxu0 0.0
    %1866 = vmatprep.subr.mxu0 0.0
    %1867 = vmatpush1.msra.mxu0 0.0
    %1868 = vmatprep.subr.mxu0 0.0
    %1869 = vmatpush1.msra.mxu0 0.0
    %1870 = vmatprep.subr.mxu0 0.0
    %1871 = vmatpush1.msra.mxu0 0.0
    %1872 = vmatprep.subr.mxu0 0.0
    %1873 = vmatpush1.msra.mxu0 0.0
    %1874 = vmatprep.subr.mxu0 0.0
    %1875 = vmatpush1.msra.mxu0 0.0
    %1876 = vmatprep.subr.mxu0 0.0
    %1877 = vmatpush1.msra.mxu0 0.0
    %1878 = vmatprep.subr.mxu0 0.0
    %1879 = vmatpush1.msra.mxu0 0.0
    %1880 = vmatprep.subr.mxu0 0.0
    %1881 = vmatpush1.msra.mxu0 0.0
    %1882 = vmatprep.subr.mxu0 0.0
    %1883 = vmatpush1.msra.mxu0 0.0
    %1884 = vmatprep.subr.mxu0 0.0
    %1885 = vmatpush1.msra.mxu0 0.0
    %1886 = vmatprep.mubr.f32.mxu0 %v1455
    %1887 = vmatmul.mubr.f32.gmra.mrb[0].mxu0 %v1142
    %v1888 = vpop.f32.mrb[0].mxu0
    %v1889 = vadd.f32 %v1429, %v1888
    %v1890 = vpop.f32.mrb[0].mxu0
    %v1891 = vadd.f32 %v1433, %v1890
    %1892 = vmatprep.mubr.f32.mxu0 %v1458
    %1893 = vmatmul.mubr.f32.gmra.mrb[0].mxu0 %v1144
    %v1894 = vpop.f32.mrb[0].mxu0
    %v1895 = vadd.f32 %v1429, %v1894
    %v1896 = vpop.f32.mrb[0].mxu0
    %v1897 = vadd.f32 %v1433, %v1896
    %1898 = vmatprep.mubr.f32.mxu0 %v1461
    %1899 = vmatmul.mubr.f32.gmra.mrb[0].mxu0 %v1146
    %v1900 = vpop.f32.mrb[0].mxu0
    %v1901 = vadd.f32 %v1429, %v1900
    %v1902 = vpop.f32.mrb[0].mxu0
    %v1903 = vadd.f32 %v1433, %v1902
    %1904 = vmatprep.mubr.f32.mxu0 %v1464
    %1905 = vmatmul.mubr.f32.gmra.mrb[0].mxu0 %v1148
    %v1906 = vpop.f32.mrb[0].mxu0
    %v1907 = vadd.f32 %v1429, %v1906
    %v1908 = vpop.f32.mrb[0].mxu0
    %v1909 = vadd.f32 %v1433, %v1908
    %1910 = vdwg.mxu0
    %1911 = vmatprep.subr.mxu0 %v1161
    %1912 = vmatpush1.msra.mxu0 %v1160
    %1913 = vmatprep.subr.mxu0 %v1173
    %1914 = vmatpush1.msra.mxu0 %v1172
    %1915 = vmatprep.subr.mxu0 %v1185
    %1916 = vmatpush1.msra.mxu0 %v1184
    %1917 = vmatprep.subr.mxu0 %v1197
    %1918 = vmatpush1.msra.mxu0 %v1196
    %1919 = vmatprep.subr.mxu0 %v1209
    %1920 = vmatpush1.msra.mxu0 %v1208
    %1921 = vmatprep.subr.mxu0 %v1221
    %1922 = vmatpush1.msra.mxu0 %v1220
    %1923 = vmatprep.subr.mxu0 %v1233
    %1924 = vmatpush1.msra.mxu0 %v1232
    %1925 = vmatprep.subr.mxu0 %v1245
    %1926 = vmatpush1.msra.mxu0 %v1244
    %1927 = vmatprep.subr.mxu0 %v1257
    %1928 = vmatpush1.msra.mxu0 %v1256
    %1929 = vmatprep.subr.mxu0 %v1269
    %1930 = vmatpush1.msra.mxu0 %v1268
    %1931 = vmatprep.subr.mxu0 %v1281
    %1932 = vmatpush1.msra.mxu0 %v1280
    %1933 = vmatprep.subr.mxu0 %v1293
    %1934 = vmatpush1.msra.mxu0 %v1292
    %1935 = vmatprep.subr.mxu0 %v1305
    %1936 = vmatpush1.msra.mxu0 %v1304
    %1937 = vmatprep.subr.mxu0 %v1317
    %1938 = vmatpush1.msra.mxu0 %v1316
    %1939 = vmatprep.subr.mxu0 %v1329
    %1940 = vmatpush1.msra.mxu0 %v1328
    %1941 = vmatprep.subr.mxu0 %v1341
    %1942 = vmatpush1.msra.mxu0 %v1340
    %1943 = vmatprep.subr.mxu0 %v1353
    %1944 = vmatpush1.msra.mxu0 %v1352
    %1945 = vmatprep.subr.mxu0 %v1365
    %1946 = vmatpush1.msra.mxu0 %v1364
    %1947 = vmatprep.subr.mxu0 %v1377
    %1948 = vmatpush1.msra.mxu0 %v1376
    %1949 = vmatprep.subr.mxu0 %v1389
    %1950 = vmatpush1.msra.mxu0 %v1388
    %1951 = vmatprep.subr.mxu0 0.0
    %1952 = vmatpush1.msra.mxu0 0.0
    %1953 = vmatprep.subr.mxu0 0.0
    %1954 = vmatpush1.msra.mxu0 0.0
    %1955 = vmatprep.subr.mxu0 0.0
    %1956 = vmatpush1.msra.mxu0 0.0
    %1957 = vmatprep.subr.mxu0 0.0
    %1958 = vmatpush1.msra.mxu0 0.0
    %1959 = vmatprep.subr.mxu0 0.0
    %1960 = vmatpush1.msra.mxu0 0.0
    %1961 = vmatprep.subr.mxu0 0.0
    %1962 = vmatpush1.msra.mxu0 0.0
    %1963 = vmatprep.subr.mxu0 0.0
    %1964 = vmatpush1.msra.mxu0 0.0
    %1965 = vmatprep.subr.mxu0 0.0
    %1966 = vmatpush1.msra.mxu0 0.0
    %1967 = vmatprep.subr.mxu0 0.0
    %1968 = vmatpush1.msra.mxu0 0.0
    %1969 = vmatprep.subr.mxu0 0.0
    %1970 = vmatpush1.msra.mxu0 0.0
    %1971 = vmatprep.subr.mxu0 0.0
    %1972 = vmatpush1.msra.mxu0 0.0
    %1973 = vmatprep.subr.mxu0 0.0
    %1974 = vmatpush1.msra.mxu0 0.0
    %1975 = vmatprep.mubr.f32.mxu0 %v1455
    %1976 = vmatmul.mubr.f32.gmra.mrb[0].mxu0 %v1142
    %v1977 = vpop.f32.mrb[0].mxu0
    %v1978 = vadd.f32 %v1437, %v1977
    %v1979 = vpop.f32.mrb[0].mxu0
    %v1980 = vadd.f32 %v1441, %v1979
    %1981 = vmatprep.mubr.f32.mxu0 %v1458
    %1982 = vmatmul.mubr.f32.gmra.mrb[0].mxu0 %v1144
    %v1983 = vpop.f32.mrb[0].mxu0
    %v1984 = vadd.f32 %v1437, %v1983
    %v1985 = vpop.f32.mrb[0].mxu0
    %v1986 = vadd.f32 %v1441, %v1985
    %1987 = vmatprep.mubr.f32.mxu0 %v1461
    %1988 = vmatmul.mubr.f32.gmra.mrb[0].mxu0 %v1146
    %v1989 = vpop.f32.mrb[0].mxu0
    %v1990 = vadd.f32 %v1437, %v1989
    %v1991 = vpop.f32.mrb[0].mxu0
    %v1992 = vadd.f32 %v1441, %v1991
    %1993 = vmatprep.mubr.f32.mxu0 %v1464
    %1994 = vmatmul.mubr.f32.gmra.mrb[0].mxu0 %v1148
    %v1995 = vpop.f32.mrb[0].mxu0
    %v1996 = vadd.f32 %v1437, %v1995
    %v1997 = vpop.f32.mrb[0].mxu0
    %v1998 = vadd.f32 %v1441, %v1997
    %1999 = vdwg.mxu0
    %v2000 = vld [vmem:[%s9] sm:$0xff]
    %v2001 = vld [vmem:[%s9 + $0x8] sm:$0xff]
    %v2002 = vld [vmem:[%s9 + $0x10] sm:$0xff]
    %v2003 = vld [vmem:[%s9 + $0x18] sm:$0xff]
    %2004 = vmatprep.subr.mxu0 0.0
    %2005 = vmatpush1.xpose.msra.mxu0 %v1711
    %2006 = vmatprep.subr.mxu0 0.0
    %2007 = vmatpush1.xpose.msra.mxu0 %v1717
    %2008 = vmatprep.subr.mxu0 0.0
    %2009 = vmatpush1.xpose.msra.mxu0 %v1723
    %2010 = vmatprep.subr.mxu0 0.0
    %2011 = vmatpush1.xpose.msra.mxu0 %v1729
    %2012 = vmatprep.subr.mxu0 0.0
    %2013 = vmatpush1.xpose.msra.mxu0 0.0
    %2014 = vmatprep.subr.mxu0 0.0
    %2015 = vmatpush1.xpose.msra.mxu0 0.0
    %2016 = vmatprep.subr.mxu0 0.0
    %2017 = vmatpush1.xpose.msra.mxu0 0.0
    %2018 = vmatprep.subr.mxu0 0.0
    %2019 = vmatpush1.xpose.msra.mxu0 0.0
    %2020 = vmatprep.subr.mxu0 0.0
    %2021 = vmatpush1.xpose.msra.mxu0 0.0
    %2022 = vmatprep.subr.mxu0 0.0
    %2023 = vmatpush1.xpose.msra.mxu0 0.0
    %2024 = vmatprep.subr.mxu0 0.0
    %2025 = vmatpush1.xpose.msra.mxu0 0.0
    %2026 = vmatprep.subr.mxu0 0.0
    %2027 = vmatpush1.xpose.msra.mxu0 0.0
    %2028 = vmatprep.subr.mxu0 0.0
    %2029 = vmatpush1.xpose.msra.mxu0 0.0
    %2030 = vmatprep.subr.mxu0 0.0
    %2031 = vmatpush1.xpose.msra.mxu0 0.0
    %2032 = vmatprep.subr.mxu0 0.0
    %2033 = vmatpush1.xpose.msra.mxu0 0.0
    %2034 = vmatprep.subr.mxu0 0.0
    %2035 = vmatpush1.xpose.msra.mxu0 0.0
    %2036 = vmatprep.subr.mxu0 0.0
    %2037 = vmatpush1.xpose.msra.mxu0 0.0
    %2038 = vmatprep.subr.mxu0 0.0
    %2039 = vmatpush1.xpose.msra.mxu0 0.0
    %2040 = vmatprep.subr.mxu0 0.0
    %2041 = vmatpush1.xpose.msra.mxu0 0.0
    %2042 = vmatprep.subr.mxu0 0.0
    %2043 = vmatpush1.xpose.msra.mxu0 0.0
    %2044 = vmatprep.subr.mxu0 0.0
    %2045 = vmatpush1.xpose.msra.mxu0 0.0
    %2046 = vmatprep.subr.mxu0 0.0
    %2047 = vmatpush1.xpose.msra.mxu0 0.0
    %2048 = vmatprep.subr.mxu0 0.0
    %2049 = vmatpush1.xpose.msra.mxu0 0.0
    %2050 = vmatprep.subr.mxu0 0.0
    %2051 = vmatpush1.xpose.msra.mxu0 0.0
    %2052 = vmatprep.subr.mxu0 0.0
    %2053 = vmatpush1.xpose.msra.mxu0 0.0
    %2054 = vmatprep.subr.mxu0 0.0
    %2055 = vmatpush1.xpose.msra.mxu0 0.0
    %2056 = vmatprep.subr.mxu0 0.0
    %2057 = vmatpush1.xpose.msra.mxu0 0.0
    %2058 = vmatprep.subr.mxu0 0.0
    %2059 = vmatpush1.xpose.msra.mxu0 0.0
    %2060 = vmatprep.subr.mxu0 0.0
    %2061 = vmatpush1.xpose.msra.mxu0 0.0
    %2062 = vmatprep.subr.mxu0 0.0
    %2063 = vmatpush1.xpose.msra.mxu0 0.0
    %2064 = vmatprep.subr.mxu0 0.0
    %2065 = vmatpush1.xpose.msra.mxu0 0.0
    %2066 = vmatprep.subr.mxu0 0.0
    %2067 = vmatpush1.xpose.msra.mxu0 0.0
    %2068 = vmatprep.mubr.f32.mxu0 0.0
    %2069 = vmatmul.mubr.f32.gmra.mrb[0].mxu0 %v1533
    %v2070 = vpop.f32.mrb[0].mxu0
    %v2071 = vadd.f32 0.0, %v2070
    %v2072 = vpop.f32.mrb[0].mxu0
    %2073 = vmatprep.mubr.f32.mxu0 0.0
    %2074 = vmatmul.mubr.f32.gmra.mrb[0].mxu0 %v1539
    %v2075 = vpop.f32.mrb[0].mxu0
    %v2076 = vadd.f32 0.0, %v2075
    %v2077 = vpop.f32.mrb[0].mxu0
    %2078 = vmatprep.mubr.f32.mxu0 0.0
    %2079 = vmatmul.mubr.f32.gmra.mrb[0].mxu0 %v1545
    %v2080 = vpop.f32.mrb[0].mxu0
    %v2081 = vadd.f32 0.0, %v2080
    %v2082 = vpop.f32.mrb[0].mxu0
    %2083 = vmatprep.mubr.f32.mxu0 0.0
    %2084 = vmatmul.mubr.f32.gmra.mrb[0].mxu0 %v1551
    %v2085 = vpop.f32.mrb[0].mxu0
    %v2086 = vadd.f32 0.0, %v2085
    %v2087 = vpop.f32.mrb[0].mxu0
    %2088 = vdwg.mxu0
    %v2089 = vmul.f32 %v2071, 0.15811388
    %v2090 = vmul.f32 %v2076, 0.15811388
    %v2091 = vmul.f32 %v2081, 0.15811388
    %v2092 = vmul.f32 %v2086, 0.15811388
    %v2093 = vadd.f32 %v2089, %v2000
    %v2094 = vadd.f32 %v2090, %v2001
    %v2095 = vadd.f32 %v2091, %v2002
    %v2096 = vadd.f32 %v2092, %v2003
    %v2097 = vsel %vm1090, %v2093, -inf
    %2098 = vmax.xlane.f32.xlu0 %v2097
    %v2099 = vpop.xlane.xlu0 %2098
    %v2100 = vsel %vm1090, %v2094, -inf
    %2101 = vmax.xlane.f32.xlu0 %v2100
    %v2102 = vpop.xlane.xlu0 %2101
    %v2103 = vsel %vm1090, %v2095, -inf
    %2104 = vmax.xlane.f32.xlu0 %v2103
    %v2105 = vpop.xlane.xlu0 %2104
    %v2106 = vsel %vm1090, %v2096, -inf
    %2107 = vmax.xlane.f32.xlu0 %v2106
    %v2108 = vpop.xlane.xlu0 %2107
    %v2109 = vsub.f32 %v2093, %v2099
    %v2110 = vsub.f32 %v2094, %v2102
    %v2111 = vsub.f32 %v2095, %v2105
    %v2112 = vsub.f32 %v2096, %v2108
    %v2113 = vmul.f32 %v2109, 1.442695
    %v2114 = vpow.pop %v2113
    %v2115 = vmul.f32 %v2110, 1.442695
    %v2116 = vpow.pop %v2115
    %v2117 = vmul.f32 %v2111, 1.442695
    %v2118 = vpow.pop %v2117
    %v2119 = vmul.f32 %v2112, 1.442695
    %v2120 = vpow.pop %v2119
    %v2121 = vsel %vm1090, %v2114, 0.0
    %2122 = vadd.xlane.f32.xlu0 %v2121
    %v2123 = vpop.xlane.xlu0 %2122
    %v2124 = vsel %vm1090, %v2116, 0.0
    %2125 = vadd.xlane.f32.xlu0 %v2124
    %v2126 = vpop.xlane.xlu0 %2125
    %v2127 = vsel %vm1090, %v2118, 0.0
    %2128 = vadd.xlane.f32.xlu0 %v2127
    %v2129 = vpop.xlane.xlu0 %2128
    %v2130 = vsel %vm1090, %v2120, 0.0
    %2131 = vadd.xlane.f32.xlu0 %v2130
    %v2132 = vpop.xlane.xlu0 %2131
    %v2133 = vrcp.pop %v2123
    %v2134 = vrcp.pop %v2126
    %v2135 = vrcp.pop %v2129
    %v2136 = vrcp.pop %v2132
    %v2137 = vmul.f32 %v2114, %v2133
    %v2138 = vmul.f32 %v2116, %v2134
    %v2139 = vmul.f32 %v2118, %v2135
    %v2140 = vmul.f32 %v2120, %v2136
    %v2142 = vsel %vm1090, %v2137, 0
    %v2145 = vsel %vm1090, %v2138, 0
    %v2148 = vsel %vm1090, %v2139, 0
    %v2151 = vsel %vm1090, %v2140, 0
    %2153 = vmatprep.subr.mxu0 0.0
    %2154 = vmatpush1.msra.mxu0 %v1889
    %2155 = vmatprep.subr.mxu0 0.0
    %2156 = vmatpush1.msra.mxu0 %v1895
    %2157 = vmatprep.subr.mxu0 0.0
    %2158 = vmatpush1.msra.mxu0 %v1901
    %2159 = vmatprep.subr.mxu0 0.0
    %2160 = vmatpush1.msra.mxu0 %v1907
    %2161 = vmatprep.subr.mxu0 0.0
    %2162 = vmatpush1.msra.mxu0 0.0
    %2163 = vmatprep.subr.mxu0 0.0
    %2164 = vmatpush1.msra.mxu0 0.0
    %2165 = vmatprep.subr.mxu0 0.0
    %2166 = vmatpush1.msra.mxu0 0.0
    %2167 = vmatprep.subr.mxu0 0.0
    %2168 = vmatpush1.msra.mxu0 0.0
    %2169 = vmatprep.subr.mxu0 0.0
    %2170 = vmatpush1.msra.mxu0 0.0
    %2171 = vmatprep.subr.mxu0 0.0
    %2172 = vmatpush1.msra.mxu0 0.0
    %2173 = vmatprep.subr.mxu0 0.0
    %2174 = vmatpush1.msra.mxu0 0.0
    %2175 = vmatprep.subr.mxu0 0.0
    %2176 = vmatpush1.msra.mxu0 0.0
    %2177 = vmatprep.subr.mxu0 0.0
    %2178 = vmatpush1.msra.mxu0 0.0
    %2179 = vmatprep.subr.mxu0 0.0
    %2180 = vmatpush1.msra.mxu0 0.0
    %2181 = vmatprep.subr.mxu0 0.0
    %2182 = vmatpush1.msra.mxu0 0.0
    %2183 = vmatprep.subr.mxu0 0.0
    %2184 = vmatpush1.msra.mxu0 0.0
    %2185 = vmatprep.subr.mxu0 0.0
    %2186 = vmatpush1.msra.mxu0 0.0
    %2187 = vmatprep.subr.mxu0 0.0
    %2188 = vmatpush1.msra.mxu0 0.0
    %2189 = vmatprep.subr.mxu0 0.0
    %2190 = vmatpush1.msra.mxu0 0.0
    %2191 = vmatprep.subr.mxu0 0.0
    %2192 = vmatpush1.msra.mxu0 0.0
    %2193 = vmatprep.subr.mxu0 0.0
    %2194 = vmatpush1.msra.mxu0 0.0
    %2195 = vmatprep.subr.mxu0 0.0
    %2196 = vmatpush1.msra.mxu0 0.0
    %2197 = vmatprep.subr.mxu0 0.0
    %2198 = vmatpush1.msra.mxu0 0.0
    %2199 = vmatprep.subr.mxu0 0.0
    %2200 = vmatpush1.msra.mxu0 0.0
    %2201 = vmatprep.subr.mxu0 0.0
    %2202 = vmatpush1.msra.mxu0 0.0
    %2203 = vmatprep.subr.mxu0 0.0
    %2204 = vmatpush1.msra.mxu0 0.0
    %2205 = vmatprep.subr.mxu0 0.0
    %2206 = vmatpush1.msra.mxu0 0.0
    %2207 = vmatprep.subr.mxu0 0.0
    %2208 = vmatpush1.msra.mxu0 0.0
    %2209 = vmatprep.subr.mxu0 0.0
    %2210 = vmatpush1.msra.mxu0 0.0
    %2211 = vmatprep.subr.mxu0 0.0
    %2212 = vmatpush1.msra.mxu0 0.0
    %2213 = vmatprep.subr.mxu0 0.0
    %2214 = vmatpush1.msra.mxu0 0.0
    %2215 = vmatprep.subr.mxu0 0.0
    %2216 = vmatpush1.msra.mxu0 0.0
    %2217 = vmatprep.mubr.f32.mxu0 0.0
    %2218 = vmatmul.mubr.f32.gmra.mrb[0].mxu0 %v2142
    %v2219 = vpop.f32.mrb[0].mxu0
    %v2220 = vadd.f32 0.0, %v2219
    %v2221 = vpop.f32.mrb[0].mxu0
    %2222 = vmatprep.mubr.f32.mxu0 0.0
    %2223 = vmatmul.mubr.f32.gmra.mrb[0].mxu0 %v2145
    %v2224 = vpop.f32.mrb[0].mxu0
    %v2225 = vadd.f32 0.0, %v2224
    %v2226 = vpop.f32.mrb[0].mxu0
    %2227 = vmatprep.mubr.f32.mxu0 0.0
    %2228 = vmatmul.mubr.f32.gmra.mrb[0].mxu0 %v2148
    %v2229 = vpop.f32.mrb[0].mxu0
    %v2230 = vadd.f32 0.0, %v2229
    %v2231 = vpop.f32.mrb[0].mxu0
    %2232 = vmatprep.mubr.f32.mxu0 0.0
    %2233 = vmatmul.mubr.f32.gmra.mrb[0].mxu0 %v2151
    %v2234 = vpop.f32.mrb[0].mxu0
    %v2235 = vadd.f32 0.0, %v2234
    %v2236 = vpop.f32.mrb[0].mxu0
    %2237 = vdwg.mxu0
    %v2238 = vld [vmem:[%s12] sm:$0xff]
    %v2239 = vld [vmem:[%s12 + $0x8] sm:$0xff]
    %v2240 = vld [vmem:[%s12 + $0x10] sm:$0xff]
    %v2241 = vld [vmem:[%s12 + $0x18] sm:$0xff]
    %v2242 = vld [vmem:[%s12 + $0x20] sm:$0xff]
    %v2243 = vld [vmem:[%s12 + $0x28] sm:$0xff]
    %v2244 = vld [vmem:[%s12 + $0x30] sm:$0xff]
    %v2245 = vld [vmem:[%s12 + $0x38] sm:$0xff]
    %v2246 = vld [vmem:[%s12 + $0x40] sm:$0xff]
    %v2247 = vld [vmem:[%s12 + $0x48] sm:$0xff]
    %v2248 = vld [vmem:[%s12 + $0x50] sm:$0xff]
    %v2249 = vld [vmem:[%s12 + $0x58] sm:$0xff]
    %v2250 = vld [vmem:[%s12 + $0x60] sm:$0xff]
    %v2251 = vld [vmem:[%s12 + $0x68] sm:$0xff]
    %v2252 = vld [vmem:[%s12 + $0x70] sm:$0xff]
    %v2253 = vld [vmem:[%s12 + $0x78] sm:$0xff]
    %v2254 = vld [vmem:[%s12 + $0x80] sm:$0xff]
    %v2255 = vld [vmem:[%s12 + $0x88] sm:$0xff]
    %v2256 = vld [vmem:[%s12 + $0x90] sm:$0xff]
    %v2257 = vld [vmem:[%s12 + $0x98] sm:$0xff]
    %v2258 = vld [vmem:[%s12 + $0xa0] sm:$0xff]
    %v2259 = vld [vmem:[%s12 + $0xa8] sm:$0xff]
    %v2260 = vld [vmem:[%s12 + $0xb0] sm:$0xff]
    %v2261 = vld [vmem:[%s12 + $0xb8] sm:$0xff]
    %v2262 = vld [vmem:[%s12 + $0xc0] sm:$0xff]
    %v2263 = vld [vmem:[%s12 + $0xc8] sm:$0xff]
    %v2264 = vld [vmem:[%s12 + $0xd0] sm:$0xff]
    %v2265 = vld [vmem:[%s12 + $0xd8] sm:$0xff]
    %v2266 = vld [vmem:[%s12 + $0xe0] sm:$0xff]
    %v2267 = vld [vmem:[%s12 + $0xe8] sm:$0xff]
    %v2268 = vld [vmem:[%s12 + $0xf0] sm:$0xff]
    %v2269 = vld [vmem:[%s12 + $0xf8] sm:$0xff]
    %2270 = vmatprep.subr.mxu0 0.0
    %2271 = vmatpush1.xpose.msra.mxu0 %v1713
    %2272 = vmatprep.subr.mxu0 0.0
    %2273 = vmatpush1.xpose.msra.mxu0 %v1719
    %2274 = vmatprep.subr.mxu0 0.0
    %2275 = vmatpush1.xpose.msra.mxu0 %v1725
    %2276 = vmatprep.subr.mxu0 0.0
    %2277 = vmatpush1.xpose.msra.mxu0 %v1731
    %2278 = vmatprep.subr.mxu0 0.0
    %2279 = vmatpush1.xpose.msra.mxu0 0.0
    %2280 = vmatprep.subr.mxu0 0.0
    %2281 = vmatpush1.xpose.msra.mxu0 0.0
    %2282 = vmatprep.subr.mxu0 0.0
    %2283 = vmatpush1.xpose.msra.mxu0 0.0
    %2284 = vmatprep.subr.mxu0 0.0
    %2285 = vmatpush1.xpose.msra.mxu0 0.0
    %2286 = vmatprep.subr.mxu0 0.0
    %2287 = vmatpush1.xpose.msra.mxu0 0.0
    %2288 = vmatprep.subr.mxu0 0.0
    %2289 = vmatpush1.xpose.msra.mxu0 0.0
    %2290 = vmatprep.subr.mxu0 0.0
    %2291 = vmatpush1.xpose.msra.mxu0 0.0
    %2292 = vmatprep.subr.mxu0 0.0
    %2293 = vmatpush1.xpose.msra.mxu0 0.0
    %2294 = vmatprep.subr.mxu0 0.0
    %2295 = vmatpush1.xpose.msra.mxu0 0.0
    %2296 = vmatprep.subr.mxu0 0.0
    %2297 = vmatpush1.xpose.msra.mxu0 0.0
    %2298 = vmatprep.subr.mxu0 0.0
    %2299 = vmatpush1.xpose.msra.mxu0 0.0
    %2300 = vmatprep.subr.mxu0 0.0
    %2301 = vmatpush1.xpose.msra.mxu0 0.0
    %2302 = vmatprep.subr.mxu0 0.0
    %2303 = vmatpush1.xpose.msra.mxu0 0.0
    %2304 = vmatprep.subr.mxu0 0.0
    %2305 = vmatpush1.xpose.msra.mxu0 0.0
    %2306 = vmatprep.subr.mxu0 0.0
    %2307 = vmatpush1.xpose.msra.mxu0 0.0
    %2308 = vmatprep.subr.mxu0 0.0
    %2309 = vmatpush1.xpose.msra.mxu0 0.0
    %2310 = vmatprep.subr.mxu0 0.0
    %2311 = vmatpush1.xpose.msra.mxu0 0.0
    %2312 = vmatprep.subr.mxu0 0.0
    %2313 = vmatpush1.xpose.msra.mxu0 0.0
    %2314 = vmatprep.subr.mxu0 0.0
    %2315 = vmatpush1.xpose.msra.mxu0 0.0
    %2316 = vmatprep.subr.mxu0 0.0
    %2317 = vmatpush1.xpose.msra.mxu0 0.0
    %2318 = vmatprep.subr.mxu0 0.0
    %2319 = vmatpush1.xpose.msra.mxu0 0.0
    %2320 = vmatprep.subr.mxu0 0.0
    %2321 = vmatpush1.xpose.msra.mxu0 0.0
    %2322 = vmatprep.subr.mxu0 0.0
    %2323 = vmatpush1.xpose.msra.mxu0 0.0
    %2324 = vmatprep.subr.mxu0 0.0
    %2325 = vmatpush1.xpose.msra.mxu0 0.0
    %2326 = vmatprep.subr.mxu0 0.0
    %2327 = vmatpush1.xpose.msra.mxu0 0.0
    %2328 = vmatprep.subr.mxu0 0.0
    %2329 = vmatpush1.xpose.msra.mxu0 0.0
    %2330 = vmatprep.subr.mxu0 0.0
    %2331 = vmatpush1.xpose.msra.mxu0 0.0
    %2332 = vmatprep.subr.mxu0 0.0
    %2333 = vmatpush1.xpose.msra.mxu0 0.0
    %2334 = vmatprep.mubr.f32.mxu0 0.0
    %2335 = vmatmul.mubr.f32.gmra.mrb[0].mxu0 %v1535
    %v2336 = vpop.f32.mrb[0].mxu0
    %v2337 = vadd.f32 0.0, %v2336
    %v2338 = vpop.f32.mrb[0].mxu0
    %2339 = vmatprep.mubr.f32.mxu0 0.0
    %2340 = vmatmul.mubr.f32.gmra.mrb[0].mxu0 %v1541
    %v2341 = vpop.f32.mrb[0].mxu0
    %v2342 = vadd.f32 0.0, %v2341
    %v2343 = vpop.f32.mrb[0].mxu0
    %2344 = vmatprep.mubr.f32.mxu0 0.0
    %2345 = vmatmul.mubr.f32.gmra.mrb[0].mxu0 %v1547
    %v2346 = vpop.f32.mrb[0].mxu0
    %v2347 = vadd.f32 0.0, %v2346
    %v2348 = vpop.f32.mrb[0].mxu0
    %2349 = vmatprep.mubr.f32.mxu0 0.0
    %2350 = vmatmul.mubr.f32.gmra.mrb[0].mxu0 %v1553
    %v2351 = vpop.f32.mrb[0].mxu0
    %v2352 = vadd.f32 0.0, %v2351
    %v2353 = vpop.f32.mrb[0].mxu0
    %2354 = vdwg.mxu0
    %v2355 = vmul.f32 %v2337, 0.15811388
    %v2356 = vmul.f32 %v2342, 0.15811388
    %v2357 = vmul.f32 %v2347, 0.15811388
    %v2358 = vmul.f32 %v2352, 0.15811388
    %v2359 = vadd.f32 %v2355, %v2000
    %v2360 = vadd.f32 %v2356, %v2001
    %v2361 = vadd.f32 %v2357, %v2002
    %v2362 = vadd.f32 %v2358, %v2003
    %v2363 = vsel %vm1090, %v2359, -inf
    %2364 = vmax.xlane.f32.xlu0 %v2363
    %v2365 = vpop.xlane.xlu0 %2364
    %v2366 = vsel %vm1090, %v2360, -inf
    %2367 = vmax.xlane.f32.xlu0 %v2366
    %v2368 = vpop.xlane.xlu0 %2367
    %v2369 = vsel %vm1090, %v2361, -inf
    %2370 = vmax.xlane.f32.xlu0 %v2369
    %v2371 = vpop.xlane.xlu0 %2370
    %v2372 = vsel %vm1090, %v2362, -inf
    %2373 = vmax.xlane.f32.xlu0 %v2372
    %v2374 = vpop.xlane.xlu0 %2373
    %v2375 = vsub.f32 %v2359, %v2365
    %v2376 = vsub.f32 %v2360, %v2368
    %v2377 = vsub.f32 %v2361, %v2371
    %v2378 = vsub.f32 %v2362, %v2374
    %v2379 = vmul.f32 %v2375, 1.442695
    %v2380 = vpow.pop %v2379
    %v2381 = vmul.f32 %v2376, 1.442695
    %v2382 = vpow.pop %v2381
    %v2383 = vmul.f32 %v2377, 1.442695
    %v2384 = vpow.pop %v2383
    %v2385 = vmul.f32 %v2378, 1.442695
    %v2386 = vpow.pop %v2385
    %v2387 = vsel %vm1090, %v2380, 0.0
    %2388 = vadd.xlane.f32.xlu0 %v2387
    %v2389 = vpop.xlane.xlu0 %2388
    %v2390 = vsel %vm1090, %v2382, 0.0
    %2391 = vadd.xlane.f32.xlu0 %v2390
    %v2392 = vpop.xlane.xlu0 %2391
    %v2393 = vsel %vm1090, %v2384, 0.0
    %2394 = vadd.xlane.f32.xlu0 %v2393
    %v2395 = vpop.xlane.xlu0 %2394
    %v2396 = vsel %vm1090, %v2386, 0.0
    %2397 = vadd.xlane.f32.xlu0 %v2396
    %v2398 = vpop.xlane.xlu0 %2397
    %v2399 = vrcp.pop %v2389
    %v2400 = vrcp.pop %v2392
    %v2401 = vrcp.pop %v2395
    %v2402 = vrcp.pop %v2398
    %v2403 = vmul.f32 %v2380, %v2399
    %v2404 = vmul.f32 %v2382, %v2400
    %v2405 = vmul.f32 %v2384, %v2401
    %v2406 = vmul.f32 %v2386, %v2402
    %v2408 = vsel %vm1090, %v2403, 0
    %v2411 = vsel %vm1090, %v2404, 0
    %v2414 = vsel %vm1090, %v2405, 0
    %v2417 = vsel %vm1090, %v2406, 0
    %2419 = vmatprep.subr.mxu0 0.0
    %2420 = vmatpush1.msra.mxu0 %v1891
    %2421 = vmatprep.subr.mxu0 0.0
    %2422 = vmatpush1.msra.mxu0 %v1897
    %2423 = vmatprep.subr.mxu0 0.0
    %2424 = vmatpush1.msra.mxu0 %v1903
    %2425 = vmatprep.subr.mxu0 0.0
    %2426 = vmatpush1.msra.mxu0 %v1909
    %2427 = vmatprep.subr.mxu0 0.0
    %2428 = vmatpush1.msra.mxu0 0.0
    %2429 = vmatprep.subr.mxu0 0.0
    %2430 = vmatpush1.msra.mxu0 0.0
    %2431 = vmatprep.subr.mxu0 0.0
    %2432 = vmatpush1.msra.mxu0 0.0
    %2433 = vmatprep.subr.mxu0 0.0
    %2434 = vmatpush1.msra.mxu0 0.0
    %2435 = vmatprep.subr.mxu0 0.0
    %2436 = vmatpush1.msra.mxu0 0.0
    %2437 = vmatprep.subr.mxu0 0.0
    %2438 = vmatpush1.msra.mxu0 0.0
    %2439 = vmatprep.subr.mxu0 0.0
    %2440 = vmatpush1.msra.mxu0 0.0
    %2441 = vmatprep.subr.mxu0 0.0
    %2442 = vmatpush1.msra.mxu0 0.0
    %2443 = vmatprep.subr.mxu0 0.0
    %2444 = vmatpush1.msra.mxu0 0.0
    %2445 = vmatprep.subr.mxu0 0.0
    %2446 = vmatpush1.msra.mxu0 0.0
    %2447 = vmatprep.subr.mxu0 0.0
    %2448 = vmatpush1.msra.mxu0 0.0
    %2449 = vmatprep.subr.mxu0 0.0
    %2450 = vmatpush1.msra.mxu0 0.0
    %2451 = vmatprep.subr.mxu0 0.0
    %2452 = vmatpush1.msra.mxu0 0.0
    %2453 = vmatprep.subr.mxu0 0.0
    %2454 = vmatpush1.msra.mxu0 0.0
    %2455 = vmatprep.subr.mxu0 0.0
    %2456 = vmatpush1.msra.mxu0 0.0
    %2457 = vmatprep.subr.mxu0 0.0
    %2458 = vmatpush1.msra.mxu0 0.0
    %2459 = vmatprep.subr.mxu0 0.0
    %2460 = vmatpush1.msra.mxu0 0.0
    %2461 = vmatprep.subr.mxu0 0.0
    %2462 = vmatpush1.msra.mxu0 0.0
    %2463 = vmatprep.subr.mxu0 0.0
    %2464 = vmatpush1.msra.mxu0 0.0
    %2465 = vmatprep.subr.mxu0 0.0
    %2466 = vmatpush1.msra.mxu0 0.0
    %2467 = vmatprep.subr.mxu0 0.0
    %2468 = vmatpush1.msra.mxu0 0.0
    %2469 = vmatprep.subr.mxu0 0.0
    %2470 = vmatpush1.msra.mxu0 0.0
    %2471 = vmatprep.subr.mxu0 0.0
    %2472 = vmatpush1.msra.mxu0 0.0
    %2473 = vmatprep.subr.mxu0 0.0
    %2474 = vmatpush1.msra.mxu0 0.0
    %2475 = vmatprep.subr.mxu0 0.0
    %2476 = vmatpush1.msra.mxu0 0.0
    %2477 = vmatprep.subr.mxu0 0.0
    %2478 = vmatpush1.msra.mxu0 0.0
    %2479 = vmatprep.subr.mxu0 0.0
    %2480 = vmatpush1.msra.mxu0 0.0
    %2481 = vmatprep.subr.mxu0 0.0
    %2482 = vmatpush1.msra.mxu0 0.0
    %2483 = vmatprep.mubr.f32.mxu0 0.0
    %2484 = vmatmul.mubr.f32.gmra.mrb[0].mxu0 %v2408
    %v2485 = vpop.f32.mrb[0].mxu0
    %v2486 = vadd.f32 0.0, %v2485
    %v2487 = vpop.f32.mrb[0].mxu0
    %2488 = vmatprep.mubr.f32.mxu0 0.0
    %2489 = vmatmul.mubr.f32.gmra.mrb[0].mxu0 %v2411
    %v2490 = vpop.f32.mrb[0].mxu0
    %v2491 = vadd.f32 0.0, %v2490
    %v2492 = vpop.f32.mrb[0].mxu0
    %2493 = vmatprep.mubr.f32.mxu0 0.0
    %2494 = vmatmul.mubr.f32.gmra.mrb[0].mxu0 %v2414
    %v2495 = vpop.f32.mrb[0].mxu0
    %v2496 = vadd.f32 0.0, %v2495
    %v2497 = vpop.f32.mrb[0].mxu0
    %2498 = vmatprep.mubr.f32.mxu0 0.0
    %2499 = vmatmul.mubr.f32.gmra.mrb[0].mxu0 %v2417
    %v2500 = vpop.f32.mrb[0].mxu0
    %v2501 = vadd.f32 0.0, %v2500
    %v2502 = vpop.f32.mrb[0].mxu0
    %2503 = vdwg.mxu0
    %v2504 = vld [vmem:[%s12 + $0x100] sm:$0xff]
    %v2505 = vld [vmem:[%s12 + $0x108] sm:$0xff]
    %v2506 = vld [vmem:[%s12 + $0x110] sm:$0xff]
    %v2507 = vld [vmem:[%s12 + $0x118] sm:$0xff]
    %v2508 = vld [vmem:[%s12 + $0x120] sm:$0xff]
    %v2509 = vld [vmem:[%s12 + $0x128] sm:$0xff]
    %v2510 = vld [vmem:[%s12 + $0x130] sm:$0xff]
    %v2511 = vld [vmem:[%s12 + $0x138] sm:$0xff]
    %v2512 = vld [vmem:[%s12 + $0x140] sm:$0xff]
    %v2513 = vld [vmem:[%s12 + $0x148] sm:$0xff]
    %v2514 = vld [vmem:[%s12 + $0x150] sm:$0xff]
    %v2515 = vld [vmem:[%s12 + $0x158] sm:$0xff]
    %v2516 = vld [vmem:[%s12 + $0x160] sm:$0xff]
    %v2517 = vld [vmem:[%s12 + $0x168] sm:$0xff]
    %v2518 = vld [vmem:[%s12 + $0x170] sm:$0xff]
    %v2519 = vld [vmem:[%s12 + $0x178] sm:$0xff]
    %v2520 = vld [vmem:[%s12 + $0x180] sm:$0xff]
    %v2521 = vld [vmem:[%s12 + $0x188] sm:$0xff]
    %v2522 = vld [vmem:[%s12 + $0x190] sm:$0xff]
    %v2523 = vld [vmem:[%s12 + $0x198] sm:$0xff]
    %v2524 = vld [vmem:[%s12 + $0x1a0] sm:$0xff]
    %v2525 = vld [vmem:[%s12 + $0x1a8] sm:$0xff]
    %v2526 = vld [vmem:[%s12 + $0x1b0] sm:$0xff]
    %v2527 = vld [vmem:[%s12 + $0x1b8] sm:$0xff]
    %v2528 = vld [vmem:[%s12 + $0x1c0] sm:$0xff]
    %v2529 = vld [vmem:[%s12 + $0x1c8] sm:$0xff]
    %v2530 = vld [vmem:[%s12 + $0x1d0] sm:$0xff]
    %v2531 = vld [vmem:[%s12 + $0x1d8] sm:$0xff]
    %v2532 = vld [vmem:[%s12 + $0x1e0] sm:$0xff]
    %v2533 = vld [vmem:[%s12 + $0x1e8] sm:$0xff]
    %v2534 = vld [vmem:[%s12 + $0x1f0] sm:$0xff]
    %v2535 = vld [vmem:[%s12 + $0x1f8] sm:$0xff]
    %2536 = vmatprep.subr.mxu0 %v2505
    %2537 = vmatpush1.msra.mxu0 %v2504
    %2538 = vmatprep.subr.mxu0 %v2507
    %2539 = vmatpush1.msra.mxu0 %v2506
    %2540 = vmatprep.subr.mxu0 %v2509
    %2541 = vmatpush1.msra.mxu0 %v2508
    %2542 = vmatprep.subr.mxu0 %v2511
    %2543 = vmatpush1.msra.mxu0 %v2510
    %2544 = vmatprep.subr.mxu0 %v2513
    %2545 = vmatpush1.msra.mxu0 %v2512
    %2546 = vmatprep.subr.mxu0 %v2515
    %2547 = vmatpush1.msra.mxu0 %v2514
    %2548 = vmatprep.subr.mxu0 %v2517
    %2549 = vmatpush1.msra.mxu0 %v2516
    %2550 = vmatprep.subr.mxu0 %v2519
    %2551 = vmatpush1.msra.mxu0 %v2518
    %2552 = vmatprep.subr.mxu0 %v2521
    %2553 = vmatpush1.msra.mxu0 %v2520
    %2554 = vmatprep.subr.mxu0 %v2523
    %2555 = vmatpush1.msra.mxu0 %v2522
    %2556 = vmatprep.subr.mxu0 %v2525
    %2557 = vmatpush1.msra.mxu0 %v2524
    %2558 = vmatprep.subr.mxu0 %v2527
    %2559 = vmatpush1.msra.mxu0 %v2526
    %2560 = vmatprep.subr.mxu0 %v2529
    %2561 = vmatpush1.msra.mxu0 %v2528
    %2562 = vmatprep.subr.mxu0 %v2531
    %2563 = vmatpush1.msra.mxu0 %v2530
    %2564 = vmatprep.subr.mxu0 %v2533
    %2565 = vmatpush1.msra.mxu0 %v2532
    %2566 = vmatprep.subr.mxu0 %v2535
    %2567 = vmatpush1.msra.mxu0 %v2534
    %2568 = vmatprep.subr.mxu0 0.0
    %2569 = vmatpush1.msra.mxu0 0.0
    %2570 = vmatprep.subr.mxu0 0.0
    %2571 = vmatpush1.msra.mxu0 0.0
    %2572 = vmatprep.subr.mxu0 0.0
    %2573 = vmatpush1.msra.mxu0 0.0
    %2574 = vmatprep.subr.mxu0 0.0
    %2575 = vmatpush1.msra.mxu0 0.0
    %2576 = vmatprep.subr.mxu0 0.0
    %2577 = vmatpush1.msra.mxu0 0.0
    %2578 = vmatprep.subr.mxu0 0.0
    %2579 = vmatpush1.msra.mxu0 0.0
    %2580 = vmatprep.subr.mxu0 0.0
    %2581 = vmatpush1.msra.mxu0 0.0
    %2582 = vmatprep.subr.mxu0 0.0
    %2583 = vmatpush1.msra.mxu0 0.0
    %2584 = vmatprep.subr.mxu0 0.0
    %2585 = vmatpush1.msra.mxu0 0.0
    %2586 = vmatprep.subr.mxu0 0.0
    %2587 = vmatpush1.msra.mxu0 0.0
    %2588 = vmatprep.subr.mxu0 0.0
    %2589 = vmatpush1.msra.mxu0 0.0
    %2590 = vmatprep.subr.mxu0 0.0
    %2591 = vmatpush1.msra.mxu0 0.0
    %2592 = vmatprep.subr.mxu0 0.0
    %2593 = vmatpush1.msra.mxu0 0.0
    %2594 = vmatprep.subr.mxu0 0.0
    %2595 = vmatpush1.msra.mxu0 0.0
    %2596 = vmatprep.subr.mxu0 0.0
    %2597 = vmatpush1.msra.mxu0 0.0
    %2598 = vmatprep.subr.mxu0 0.0
    %2599 = vmatpush1.msra.mxu0 0.0
    %2600 = vmatprep.mubr.f32.mxu0 0.0
    %2601 = vmatmul.mubr.f32.gmra.mrb[0].mxu0 %v2486
    %v2602 = vpop.f32.mrb[0].mxu0
    %v2603 = vadd.f32 0.0, %v2602
    %v2604 = vpop.f32.mrb[0].mxu0
    %v2605 = vadd.f32 0.0, %v2604
    %2606 = vmatprep.mubr.f32.mxu0 0.0
    %2607 = vmatmul.mubr.f32.gmra.mrb[0].mxu0 %v2491
    %v2608 = vpop.f32.mrb[0].mxu0
    %v2609 = vadd.f32 0.0, %v2608
    %v2610 = vpop.f32.mrb[0].mxu0
    %v2611 = vadd.f32 0.0, %v2610
    %2612 = vmatprep.mubr.f32.mxu0 0.0
    %2613 = vmatmul.mubr.f32.gmra.mrb[0].mxu0 %v2496
    %v2614 = vpop.f32.mrb[0].mxu0
    %v2615 = vadd.f32 0.0, %v2614
    %v2616 = vpop.f32.mrb[0].mxu0
    %v2617 = vadd.f32 0.0, %v2616
    %2618 = vmatprep.mubr.f32.mxu0 0.0
    %2619 = vmatmul.mubr.f32.gmra.mrb[0].mxu0 %v2501
    %v2620 = vpop.f32.mrb[0].mxu0
    %v2621 = vadd.f32 0.0, %v2620
    %v2622 = vpop.f32.mrb[0].mxu0
    %v2623 = vadd.f32 0.0, %v2622
    %2624 = vdwg.mxu0
    %2625 = vmatprep.subr.mxu0 %v2239
    %2626 = vmatpush1.msra.mxu0 %v2238
    %2627 = vmatprep.subr.mxu0 %v2241
    %2628 = vmatpush1.msra.mxu0 %v2240
    %2629 = vmatprep.subr.mxu0 %v2243
    %2630 = vmatpush1.msra.mxu0 %v2242
    %2631 = vmatprep.subr.mxu0 %v2245
    %2632 = vmatpush1.msra.mxu0 %v2244
    %2633 = vmatprep.subr.mxu0 %v2247
    %2634 = vmatpush1.msra.mxu0 %v2246
    %2635 = vmatprep.subr.mxu0 %v2249
    %2636 = vmatpush1.msra.mxu0 %v2248
    %2637 = vmatprep.subr.mxu0 %v2251
    %2638 = vmatpush1.msra.mxu0 %v2250
    %2639 = vmatprep.subr.mxu0 %v2253
    %2640 = vmatpush1.msra.mxu0 %v2252
    %2641 = vmatprep.subr.mxu0 %v2255
    %2642 = vmatpush1.msra.mxu0 %v2254
    %2643 = vmatprep.subr.mxu0 %v2257
    %2644 = vmatpush1.msra.mxu0 %v2256
    %2645 = vmatprep.subr.mxu0 %v2259
    %2646 = vmatpush1.msra.mxu0 %v2258
    %2647 = vmatprep.subr.mxu0 %v2261
    %2648 = vmatpush1.msra.mxu0 %v2260
    %2649 = vmatprep.subr.mxu0 %v2263
    %2650 = vmatpush1.msra.mxu0 %v2262
    %2651 = vmatprep.subr.mxu0 %v2265
    %2652 = vmatpush1.msra.mxu0 %v2264
    %2653 = vmatprep.subr.mxu0 %v2267
    %2654 = vmatpush1.msra.mxu0 %v2266
    %2655 = vmatprep.subr.mxu0 %v2269
    %2656 = vmatpush1.msra.mxu0 %v2268
    %2657 = vmatprep.subr.mxu0 0.0
    %2658 = vmatpush1.msra.mxu0 0.0
    %2659 = vmatprep.subr.mxu0 0.0
    %2660 = vmatpush1.msra.mxu0 0.0
    %2661 = vmatprep.subr.mxu0 0.0
    %2662 = vmatpush1.msra.mxu0 0.0
    %2663 = vmatprep.subr.mxu0 0.0
    %2664 = vmatpush1.msra.mxu0 0.0
    %2665 = vmatprep.subr.mxu0 0.0
    %2666 = vmatpush1.msra.mxu0 0.0
    %2667 = vmatprep.subr.mxu0 0.0
    %2668 = vmatpush1.msra.mxu0 0.0
    %2669 = vmatprep.subr.mxu0 0.0
    %2670 = vmatpush1.msra.mxu0 0.0
    %2671 = vmatprep.subr.mxu0 0.0
    %2672 = vmatpush1.msra.mxu0 0.0
    %2673 = vmatprep.subr.mxu0 0.0
    %2674 = vmatpush1.msra.mxu0 0.0
    %2675 = vmatprep.subr.mxu0 0.0
    %2676 = vmatpush1.msra.mxu0 0.0
    %2677 = vmatprep.subr.mxu0 0.0
    %2678 = vmatpush1.msra.mxu0 0.0
    %2679 = vmatprep.subr.mxu0 0.0
    %2680 = vmatpush1.msra.mxu0 0.0
    %2681 = vmatprep.subr.mxu0 0.0
    %2682 = vmatpush1.msra.mxu0 0.0
    %2683 = vmatprep.subr.mxu0 0.0
    %2684 = vmatpush1.msra.mxu0 0.0
    %2685 = vmatprep.subr.mxu0 0.0
    %2686 = vmatpush1.msra.mxu0 0.0
    %2687 = vmatprep.subr.mxu0 0.0
    %2688 = vmatpush1.msra.mxu0 0.0
    %2689 = vmatprep.mubr.f32.mxu0 0.0
    %2690 = vmatmul.mubr.f32.gmra.mrb[0].mxu0 %v2220
    %v2691 = vpop.f32.mrb[0].mxu0
    %v2692 = vadd.f32 %v2603, %v2691
    %v2693 = vpop.f32.mrb[0].mxu0
    %v2694 = vadd.f32 %v2605, %v2693
    %2695 = vmatprep.mubr.f32.mxu0 0.0
    %2696 = vmatmul.mubr.f32.gmra.mrb[0].mxu0 %v2225
    %v2697 = vpop.f32.mrb[0].mxu0
    %v2698 = vadd.f32 %v2609, %v2697
    %v2699 = vpop.f32.mrb[0].mxu0
    %v2700 = vadd.f32 %v2611, %v2699
    %2701 = vmatprep.mubr.f32.mxu0 0.0
    %2702 = vmatmul.mubr.f32.gmra.mrb[0].mxu0 %v2230
    %v2703 = vpop.f32.mrb[0].mxu0
    %v2704 = vadd.f32 %v2615, %v2703
    %v2705 = vpop.f32.mrb[0].mxu0
    %v2706 = vadd.f32 %v2617, %v2705
    %2707 = vmatprep.mubr.f32.mxu0 0.0
    %2708 = vmatmul.mubr.f32.gmra.mrb[0].mxu0 %v2235
    %v2709 = vpop.f32.mrb[0].mxu0
    %v2710 = vadd.f32 %v2621, %v2709
    %v2711 = vpop.f32.mrb[0].mxu0
    %v2712 = vadd.f32 %v2623, %v2711
    %2713 = vdwg.mxu0
    %2714 = vmatprep.subr.mxu0 0.0
    %2715 = vmatpush1.xpose.msra.mxu0 %v1800
    %2716 = vmatprep.subr.mxu0 0.0
    %2717 = vmatpush1.xpose.msra.mxu0 %v1806
    %2718 = vmatprep.subr.mxu0 0.0
    %2719 = vmatpush1.xpose.msra.mxu0 %v1812
    %2720 = vmatprep.subr.mxu0 0.0
    %2721 = vmatpush1.xpose.msra.mxu0 %v1818
    %2722 = vmatprep.subr.mxu0 0.0
    %2723 = vmatpush1.xpose.msra.mxu0 0.0
    %2724 = vmatprep.subr.mxu0 0.0
    %2725 = vmatpush1.xpose.msra.mxu0 0.0
    %2726 = vmatprep.subr.mxu0 0.0
    %2727 = vmatpush1.xpose.msra.mxu0 0.0
    %2728 = vmatprep.subr.mxu0 0.0
    %2729 = vmatpush1.xpose.msra.mxu0 0.0
    %2730 = vmatprep.subr.mxu0 0.0
    %2731 = vmatpush1.xpose.msra.mxu0 0.0
    %2732 = vmatprep.subr.mxu0 0.0
    %2733 = vmatpush1.xpose.msra.mxu0 0.0
    %2734 = vmatprep.subr.mxu0 0.0
    %2735 = vmatpush1.xpose.msra.mxu0 0.0
    %2736 = vmatprep.subr.mxu0 0.0
    %2737 = vmatpush1.xpose.msra.mxu0 0.0
    %2738 = vmatprep.subr.mxu0 0.0
    %2739 = vmatpush1.xpose.msra.mxu0 0.0
    %2740 = vmatprep.subr.mxu0 0.0
    %2741 = vmatpush1.xpose.msra.mxu0 0.0
    %2742 = vmatprep.subr.mxu0 0.0
    %2743 = vmatpush1.xpose.msra.mxu0 0.0
    %2744 = vmatprep.subr.mxu0 0.0
    %2745 = vmatpush1.xpose.msra.mxu0 0.0
    %2746 = vmatprep.subr.mxu0 0.0
    %2747 = vmatpush1.xpose.msra.mxu0 0.0
    %2748 = vmatprep.subr.mxu0 0.0
    %2749 = vmatpush1.xpose.msra.mxu0 0.0
    %2750 = vmatprep.subr.mxu0 0.0
    %2751 = vmatpush1.xpose.msra.mxu0 0.0
    %2752 = vmatprep.subr.mxu0 0.0
    %2753 = vmatpush1.xpose.msra.mxu0 0.0
    %2754 = vmatprep.subr.mxu0 0.0
    %2755 = vmatpush1.xpose.msra.mxu0 0.0
    %2756 = vmatprep.subr.mxu0 0.0
    %2757 = vmatpush1.xpose.msra.mxu0 0.0
    %2758 = vmatprep.subr.mxu0 0.0
    %2759 = vmatpush1.xpose.msra.mxu0 0.0
    %2760 = vmatprep.subr.mxu0 0.0
    %2761 = vmatpush1.xpose.msra.mxu0 0.0
    %2762 = vmatprep.subr.mxu0 0.0
    %2763 = vmatpush1.xpose.msra.mxu0 0.0
    %2764 = vmatprep.subr.mxu0 0.0
    %2765 = vmatpush1.xpose.msra.mxu0 0.0
    %2766 = vmatprep.subr.mxu0 0.0
    %2767 = vmatpush1.xpose.msra.mxu0 0.0
    %2768 = vmatprep.subr.mxu0 0.0
    %2769 = vmatpush1.xpose.msra.mxu0 0.0
    %2770 = vmatprep.subr.mxu0 0.0
    %2771 = vmatpush1.xpose.msra.mxu0 0.0
    %2772 = vmatprep.subr.mxu0 0.0
    %2773 = vmatpush1.xpose.msra.mxu0 0.0
    %2774 = vmatprep.subr.mxu0 0.0
    %2775 = vmatpush1.xpose.msra.mxu0 0.0
    %2776 = vmatprep.subr.mxu0 0.0
    %2777 = vmatpush1.xpose.msra.mxu0 0.0
    %2778 = vmatprep.mubr.f32.mxu0 0.0
    %2779 = vmatmul.mubr.f32.gmra.mrb[0].mxu0 %v1622
    %v2780 = vpop.f32.mrb[0].mxu0
    %v2781 = vadd.f32 0.0, %v2780
    %v2782 = vpop.f32.mrb[0].mxu0
    %2783 = vmatprep.mubr.f32.mxu0 0.0
    %2784 = vmatmul.mubr.f32.gmra.mrb[0].mxu0 %v1628
    %v2785 = vpop.f32.mrb[0].mxu0
    %v2786 = vadd.f32 0.0, %v2785
    %v2787 = vpop.f32.mrb[0].mxu0
    %2788 = vmatprep.mubr.f32.mxu0 0.0
    %2789 = vmatmul.mubr.f32.gmra.mrb[0].mxu0 %v1634
    %v2790 = vpop.f32.mrb[0].mxu0
    %v2791 = vadd.f32 0.0, %v2790
    %v2792 = vpop.f32.mrb[0].mxu0
    %2793 = vmatprep.mubr.f32.mxu0 0.0
    %2794 = vmatmul.mubr.f32.gmra.mrb[0].mxu0 %v1640
    %v2795 = vpop.f32.mrb[0].mxu0
    %v2796 = vadd.f32 0.0, %v2795
    %v2797 = vpop.f32.mrb[0].mxu0
    %2798 = vdwg.mxu0
    %v2799 = vmul.f32 %v2781, 0.15811388
    %v2800 = vmul.f32 %v2786, 0.15811388
    %v2801 = vmul.f32 %v2791, 0.15811388
    %v2802 = vmul.f32 %v2796, 0.15811388
    %v2803 = vadd.f32 %v2799, %v2000
    %v2804 = vadd.f32 %v2800, %v2001
    %v2805 = vadd.f32 %v2801, %v2002
    %v2806 = vadd.f32 %v2802, %v2003
    %v2807 = vsel %vm1090, %v2803, -inf
    %2808 = vmax.xlane.f32.xlu0 %v2807
    %v2809 = vpop.xlane.xlu0 %2808
    %v2810 = vsel %vm1090, %v2804, -inf
    %2811 = vmax.xlane.f32.xlu0 %v2810
    %v2812 = vpop.xlane.xlu0 %2811
    %v2813 = vsel %vm1090, %v2805, -inf
    %2814 = vmax.xlane.f32.xlu0 %v2813
    %v2815 = vpop.xlane.xlu0 %2814
    %v2816 = vsel %vm1090, %v2806, -inf
    %2817 = vmax.xlane.f32.xlu0 %v2816
    %v2818 = vpop.xlane.xlu0 %2817
    %v2819 = vsub.f32 %v2803, %v2809
    %v2820 = vsub.f32 %v2804, %v2812
    %v2821 = vsub.f32 %v2805, %v2815
    %v2822 = vsub.f32 %v2806, %v2818
    %v2823 = vmul.f32 %v2819, 1.442695
    %v2824 = vpow.pop %v2823
    %v2825 = vmul.f32 %v2820, 1.442695
    %v2826 = vpow.pop %v2825
    %v2827 = vmul.f32 %v2821, 1.442695
    %v2828 = vpow.pop %v2827
    %v2829 = vmul.f32 %v2822, 1.442695
    %v2830 = vpow.pop %v2829
    %v2831 = vsel %vm1090, %v2824, 0.0
    %2832 = vadd.xlane.f32.xlu0 %v2831
    %v2833 = vpop.xlane.xlu0 %2832
    %v2834 = vsel %vm1090, %v2826, 0.0
    %2835 = vadd.xlane.f32.xlu0 %v2834
    %v2836 = vpop.xlane.xlu0 %2835
    %v2837 = vsel %vm1090, %v2828, 0.0
    %2838 = vadd.xlane.f32.xlu0 %v2837
    %v2839 = vpop.xlane.xlu0 %2838
    %v2840 = vsel %vm1090, %v2830, 0.0
    %2841 = vadd.xlane.f32.xlu0 %v2840
    %v2842 = vpop.xlane.xlu0 %2841
    %v2843 = vrcp.pop %v2833
    %v2844 = vrcp.pop %v2836
    %v2845 = vrcp.pop %v2839
    %v2846 = vrcp.pop %v2842
    %v2847 = vmul.f32 %v2824, %v2843
    %v2848 = vmul.f32 %v2826, %v2844
    %v2849 = vmul.f32 %v2828, %v2845
    %v2850 = vmul.f32 %v2830, %v2846
    %v2852 = vsel %vm1090, %v2847, 0
    %v2855 = vsel %vm1090, %v2848, 0
    %v2858 = vsel %vm1090, %v2849, 0
    %v2861 = vsel %vm1090, %v2850, 0
    %2863 = vmatprep.subr.mxu0 0.0
    %2864 = vmatpush1.msra.mxu0 %v1978
    %2865 = vmatprep.subr.mxu0 0.0
    %2866 = vmatpush1.msra.mxu0 %v1984
    %2867 = vmatprep.subr.mxu0 0.0
    %2868 = vmatpush1.msra.mxu0 %v1990
    %2869 = vmatprep.subr.mxu0 0.0
    %2870 = vmatpush1.msra.mxu0 %v1996
    %2871 = vmatprep.subr.mxu0 0.0
    %2872 = vmatpush1.msra.mxu0 0.0
    %2873 = vmatprep.subr.mxu0 0.0
    %2874 = vmatpush1.msra.mxu0 0.0
    %2875 = vmatprep.subr.mxu0 0.0
    %2876 = vmatpush1.msra.mxu0 0.0
    %2877 = vmatprep.subr.mxu0 0.0
    %2878 = vmatpush1.msra.mxu0 0.0
    %2879 = vmatprep.subr.mxu0 0.0
    %2880 = vmatpush1.msra.mxu0 0.0
    %2881 = vmatprep.subr.mxu0 0.0
    %2882 = vmatpush1.msra.mxu0 0.0
    %2883 = vmatprep.subr.mxu0 0.0
    %2884 = vmatpush1.msra.mxu0 0.0
    %2885 = vmatprep.subr.mxu0 0.0
    %2886 = vmatpush1.msra.mxu0 0.0
    %2887 = vmatprep.subr.mxu0 0.0
    %2888 = vmatpush1.msra.mxu0 0.0
    %2889 = vmatprep.subr.mxu0 0.0
    %2890 = vmatpush1.msra.mxu0 0.0
    %2891 = vmatprep.subr.mxu0 0.0
    %2892 = vmatpush1.msra.mxu0 0.0
    %2893 = vmatprep.subr.mxu0 0.0
    %2894 = vmatpush1.msra.mxu0 0.0
    %2895 = vmatprep.subr.mxu0 0.0
    %2896 = vmatpush1.msra.mxu0 0.0
    %2897 = vmatprep.subr.mxu0 0.0
    %2898 = vmatpush1.msra.mxu0 0.0
    %2899 = vmatprep.subr.mxu0 0.0
    %2900 = vmatpush1.msra.mxu0 0.0
    %2901 = vmatprep.subr.mxu0 0.0
    %2902 = vmatpush1.msra.mxu0 0.0
    %2903 = vmatprep.subr.mxu0 0.0
    %2904 = vmatpush1.msra.mxu0 0.0
    %2905 = vmatprep.subr.mxu0 0.0
    %2906 = vmatpush1.msra.mxu0 0.0
    %2907 = vmatprep.subr.mxu0 0.0
    %2908 = vmatpush1.msra.mxu0 0.0
    %2909 = vmatprep.subr.mxu0 0.0
    %2910 = vmatpush1.msra.mxu0 0.0
    %2911 = vmatprep.subr.mxu0 0.0
    %2912 = vmatpush1.msra.mxu0 0.0
    %2913 = vmatprep.subr.mxu0 0.0
    %2914 = vmatpush1.msra.mxu0 0.0
    %2915 = vmatprep.subr.mxu0 0.0
    %2916 = vmatpush1.msra.mxu0 0.0
    %2917 = vmatprep.subr.mxu0 0.0
    %2918 = vmatpush1.msra.mxu0 0.0
    %2919 = vmatprep.subr.mxu0 0.0
    %2920 = vmatpush1.msra.mxu0 0.0
    %2921 = vmatprep.subr.mxu0 0.0
    %2922 = vmatpush1.msra.mxu0 0.0
    %2923 = vmatprep.subr.mxu0 0.0
    %2924 = vmatpush1.msra.mxu0 0.0
    %2925 = vmatprep.subr.mxu0 0.0
    %2926 = vmatpush1.msra.mxu0 0.0
    %2927 = vmatprep.mubr.f32.mxu0 0.0
    %2928 = vmatmul.mubr.f32.gmra.mrb[0].mxu0 %v2852
    %v2929 = vpop.f32.mrb[0].mxu0
    %v2930 = vadd.f32 0.0, %v2929
    %v2931 = vpop.f32.mrb[0].mxu0
    %2932 = vmatprep.mubr.f32.mxu0 0.0
    %2933 = vmatmul.mubr.f32.gmra.mrb[0].mxu0 %v2855
    %v2934 = vpop.f32.mrb[0].mxu0
    %v2935 = vadd.f32 0.0, %v2934
    %v2936 = vpop.f32.mrb[0].mxu0
    %2937 = vmatprep.mubr.f32.mxu0 0.0
    %2938 = vmatmul.mubr.f32.gmra.mrb[0].mxu0 %v2858
    %v2939 = vpop.f32.mrb[0].mxu0
    %v2940 = vadd.f32 0.0, %v2939
    %v2941 = vpop.f32.mrb[0].mxu0
    %2942 = vmatprep.mubr.f32.mxu0 0.0
    %2943 = vmatmul.mubr.f32.gmra.mrb[0].mxu0 %v2861
    %v2944 = vpop.f32.mrb[0].mxu0
    %v2945 = vadd.f32 0.0, %v2944
    %v2946 = vpop.f32.mrb[0].mxu0
    %2947 = vdwg.mxu0
    %v2948 = vld [vmem:[%s12 + $0x200] sm:$0xff]
    %v2949 = vld [vmem:[%s12 + $0x208] sm:$0xff]
    %v2950 = vld [vmem:[%s12 + $0x210] sm:$0xff]
    %v2951 = vld [vmem:[%s12 + $0x218] sm:$0xff]
    %v2952 = vld [vmem:[%s12 + $0x220] sm:$0xff]
    %v2953 = vld [vmem:[%s12 + $0x228] sm:$0xff]
    %v2954 = vld [vmem:[%s12 + $0x230] sm:$0xff]
    %v2955 = vld [vmem:[%s12 + $0x238] sm:$0xff]
    %v2956 = vld [vmem:[%s12 + $0x240] sm:$0xff]
    %v2957 = vld [vmem:[%s12 + $0x248] sm:$0xff]
    %v2958 = vld [vmem:[%s12 + $0x250] sm:$0xff]
    %v2959 = vld [vmem:[%s12 + $0x258] sm:$0xff]
    %v2960 = vld [vmem:[%s12 + $0x260] sm:$0xff]
    %v2961 = vld [vmem:[%s12 + $0x268] sm:$0xff]
    %v2962 = vld [vmem:[%s12 + $0x270] sm:$0xff]
    %v2963 = vld [vmem:[%s12 + $0x278] sm:$0xff]
    %v2964 = vld [vmem:[%s12 + $0x280] sm:$0xff]
    %v2965 = vld [vmem:[%s12 + $0x288] sm:$0xff]
    %v2966 = vld [vmem:[%s12 + $0x290] sm:$0xff]
    %v2967 = vld [vmem:[%s12 + $0x298] sm:$0xff]
    %v2968 = vld [vmem:[%s12 + $0x2a0] sm:$0xff]
    %v2969 = vld [vmem:[%s12 + $0x2a8] sm:$0xff]
    %v2970 = vld [vmem:[%s12 + $0x2b0] sm:$0xff]
    %v2971 = vld [vmem:[%s12 + $0x2b8] sm:$0xff]
    %v2972 = vld [vmem:[%s12 + $0x2c0] sm:$0xff]
    %v2973 = vld [vmem:[%s12 + $0x2c8] sm:$0xff]
    %v2974 = vld [vmem:[%s12 + $0x2d0] sm:$0xff]
    %v2975 = vld [vmem:[%s12 + $0x2d8] sm:$0xff]
    %v2976 = vld [vmem:[%s12 + $0x2e0] sm:$0xff]
    %v2977 = vld [vmem:[%s12 + $0x2e8] sm:$0xff]
    %v2978 = vld [vmem:[%s12 + $0x2f0] sm:$0xff]
    %v2979 = vld [vmem:[%s12 + $0x2f8] sm:$0xff]
    %2980 = vmatprep.subr.mxu0 %v2949
    %2981 = vmatpush1.msra.mxu0 %v2948
    %2982 = vmatprep.subr.mxu0 %v2951
    %2983 = vmatpush1.msra.mxu0 %v2950
    %2984 = vmatprep.subr.mxu0 %v2953
    %2985 = vmatpush1.msra.mxu0 %v2952
    %2986 = vmatprep.subr.mxu0 %v2955
    %2987 = vmatpush1.msra.mxu0 %v2954
    %2988 = vmatprep.subr.mxu0 %v2957
    %2989 = vmatpush1.msra.mxu0 %v2956
    %2990 = vmatprep.subr.mxu0 %v2959
    %2991 = vmatpush1.msra.mxu0 %v2958
    %2992 = vmatprep.subr.mxu0 %v2961
    %2993 = vmatpush1.msra.mxu0 %v2960
    %2994 = vmatprep.subr.mxu0 %v2963
    %2995 = vmatpush1.msra.mxu0 %v2962
    %2996 = vmatprep.subr.mxu0 %v2965
    %2997 = vmatpush1.msra.mxu0 %v2964
    %2998 = vmatprep.subr.mxu0 %v2967
    %2999 = vmatpush1.msra.mxu0 %v2966
    %3000 = vmatprep.subr.mxu0 %v2969
    %3001 = vmatpush1.msra.mxu0 %v2968
    %3002 = vmatprep.subr.mxu0 %v2971
    %3003 = vmatpush1.msra.mxu0 %v2970
    %3004 = vmatprep.subr.mxu0 %v2973
    %3005 = vmatpush1.msra.mxu0 %v2972
    %3006 = vmatprep.subr.mxu0 %v2975
    %3007 = vmatpush1.msra.mxu0 %v2974
    %3008 = vmatprep.subr.mxu0 %v2977
    %3009 = vmatpush1.msra.mxu0 %v2976
    %3010 = vmatprep.subr.mxu0 %v2979
    %3011 = vmatpush1.msra.mxu0 %v2978
    %3012 = vmatprep.subr.mxu0 0.0
    %3013 = vmatpush1.msra.mxu0 0.0
    %3014 = vmatprep.subr.mxu0 0.0
    %3015 = vmatpush1.msra.mxu0 0.0
    %3016 = vmatprep.subr.mxu0 0.0
    %3017 = vmatpush1.msra.mxu0 0.0
    %3018 = vmatprep.subr.mxu0 0.0
    %3019 = vmatpush1.msra.mxu0 0.0
    %3020 = vmatprep.subr.mxu0 0.0
    %3021 = vmatpush1.msra.mxu0 0.0
    %3022 = vmatprep.subr.mxu0 0.0
    %3023 = vmatpush1.msra.mxu0 0.0
    %3024 = vmatprep.subr.mxu0 0.0
    %3025 = vmatpush1.msra.mxu0 0.0
    %3026 = vmatprep.subr.mxu0 0.0
    %3027 = vmatpush1.msra.mxu0 0.0
    %3028 = vmatprep.subr.mxu0 0.0
    %3029 = vmatpush1.msra.mxu0 0.0
    %3030 = vmatprep.subr.mxu0 0.0
    %3031 = vmatpush1.msra.mxu0 0.0
    %3032 = vmatprep.subr.mxu0 0.0
    %3033 = vmatpush1.msra.mxu0 0.0
    %3034 = vmatprep.subr.mxu0 0.0
    %3035 = vmatpush1.msra.mxu0 0.0
    %3036 = vmatprep.subr.mxu0 0.0
    %3037 = vmatpush1.msra.mxu0 0.0
    %3038 = vmatprep.subr.mxu0 0.0
    %3039 = vmatpush1.msra.mxu0 0.0
    %3040 = vmatprep.subr.mxu0 0.0
    %3041 = vmatpush1.msra.mxu0 0.0
    %3042 = vmatprep.subr.mxu0 0.0
    %3043 = vmatpush1.msra.mxu0 0.0
    %3044 = vmatprep.mubr.f32.mxu0 0.0
    %3045 = vmatmul.mubr.f32.gmra.mrb[0].mxu0 %v2930
    %v3046 = vpop.f32.mrb[0].mxu0
    %v3047 = vadd.f32 0.0, %v3046
    %v3048 = vpop.f32.mrb[0].mxu0
    %v3049 = vadd.f32 0.0, %v3048
    %3050 = vmatprep.mubr.f32.mxu0 0.0
    %3051 = vmatmul.mubr.f32.gmra.mrb[0].mxu0 %v2935
    %v3052 = vpop.f32.mrb[0].mxu0
    %v3053 = vadd.f32 0.0, %v3052
    %v3054 = vpop.f32.mrb[0].mxu0
    %v3055 = vadd.f32 0.0, %v3054
    %3056 = vmatprep.mubr.f32.mxu0 0.0
    %3057 = vmatmul.mubr.f32.gmra.mrb[0].mxu0 %v2940
    %v3058 = vpop.f32.mrb[0].mxu0
    %v3059 = vadd.f32 0.0, %v3058
    %v3060 = vpop.f32.mrb[0].mxu0
    %v3061 = vadd.f32 0.0, %v3060
    %3062 = vmatprep.mubr.f32.mxu0 0.0
    %3063 = vmatmul.mubr.f32.gmra.mrb[0].mxu0 %v2945
    %v3064 = vpop.f32.mrb[0].mxu0
    %v3065 = vadd.f32 0.0, %v3064
    %v3066 = vpop.f32.mrb[0].mxu0
    %v3067 = vadd.f32 0.0, %v3066
    %3068 = vdwg.mxu0
    %v3069 = vadd.f32 %v2692, %v3047
    %v3070 = vadd.f32 %v2694, %v3049
    %v3071 = vadd.f32 %v2698, %v3053
    %v3072 = vadd.f32 %v2700, %v3055
    %v3073 = vadd.f32 %v2704, %v3059
    %v3074 = vadd.f32 %v2706, %v3061
    %v3075 = vadd.f32 %v2710, %v3065
    %v3076 = vadd.f32 %v2712, %v3067
    %3077 = vmatprep.subr.mxu0 0.0
    %3078 = vmatpush1.xpose.msra.mxu0 %v1802
    %3079 = vmatprep.subr.mxu0 0.0
    %3080 = vmatpush1.xpose.msra.mxu0 %v1808
    %3081 = vmatprep.subr.mxu0 0.0
    %3082 = vmatpush1.xpose.msra.mxu0 %v1814
    %3083 = vmatprep.subr.mxu0 0.0
    %3084 = vmatpush1.xpose.msra.mxu0 %v1820
    %3085 = vmatprep.subr.mxu0 0.0
    %3086 = vmatpush1.xpose.msra.mxu0 0.0
    %3087 = vmatprep.subr.mxu0 0.0
    %3088 = vmatpush1.xpose.msra.mxu0 0.0
    %3089 = vmatprep.subr.mxu0 0.0
    %3090 = vmatpush1.xpose.msra.mxu0 0.0
    %3091 = vmatprep.subr.mxu0 0.0
    %3092 = vmatpush1.xpose.msra.mxu0 0.0
    %3093 = vmatprep.subr.mxu0 0.0
    %3094 = vmatpush1.xpose.msra.mxu0 0.0
    %3095 = vmatprep.subr.mxu0 0.0
    %3096 = vmatpush1.xpose.msra.mxu0 0.0
    %3097 = vmatprep.subr.mxu0 0.0
    %3098 = vmatpush1.xpose.msra.mxu0 0.0
    %3099 = vmatprep.subr.mxu0 0.0
    %3100 = vmatpush1.xpose.msra.mxu0 0.0
    %3101 = vmatprep.subr.mxu0 0.0
    %3102 = vmatpush1.xpose.msra.mxu0 0.0
    %3103 = vmatprep.subr.mxu0 0.0
    %3104 = vmatpush1.xpose.msra.mxu0 0.0
    %3105 = vmatprep.subr.mxu0 0.0
    %3106 = vmatpush1.xpose.msra.mxu0 0.0
    %3107 = vmatprep.subr.mxu0 0.0
    %3108 = vmatpush1.xpose.msra.mxu0 0.0
    %3109 = vmatprep.subr.mxu0 0.0
    %3110 = vmatpush1.xpose.msra.mxu0 0.0
    %3111 = vmatprep.subr.mxu0 0.0
    %3112 = vmatpush1.xpose.msra.mxu0 0.0
    %3113 = vmatprep.subr.mxu0 0.0
    %3114 = vmatpush1.xpose.msra.mxu0 0.0
    %3115 = vmatprep.subr.mxu0 0.0
    %3116 = vmatpush1.xpose.msra.mxu0 0.0
    %3117 = vmatprep.subr.mxu0 0.0
    %3118 = vmatpush1.xpose.msra.mxu0 0.0
    %3119 = vmatprep.subr.mxu0 0.0
    %3120 = vmatpush1.xpose.msra.mxu0 0.0
    %3121 = vmatprep.subr.mxu0 0.0
    %3122 = vmatpush1.xpose.msra.mxu0 0.0
    %3123 = vmatprep.subr.mxu0 0.0
    %3124 = vmatpush1.xpose.msra.mxu0 0.0
    %3125 = vmatprep.subr.mxu0 0.0
    %3126 = vmatpush1.xpose.msra.mxu0 0.0
    %3127 = vmatprep.subr.mxu0 0.0
    %3128 = vmatpush1.xpose.msra.mxu0 0.0
    %3129 = vmatprep.subr.mxu0 0.0
    %3130 = vmatpush1.xpose.msra.mxu0 0.0
    %3131 = vmatprep.subr.mxu0 0.0
    %3132 = vmatpush1.xpose.msra.mxu0 0.0
    %3133 = vmatprep.subr.mxu0 0.0
    %3134 = vmatpush1.xpose.msra.mxu0 0.0
    %3135 = vmatprep.subr.mxu0 0.0
    %3136 = vmatpush1.xpose.msra.mxu0 0.0
    %3137 = vmatprep.subr.mxu0 0.0
    %3138 = vmatpush1.xpose.msra.mxu0 0.0
    %3139 = vmatprep.subr.mxu0 0.0
    %3140 = vmatpush1.xpose.msra.mxu0 0.0
    %3141 = vmatprep.mubr.f32.mxu0 0.0
    %3142 = vmatmul.mubr.f32.gmra.mrb[0].mxu0 %v1624
    %v3143 = vpop.f32.mrb[0].mxu0
    %v3144 = vadd.f32 0.0, %v3143
    %v3145 = vpop.f32.mrb[0].mxu0
    %3146 = vmatprep.mubr.f32.mxu0 0.0
    %3147 = vmatmul.mubr.f32.gmra.mrb[0].mxu0 %v1630
    %v3148 = vpop.f32.mrb[0].mxu0
    %v3149 = vadd.f32 0.0, %v3148
    %v3150 = vpop.f32.mrb[0].mxu0
    %3151 = vmatprep.mubr.f32.mxu0 0.0
    %3152 = vmatmul.mubr.f32.gmra.mrb[0].mxu0 %v1636
    %v3153 = vpop.f32.mrb[0].mxu0
    %v3154 = vadd.f32 0.0, %v3153
    %v3155 = vpop.f32.mrb[0].mxu0
    %3156 = vmatprep.mubr.f32.mxu0 0.0
    %3157 = vmatmul.mubr.f32.gmra.mrb[0].mxu0 %v1642
    %v3158 = vpop.f32.mrb[0].mxu0
    %v3159 = vadd.f32 0.0, %v3158
    %v3160 = vpop.f32.mrb[0].mxu0
    %3161 = vdwg.mxu0
    %v3162 = vmul.f32 %v3144, 0.15811388
    %v3163 = vmul.f32 %v3149, 0.15811388
    %v3164 = vmul.f32 %v3154, 0.15811388
    %v3165 = vmul.f32 %v3159, 0.15811388
    %v3166 = vadd.f32 %v3162, %v2000
    %v3167 = vadd.f32 %v3163, %v2001
    %v3168 = vadd.f32 %v3164, %v2002
    %v3169 = vadd.f32 %v3165, %v2003
    %v3170 = vsel %vm1090, %v3166, -inf
    %3171 = vmax.xlane.f32.xlu0 %v3170
    %v3172 = vpop.xlane.xlu0 %3171
    %v3173 = vsel %vm1090, %v3167, -inf
    %3174 = vmax.xlane.f32.xlu0 %v3173
    %v3175 = vpop.xlane.xlu0 %3174
    %v3176 = vsel %vm1090, %v3168, -inf
    %3177 = vmax.xlane.f32.xlu0 %v3176
    %v3178 = vpop.xlane.xlu0 %3177
    %v3179 = vsel %vm1090, %v3169, -inf
    %3180 = vmax.xlane.f32.xlu0 %v3179
    %v3181 = vpop.xlane.xlu0 %3180
    %v3182 = vsub.f32 %v3166, %v3172
    %v3183 = vsub.f32 %v3167, %v3175
    %v3184 = vsub.f32 %v3168, %v3178
    %v3185 = vsub.f32 %v3169, %v3181
    %v3186 = vmul.f32 %v3182, 1.442695
    %v3187 = vpow.pop %v3186
    %v3188 = vmul.f32 %v3183, 1.442695
    %v3189 = vpow.pop %v3188
    %v3190 = vmul.f32 %v3184, 1.442695
    %v3191 = vpow.pop %v3190
    %v3192 = vmul.f32 %v3185, 1.442695
    %v3193 = vpow.pop %v3192
    %v3194 = vsel %vm1090, %v3187, 0.0
    %3195 = vadd.xlane.f32.xlu0 %v3194
    %v3196 = vpop.xlane.xlu0 %3195
    %v3197 = vsel %vm1090, %v3189, 0.0
    %3198 = vadd.xlane.f32.xlu0 %v3197
    %v3199 = vpop.xlane.xlu0 %3198
    %v3200 = vsel %vm1090, %v3191, 0.0
    %3201 = vadd.xlane.f32.xlu0 %v3200
    %v3202 = vpop.xlane.xlu0 %3201
    %v3203 = vsel %vm1090, %v3193, 0.0
    %3204 = vadd.xlane.f32.xlu0 %v3203
    %v3205 = vpop.xlane.xlu0 %3204
    %v3206 = vrcp.pop %v3196
    %v3207 = vrcp.pop %v3199
    %v3208 = vrcp.pop %v3202
    %v3209 = vrcp.pop %v3205
    %v3210 = vmul.f32 %v3187, %v3206
    %v3211 = vmul.f32 %v3189, %v3207
    %v3212 = vmul.f32 %v3191, %v3208
    %v3213 = vmul.f32 %v3193, %v3209
    %v3215 = vsel %vm1090, %v3210, 0
    %v3218 = vsel %vm1090, %v3211, 0
    %v3221 = vsel %vm1090, %v3212, 0
    %v3224 = vsel %vm1090, %v3213, 0
    %3226 = vmatprep.subr.mxu0 0.0
    %3227 = vmatpush1.msra.mxu0 %v1980
    %3228 = vmatprep.subr.mxu0 0.0
    %3229 = vmatpush1.msra.mxu0 %v1986
    %3230 = vmatprep.subr.mxu0 0.0
    %3231 = vmatpush1.msra.mxu0 %v1992
    %3232 = vmatprep.subr.mxu0 0.0
    %3233 = vmatpush1.msra.mxu0 %v1998
    %3234 = vmatprep.subr.mxu0 0.0
    %3235 = vmatpush1.msra.mxu0 0.0
    %3236 = vmatprep.subr.mxu0 0.0
    %3237 = vmatpush1.msra.mxu0 0.0
    %3238 = vmatprep.subr.mxu0 0.0
    %3239 = vmatpush1.msra.mxu0 0.0
    %3240 = vmatprep.subr.mxu0 0.0
    %3241 = vmatpush1.msra.mxu0 0.0
    %3242 = vmatprep.subr.mxu0 0.0
    %3243 = vmatpush1.msra.mxu0 0.0
    %3244 = vmatprep.subr.mxu0 0.0
    %3245 = vmatpush1.msra.mxu0 0.0
    %3246 = vmatprep.subr.mxu0 0.0
    %3247 = vmatpush1.msra.mxu0 0.0
    %3248 = vmatprep.subr.mxu0 0.0
    %3249 = vmatpush1.msra.mxu0 0.0
    %3250 = vmatprep.subr.mxu0 0.0
    %3251 = vmatpush1.msra.mxu0 0.0
    %3252 = vmatprep.subr.mxu0 0.0
    %3253 = vmatpush1.msra.mxu0 0.0
    %3254 = vmatprep.subr.mxu0 0.0
    %3255 = vmatpush1.msra.mxu0 0.0
    %3256 = vmatprep.subr.mxu0 0.0
    %3257 = vmatpush1.msra.mxu0 0.0
    %3258 = vmatprep.subr.mxu0 0.0
    %3259 = vmatpush1.msra.mxu0 0.0
    %3260 = vmatprep.subr.mxu0 0.0
    %3261 = vmatpush1.msra.mxu0 0.0
    %3262 = vmatprep.subr.mxu0 0.0
    %3263 = vmatpush1.msra.mxu0 0.0
    %3264 = vmatprep.subr.mxu0 0.0
    %3265 = vmatpush1.msra.mxu0 0.0
    %3266 = vmatprep.subr.mxu0 0.0
    %3267 = vmatpush1.msra.mxu0 0.0
    %3268 = vmatprep.subr.mxu0 0.0
    %3269 = vmatpush1.msra.mxu0 0.0
    %3270 = vmatprep.subr.mxu0 0.0
    %3271 = vmatpush1.msra.mxu0 0.0
    %3272 = vmatprep.subr.mxu0 0.0
    %3273 = vmatpush1.msra.mxu0 0.0
    %3274 = vmatprep.subr.mxu0 0.0
    %3275 = vmatpush1.msra.mxu0 0.0
    %3276 = vmatprep.subr.mxu0 0.0
    %3277 = vmatpush1.msra.mxu0 0.0
    %3278 = vmatprep.subr.mxu0 0.0
    %3279 = vmatpush1.msra.mxu0 0.0
    %3280 = vmatprep.subr.mxu0 0.0
    %3281 = vmatpush1.msra.mxu0 0.0
    %3282 = vmatprep.subr.mxu0 0.0
    %3283 = vmatpush1.msra.mxu0 0.0
    %3284 = vmatprep.subr.mxu0 0.0
    %3285 = vmatpush1.msra.mxu0 0.0
    %3286 = vmatprep.subr.mxu0 0.0
    %3287 = vmatpush1.msra.mxu0 0.0
    %3288 = vmatprep.subr.mxu0 0.0
    %3289 = vmatpush1.msra.mxu0 0.0
    %3290 = vmatprep.mubr.f32.mxu0 0.0
    %3291 = vmatmul.mubr.f32.gmra.mrb[0].mxu0 %v3215
    %v3292 = vpop.f32.mrb[0].mxu0
    %v3293 = vadd.f32 0.0, %v3292
    %v3294 = vpop.f32.mrb[0].mxu0
    %3295 = vmatprep.mubr.f32.mxu0 0.0
    %3296 = vmatmul.mubr.f32.gmra.mrb[0].mxu0 %v3218
    %v3297 = vpop.f32.mrb[0].mxu0
    %v3298 = vadd.f32 0.0, %v3297
    %v3299 = vpop.f32.mrb[0].mxu0
    %3300 = vmatprep.mubr.f32.mxu0 0.0
    %3301 = vmatmul.mubr.f32.gmra.mrb[0].mxu0 %v3221
    %v3302 = vpop.f32.mrb[0].mxu0
    %v3303 = vadd.f32 0.0, %v3302
    %v3304 = vpop.f32.mrb[0].mxu0
    %3305 = vmatprep.mubr.f32.mxu0 0.0
    %3306 = vmatmul.mubr.f32.gmra.mrb[0].mxu0 %v3224
    %v3307 = vpop.f32.mrb[0].mxu0
    %v3308 = vadd.f32 0.0, %v3307
    %v3309 = vpop.f32.mrb[0].mxu0
    %3310 = vdwg.mxu0
    %v3311 = vld [vmem:[%s12 + $0x300] sm:$0xff]
    %v3312 = vld [vmem:[%s12 + $0x308] sm:$0xff]
    %v3313 = vld [vmem:[%s12 + $0x310] sm:$0xff]
    %v3314 = vld [vmem:[%s12 + $0x318] sm:$0xff]
    %v3315 = vld [vmem:[%s12 + $0x320] sm:$0xff]
    %v3316 = vld [vmem:[%s12 + $0x328] sm:$0xff]
    %v3317 = vld [vmem:[%s12 + $0x330] sm:$0xff]
    %v3318 = vld [vmem:[%s12 + $0x338] sm:$0xff]
    %v3319 = vld [vmem:[%s12 + $0x340] sm:$0xff]
    %v3320 = vld [vmem:[%s12 + $0x348] sm:$0xff]
    %v3321 = vld [vmem:[%s12 + $0x350] sm:$0xff]
    %v3322 = vld [vmem:[%s12 + $0x358] sm:$0xff]
    %v3323 = vld [vmem:[%s12 + $0x360] sm:$0xff]
    %v3324 = vld [vmem:[%s12 + $0x368] sm:$0xff]
    %v3325 = vld [vmem:[%s12 + $0x370] sm:$0xff]
    %v3326 = vld [vmem:[%s12 + $0x378] sm:$0xff]
    %v3327 = vld [vmem:[%s12 + $0x380] sm:$0xff]
    %v3328 = vld [vmem:[%s12 + $0x388] sm:$0xff]
    %v3329 = vld [vmem:[%s12 + $0x390] sm:$0xff]
    %v3330 = vld [vmem:[%s12 + $0x398] sm:$0xff]
    %v3331 = vld [vmem:[%s12 + $0x3a0] sm:$0xff]
    %v3332 = vld [vmem:[%s12 + $0x3a8] sm:$0xff]
    %v3333 = vld [vmem:[%s12 + $0x3b0] sm:$0xff]
    %v3334 = vld [vmem:[%s12 + $0x3b8] sm:$0xff]
    %v3335 = vld [vmem:[%s12 + $0x3c0] sm:$0xff]
    %v3336 = vld [vmem:[%s12 + $0x3c8] sm:$0xff]
    %v3337 = vld [vmem:[%s12 + $0x3d0] sm:$0xff]
    %v3338 = vld [vmem:[%s12 + $0x3d8] sm:$0xff]
    %v3339 = vld [vmem:[%s12 + $0x3e0] sm:$0xff]
    %v3340 = vld [vmem:[%s12 + $0x3e8] sm:$0xff]
    %v3341 = vld [vmem:[%s12 + $0x3f0] sm:$0xff]
    %v3342 = vld [vmem:[%s12 + $0x3f8] sm:$0xff]
    %3343 = vmatprep.subr.mxu0 %v3312
    %3344 = vmatpush1.msra.mxu0 %v3311
    %3345 = vmatprep.subr.mxu0 %v3314
    %3346 = vmatpush1.msra.mxu0 %v3313
    %3347 = vmatprep.subr.mxu0 %v3316
    %3348 = vmatpush1.msra.mxu0 %v3315
    %3349 = vmatprep.subr.mxu0 %v3318
    %3350 = vmatpush1.msra.mxu0 %v3317
    %3351 = vmatprep.subr.mxu0 %v3320
    %3352 = vmatpush1.msra.mxu0 %v3319
    %3353 = vmatprep.subr.mxu0 %v3322
    %3354 = vmatpush1.msra.mxu0 %v3321
    %3355 = vmatprep.subr.mxu0 %v3324
    %3356 = vmatpush1.msra.mxu0 %v3323
    %3357 = vmatprep.subr.mxu0 %v3326
    %3358 = vmatpush1.msra.mxu0 %v3325
    %3359 = vmatprep.subr.mxu0 %v3328
    %3360 = vmatpush1.msra.mxu0 %v3327
    %3361 = vmatprep.subr.mxu0 %v3330
    %3362 = vmatpush1.msra.mxu0 %v3329
    %3363 = vmatprep.subr.mxu0 %v3332
    %3364 = vmatpush1.msra.mxu0 %v3331
    %3365 = vmatprep.subr.mxu0 %v3334
    %3366 = vmatpush1.msra.mxu0 %v3333
    %3367 = vmatprep.subr.mxu0 %v3336
    %3368 = vmatpush1.msra.mxu0 %v3335
    %3369 = vmatprep.subr.mxu0 %v3338
    %3370 = vmatpush1.msra.mxu0 %v3337
    %3371 = vmatprep.subr.mxu0 %v3340
    %3372 = vmatpush1.msra.mxu0 %v3339
    %3373 = vmatprep.subr.mxu0 %v3342
    %3374 = vmatpush1.msra.mxu0 %v3341
    %3375 = vmatprep.subr.mxu0 0.0
    %3376 = vmatpush1.msra.mxu0 0.0
    %3377 = vmatprep.subr.mxu0 0.0
    %3378 = vmatpush1.msra.mxu0 0.0
    %3379 = vmatprep.subr.mxu0 0.0
    %3380 = vmatpush1.msra.mxu0 0.0
    %3381 = vmatprep.subr.mxu0 0.0
    %3382 = vmatpush1.msra.mxu0 0.0
    %3383 = vmatprep.subr.mxu0 0.0
    %3384 = vmatpush1.msra.mxu0 0.0
    %3385 = vmatprep.subr.mxu0 0.0
    %3386 = vmatpush1.msra.mxu0 0.0
    %3387 = vmatprep.subr.mxu0 0.0
    %3388 = vmatpush1.msra.mxu0 0.0
    %3389 = vmatprep.subr.mxu0 0.0
    %3390 = vmatpush1.msra.mxu0 0.0
    %3391 = vmatprep.subr.mxu0 0.0
    %3392 = vmatpush1.msra.mxu0 0.0
    %3393 = vmatprep.subr.mxu0 0.0
    %3394 = vmatpush1.msra.mxu0 0.0
    %3395 = vmatprep.subr.mxu0 0.0
    %3396 = vmatpush1.msra.mxu0 0.0
    %3397 = vmatprep.subr.mxu0 0.0
    %3398 = vmatpush1.msra.mxu0 0.0
    %3399 = vmatprep.subr.mxu0 0.0
    %3400 = vmatpush1.msra.mxu0 0.0
    %3401 = vmatprep.subr.mxu0 0.0
    %3402 = vmatpush1.msra.mxu0 0.0
    %3403 = vmatprep.subr.mxu0 0.0
    %3404 = vmatpush1.msra.mxu0 0.0
    %3405 = vmatprep.subr.mxu0 0.0
    %3406 = vmatpush1.msra.mxu0 0.0
    %3407 = vmatprep.mubr.f32.mxu0 0.0
    %3408 = vmatmul.mubr.f32.gmra.mrb[0].mxu0 %v3293
    %v3409 = vpop.f32.mrb[0].mxu0
    %v3410 = vadd.f32 0.0, %v3409
    %v3411 = vpop.f32.mrb[0].mxu0
    %v3412 = vadd.f32 0.0, %v3411
    %3413 = vmatprep.mubr.f32.mxu0 0.0
    %3414 = vmatmul.mubr.f32.gmra.mrb[0].mxu0 %v3298
    %v3415 = vpop.f32.mrb[0].mxu0
    %v3416 = vadd.f32 0.0, %v3415
    %v3417 = vpop.f32.mrb[0].mxu0
    %v3418 = vadd.f32 0.0, %v3417
    %3419 = vmatprep.mubr.f32.mxu0 0.0
    %3420 = vmatmul.mubr.f32.gmra.mrb[0].mxu0 %v3303
    %v3421 = vpop.f32.mrb[0].mxu0
    %v3422 = vadd.f32 0.0, %v3421
    %v3423 = vpop.f32.mrb[0].mxu0
    %v3424 = vadd.f32 0.0, %v3423
    %3425 = vmatprep.mubr.f32.mxu0 0.0
    %3426 = vmatmul.mubr.f32.gmra.mrb[0].mxu0 %v3308
    %v3427 = vpop.f32.mrb[0].mxu0
    %v3428 = vadd.f32 0.0, %v3427
    %v3429 = vpop.f32.mrb[0].mxu0
    %v3430 = vadd.f32 0.0, %v3429
    %3431 = vdwg.mxu0
    %v3432 = vadd.f32 %v3069, %v3410
    %v3433 = vadd.f32 %v3070, %v3412
    %v3434 = vadd.f32 %v3071, %v3416
    %v3435 = vadd.f32 %v3072, %v3418
    %v3436 = vadd.f32 %v3073, %v3422
    %v3437 = vadd.f32 %v3074, %v3424
    %v3438 = vadd.f32 %v3075, %v3428
    %v3439 = vadd.f32 %v3076, %v3430
    %v3440 = vld [vmem:[%s13] sm:$0x3]
    %v3442 = vlaneseq
    %v3443 = vshrl.u32 %v3442, 7
    %v3444 = vsub.s32 0, %v3443
    %v3445 = vrot.slane %v3440, %v3444
    %v3446 = vlaneseq
    %v3447 = vshrl.u32 %v3446, 7
    %v3448 = vsub.s32 1, %v3447
    %v3449 = vrot.slane %v3440, %v3448
    %v3452 = vadd.f32 %v3432, %v3445
    %v3453 = vadd.f32 %v3433, %v3449
    %v3454 = vadd.f32 %v3434, %v3445
    %v3455 = vadd.f32 %v3435, %v3449
    %v3456 = vadd.f32 %v3436, %v3445
    %v3457 = vadd.f32 %v3437, %v3449
    %v3458 = vadd.f32 %v3438, %v3445
    %v3459 = vadd.f32 %v3439, %v3449
    %v3460 = vadd.f32 %v1142, %v3452
    %v3461 = vadd.f32 %v1143, %v3453
    %v3462 = vadd.f32 %v1144, %v3454
    %v3463 = vadd.f32 %v1145, %v3455
    %v3464 = vadd.f32 %v1146, %v3456
    %v3465 = vadd.f32 %v1147, %v3457
    %v3466 = vadd.f32 %v1148, %v3458
    %v3467 = vadd.f32 %v1149, %v3459
    %v3468 = vld [vmem:[%s14] sm:$0x3]
    %v3469 = vld [vmem:[%s15] sm:$0x3]
    %v3470 = vsel %vm1090, %v3461, 0.0
    %v3471 = vadd.f32 %v3460, %v3470
    %3472 = vadd.xlane.f32.xlu0 %v3471
    %v3473 = vpop.xlane.xlu0 %3472
    %v3474 = vsel %vm1090, %v3463, 0.0
    %v3475 = vadd.f32 %v3462, %v3474
    %3476 = vadd.xlane.f32.xlu0 %v3475
    %v3477 = vpop.xlane.xlu0 %3476
    %v3478 = vsel %vm1090, %v3465, 0.0
    %v3479 = vadd.f32 %v3464, %v3478
    %3480 = vadd.xlane.f32.xlu0 %v3479
    %v3481 = vpop.xlane.xlu0 %3480
    %v3482 = vsel %vm1090, %v3467, 0.0
    %v3483 = vadd.f32 %v3466, %v3482
    %3484 = vadd.xlane.f32.xlu0 %v3483
    %v3485 = vpop.xlane.xlu0 %3484
    %v3486 = vrcp.pop 160.0
    %v3487 = vmul.f32 %v3473, %v3486
    %v3488 = vmul.f32 %v3477, %v3486
    %v3489 = vmul.f32 %v3481, %v3486
    %v3490 = vmul.f32 %v3485, %v3486
    %v3491 = vsub.f32 %v3460, %v3487
    %v3492 = vsub.f32 %v3461, %v3487
    %v3493 = vsub.f32 %v3462, %v3488
    %v3494 = vsub.f32 %v3463, %v3488
    %v3495 = vsub.f32 %v3464, %v3489
    %v3496 = vsub.f32 %v3465, %v3489
    %v3497 = vsub.f32 %v3466, %v3490
    %v3498 = vsub.f32 %v3467, %v3490
    %v3499 = vmul.f32 %v3491, %v3491
    %v3500 = vmul.f32 %v3492, %v3492
    %v3501 = vmul.f32 %v3493, %v3493
    %v3502 = vmul.f32 %v3494, %v3494
    %v3503 = vmul.f32 %v3495, %v3495
    %v3504 = vmul.f32 %v3496, %v3496
    %v3505 = vmul.f32 %v3497, %v3497
    %v3506 = vmul.f32 %v3498, %v3498
    %v3507 = vsel %vm1090, %v3500, 0.0
    %v3508 = vadd.f32 %v3499, %v3507
    %3509 = vadd.xlane.f32.xlu0 %v3508
    %v3510 = vpop.xlane.xlu0 %3509
    %v3511 = vsel %vm1090, %v3502, 0.0
    %v3512 = vadd.f32 %v3501, %v3511
    %3513 = vadd.xlane.f32.xlu0 %v3512
    %v3514 = vpop.xlane.xlu0 %3513
    %v3515 = vsel %vm1090, %v3504, 0.0
    %v3516 = vadd.f32 %v3503, %v3515
    %3517 = vadd.xlane.f32.xlu0 %v3516
    %v3518 = vpop.xlane.xlu0 %3517
    %v3519 = vsel %vm1090, %v3506, 0.0
    %v3520 = vadd.f32 %v3505, %v3519
    %3521 = vadd.xlane.f32.xlu0 %v3520
    %v3522 = vpop.xlane.xlu0 %3521
    %v3523 = vmul.f32 %v3510, %v3486
    %v3524 = vmul.f32 %v3514, %v3486
    %v3525 = vmul.f32 %v3518, %v3486
    %v3526 = vmul.f32 %v3522, %v3486
    %v3527 = vadd.f32 %v3523, 1e-05
    %v3528 = vadd.f32 %v3524, 1e-05
    %v3529 = vadd.f32 %v3525, 1e-05
    %v3530 = vadd.f32 %v3526, 1e-05
    %v3531 = vrsqrt.pop %v3527
    %v3532 = vrsqrt.pop %v3528
    %v3533 = vrsqrt.pop %v3529
    %v3534 = vrsqrt.pop %v3530
    %v3535 = vmul.f32 %v3491, %v3531
    %v3536 = vmul.f32 %v3492, %v3531
    %v3537 = vmul.f32 %v3493, %v3532
    %v3538 = vmul.f32 %v3494, %v3532
    %v3539 = vmul.f32 %v3495, %v3533
    %v3540 = vmul.f32 %v3496, %v3533
    %v3541 = vmul.f32 %v3497, %v3534
    %v3542 = vmul.f32 %v3498, %v3534
    %v3544 = vlaneseq
    %v3545 = vshrl.u32 %v3544, 7
    %v3546 = vsub.s32 0, %v3545
    %v3547 = vrot.slane %v3468, %v3546
    %v3548 = vlaneseq
    %v3549 = vshrl.u32 %v3548, 7
    %v3550 = vsub.s32 1, %v3549
    %v3551 = vrot.slane %v3468, %v3550
    %v3554 = vmul.f32 %v3535, %v3547
    %v3555 = vmul.f32 %v3536, %v3551
    %v3556 = vmul.f32 %v3537, %v3547
    %v3557 = vmul.f32 %v3538, %v3551
    %v3558 = vmul.f32 %v3539, %v3547
    %v3559 = vmul.f32 %v3540, %v3551
    %v3560 = vmul.f32 %v3541, %v3547
    %v3561 = vmul.f32 %v3542, %v3551
    %v3563 = vlaneseq
    %v3564 = vshrl.u32 %v3563, 7
    %v3565 = vsub.s32 0, %v3564
    %v3566 = vrot.slane %v3469, %v3565
    %v3567 = vlaneseq
    %v3568 = vshrl.u32 %v3567, 7
    %v3569 = vsub.s32 1, %v3568
    %v3570 = vrot.slane %v3469, %v3569
    %v3573 = vadd.f32 %v3554, %v3566
    %v3574 = vadd.f32 %v3555, %v3570
    %v3575 = vadd.f32 %v3556, %v3566
    %v3576 = vadd.f32 %v3557, %v3570
    %v3577 = vadd.f32 %v3558, %v3566
    %v3578 = vadd.f32 %v3559, %v3570
    %v3579 = vadd.f32 %v3560, %v3566
    %v3580 = vadd.f32 %v3561, %v3570
    %v3581 = vld [vmem:[%s16] sm:$0xff]
    %v3582 = vld [vmem:[%s16 + $0x8] sm:$0xff]
    %v3583 = vld [vmem:[%s16 + $0x10] sm:$0xff]
    %v3584 = vld [vmem:[%s16 + $0x18] sm:$0xff]
    %v3585 = vld [vmem:[%s16 + $0x20] sm:$0xff]
    %v3586 = vld [vmem:[%s16 + $0x28] sm:$0xff]
    %v3587 = vld [vmem:[%s16 + $0x30] sm:$0xff]
    %v3588 = vld [vmem:[%s16 + $0x38] sm:$0xff]
    %v3589 = vld [vmem:[%s16 + $0x40] sm:$0xff]
    %v3590 = vld [vmem:[%s16 + $0x48] sm:$0xff]
    %v3591 = vld [vmem:[%s16 + $0x50] sm:$0xff]
    %v3592 = vld [vmem:[%s16 + $0x58] sm:$0xff]
    %v3593 = vld [vmem:[%s16 + $0x60] sm:$0xff]
    %v3594 = vld [vmem:[%s16 + $0x68] sm:$0xff]
    %v3595 = vld [vmem:[%s16 + $0x70] sm:$0xff]
    %v3596 = vld [vmem:[%s16 + $0x78] sm:$0xff]
    %v3597 = vld [vmem:[%s16 + $0x80] sm:$0xff]
    %v3598 = vld [vmem:[%s16 + $0x88] sm:$0xff]
    %v3599 = vld [vmem:[%s16 + $0x90] sm:$0xff]
    %v3600 = vld [vmem:[%s16 + $0x98] sm:$0xff]
    %v3601 = vld [vmem:[%s16 + $0xa0] sm:$0xff]
    %v3602 = vld [vmem:[%s16 + $0xa8] sm:$0xff]
    %v3603 = vld [vmem:[%s16 + $0xb0] sm:$0xff]
    %v3604 = vld [vmem:[%s16 + $0xb8] sm:$0xff]
    %v3605 = vld [vmem:[%s16 + $0xc0] sm:$0xff]
    %v3606 = vld [vmem:[%s16 + $0xc8] sm:$0xff]
    %v3607 = vld [vmem:[%s16 + $0xd0] sm:$0xff]
    %v3608 = vld [vmem:[%s16 + $0xd8] sm:$0xff]
    %v3609 = vld [vmem:[%s16 + $0xe0] sm:$0xff]
    %v3610 = vld [vmem:[%s16 + $0xe8] sm:$0xff]
    %v3611 = vld [vmem:[%s16 + $0xf0] sm:$0xff]
    %v3612 = vld [vmem:[%s16 + $0xf8] sm:$0xff]
    %v3613 = vld [vmem:[%s16 + $0x100] sm:$0xff]
    %v3614 = vld [vmem:[%s16 + $0x108] sm:$0xff]
    %v3615 = vld [vmem:[%s16 + $0x110] sm:$0xff]
    %v3616 = vld [vmem:[%s16 + $0x118] sm:$0xff]
    %v3617 = vld [vmem:[%s16 + $0x120] sm:$0xff]
    %v3618 = vld [vmem:[%s16 + $0x128] sm:$0xff]
    %v3619 = vld [vmem:[%s16 + $0x130] sm:$0xff]
    %v3620 = vld [vmem:[%s16 + $0x138] sm:$0xff]
    %v3621 = vld [vmem:[%s16 + $0x140] sm:$0xff]
    %v3622 = vld [vmem:[%s16 + $0x148] sm:$0xff]
    %v3623 = vld [vmem:[%s16 + $0x150] sm:$0xff]
    %v3624 = vld [vmem:[%s16 + $0x158] sm:$0xff]
    %v3625 = vld [vmem:[%s16 + $0x160] sm:$0xff]
    %v3626 = vld [vmem:[%s16 + $0x168] sm:$0xff]
    %v3627 = vld [vmem:[%s16 + $0x170] sm:$0xff]
    %v3628 = vld [vmem:[%s16 + $0x178] sm:$0xff]
    %v3629 = vld [vmem:[%s16 + $0x180] sm:$0xff]
    %v3630 = vld [vmem:[%s16 + $0x188] sm:$0xff]
    %v3631 = vld [vmem:[%s16 + $0x190] sm:$0xff]
    %v3632 = vld [vmem:[%s16 + $0x198] sm:$0xff]
    %v3633 = vld [vmem:[%s16 + $0x1a0] sm:$0xff]
    %v3634 = vld [vmem:[%s16 + $0x1a8] sm:$0xff]
    %v3635 = vld [vmem:[%s16 + $0x1b0] sm:$0xff]
    %v3636 = vld [vmem:[%s16 + $0x1b8] sm:$0xff]
    %v3637 = vld [vmem:[%s16 + $0x1c0] sm:$0xff]
    %v3638 = vld [vmem:[%s16 + $0x1c8] sm:$0xff]
    %v3639 = vld [vmem:[%s16 + $0x1d0] sm:$0xff]
    %v3640 = vld [vmem:[%s16 + $0x1d8] sm:$0xff]
    %v3641 = vld [vmem:[%s16 + $0x1e0] sm:$0xff]
    %v3642 = vld [vmem:[%s16 + $0x1e8] sm:$0xff]
    %v3643 = vld [vmem:[%s16 + $0x1f0] sm:$0xff]
    %v3644 = vld [vmem:[%s16 + $0x1f8] sm:$0xff]
    %v3645 = vld [vmem:[%s16 + $0x200] sm:$0xff]
    %v3646 = vld [vmem:[%s16 + $0x208] sm:$0xff]
    %v3647 = vld [vmem:[%s16 + $0x210] sm:$0xff]
    %v3648 = vld [vmem:[%s16 + $0x218] sm:$0xff]
    %v3649 = vld [vmem:[%s16 + $0x220] sm:$0xff]
    %v3650 = vld [vmem:[%s16 + $0x228] sm:$0xff]
    %v3651 = vld [vmem:[%s16 + $0x230] sm:$0xff]
    %v3652 = vld [vmem:[%s16 + $0x238] sm:$0xff]
    %v3653 = vld [vmem:[%s16 + $0x240] sm:$0xff]
    %v3654 = vld [vmem:[%s16 + $0x248] sm:$0xff]
    %v3655 = vld [vmem:[%s16 + $0x250] sm:$0xff]
    %v3656 = vld [vmem:[%s16 + $0x258] sm:$0xff]
    %v3657 = vld [vmem:[%s16 + $0x260] sm:$0xff]
    %v3658 = vld [vmem:[%s16 + $0x268] sm:$0xff]
    %v3659 = vld [vmem:[%s16 + $0x270] sm:$0xff]
    %v3660 = vld [vmem:[%s16 + $0x278] sm:$0xff]
    %v3661 = vld [vmem:[%s16 + $0x280] sm:$0xff]
    %v3662 = vld [vmem:[%s16 + $0x288] sm:$0xff]
    %v3663 = vld [vmem:[%s16 + $0x290] sm:$0xff]
    %v3664 = vld [vmem:[%s16 + $0x298] sm:$0xff]
    %v3665 = vld [vmem:[%s16 + $0x2a0] sm:$0xff]
    %v3666 = vld [vmem:[%s16 + $0x2a8] sm:$0xff]
    %v3667 = vld [vmem:[%s16 + $0x2b0] sm:$0xff]
    %v3668 = vld [vmem:[%s16 + $0x2b8] sm:$0xff]
    %v3669 = vld [vmem:[%s16 + $0x2c0] sm:$0xff]
    %v3670 = vld [vmem:[%s16 + $0x2c8] sm:$0xff]
    %v3671 = vld [vmem:[%s16 + $0x2d0] sm:$0xff]
    %v3672 = vld [vmem:[%s16 + $0x2d8] sm:$0xff]
    %v3673 = vld [vmem:[%s16 + $0x2e0] sm:$0xff]
    %v3674 = vld [vmem:[%s16 + $0x2e8] sm:$0xff]
    %v3675 = vld [vmem:[%s16 + $0x2f0] sm:$0xff]
    %v3676 = vld [vmem:[%s16 + $0x2f8] sm:$0xff]
    %v3677 = vld [vmem:[%s16 + $0x300] sm:$0xff]
    %v3678 = vld [vmem:[%s16 + $0x308] sm:$0xff]
    %v3679 = vld [vmem:[%s16 + $0x310] sm:$0xff]
    %v3680 = vld [vmem:[%s16 + $0x318] sm:$0xff]
    %v3681 = vld [vmem:[%s16 + $0x320] sm:$0xff]
    %v3682 = vld [vmem:[%s16 + $0x328] sm:$0xff]
    %v3683 = vld [vmem:[%s16 + $0x330] sm:$0xff]
    %v3684 = vld [vmem:[%s16 + $0x338] sm:$0xff]
    %v3685 = vld [vmem:[%s16 + $0x340] sm:$0xff]
    %v3686 = vld [vmem:[%s16 + $0x348] sm:$0xff]
    %v3687 = vld [vmem:[%s16 + $0x350] sm:$0xff]
    %v3688 = vld [vmem:[%s16 + $0x358] sm:$0xff]
    %v3689 = vld [vmem:[%s16 + $0x360] sm:$0xff]
    %v3690 = vld [vmem:[%s16 + $0x368] sm:$0xff]
    %v3691 = vld [vmem:[%s16 + $0x370] sm:$0xff]
    %v3692 = vld [vmem:[%s16 + $0x378] sm:$0xff]
    %v3693 = vld [vmem:[%s16 + $0x380] sm:$0xff]
    %v3694 = vld [vmem:[%s16 + $0x388] sm:$0xff]
    %v3695 = vld [vmem:[%s16 + $0x390] sm:$0xff]
    %v3696 = vld [vmem:[%s16 + $0x398] sm:$0xff]
    %v3697 = vld [vmem:[%s16 + $0x3a0] sm:$0xff]
    %v3698 = vld [vmem:[%s16 + $0x3a8] sm:$0xff]
    %v3699 = vld [vmem:[%s16 + $0x3b0] sm:$0xff]
    %v3700 = vld [vmem:[%s16 + $0x3b8] sm:$0xff]
    %v3701 = vld [vmem:[%s16 + $0x3c0] sm:$0xff]
    %v3702 = vld [vmem:[%s16 + $0x3c8] sm:$0xff]
    %v3703 = vld [vmem:[%s16 + $0x3d0] sm:$0xff]
    %v3704 = vld [vmem:[%s16 + $0x3d8] sm:$0xff]
    %v3705 = vld [vmem:[%s16 + $0x3e0] sm:$0xff]
    %v3706 = vld [vmem:[%s16 + $0x3e8] sm:$0xff]
    %v3707 = vld [vmem:[%s16 + $0x3f0] sm:$0xff]
    %v3708 = vld [vmem:[%s16 + $0x3f8] sm:$0xff]
    %v3709 = vld [vmem:[%s16 + $0x400] sm:$0xff]
    %v3710 = vld [vmem:[%s16 + $0x408] sm:$0xff]
    %v3711 = vld [vmem:[%s16 + $0x410] sm:$0xff]
    %v3712 = vld [vmem:[%s16 + $0x418] sm:$0xff]
    %v3713 = vld [vmem:[%s16 + $0x420] sm:$0xff]
    %v3714 = vld [vmem:[%s16 + $0x428] sm:$0xff]
    %v3715 = vld [vmem:[%s16 + $0x430] sm:$0xff]
    %v3716 = vld [vmem:[%s16 + $0x438] sm:$0xff]
    %v3717 = vld [vmem:[%s16 + $0x440] sm:$0xff]
    %v3718 = vld [vmem:[%s16 + $0x448] sm:$0xff]
    %v3719 = vld [vmem:[%s16 + $0x450] sm:$0xff]
    %v3720 = vld [vmem:[%s16 + $0x458] sm:$0xff]
    %v3721 = vld [vmem:[%s16 + $0x460] sm:$0xff]
    %v3722 = vld [vmem:[%s16 + $0x468] sm:$0xff]
    %v3723 = vld [vmem:[%s16 + $0x470] sm:$0xff]
    %v3724 = vld [vmem:[%s16 + $0x478] sm:$0xff]
    %v3725 = vld [vmem:[%s16 + $0x480] sm:$0xff]
    %v3726 = vld [vmem:[%s16 + $0x488] sm:$0xff]
    %v3727 = vld [vmem:[%s16 + $0x490] sm:$0xff]
    %v3728 = vld [vmem:[%s16 + $0x498] sm:$0xff]
    %v3729 = vld [vmem:[%s16 + $0x4a0] sm:$0xff]
    %v3730 = vld [vmem:[%s16 + $0x4a8] sm:$0xff]
    %v3731 = vld [vmem:[%s16 + $0x4b0] sm:$0xff]
    %v3732 = vld [vmem:[%s16 + $0x4b8] sm:$0xff]
    %v3733 = vld [vmem:[%s16 + $0x4c0] sm:$0xff]
    %v3734 = vld [vmem:[%s16 + $0x4c8] sm:$0xff]
    %v3735 = vld [vmem:[%s16 + $0x4d0] sm:$0xff]
    %v3736 = vld [vmem:[%s16 + $0x4d8] sm:$0xff]
    %v3737 = vld [vmem:[%s16 + $0x4e0] sm:$0xff]
    %v3738 = vld [vmem:[%s16 + $0x4e8] sm:$0xff]
    %v3739 = vld [vmem:[%s16 + $0x4f0] sm:$0xff]
    %v3740 = vld [vmem:[%s16 + $0x4f8] sm:$0xff]
    %v3741 = vld [vmem:[%s16 + $0x500] sm:$0xff]
    %v3742 = vld [vmem:[%s16 + $0x508] sm:$0xff]
    %v3743 = vld [vmem:[%s16 + $0x510] sm:$0xff]
    %v3744 = vld [vmem:[%s16 + $0x518] sm:$0xff]
    %v3745 = vld [vmem:[%s16 + $0x520] sm:$0xff]
    %v3746 = vld [vmem:[%s16 + $0x528] sm:$0xff]
    %v3747 = vld [vmem:[%s16 + $0x530] sm:$0xff]
    %v3748 = vld [vmem:[%s16 + $0x538] sm:$0xff]
    %v3749 = vld [vmem:[%s16 + $0x540] sm:$0xff]
    %v3750 = vld [vmem:[%s16 + $0x548] sm:$0xff]
    %v3751 = vld [vmem:[%s16 + $0x550] sm:$0xff]
    %v3752 = vld [vmem:[%s16 + $0x558] sm:$0xff]
    %v3753 = vld [vmem:[%s16 + $0x560] sm:$0xff]
    %v3754 = vld [vmem:[%s16 + $0x568] sm:$0xff]
    %v3755 = vld [vmem:[%s16 + $0x570] sm:$0xff]
    %v3756 = vld [vmem:[%s16 + $0x578] sm:$0xff]
    %v3757 = vld [vmem:[%s16 + $0x580] sm:$0xff]
    %v3758 = vld [vmem:[%s16 + $0x588] sm:$0xff]
    %v3759 = vld [vmem:[%s16 + $0x590] sm:$0xff]
    %v3760 = vld [vmem:[%s16 + $0x598] sm:$0xff]
    %v3761 = vld [vmem:[%s16 + $0x5a0] sm:$0xff]
    %v3762 = vld [vmem:[%s16 + $0x5a8] sm:$0xff]
    %v3763 = vld [vmem:[%s16 + $0x5b0] sm:$0xff]
    %v3764 = vld [vmem:[%s16 + $0x5b8] sm:$0xff]
    %v3765 = vld [vmem:[%s16 + $0x5c0] sm:$0xff]
    %v3766 = vld [vmem:[%s16 + $0x5c8] sm:$0xff]
    %v3767 = vld [vmem:[%s16 + $0x5d0] sm:$0xff]
    %v3768 = vld [vmem:[%s16 + $0x5d8] sm:$0xff]
    %v3769 = vld [vmem:[%s16 + $0x5e0] sm:$0xff]
    %v3770 = vld [vmem:[%s16 + $0x5e8] sm:$0xff]
    %v3771 = vld [vmem:[%s16 + $0x5f0] sm:$0xff]
    %v3772 = vld [vmem:[%s16 + $0x5f8] sm:$0xff]
    %v3773 = vld [vmem:[%s16 + $0x600] sm:$0xff]
    %v3774 = vld [vmem:[%s16 + $0x608] sm:$0xff]
    %v3775 = vld [vmem:[%s16 + $0x610] sm:$0xff]
    %v3776 = vld [vmem:[%s16 + $0x618] sm:$0xff]
    %v3777 = vld [vmem:[%s16 + $0x620] sm:$0xff]
    %v3778 = vld [vmem:[%s16 + $0x628] sm:$0xff]
    %v3779 = vld [vmem:[%s16 + $0x630] sm:$0xff]
    %v3780 = vld [vmem:[%s16 + $0x638] sm:$0xff]
    %v3781 = vld [vmem:[%s16 + $0x640] sm:$0xff]
    %v3782 = vld [vmem:[%s16 + $0x648] sm:$0xff]
    %v3783 = vld [vmem:[%s16 + $0x650] sm:$0xff]
    %v3784 = vld [vmem:[%s16 + $0x658] sm:$0xff]
    %v3785 = vld [vmem:[%s16 + $0x660] sm:$0xff]
    %v3786 = vld [vmem:[%s16 + $0x668] sm:$0xff]
    %v3787 = vld [vmem:[%s16 + $0x670] sm:$0xff]
    %v3788 = vld [vmem:[%s16 + $0x678] sm:$0xff]
    %v3789 = vld [vmem:[%s16 + $0x680] sm:$0xff]
    %v3790 = vld [vmem:[%s16 + $0x688] sm:$0xff]
    %v3791 = vld [vmem:[%s16 + $0x690] sm:$0xff]
    %v3792 = vld [vmem:[%s16 + $0x698] sm:$0xff]
    %v3793 = vld [vmem:[%s16 + $0x6a0] sm:$0xff]
    %v3794 = vld [vmem:[%s16 + $0x6a8] sm:$0xff]
    %v3795 = vld [vmem:[%s16 + $0x6b0] sm:$0xff]
    %v3796 = vld [vmem:[%s16 + $0x6b8] sm:$0xff]
    %v3797 = vld [vmem:[%s16 + $0x6c0] sm:$0xff]
    %v3798 = vld [vmem:[%s16 + $0x6c8] sm:$0xff]
    %v3799 = vld [vmem:[%s16 + $0x6d0] sm:$0xff]
    %v3800 = vld [vmem:[%s16 + $0x6d8] sm:$0xff]
    %v3801 = vld [vmem:[%s16 + $0x6e0] sm:$0xff]
    %v3802 = vld [vmem:[%s16 + $0x6e8] sm:$0xff]
    %v3803 = vld [vmem:[%s16 + $0x6f0] sm:$0xff]
    %v3804 = vld [vmem:[%s16 + $0x6f8] sm:$0xff]
    %v3805 = vld [vmem:[%s16 + $0x700] sm:$0xff]
    %v3806 = vld [vmem:[%s16 + $0x708] sm:$0xff]
    %v3807 = vld [vmem:[%s16 + $0x710] sm:$0xff]
    %v3808 = vld [vmem:[%s16 + $0x718] sm:$0xff]
    %v3809 = vld [vmem:[%s16 + $0x720] sm:$0xff]
    %v3810 = vld [vmem:[%s16 + $0x728] sm:$0xff]
    %v3811 = vld [vmem:[%s16 + $0x730] sm:$0xff]
    %v3812 = vld [vmem:[%s16 + $0x738] sm:$0xff]
    %v3813 = vld [vmem:[%s16 + $0x740] sm:$0xff]
    %v3814 = vld [vmem:[%s16 + $0x748] sm:$0xff]
    %v3815 = vld [vmem:[%s16 + $0x750] sm:$0xff]
    %v3816 = vld [vmem:[%s16 + $0x758] sm:$0xff]
    %v3817 = vld [vmem:[%s16 + $0x760] sm:$0xff]
    %v3818 = vld [vmem:[%s16 + $0x768] sm:$0xff]
    %v3819 = vld [vmem:[%s16 + $0x770] sm:$0xff]
    %v3820 = vld [vmem:[%s16 + $0x778] sm:$0xff]
    %v3821 = vld [vmem:[%s16 + $0x780] sm:$0xff]
    %v3822 = vld [vmem:[%s16 + $0x788] sm:$0xff]
    %v3823 = vld [vmem:[%s16 + $0x790] sm:$0xff]
    %v3824 = vld [vmem:[%s16 + $0x798] sm:$0xff]
    %v3825 = vld [vmem:[%s16 + $0x7a0] sm:$0xff]
    %v3826 = vld [vmem:[%s16 + $0x7a8] sm:$0xff]
    %v3827 = vld [vmem:[%s16 + $0x7b0] sm:$0xff]
    %v3828 = vld [vmem:[%s16 + $0x7b8] sm:$0xff]
    %v3829 = vld [vmem:[%s16 + $0x7c0] sm:$0xff]
    %v3830 = vld [vmem:[%s16 + $0x7c8] sm:$0xff]
    %v3831 = vld [vmem:[%s16 + $0x7d0] sm:$0xff]
    %v3832 = vld [vmem:[%s16 + $0x7d8] sm:$0xff]
    %v3833 = vld [vmem:[%s16 + $0x7e0] sm:$0xff]
    %v3834 = vld [vmem:[%s16 + $0x7e8] sm:$0xff]
    %v3835 = vld [vmem:[%s16 + $0x7f0] sm:$0xff]
    %v3836 = vld [vmem:[%s16 + $0x7f8] sm:$0xff]
    %v3837 = vld [vmem:[%s16 + $0x800] sm:$0xff]
    %v3838 = vld [vmem:[%s16 + $0x808] sm:$0xff]
    %v3839 = vld [vmem:[%s16 + $0x810] sm:$0xff]
    %v3840 = vld [vmem:[%s16 + $0x818] sm:$0xff]
    %v3841 = vld [vmem:[%s16 + $0x820] sm:$0xff]
    %v3842 = vld [vmem:[%s16 + $0x828] sm:$0xff]
    %v3843 = vld [vmem:[%s16 + $0x830] sm:$0xff]
    %v3844 = vld [vmem:[%s16 + $0x838] sm:$0xff]
    %v3845 = vld [vmem:[%s16 + $0x840] sm:$0xff]
    %v3846 = vld [vmem:[%s16 + $0x848] sm:$0xff]
    %v3847 = vld [vmem:[%s16 + $0x850] sm:$0xff]
    %v3848 = vld [vmem:[%s16 + $0x858] sm:$0xff]
    %v3849 = vld [vmem:[%s16 + $0x860] sm:$0xff]
    %v3850 = vld [vmem:[%s16 + $0x868] sm:$0xff]
    %v3851 = vld [vmem:[%s16 + $0x870] sm:$0xff]
    %v3852 = vld [vmem:[%s16 + $0x878] sm:$0xff]
    %v3853 = vld [vmem:[%s16 + $0x880] sm:$0xff]
    %v3854 = vld [vmem:[%s16 + $0x888] sm:$0xff]
    %v3855 = vld [vmem:[%s16 + $0x890] sm:$0xff]
    %v3856 = vld [vmem:[%s16 + $0x898] sm:$0xff]
    %v3857 = vld [vmem:[%s16 + $0x8a0] sm:$0xff]
    %v3858 = vld [vmem:[%s16 + $0x8a8] sm:$0xff]
    %v3859 = vld [vmem:[%s16 + $0x8b0] sm:$0xff]
    %v3860 = vld [vmem:[%s16 + $0x8b8] sm:$0xff]
    %v3861 = vld [vmem:[%s16 + $0x8c0] sm:$0xff]
    %v3862 = vld [vmem:[%s16 + $0x8c8] sm:$0xff]
    %v3863 = vld [vmem:[%s16 + $0x8d0] sm:$0xff]
    %v3864 = vld [vmem:[%s16 + $0x8d8] sm:$0xff]
    %v3865 = vld [vmem:[%s16 + $0x8e0] sm:$0xff]
    %v3866 = vld [vmem:[%s16 + $0x8e8] sm:$0xff]
    %v3867 = vld [vmem:[%s16 + $0x8f0] sm:$0xff]
    %v3868 = vld [vmem:[%s16 + $0x8f8] sm:$0xff]
    %v3869 = vld [vmem:[%s16 + $0x900] sm:$0xff]
    %v3870 = vld [vmem:[%s16 + $0x908] sm:$0xff]
    %v3871 = vld [vmem:[%s16 + $0x910] sm:$0xff]
    %v3872 = vld [vmem:[%s16 + $0x918] sm:$0xff]
    %v3873 = vld [vmem:[%s16 + $0x920] sm:$0xff]
    %v3874 = vld [vmem:[%s16 + $0x928] sm:$0xff]
    %v3875 = vld [vmem:[%s16 + $0x930] sm:$0xff]
    %v3876 = vld [vmem:[%s16 + $0x938] sm:$0xff]
    %v3877 = vld [vmem:[%s16 + $0x940] sm:$0xff]
    %v3878 = vld [vmem:[%s16 + $0x948] sm:$0xff]
    %v3879 = vld [vmem:[%s16 + $0x950] sm:$0xff]
    %v3880 = vld [vmem:[%s16 + $0x958] sm:$0xff]
    %v3881 = vld [vmem:[%s16 + $0x960] sm:$0xff]
    %v3882 = vld [vmem:[%s16 + $0x968] sm:$0xff]
    %v3883 = vld [vmem:[%s16 + $0x970] sm:$0xff]
    %v3884 = vld [vmem:[%s16 + $0x978] sm:$0xff]
    %v3885 = vld [vmem:[%s16 + $0x980] sm:$0xff]
    %v3886 = vld [vmem:[%s16 + $0x988] sm:$0xff]
    %v3887 = vld [vmem:[%s16 + $0x990] sm:$0xff]
    %v3888 = vld [vmem:[%s16 + $0x998] sm:$0xff]
    %v3889 = vld [vmem:[%s16 + $0x9a0] sm:$0xff]
    %v3890 = vld [vmem:[%s16 + $0x9a8] sm:$0xff]
    %v3891 = vld [vmem:[%s16 + $0x9b0] sm:$0xff]
    %v3892 = vld [vmem:[%s16 + $0x9b8] sm:$0xff]
    %v3893 = vld [vmem:[%s16 + $0x9c0] sm:$0xff]
    %v3894 = vld [vmem:[%s16 + $0x9c8] sm:$0xff]
    %v3895 = vld [vmem:[%s16 + $0x9d0] sm:$0xff]
    %v3896 = vld [vmem:[%s16 + $0x9d8] sm:$0xff]
    %v3897 = vld [vmem:[%s16 + $0x9e0] sm:$0xff]
    %v3898 = vld [vmem:[%s16 + $0x9e8] sm:$0xff]
    %v3899 = vld [vmem:[%s16 + $0x9f0] sm:$0xff]
    %v3900 = vld [vmem:[%s16 + $0x9f8] sm:$0xff]
    %v3901 = vld [vmem:[%s17] sm:$0xff]
    %v3902 = vld [vmem:[%s17 + $0x8] sm:$0xff]
    %v3905 = vlaneseq
    %v3906 = vshrl.u32 %v3905, 7
    %v3907 = vsub.s32 0, %v3906
    %v3908 = vrot.slane %v3901, %v3907
    %v3909 = vlaneseq
    %v3910 = vshrl.u32 %v3909, 7
    %v3911 = vsub.s32 1, %v3910
    %v3912 = vrot.slane %v3901, %v3911
    %v3913 = vlaneseq
    %v3914 = vshrl.u32 %v3913, 7
    %v3915 = vsub.s32 2, %v3914
    %v3916 = vrot.slane %v3901, %v3915
    %v3917 = vlaneseq
    %v3918 = vshrl.u32 %v3917, 7
    %v3919 = vsub.s32 3, %v3918
    %v3920 = vrot.slane %v3901, %v3919
    %v3921 = vlaneseq
    %v3922 = vshrl.u32 %v3921, 7
    %v3923 = vsub.s32 4, %v3922
    %v3924 = vrot.slane %v3901, %v3923
    %v3925 = vlaneseq
    %v3926 = vshrl.u32 %v3925, 7
    %v3927 = vsub.s32 5, %v3926
    %v3928 = vrot.slane %v3901, %v3927
    %v3929 = vlaneseq
    %v3930 = vshrl.u32 %v3929, 7
    %v3931 = vsub.s32 6, %v3930
    %v3932 = vrot.slane %v3901, %v3931
    %v3933 = vlaneseq
    %v3934 = vshrl.u32 %v3933, 7
    %v3935 = vsub.s32 7, %v3934
    %v3936 = vrot.slane %v3901, %v3935
    %v3937 = vlaneseq
    %v3938 = vshrl.u32 %v3937, 7
    %v3939 = vsub.s32 0, %v3938
    %v3940 = vrot.slane %v3902, %v3939
    %v3941 = vlaneseq
    %v3942 = vshrl.u32 %v3941, 7
    %v3943 = vsub.s32 1, %v3942
    %v3944 = vrot.slane %v3902, %v3943
    %v3945 = vlaneseq
    %v3946 = vshrl.u32 %v3945, 7
    %v3947 = vsub.s32 2, %v3946
    %v3948 = vrot.slane %v3902, %v3947
    %v3949 = vlaneseq
    %v3950 = vshrl.u32 %v3949, 7
    %v3951 = vsub.s32 3, %v3950
    %v3952 = vrot.slane %v3902, %v3951
    %v3953 = vlaneseq
    %v3954 = vshrl.u32 %v3953, 7
    %v3955 = vsub.s32 4, %v3954
    %v3956 = vrot.slane %v3902, %v3955
    %v3957 = vlaneseq
    %v3958 = vshrl.u32 %v3957, 7
    %v3959 = vsub.s32 5, %v3958
    %v3960 = vrot.slane %v3902, %v3959
    %v3961 = vlaneseq
    %v3962 = vshrl.u32 %v3961, 7
    %v3963 = vsub.s32 6, %v3962
    %v3964 = vrot.slane %v3902, %v3963
    %v3965 = vlaneseq
    %v3966 = vshrl.u32 %v3965, 7
    %v3967 = vsub.s32 7, %v3966
    %v3968 = vrot.slane %v3902, %v3967
    %v3986 = vsel %vm1090, %v3574, 0
    %v3989 = vsel %vm1090, %v3576, 0
    %v3992 = vsel %vm1090, %v3578, 0
    %v3995 = vsel %vm1090, %v3580, 0
    %3997 = vmatprep.subr.mxu0 %v3582
    %3998 = vmatpush1.msra.mxu0 %v3581
    %3999 = vmatprep.subr.mxu0 %v3598
    %4000 = vmatpush1.msra.mxu0 %v3597
    %4001 = vmatprep.subr.mxu0 %v3614
    %4002 = vmatpush1.msra.mxu0 %v3613
    %4003 = vmatprep.subr.mxu0 %v3630
    %4004 = vmatpush1.msra.mxu0 %v3629
    %4005 = vmatprep.subr.mxu0 %v3646
    %4006 = vmatpush1.msra.mxu0 %v3645
    %4007 = vmatprep.subr.mxu0 %v3662
    %4008 = vmatpush1.msra.mxu0 %v3661
    %4009 = vmatprep.subr.mxu0 %v3678
    %4010 = vmatpush1.msra.mxu0 %v3677
    %4011 = vmatprep.subr.mxu0 %v3694
    %4012 = vmatpush1.msra.mxu0 %v3693
    %4013 = vmatprep.subr.mxu0 %v3710
    %4014 = vmatpush1.msra.mxu0 %v3709
    %4015 = vmatprep.subr.mxu0 %v3726
    %4016 = vmatpush1.msra.mxu0 %v3725
    %4017 = vmatprep.subr.mxu0 %v3742
    %4018 = vmatpush1.msra.mxu0 %v3741
    %4019 = vmatprep.subr.mxu0 %v3758
    %4020 = vmatpush1.msra.mxu0 %v3757
    %4021 = vmatprep.subr.mxu0 %v3774
    %4022 = vmatpush1.msra.mxu0 %v3773
    %4023 = vmatprep.subr.mxu0 %v3790
    %4024 = vmatpush1.msra.mxu0 %v3789
    %4025 = vmatprep.subr.mxu0 %v3806
    %4026 = vmatpush1.msra.mxu0 %v3805
    %4027 = vmatprep.subr.mxu0 %v3822
    %4028 = vmatpush1.msra.mxu0 %v3821
    %4029 = vmatprep.subr.mxu0 %v3838
    %4030 = vmatpush1.msra.mxu0 %v3837
    %4031 = vmatprep.subr.mxu0 %v3854
    %4032 = vmatpush1.msra.mxu0 %v3853
    %4033 = vmatprep.subr.mxu0 %v3870
    %4034 = vmatpush1.msra.mxu0 %v3869
    %4035 = vmatprep.subr.mxu0 %v3886
    %4036 = vmatpush1.msra.mxu0 %v3885
    %4037 = vmatprep.subr.mxu0 0.0
    %4038 = vmatpush1.msra.mxu0 0.0
    %4039 = vmatprep.subr.mxu0 0.0
    %4040 = vmatpush1.msra.mxu0 0.0
    %4041 = vmatprep.subr.mxu0 0.0
    %4042 = vmatpush1.msra.mxu0 0.0
    %4043 = vmatprep.subr.mxu0 0.0
    %4044 = vmatpush1.msra.mxu0 0.0
    %4045 = vmatprep.subr.mxu0 0.0
    %4046 = vmatpush1.msra.mxu0 0.0
    %4047 = vmatprep.subr.mxu0 0.0
    %4048 = vmatpush1.msra.mxu0 0.0
    %4049 = vmatprep.subr.mxu0 0.0
    %4050 = vmatpush1.msra.mxu0 0.0
    %4051 = vmatprep.subr.mxu0 0.0
    %4052 = vmatpush1.msra.mxu0 0.0
    %4053 = vmatprep.subr.mxu0 0.0
    %4054 = vmatpush1.msra.mxu0 0.0
    %4055 = vmatprep.subr.mxu0 0.0
    %4056 = vmatpush1.msra.mxu0 0.0
    %4057 = vmatprep.subr.mxu0 0.0
    %4058 = vmatpush1.msra.mxu0 0.0
    %4059 = vmatprep.subr.mxu0 0.0
    %4060 = vmatpush1.msra.mxu0 0.0
    %4061 = vmatprep.mubr.f32.mxu0 %v3986
    %4062 = vmatmul.mubr.f32.gmra.mrb[0].mxu0 %v3573
    %v4063 = vpop.f32.mrb[0].mxu0
    %v4064 = vadd.f32 %v3908, %v4063
    %v4065 = vpop.f32.mrb[0].mxu0
    %v4066 = vadd.f32 %v3912, %v4065
    %4067 = vmatprep.mubr.f32.mxu0 %v3989
    %4068 = vmatmul.mubr.f32.gmra.mrb[0].mxu0 %v3575
    %v4069 = vpop.f32.mrb[0].mxu0
    %v4070 = vadd.f32 %v3908, %v4069
    %v4071 = vpop.f32.mrb[0].mxu0
    %v4072 = vadd.f32 %v3912, %v4071
    %4073 = vmatprep.mubr.f32.mxu0 %v3992
    %4074 = vmatmul.mubr.f32.gmra.mrb[0].mxu0 %v3577
    %v4075 = vpop.f32.mrb[0].mxu0
    %v4076 = vadd.f32 %v3908, %v4075
    %v4077 = vpop.f32.mrb[0].mxu0
    %v4078 = vadd.f32 %v3912, %v4077
    %4079 = vmatprep.mubr.f32.mxu0 %v3995
    %4080 = vmatmul.mubr.f32.gmra.mrb[0].mxu0 %v3579
    %v4081 = vpop.f32.mrb[0].mxu0
    %v4082 = vadd.f32 %v3908, %v4081
    %v4083 = vpop.f32.mrb[0].mxu0
    %v4084 = vadd.f32 %v3912, %v4083
    %4085 = vdwg.mxu0
    %4086 = vmatprep.subr.mxu0 %v3584
    %4087 = vmatpush1.msra.mxu0 %v3583
    %4088 = vmatprep.subr.mxu0 %v3600
    %4089 = vmatpush1.msra.mxu0 %v3599
    %4090 = vmatprep.subr.mxu0 %v3616
    %4091 = vmatpush1.msra.mxu0 %v3615
    %4092 = vmatprep.subr.mxu0 %v3632
    %4093 = vmatpush1.msra.mxu0 %v3631
    %4094 = vmatprep.subr.mxu0 %v3648
    %4095 = vmatpush1.msra.mxu0 %v3647
    %4096 = vmatprep.subr.mxu0 %v3664
    %4097 = vmatpush1.msra.mxu0 %v3663
    %4098 = vmatprep.subr.mxu0 %v3680
    %4099 = vmatpush1.msra.mxu0 %v3679
    %4100 = vmatprep.subr.mxu0 %v3696
    %4101 = vmatpush1.msra.mxu0 %v3695
    %4102 = vmatprep.subr.mxu0 %v3712
    %4103 = vmatpush1.msra.mxu0 %v3711
    %4104 = vmatprep.subr.mxu0 %v3728
    %4105 = vmatpush1.msra.mxu0 %v3727
    %4106 = vmatprep.subr.mxu0 %v3744
    %4107 = vmatpush1.msra.mxu0 %v3743
    %4108 = vmatprep.subr.mxu0 %v3760
    %4109 = vmatpush1.msra.mxu0 %v3759
    %4110 = vmatprep.subr.mxu0 %v3776
    %4111 = vmatpush1.msra.mxu0 %v3775
    %4112 = vmatprep.subr.mxu0 %v3792
    %4113 = vmatpush1.msra.mxu0 %v3791
    %4114 = vmatprep.subr.mxu0 %v3808
    %4115 = vmatpush1.msra.mxu0 %v3807
    %4116 = vmatprep.subr.mxu0 %v3824
    %4117 = vmatpush1.msra.mxu0 %v3823
    %4118 = vmatprep.subr.mxu0 %v3840
    %4119 = vmatpush1.msra.mxu0 %v3839
    %4120 = vmatprep.subr.mxu0 %v3856
    %4121 = vmatpush1.msra.mxu0 %v3855
    %4122 = vmatprep.subr.mxu0 %v3872
    %4123 = vmatpush1.msra.mxu0 %v3871
    %4124 = vmatprep.subr.mxu0 %v3888
    %4125 = vmatpush1.msra.mxu0 %v3887
    %4126 = vmatprep.subr.mxu0 0.0
    %4127 = vmatpush1.msra.mxu0 0.0
    %4128 = vmatprep.subr.mxu0 0.0
    %4129 = vmatpush1.msra.mxu0 0.0
    %4130 = vmatprep.subr.mxu0 0.0
    %4131 = vmatpush1.msra.mxu0 0.0
    %4132 = vmatprep.subr.mxu0 0.0
    %4133 = vmatpush1.msra.mxu0 0.0
    %4134 = vmatprep.subr.mxu0 0.0
    %4135 = vmatpush1.msra.mxu0 0.0
    %4136 = vmatprep.subr.mxu0 0.0
    %4137 = vmatpush1.msra.mxu0 0.0
    %4138 = vmatprep.subr.mxu0 0.0
    %4139 = vmatpush1.msra.mxu0 0.0
    %4140 = vmatprep.subr.mxu0 0.0
    %4141 = vmatpush1.msra.mxu0 0.0
    %4142 = vmatprep.subr.mxu0 0.0
    %4143 = vmatpush1.msra.mxu0 0.0
    %4144 = vmatprep.subr.mxu0 0.0
    %4145 = vmatpush1.msra.mxu0 0.0
    %4146 = vmatprep.subr.mxu0 0.0
    %4147 = vmatpush1.msra.mxu0 0.0
    %4148 = vmatprep.subr.mxu0 0.0
    %4149 = vmatpush1.msra.mxu0 0.0
    %4150 = vmatprep.mubr.f32.mxu0 %v3986
    %4151 = vmatmul.mubr.f32.gmra.mrb[0].mxu0 %v3573
    %v4152 = vpop.f32.mrb[0].mxu0
    %v4153 = vadd.f32 %v3916, %v4152
    %v4154 = vpop.f32.mrb[0].mxu0
    %v4155 = vadd.f32 %v3920, %v4154
    %4156 = vmatprep.mubr.f32.mxu0 %v3989
    %4157 = vmatmul.mubr.f32.gmra.mrb[0].mxu0 %v3575
    %v4158 = vpop.f32.mrb[0].mxu0
    %v4159 = vadd.f32 %v3916, %v4158
    %v4160 = vpop.f32.mrb[0].mxu0
    %v4161 = vadd.f32 %v3920, %v4160
    %4162 = vmatprep.mubr.f32.mxu0 %v3992
    %4163 = vmatmul.mubr.f32.gmra.mrb[0].mxu0 %v3577
    %v4164 = vpop.f32.mrb[0].mxu0
    %v4165 = vadd.f32 %v3916, %v4164
    %v4166 = vpop.f32.mrb[0].mxu0
    %v4167 = vadd.f32 %v3920, %v4166
    %4168 = vmatprep.mubr.f32.mxu0 %v3995
    %4169 = vmatmul.mubr.f32.gmra.mrb[0].mxu0 %v3579
    %v4170 = vpop.f32.mrb[0].mxu0
    %v4171 = vadd.f32 %v3916, %v4170
    %v4172 = vpop.f32.mrb[0].mxu0
    %v4173 = vadd.f32 %v3920, %v4172
    %4174 = vdwg.mxu0
    %4175 = vmatprep.subr.mxu0 %v3586
    %4176 = vmatpush1.msra.mxu0 %v3585
    %4177 = vmatprep.subr.mxu0 %v3602
    %4178 = vmatpush1.msra.mxu0 %v3601
    %4179 = vmatprep.subr.mxu0 %v3618
    %4180 = vmatpush1.msra.mxu0 %v3617
    %4181 = vmatprep.subr.mxu0 %v3634
    %4182 = vmatpush1.msra.mxu0 %v3633
    %4183 = vmatprep.subr.mxu0 %v3650
    %4184 = vmatpush1.msra.mxu0 %v3649
    %4185 = vmatprep.subr.mxu0 %v3666
    %4186 = vmatpush1.msra.mxu0 %v3665
    %4187 = vmatprep.subr.mxu0 %v3682
    %4188 = vmatpush1.msra.mxu0 %v3681
    %4189 = vmatprep.subr.mxu0 %v3698
    %4190 = vmatpush1.msra.mxu0 %v3697
    %4191 = vmatprep.subr.mxu0 %v3714
    %4192 = vmatpush1.msra.mxu0 %v3713
    %4193 = vmatprep.subr.mxu0 %v3730
    %4194 = vmatpush1.msra.mxu0 %v3729
    %4195 = vmatprep.subr.mxu0 %v3746
    %4196 = vmatpush1.msra.mxu0 %v3745
    %4197 = vmatprep.subr.mxu0 %v3762
    %4198 = vmatpush1.msra.mxu0 %v3761
    %4199 = vmatprep.subr.mxu0 %v3778
    %4200 = vmatpush1.msra.mxu0 %v3777
    %4201 = vmatprep.subr.mxu0 %v3794
    %4202 = vmatpush1.msra.mxu0 %v3793
    %4203 = vmatprep.subr.mxu0 %v3810
    %4204 = vmatpush1.msra.mxu0 %v3809
    %4205 = vmatprep.subr.mxu0 %v3826
    %4206 = vmatpush1.msra.mxu0 %v3825
    %4207 = vmatprep.subr.mxu0 %v3842
    %4208 = vmatpush1.msra.mxu0 %v3841
    %4209 = vmatprep.subr.mxu0 %v3858
    %4210 = vmatpush1.msra.mxu0 %v3857
    %4211 = vmatprep.subr.mxu0 %v3874
    %4212 = vmatpush1.msra.mxu0 %v3873
    %4213 = vmatprep.subr.mxu0 %v3890
    %4214 = vmatpush1.msra.mxu0 %v3889
    %4215 = vmatprep.subr.mxu0 0.0
    %4216 = vmatpush1.msra.mxu0 0.0
    %4217 = vmatprep.subr.mxu0 0.0
    %4218 = vmatpush1.msra.mxu0 0.0
    %4219 = vmatprep.subr.mxu0 0.0
    %4220 = vmatpush1.msra.mxu0 0.0
    %4221 = vmatprep.subr.mxu0 0.0
    %4222 = vmatpush1.msra.mxu0 0.0
    %4223 = vmatprep.subr.mxu0 0.0
    %4224 = vmatpush1.msra.mxu0 0.0
    %4225 = vmatprep.subr.mxu0 0.0
    %4226 = vmatpush1.msra.mxu0 0.0
    %4227 = vmatprep.subr.mxu0 0.0
    %4228 = vmatpush1.msra.mxu0 0.0
    %4229 = vmatprep.subr.mxu0 0.0
    %4230 = vmatpush1.msra.mxu0 0.0
    %4231 = vmatprep.subr.mxu0 0.0
    %4232 = vmatpush1.msra.mxu0 0.0
    %4233 = vmatprep.subr.mxu0 0.0
    %4234 = vmatpush1.msra.mxu0 0.0
    %4235 = vmatprep.subr.mxu0 0.0
    %4236 = vmatpush1.msra.mxu0 0.0
    %4237 = vmatprep.subr.mxu0 0.0
    %4238 = vmatpush1.msra.mxu0 0.0
    %4239 = vmatprep.mubr.f32.mxu0 %v3986
    %4240 = vmatmul.mubr.f32.gmra.mrb[0].mxu0 %v3573
    %v4241 = vpop.f32.mrb[0].mxu0
    %v4242 = vadd.f32 %v3924, %v4241
    %v4243 = vpop.f32.mrb[0].mxu0
    %v4244 = vadd.f32 %v3928, %v4243
    %4245 = vmatprep.mubr.f32.mxu0 %v3989
    %4246 = vmatmul.mubr.f32.gmra.mrb[0].mxu0 %v3575
    %v4247 = vpop.f32.mrb[0].mxu0
    %v4248 = vadd.f32 %v3924, %v4247
    %v4249 = vpop.f32.mrb[0].mxu0
    %v4250 = vadd.f32 %v3928, %v4249
    %4251 = vmatprep.mubr.f32.mxu0 %v3992
    %4252 = vmatmul.mubr.f32.gmra.mrb[0].mxu0 %v3577
    %v4253 = vpop.f32.mrb[0].mxu0
    %v4254 = vadd.f32 %v3924, %v4253
    %v4255 = vpop.f32.mrb[0].mxu0
    %v4256 = vadd.f32 %v3928, %v4255
    %4257 = vmatprep.mubr.f32.mxu0 %v3995
    %4258 = vmatmul.mubr.f32.gmra.mrb[0].mxu0 %v3579
    %v4259 = vpop.f32.mrb[0].mxu0
    %v4260 = vadd.f32 %v3924, %v4259
    %v4261 = vpop.f32.mrb[0].mxu0
    %v4262 = vadd.f32 %v3928, %v4261
    %4263 = vdwg.mxu0
    %4264 = vmatprep.subr.mxu0 %v3588
    %4265 = vmatpush1.msra.mxu0 %v3587
    %4266 = vmatprep.subr.mxu0 %v3604
    %4267 = vmatpush1.msra.mxu0 %v3603
    %4268 = vmatprep.subr.mxu0 %v3620
    %4269 = vmatpush1.msra.mxu0 %v3619
    %4270 = vmatprep.subr.mxu0 %v3636
    %4271 = vmatpush1.msra.mxu0 %v3635
    %4272 = vmatprep.subr.mxu0 %v3652
    %4273 = vmatpush1.msra.mxu0 %v3651
    %4274 = vmatprep.subr.mxu0 %v3668
    %4275 = vmatpush1.msra.mxu0 %v3667
    %4276 = vmatprep.subr.mxu0 %v3684
    %4277 = vmatpush1.msra.mxu0 %v3683
    %4278 = vmatprep.subr.mxu0 %v3700
    %4279 = vmatpush1.msra.mxu0 %v3699
    %4280 = vmatprep.subr.mxu0 %v3716
    %4281 = vmatpush1.msra.mxu0 %v3715
    %4282 = vmatprep.subr.mxu0 %v3732
    %4283 = vmatpush1.msra.mxu0 %v3731
    %4284 = vmatprep.subr.mxu0 %v3748
    %4285 = vmatpush1.msra.mxu0 %v3747
    %4286 = vmatprep.subr.mxu0 %v3764
    %4287 = vmatpush1.msra.mxu0 %v3763
    %4288 = vmatprep.subr.mxu0 %v3780
    %4289 = vmatpush1.msra.mxu0 %v3779
    %4290 = vmatprep.subr.mxu0 %v3796
    %4291 = vmatpush1.msra.mxu0 %v3795
    %4292 = vmatprep.subr.mxu0 %v3812
    %4293 = vmatpush1.msra.mxu0 %v3811
    %4294 = vmatprep.subr.mxu0 %v3828
    %4295 = vmatpush1.msra.mxu0 %v3827
    %4296 = vmatprep.subr.mxu0 %v3844
    %4297 = vmatpush1.msra.mxu0 %v3843
    %4298 = vmatprep.subr.mxu0 %v3860
    %4299 = vmatpush1.msra.mxu0 %v3859
    %4300 = vmatprep.subr.mxu0 %v3876
    %4301 = vmatpush1.msra.mxu0 %v3875
    %4302 = vmatprep.subr.mxu0 %v3892
    %4303 = vmatpush1.msra.mxu0 %v3891
    %4304 = vmatprep.subr.mxu0 0.0
    %4305 = vmatpush1.msra.mxu0 0.0
    %4306 = vmatprep.subr.mxu0 0.0
    %4307 = vmatpush1.msra.mxu0 0.0
    %4308 = vmatprep.subr.mxu0 0.0
    %4309 = vmatpush1.msra.mxu0 0.0
    %4310 = vmatprep.subr.mxu0 0.0
    %4311 = vmatpush1.msra.mxu0 0.0
    %4312 = vmatprep.subr.mxu0 0.0
    %4313 = vmatpush1.msra.mxu0 0.0
    %4314 = vmatprep.subr.mxu0 0.0
    %4315 = vmatpush1.msra.mxu0 0.0
    %4316 = vmatprep.subr.mxu0 0.0
    %4317 = vmatpush1.msra.mxu0 0.0
    %4318 = vmatprep.subr.mxu0 0.0
    %4319 = vmatpush1.msra.mxu0 0.0
    %4320 = vmatprep.subr.mxu0 0.0
    %4321 = vmatpush1.msra.mxu0 0.0
    %4322 = vmatprep.subr.mxu0 0.0
    %4323 = vmatpush1.msra.mxu0 0.0
    %4324 = vmatprep.subr.mxu0 0.0
    %4325 = vmatpush1.msra.mxu0 0.0
    %4326 = vmatprep.subr.mxu0 0.0
    %4327 = vmatpush1.msra.mxu0 0.0
    %4328 = vmatprep.mubr.f32.mxu0 %v3986
    %4329 = vmatmul.mubr.f32.gmra.mrb[0].mxu0 %v3573
    %v4330 = vpop.f32.mrb[0].mxu0
    %v4331 = vadd.f32 %v3932, %v4330
    %v4332 = vpop.f32.mrb[0].mxu0
    %v4333 = vadd.f32 %v3936, %v4332
    %4334 = vmatprep.mubr.f32.mxu0 %v3989
    %4335 = vmatmul.mubr.f32.gmra.mrb[0].mxu0 %v3575
    %v4336 = vpop.f32.mrb[0].mxu0
    %v4337 = vadd.f32 %v3932, %v4336
    %v4338 = vpop.f32.mrb[0].mxu0
    %v4339 = vadd.f32 %v3936, %v4338
    %4340 = vmatprep.mubr.f32.mxu0 %v3992
    %4341 = vmatmul.mubr.f32.gmra.mrb[0].mxu0 %v3577
    %v4342 = vpop.f32.mrb[0].mxu0
    %v4343 = vadd.f32 %v3932, %v4342
    %v4344 = vpop.f32.mrb[0].mxu0
    %v4345 = vadd.f32 %v3936, %v4344
    %4346 = vmatprep.mubr.f32.mxu0 %v3995
    %4347 = vmatmul.mubr.f32.gmra.mrb[0].mxu0 %v3579
    %v4348 = vpop.f32.mrb[0].mxu0
    %v4349 = vadd.f32 %v3932, %v4348
    %v4350 = vpop.f32.mrb[0].mxu0
    %v4351 = vadd.f32 %v3936, %v4350
    %4352 = vdwg.mxu0
    %4353 = vmatprep.subr.mxu0 %v3590
    %4354 = vmatpush1.msra.mxu0 %v3589
    %4355 = vmatprep.subr.mxu0 %v3606
    %4356 = vmatpush1.msra.mxu0 %v3605
    %4357 = vmatprep.subr.mxu0 %v3622
    %4358 = vmatpush1.msra.mxu0 %v3621
    %4359 = vmatprep.subr.mxu0 %v3638
    %4360 = vmatpush1.msra.mxu0 %v3637
    %4361 = vmatprep.subr.mxu0 %v3654
    %4362 = vmatpush1.msra.mxu0 %v3653
    %4363 = vmatprep.subr.mxu0 %v3670
    %4364 = vmatpush1.msra.mxu0 %v3669
    %4365 = vmatprep.subr.mxu0 %v3686
    %4366 = vmatpush1.msra.mxu0 %v3685
    %4367 = vmatprep.subr.mxu0 %v3702
    %4368 = vmatpush1.msra.mxu0 %v3701
    %4369 = vmatprep.subr.mxu0 %v3718
    %4370 = vmatpush1.msra.mxu0 %v3717
    %4371 = vmatprep.subr.mxu0 %v3734
    %4372 = vmatpush1.msra.mxu0 %v3733
    %4373 = vmatprep.subr.mxu0 %v3750
    %4374 = vmatpush1.msra.mxu0 %v3749
    %4375 = vmatprep.subr.mxu0 %v3766
    %4376 = vmatpush1.msra.mxu0 %v3765
    %4377 = vmatprep.subr.mxu0 %v3782
    %4378 = vmatpush1.msra.mxu0 %v3781
    %4379 = vmatprep.subr.mxu0 %v3798
    %4380 = vmatpush1.msra.mxu0 %v3797
    %4381 = vmatprep.subr.mxu0 %v3814
    %4382 = vmatpush1.msra.mxu0 %v3813
    %4383 = vmatprep.subr.mxu0 %v3830
    %4384 = vmatpush1.msra.mxu0 %v3829
    %4385 = vmatprep.subr.mxu0 %v3846
    %4386 = vmatpush1.msra.mxu0 %v3845
    %4387 = vmatprep.subr.mxu0 %v3862
    %4388 = vmatpush1.msra.mxu0 %v3861
    %4389 = vmatprep.subr.mxu0 %v3878
    %4390 = vmatpush1.msra.mxu0 %v3877
    %4391 = vmatprep.subr.mxu0 %v3894
    %4392 = vmatpush1.msra.mxu0 %v3893
    %4393 = vmatprep.subr.mxu0 0.0
    %4394 = vmatpush1.msra.mxu0 0.0
    %4395 = vmatprep.subr.mxu0 0.0
    %4396 = vmatpush1.msra.mxu0 0.0
    %4397 = vmatprep.subr.mxu0 0.0
    %4398 = vmatpush1.msra.mxu0 0.0
    %4399 = vmatprep.subr.mxu0 0.0
    %4400 = vmatpush1.msra.mxu0 0.0
    %4401 = vmatprep.subr.mxu0 0.0
    %4402 = vmatpush1.msra.mxu0 0.0
    %4403 = vmatprep.subr.mxu0 0.0
    %4404 = vmatpush1.msra.mxu0 0.0
    %4405 = vmatprep.subr.mxu0 0.0
    %4406 = vmatpush1.msra.mxu0 0.0
    %4407 = vmatprep.subr.mxu0 0.0
    %4408 = vmatpush1.msra.mxu0 0.0
    %4409 = vmatprep.subr.mxu0 0.0
    %4410 = vmatpush1.msra.mxu0 0.0
    %4411 = vmatprep.subr.mxu0 0.0
    %4412 = vmatpush1.msra.mxu0 0.0
    %4413 = vmatprep.subr.mxu0 0.0
    %4414 = vmatpush1.msra.mxu0 0.0
    %4415 = vmatprep.subr.mxu0 0.0
    %4416 = vmatpush1.msra.mxu0 0.0
    %4417 = vmatprep.mubr.f32.mxu0 %v3986
    %4418 = vmatmul.mubr.f32.gmra.mrb[0].mxu0 %v3573
    %v4419 = vpop.f32.mrb[0].mxu0
    %v4420 = vadd.f32 %v3940, %v4419
    %v4421 = vpop.f32.mrb[0].mxu0
    %v4422 = vadd.f32 %v3944, %v4421
    %4423 = vmatprep.mubr.f32.mxu0 %v3989
    %4424 = vmatmul.mubr.f32.gmra.mrb[0].mxu0 %v3575
    %v4425 = vpop.f32.mrb[0].mxu0
    %v4426 = vadd.f32 %v3940, %v4425
    %v4427 = vpop.f32.mrb[0].mxu0
    %v4428 = vadd.f32 %v3944, %v4427
    %4429 = vmatprep.mubr.f32.mxu0 %v3992
    %4430 = vmatmul.mubr.f32.gmra.mrb[0].mxu0 %v3577
    %v4431 = vpop.f32.mrb[0].mxu0
    %v4432 = vadd.f32 %v3940, %v4431
    %v4433 = vpop.f32.mrb[0].mxu0
    %v4434 = vadd.f32 %v3944, %v4433
    %4435 = vmatprep.mubr.f32.mxu0 %v3995
    %4436 = vmatmul.mubr.f32.gmra.mrb[0].mxu0 %v3579
    %v4437 = vpop.f32.mrb[0].mxu0
    %v4438 = vadd.f32 %v3940, %v4437
    %v4439 = vpop.f32.mrb[0].mxu0
    %v4440 = vadd.f32 %v3944, %v4439
    %4441 = vdwg.mxu0
    %4442 = vmatprep.subr.mxu0 %v3592
    %4443 = vmatpush1.msra.mxu0 %v3591
    %4444 = vmatprep.subr.mxu0 %v3608
    %4445 = vmatpush1.msra.mxu0 %v3607
    %4446 = vmatprep.subr.mxu0 %v3624
    %4447 = vmatpush1.msra.mxu0 %v3623
    %4448 = vmatprep.subr.mxu0 %v3640
    %4449 = vmatpush1.msra.mxu0 %v3639
    %4450 = vmatprep.subr.mxu0 %v3656
    %4451 = vmatpush1.msra.mxu0 %v3655
    %4452 = vmatprep.subr.mxu0 %v3672
    %4453 = vmatpush1.msra.mxu0 %v3671
    %4454 = vmatprep.subr.mxu0 %v3688
    %4455 = vmatpush1.msra.mxu0 %v3687
    %4456 = vmatprep.subr.mxu0 %v3704
    %4457 = vmatpush1.msra.mxu0 %v3703
    %4458 = vmatprep.subr.mxu0 %v3720
    %4459 = vmatpush1.msra.mxu0 %v3719
    %4460 = vmatprep.subr.mxu0 %v3736
    %4461 = vmatpush1.msra.mxu0 %v3735
    %4462 = vmatprep.subr.mxu0 %v3752
    %4463 = vmatpush1.msra.mxu0 %v3751
    %4464 = vmatprep.subr.mxu0 %v3768
    %4465 = vmatpush1.msra.mxu0 %v3767
    %4466 = vmatprep.subr.mxu0 %v3784
    %4467 = vmatpush1.msra.mxu0 %v3783
    %4468 = vmatprep.subr.mxu0 %v3800
    %4469 = vmatpush1.msra.mxu0 %v3799
    %4470 = vmatprep.subr.mxu0 %v3816
    %4471 = vmatpush1.msra.mxu0 %v3815
    %4472 = vmatprep.subr.mxu0 %v3832
    %4473 = vmatpush1.msra.mxu0 %v3831
    %4474 = vmatprep.subr.mxu0 %v3848
    %4475 = vmatpush1.msra.mxu0 %v3847
    %4476 = vmatprep.subr.mxu0 %v3864
    %4477 = vmatpush1.msra.mxu0 %v3863
    %4478 = vmatprep.subr.mxu0 %v3880
    %4479 = vmatpush1.msra.mxu0 %v3879
    %4480 = vmatprep.subr.mxu0 %v3896
    %4481 = vmatpush1.msra.mxu0 %v3895
    %4482 = vmatprep.subr.mxu0 0.0
    %4483 = vmatpush1.msra.mxu0 0.0
    %4484 = vmatprep.subr.mxu0 0.0
    %4485 = vmatpush1.msra.mxu0 0.0
    %4486 = vmatprep.subr.mxu0 0.0
    %4487 = vmatpush1.msra.mxu0 0.0
    %4488 = vmatprep.subr.mxu0 0.0
    %4489 = vmatpush1.msra.mxu0 0.0
    %4490 = vmatprep.subr.mxu0 0.0
    %4491 = vmatpush1.msra.mxu0 0.0
    %4492 = vmatprep.subr.mxu0 0.0
    %4493 = vmatpush1.msra.mxu0 0.0
    %4494 = vmatprep.subr.mxu0 0.0
    %4495 = vmatpush1.msra.mxu0 0.0
    %4496 = vmatprep.subr.mxu0 0.0
    %4497 = vmatpush1.msra.mxu0 0.0
    %4498 = vmatprep.subr.mxu0 0.0
    %4499 = vmatpush1.msra.mxu0 0.0
    %4500 = vmatprep.subr.mxu0 0.0
    %4501 = vmatpush1.msra.mxu0 0.0
    %4502 = vmatprep.subr.mxu0 0.0
    %4503 = vmatpush1.msra.mxu0 0.0
    %4504 = vmatprep.subr.mxu0 0.0
    %4505 = vmatpush1.msra.mxu0 0.0
    %4506 = vmatprep.mubr.f32.mxu0 %v3986
    %4507 = vmatmul.mubr.f32.gmra.mrb[0].mxu0 %v3573
    %v4508 = vpop.f32.mrb[0].mxu0
    %v4509 = vadd.f32 %v3948, %v4508
    %v4510 = vpop.f32.mrb[0].mxu0
    %v4511 = vadd.f32 %v3952, %v4510
    %4512 = vmatprep.mubr.f32.mxu0 %v3989
    %4513 = vmatmul.mubr.f32.gmra.mrb[0].mxu0 %v3575
    %v4514 = vpop.f32.mrb[0].mxu0
    %v4515 = vadd.f32 %v3948, %v4514
    %v4516 = vpop.f32.mrb[0].mxu0
    %v4517 = vadd.f32 %v3952, %v4516
    %4518 = vmatprep.mubr.f32.mxu0 %v3992
    %4519 = vmatmul.mubr.f32.gmra.mrb[0].mxu0 %v3577
    %v4520 = vpop.f32.mrb[0].mxu0
    %v4521 = vadd.f32 %v3948, %v4520
    %v4522 = vpop.f32.mrb[0].mxu0
    %v4523 = vadd.f32 %v3952, %v4522
    %4524 = vmatprep.mubr.f32.mxu0 %v3995
    %4525 = vmatmul.mubr.f32.gmra.mrb[0].mxu0 %v3579
    %v4526 = vpop.f32.mrb[0].mxu0
    %v4527 = vadd.f32 %v3948, %v4526
    %v4528 = vpop.f32.mrb[0].mxu0
    %v4529 = vadd.f32 %v3952, %v4528
    %4530 = vdwg.mxu0
    %4531 = vmatprep.subr.mxu0 %v3594
    %4532 = vmatpush1.msra.mxu0 %v3593
    %4533 = vmatprep.subr.mxu0 %v3610
    %4534 = vmatpush1.msra.mxu0 %v3609
    %4535 = vmatprep.subr.mxu0 %v3626
    %4536 = vmatpush1.msra.mxu0 %v3625
    %4537 = vmatprep.subr.mxu0 %v3642
    %4538 = vmatpush1.msra.mxu0 %v3641
    %4539 = vmatprep.subr.mxu0 %v3658
    %4540 = vmatpush1.msra.mxu0 %v3657
    %4541 = vmatprep.subr.mxu0 %v3674
    %4542 = vmatpush1.msra.mxu0 %v3673
    %4543 = vmatprep.subr.mxu0 %v3690
    %4544 = vmatpush1.msra.mxu0 %v3689
    %4545 = vmatprep.subr.mxu0 %v3706
    %4546 = vmatpush1.msra.mxu0 %v3705
    %4547 = vmatprep.subr.mxu0 %v3722
    %4548 = vmatpush1.msra.mxu0 %v3721
    %4549 = vmatprep.subr.mxu0 %v3738
    %4550 = vmatpush1.msra.mxu0 %v3737
    %4551 = vmatprep.subr.mxu0 %v3754
    %4552 = vmatpush1.msra.mxu0 %v3753
    %4553 = vmatprep.subr.mxu0 %v3770
    %4554 = vmatpush1.msra.mxu0 %v3769
    %4555 = vmatprep.subr.mxu0 %v3786
    %4556 = vmatpush1.msra.mxu0 %v3785
    %4557 = vmatprep.subr.mxu0 %v3802
    %4558 = vmatpush1.msra.mxu0 %v3801
    %4559 = vmatprep.subr.mxu0 %v3818
    %4560 = vmatpush1.msra.mxu0 %v3817
    %4561 = vmatprep.subr.mxu0 %v3834
    %4562 = vmatpush1.msra.mxu0 %v3833
    %4563 = vmatprep.subr.mxu0 %v3850
    %4564 = vmatpush1.msra.mxu0 %v3849
    %4565 = vmatprep.subr.mxu0 %v3866
    %4566 = vmatpush1.msra.mxu0 %v3865
    %4567 = vmatprep.subr.mxu0 %v3882
    %4568 = vmatpush1.msra.mxu0 %v3881
    %4569 = vmatprep.subr.mxu0 %v3898
    %4570 = vmatpush1.msra.mxu0 %v3897
    %4571 = vmatprep.subr.mxu0 0.0
    %4572 = vmatpush1.msra.mxu0 0.0
    %4573 = vmatprep.subr.mxu0 0.0
    %4574 = vmatpush1.msra.mxu0 0.0
    %4575 = vmatprep.subr.mxu0 0.0
    %4576 = vmatpush1.msra.mxu0 0.0
    %4577 = vmatprep.subr.mxu0 0.0
    %4578 = vmatpush1.msra.mxu0 0.0
    %4579 = vmatprep.subr.mxu0 0.0
    %4580 = vmatpush1.msra.mxu0 0.0
    %4581 = vmatprep.subr.mxu0 0.0
    %4582 = vmatpush1.msra.mxu0 0.0
    %4583 = vmatprep.subr.mxu0 0.0
    %4584 = vmatpush1.msra.mxu0 0.0
    %4585 = vmatprep.subr.mxu0 0.0
    %4586 = vmatpush1.msra.mxu0 0.0
    %4587 = vmatprep.subr.mxu0 0.0
    %4588 = vmatpush1.msra.mxu0 0.0
    %4589 = vmatprep.subr.mxu0 0.0
    %4590 = vmatpush1.msra.mxu0 0.0
    %4591 = vmatprep.subr.mxu0 0.0
    %4592 = vmatpush1.msra.mxu0 0.0
    %4593 = vmatprep.subr.mxu0 0.0
    %4594 = vmatpush1.msra.mxu0 0.0
    %4595 = vmatprep.mubr.f32.mxu0 %v3986
    %4596 = vmatmul.mubr.f32.gmra.mrb[0].mxu0 %v3573
    %v4597 = vpop.f32.mrb[0].mxu0
    %v4598 = vadd.f32 %v3956, %v4597
    %v4599 = vpop.f32.mrb[0].mxu0
    %v4600 = vadd.f32 %v3960, %v4599
    %4601 = vmatprep.mubr.f32.mxu0 %v3989
    %4602 = vmatmul.mubr.f32.gmra.mrb[0].mxu0 %v3575
    %v4603 = vpop.f32.mrb[0].mxu0
    %v4604 = vadd.f32 %v3956, %v4603
    %v4605 = vpop.f32.mrb[0].mxu0
    %v4606 = vadd.f32 %v3960, %v4605
    %4607 = vmatprep.mubr.f32.mxu0 %v3992
    %4608 = vmatmul.mubr.f32.gmra.mrb[0].mxu0 %v3577
    %v4609 = vpop.f32.mrb[0].mxu0
    %v4610 = vadd.f32 %v3956, %v4609
    %v4611 = vpop.f32.mrb[0].mxu0
    %v4612 = vadd.f32 %v3960, %v4611
    %4613 = vmatprep.mubr.f32.mxu0 %v3995
    %4614 = vmatmul.mubr.f32.gmra.mrb[0].mxu0 %v3579
    %v4615 = vpop.f32.mrb[0].mxu0
    %v4616 = vadd.f32 %v3956, %v4615
    %v4617 = vpop.f32.mrb[0].mxu0
    %v4618 = vadd.f32 %v3960, %v4617
    %4619 = vdwg.mxu0
    %4620 = vmatprep.subr.mxu0 %v3596
    %4621 = vmatpush1.msra.mxu0 %v3595
    %4622 = vmatprep.subr.mxu0 %v3612
    %4623 = vmatpush1.msra.mxu0 %v3611
    %4624 = vmatprep.subr.mxu0 %v3628
    %4625 = vmatpush1.msra.mxu0 %v3627
    %4626 = vmatprep.subr.mxu0 %v3644
    %4627 = vmatpush1.msra.mxu0 %v3643
    %4628 = vmatprep.subr.mxu0 %v3660
    %4629 = vmatpush1.msra.mxu0 %v3659
    %4630 = vmatprep.subr.mxu0 %v3676
    %4631 = vmatpush1.msra.mxu0 %v3675
    %4632 = vmatprep.subr.mxu0 %v3692
    %4633 = vmatpush1.msra.mxu0 %v3691
    %4634 = vmatprep.subr.mxu0 %v3708
    %4635 = vmatpush1.msra.mxu0 %v3707
    %4636 = vmatprep.subr.mxu0 %v3724
    %4637 = vmatpush1.msra.mxu0 %v3723
    %4638 = vmatprep.subr.mxu0 %v3740
    %4639 = vmatpush1.msra.mxu0 %v3739
    %4640 = vmatprep.subr.mxu0 %v3756
    %4641 = vmatpush1.msra.mxu0 %v3755
    %4642 = vmatprep.subr.mxu0 %v3772
    %4643 = vmatpush1.msra.mxu0 %v3771
    %4644 = vmatprep.subr.mxu0 %v3788
    %4645 = vmatpush1.msra.mxu0 %v3787
    %4646 = vmatprep.subr.mxu0 %v3804
    %4647 = vmatpush1.msra.mxu0 %v3803
    %4648 = vmatprep.subr.mxu0 %v3820
    %4649 = vmatpush1.msra.mxu0 %v3819
    %4650 = vmatprep.subr.mxu0 %v3836
    %4651 = vmatpush1.msra.mxu0 %v3835
    %4652 = vmatprep.subr.mxu0 %v3852
    %4653 = vmatpush1.msra.mxu0 %v3851
    %4654 = vmatprep.subr.mxu0 %v3868
    %4655 = vmatpush1.msra.mxu0 %v3867
    %4656 = vmatprep.subr.mxu0 %v3884
    %4657 = vmatpush1.msra.mxu0 %v3883
    %4658 = vmatprep.subr.mxu0 %v3900
    %4659 = vmatpush1.msra.mxu0 %v3899
    %4660 = vmatprep.subr.mxu0 0.0
    %4661 = vmatpush1.msra.mxu0 0.0
    %4662 = vmatprep.subr.mxu0 0.0
    %4663 = vmatpush1.msra.mxu0 0.0
    %4664 = vmatprep.subr.mxu0 0.0
    %4665 = vmatpush1.msra.mxu0 0.0
    %4666 = vmatprep.subr.mxu0 0.0
    %4667 = vmatpush1.msra.mxu0 0.0
    %4668 = vmatprep.subr.mxu0 0.0
    %4669 = vmatpush1.msra.mxu0 0.0
    %4670 = vmatprep.subr.mxu0 0.0
    %4671 = vmatpush1.msra.mxu0 0.0
    %4672 = vmatprep.subr.mxu0 0.0
    %4673 = vmatpush1.msra.mxu0 0.0
    %4674 = vmatprep.subr.mxu0 0.0
    %4675 = vmatpush1.msra.mxu0 0.0
    %4676 = vmatprep.subr.mxu0 0.0
    %4677 = vmatpush1.msra.mxu0 0.0
    %4678 = vmatprep.subr.mxu0 0.0
    %4679 = vmatpush1.msra.mxu0 0.0
    %4680 = vmatprep.subr.mxu0 0.0
    %4681 = vmatpush1.msra.mxu0 0.0
    %4682 = vmatprep.subr.mxu0 0.0
    %4683 = vmatpush1.msra.mxu0 0.0
    %4684 = vmatprep.mubr.f32.mxu0 %v3986
    %4685 = vmatmul.mubr.f32.gmra.mrb[0].mxu0 %v3573
    %v4686 = vpop.f32.mrb[0].mxu0
    %v4687 = vadd.f32 %v3964, %v4686
    %v4688 = vpop.f32.mrb[0].mxu0
    %v4689 = vadd.f32 %v3968, %v4688
    %4690 = vmatprep.mubr.f32.mxu0 %v3989
    %4691 = vmatmul.mubr.f32.gmra.mrb[0].mxu0 %v3575
    %v4692 = vpop.f32.mrb[0].mxu0
    %v4693 = vadd.f32 %v3964, %v4692
    %v4694 = vpop.f32.mrb[0].mxu0
    %v4695 = vadd.f32 %v3968, %v4694
    %4696 = vmatprep.mubr.f32.mxu0 %v3992
    %4697 = vmatmul.mubr.f32.gmra.mrb[0].mxu0 %v3577
    %v4698 = vpop.f32.mrb[0].mxu0
    %v4699 = vadd.f32 %v3964, %v4698
    %v4700 = vpop.f32.mrb[0].mxu0
    %v4701 = vadd.f32 %v3968, %v4700
    %4702 = vmatprep.mubr.f32.mxu0 %v3995
    %4703 = vmatmul.mubr.f32.gmra.mrb[0].mxu0 %v3579
    %v4704 = vpop.f32.mrb[0].mxu0
    %v4705 = vadd.f32 %v3964, %v4704
    %v4706 = vpop.f32.mrb[0].mxu0
    %v4707 = vadd.f32 %v3968, %v4706
    %4708 = vdwg.mxu0
    %v4709 = vmax.f32 %v4064, 0.0
    %v4710 = vmax.f32 %v4066, 0.0
    %v4711 = vmax.f32 %v4153, 0.0
    %v4712 = vmax.f32 %v4155, 0.0
    %v4713 = vmax.f32 %v4242, 0.0
    %v4714 = vmax.f32 %v4244, 0.0
    %v4715 = vmax.f32 %v4331, 0.0
    %v4716 = vmax.f32 %v4333, 0.0
    %v4717 = vmax.f32 %v4420, 0.0
    %v4718 = vmax.f32 %v4422, 0.0
    %v4719 = vmax.f32 %v4509, 0.0
    %v4720 = vmax.f32 %v4511, 0.0
    %v4721 = vmax.f32 %v4598, 0.0
    %v4722 = vmax.f32 %v4600, 0.0
    %v4723 = vmax.f32 %v4687, 0.0
    %v4724 = vmax.f32 %v4689, 0.0
    %v4725 = vmax.f32 %v4070, 0.0
    %v4726 = vmax.f32 %v4072, 0.0
    %v4727 = vmax.f32 %v4159, 0.0
    %v4728 = vmax.f32 %v4161, 0.0
    %v4729 = vmax.f32 %v4248, 0.0
    %v4730 = vmax.f32 %v4250, 0.0
    %v4731 = vmax.f32 %v4337, 0.0
    %v4732 = vmax.f32 %v4339, 0.0
    %v4733 = vmax.f32 %v4426, 0.0
    %v4734 = vmax.f32 %v4428, 0.0
    %v4735 = vmax.f32 %v4515, 0.0
    %v4736 = vmax.f32 %v4517, 0.0
    %v4737 = vmax.f32 %v4604, 0.0
    %v4738 = vmax.f32 %v4606, 0.0
    %v4739 = vmax.f32 %v4693, 0.0
    %v4740 = vmax.f32 %v4695, 0.0
    %v4741 = vmax.f32 %v4076, 0.0
    %v4742 = vmax.f32 %v4078, 0.0
    %v4743 = vmax.f32 %v4165, 0.0
    %v4744 = vmax.f32 %v4167, 0.0
    %v4745 = vmax.f32 %v4254, 0.0
    %v4746 = vmax.f32 %v4256, 0.0
    %v4747 = vmax.f32 %v4343, 0.0
    %v4748 = vmax.f32 %v4345, 0.0
    %v4749 = vmax.f32 %v4432, 0.0
    %v4750 = vmax.f32 %v4434, 0.0
    %v4751 = vmax.f32 %v4521, 0.0
    %v4752 = vmax.f32 %v4523, 0.0
    %v4753 = vmax.f32 %v4610, 0.0
    %v4754 = vmax.f32 %v4612, 0.0
    %v4755 = vmax.f32 %v4699, 0.0
    %v4756 = vmax.f32 %v4701, 0.0
    %v4757 = vmax.f32 %v4082, 0.0
    %v4758 = vmax.f32 %v4084, 0.0
    %v4759 = vmax.f32 %v4171, 0.0
    %v4760 = vmax.f32 %v4173, 0.0
    %v4761 = vmax.f32 %v4260, 0.0
    %v4762 = vmax.f32 %v4262, 0.0
    %v4763 = vmax.f32 %v4349, 0.0
    %v4764 = vmax.f32 %v4351, 0.0
    %v4765 = vmax.f32 %v4438, 0.0
    %v4766 = vmax.f32 %v4440, 0.0
    %v4767 = vmax.f32 %v4527, 0.0
    %v4768 = vmax.f32 %v4529, 0.0
    %v4769 = vmax.f32 %v4616, 0.0
    %v4770 = vmax.f32 %v4618, 0.0
    %v4771 = vmax.f32 %v4705, 0.0
    %v4772 = vmax.f32 %v4707, 0.0
    %v4773 = vld [vmem:[%s18] sm:$0xff]
    %v4774 = vld [vmem:[%s18 + $0x8] sm:$0xff]
    %v4775 = vld [vmem:[%s18 + $0x10] sm:$0xff]
    %v4776 = vld [vmem:[%s18 + $0x18] sm:$0xff]
    %v4777 = vld [vmem:[%s18 + $0x20] sm:$0xff]
    %v4778 = vld [vmem:[%s18 + $0x28] sm:$0xff]
    %v4779 = vld [vmem:[%s18 + $0x30] sm:$0xff]
    %v4780 = vld [vmem:[%s18 + $0x38] sm:$0xff]
    %v4781 = vld [vmem:[%s18 + $0x40] sm:$0xff]
    %v4782 = vld [vmem:[%s18 + $0x48] sm:$0xff]
    %v4783 = vld [vmem:[%s18 + $0x50] sm:$0xff]
    %v4784 = vld [vmem:[%s18 + $0x58] sm:$0xff]
    %v4785 = vld [vmem:[%s18 + $0x60] sm:$0xff]
    %v4786 = vld [vmem:[%s18 + $0x68] sm:$0xff]
    %v4787 = vld [vmem:[%s18 + $0x70] sm:$0xff]
    %v4788 = vld [vmem:[%s18 + $0x78] sm:$0xff]
    %v4789 = vld [vmem:[%s18 + $0x80] sm:$0xff]
    %v4790 = vld [vmem:[%s18 + $0x88] sm:$0xff]
    %v4791 = vld [vmem:[%s18 + $0x90] sm:$0xff]
    %v4792 = vld [vmem:[%s18 + $0x98] sm:$0xff]
    %v4793 = vld [vmem:[%s18 + $0xa0] sm:$0xff]
    %v4794 = vld [vmem:[%s18 + $0xa8] sm:$0xff]
    %v4795 = vld [vmem:[%s18 + $0xb0] sm:$0xff]
    %v4796 = vld [vmem:[%s18 + $0xb8] sm:$0xff]
    %v4797 = vld [vmem:[%s18 + $0xc0] sm:$0xff]
    %v4798 = vld [vmem:[%s18 + $0xc8] sm:$0xff]
    %v4799 = vld [vmem:[%s18 + $0xd0] sm:$0xff]
    %v4800 = vld [vmem:[%s18 + $0xd8] sm:$0xff]
    %v4801 = vld [vmem:[%s18 + $0xe0] sm:$0xff]
    %v4802 = vld [vmem:[%s18 + $0xe8] sm:$0xff]
    %v4803 = vld [vmem:[%s18 + $0xf0] sm:$0xff]
    %v4804 = vld [vmem:[%s18 + $0xf8] sm:$0xff]
    %v4805 = vld [vmem:[%s18 + $0x100] sm:$0xff]
    %v4806 = vld [vmem:[%s18 + $0x108] sm:$0xff]
    %v4807 = vld [vmem:[%s18 + $0x110] sm:$0xff]
    %v4808 = vld [vmem:[%s18 + $0x118] sm:$0xff]
    %v4809 = vld [vmem:[%s18 + $0x120] sm:$0xff]
    %v4810 = vld [vmem:[%s18 + $0x128] sm:$0xff]
    %v4811 = vld [vmem:[%s18 + $0x130] sm:$0xff]
    %v4812 = vld [vmem:[%s18 + $0x138] sm:$0xff]
    %v4813 = vld [vmem:[%s18 + $0x140] sm:$0xff]
    %v4814 = vld [vmem:[%s18 + $0x148] sm:$0xff]
    %v4815 = vld [vmem:[%s18 + $0x150] sm:$0xff]
    %v4816 = vld [vmem:[%s18 + $0x158] sm:$0xff]
    %v4817 = vld [vmem:[%s18 + $0x160] sm:$0xff]
    %v4818 = vld [vmem:[%s18 + $0x168] sm:$0xff]
    %v4819 = vld [vmem:[%s18 + $0x170] sm:$0xff]
    %v4820 = vld [vmem:[%s18 + $0x178] sm:$0xff]
    %v4821 = vld [vmem:[%s18 + $0x180] sm:$0xff]
    %v4822 = vld [vmem:[%s18 + $0x188] sm:$0xff]
    %v4823 = vld [vmem:[%s18 + $0x190] sm:$0xff]
    %v4824 = vld [vmem:[%s18 + $0x198] sm:$0xff]
    %v4825 = vld [vmem:[%s18 + $0x1a0] sm:$0xff]
    %v4826 = vld [vmem:[%s18 + $0x1a8] sm:$0xff]
    %v4827 = vld [vmem:[%s18 + $0x1b0] sm:$0xff]
    %v4828 = vld [vmem:[%s18 + $0x1b8] sm:$0xff]
    %v4829 = vld [vmem:[%s18 + $0x1c0] sm:$0xff]
    %v4830 = vld [vmem:[%s18 + $0x1c8] sm:$0xff]
    %v4831 = vld [vmem:[%s18 + $0x1d0] sm:$0xff]
    %v4832 = vld [vmem:[%s18 + $0x1d8] sm:$0xff]
    %v4833 = vld [vmem:[%s18 + $0x1e0] sm:$0xff]
    %v4834 = vld [vmem:[%s18 + $0x1e8] sm:$0xff]
    %v4835 = vld [vmem:[%s18 + $0x1f0] sm:$0xff]
    %v4836 = vld [vmem:[%s18 + $0x1f8] sm:$0xff]
    %v4837 = vld [vmem:[%s18 + $0x200] sm:$0xff]
    %v4838 = vld [vmem:[%s18 + $0x208] sm:$0xff]
    %v4839 = vld [vmem:[%s18 + $0x210] sm:$0xff]
    %v4840 = vld [vmem:[%s18 + $0x218] sm:$0xff]
    %v4841 = vld [vmem:[%s18 + $0x220] sm:$0xff]
    %v4842 = vld [vmem:[%s18 + $0x228] sm:$0xff]
    %v4843 = vld [vmem:[%s18 + $0x230] sm:$0xff]
    %v4844 = vld [vmem:[%s18 + $0x238] sm:$0xff]
    %v4845 = vld [vmem:[%s18 + $0x240] sm:$0xff]
    %v4846 = vld [vmem:[%s18 + $0x248] sm:$0xff]
    %v4847 = vld [vmem:[%s18 + $0x250] sm:$0xff]
    %v4848 = vld [vmem:[%s18 + $0x258] sm:$0xff]
    %v4849 = vld [vmem:[%s18 + $0x260] sm:$0xff]
    %v4850 = vld [vmem:[%s18 + $0x268] sm:$0xff]
    %v4851 = vld [vmem:[%s18 + $0x270] sm:$0xff]
    %v4852 = vld [vmem:[%s18 + $0x278] sm:$0xff]
    %v4853 = vld [vmem:[%s18 + $0x280] sm:$0xff]
    %v4854 = vld [vmem:[%s18 + $0x288] sm:$0xff]
    %v4855 = vld [vmem:[%s18 + $0x290] sm:$0xff]
    %v4856 = vld [vmem:[%s18 + $0x298] sm:$0xff]
    %v4857 = vld [vmem:[%s18 + $0x2a0] sm:$0xff]
    %v4858 = vld [vmem:[%s18 + $0x2a8] sm:$0xff]
    %v4859 = vld [vmem:[%s18 + $0x2b0] sm:$0xff]
    %v4860 = vld [vmem:[%s18 + $0x2b8] sm:$0xff]
    %v4861 = vld [vmem:[%s18 + $0x2c0] sm:$0xff]
    %v4862 = vld [vmem:[%s18 + $0x2c8] sm:$0xff]
    %v4863 = vld [vmem:[%s18 + $0x2d0] sm:$0xff]
    %v4864 = vld [vmem:[%s18 + $0x2d8] sm:$0xff]
    %v4865 = vld [vmem:[%s18 + $0x2e0] sm:$0xff]
    %v4866 = vld [vmem:[%s18 + $0x2e8] sm:$0xff]
    %v4867 = vld [vmem:[%s18 + $0x2f0] sm:$0xff]
    %v4868 = vld [vmem:[%s18 + $0x2f8] sm:$0xff]
    %v4869 = vld [vmem:[%s18 + $0x300] sm:$0xff]
    %v4870 = vld [vmem:[%s18 + $0x308] sm:$0xff]
    %v4871 = vld [vmem:[%s18 + $0x310] sm:$0xff]
    %v4872 = vld [vmem:[%s18 + $0x318] sm:$0xff]
    %v4873 = vld [vmem:[%s18 + $0x320] sm:$0xff]
    %v4874 = vld [vmem:[%s18 + $0x328] sm:$0xff]
    %v4875 = vld [vmem:[%s18 + $0x330] sm:$0xff]
    %v4876 = vld [vmem:[%s18 + $0x338] sm:$0xff]
    %v4877 = vld [vmem:[%s18 + $0x340] sm:$0xff]
    %v4878 = vld [vmem:[%s18 + $0x348] sm:$0xff]
    %v4879 = vld [vmem:[%s18 + $0x350] sm:$0xff]
    %v4880 = vld [vmem:[%s18 + $0x358] sm:$0xff]
    %v4881 = vld [vmem:[%s18 + $0x360] sm:$0xff]
    %v4882 = vld [vmem:[%s18 + $0x368] sm:$0xff]
    %v4883 = vld [vmem:[%s18 + $0x370] sm:$0xff]
    %v4884 = vld [vmem:[%s18 + $0x378] sm:$0xff]
    %v4885 = vld [vmem:[%s18 + $0x380] sm:$0xff]
    %v4886 = vld [vmem:[%s18 + $0x388] sm:$0xff]
    %v4887 = vld [vmem:[%s18 + $0x390] sm:$0xff]
    %v4888 = vld [vmem:[%s18 + $0x398] sm:$0xff]
    %v4889 = vld [vmem:[%s18 + $0x3a0] sm:$0xff]
    %v4890 = vld [vmem:[%s18 + $0x3a8] sm:$0xff]
    %v4891 = vld [vmem:[%s18 + $0x3b0] sm:$0xff]
    %v4892 = vld [vmem:[%s18 + $0x3b8] sm:$0xff]
    %v4893 = vld [vmem:[%s18 + $0x3c0] sm:$0xff]
    %v4894 = vld [vmem:[%s18 + $0x3c8] sm:$0xff]
    %v4895 = vld [vmem:[%s18 + $0x3d0] sm:$0xff]
    %v4896 = vld [vmem:[%s18 + $0x3d8] sm:$0xff]
    %v4897 = vld [vmem:[%s18 + $0x3e0] sm:$0xff]
    %v4898 = vld [vmem:[%s18 + $0x3e8] sm:$0xff]
    %v4899 = vld [vmem:[%s18 + $0x3f0] sm:$0xff]
    %v4900 = vld [vmem:[%s18 + $0x3f8] sm:$0xff]
    %v4901 = vld [vmem:[%s18 + $0x400] sm:$0xff]
    %v4902 = vld [vmem:[%s18 + $0x408] sm:$0xff]
    %v4903 = vld [vmem:[%s18 + $0x410] sm:$0xff]
    %v4904 = vld [vmem:[%s18 + $0x418] sm:$0xff]
    %v4905 = vld [vmem:[%s18 + $0x420] sm:$0xff]
    %v4906 = vld [vmem:[%s18 + $0x428] sm:$0xff]
    %v4907 = vld [vmem:[%s18 + $0x430] sm:$0xff]
    %v4908 = vld [vmem:[%s18 + $0x438] sm:$0xff]
    %v4909 = vld [vmem:[%s18 + $0x440] sm:$0xff]
    %v4910 = vld [vmem:[%s18 + $0x448] sm:$0xff]
    %v4911 = vld [vmem:[%s18 + $0x450] sm:$0xff]
    %v4912 = vld [vmem:[%s18 + $0x458] sm:$0xff]
    %v4913 = vld [vmem:[%s18 + $0x460] sm:$0xff]
    %v4914 = vld [vmem:[%s18 + $0x468] sm:$0xff]
    %v4915 = vld [vmem:[%s18 + $0x470] sm:$0xff]
    %v4916 = vld [vmem:[%s18 + $0x478] sm:$0xff]
    %v4917 = vld [vmem:[%s18 + $0x480] sm:$0xff]
    %v4918 = vld [vmem:[%s18 + $0x488] sm:$0xff]
    %v4919 = vld [vmem:[%s18 + $0x490] sm:$0xff]
    %v4920 = vld [vmem:[%s18 + $0x498] sm:$0xff]
    %v4921 = vld [vmem:[%s18 + $0x4a0] sm:$0xff]
    %v4922 = vld [vmem:[%s18 + $0x4a8] sm:$0xff]
    %v4923 = vld [vmem:[%s18 + $0x4b0] sm:$0xff]
    %v4924 = vld [vmem:[%s18 + $0x4b8] sm:$0xff]
    %v4925 = vld [vmem:[%s18 + $0x4c0] sm:$0xff]
    %v4926 = vld [vmem:[%s18 + $0x4c8] sm:$0xff]
    %v4927 = vld [vmem:[%s18 + $0x4d0] sm:$0xff]
    %v4928 = vld [vmem:[%s18 + $0x4d8] sm:$0xff]
    %v4929 = vld [vmem:[%s18 + $0x4e0] sm:$0xff]
    %v4930 = vld [vmem:[%s18 + $0x4e8] sm:$0xff]
    %v4931 = vld [vmem:[%s18 + $0x4f0] sm:$0xff]
    %v4932 = vld [vmem:[%s18 + $0x4f8] sm:$0xff]
    %v4933 = vld [vmem:[%s18 + $0x500] sm:$0xff]
    %v4934 = vld [vmem:[%s18 + $0x508] sm:$0xff]
    %v4935 = vld [vmem:[%s18 + $0x510] sm:$0xff]
    %v4936 = vld [vmem:[%s18 + $0x518] sm:$0xff]
    %v4937 = vld [vmem:[%s18 + $0x520] sm:$0xff]
    %v4938 = vld [vmem:[%s18 + $0x528] sm:$0xff]
    %v4939 = vld [vmem:[%s18 + $0x530] sm:$0xff]
    %v4940 = vld [vmem:[%s18 + $0x538] sm:$0xff]
    %v4941 = vld [vmem:[%s18 + $0x540] sm:$0xff]
    %v4942 = vld [vmem:[%s18 + $0x548] sm:$0xff]
    %v4943 = vld [vmem:[%s18 + $0x550] sm:$0xff]
    %v4944 = vld [vmem:[%s18 + $0x558] sm:$0xff]
    %v4945 = vld [vmem:[%s18 + $0x560] sm:$0xff]
    %v4946 = vld [vmem:[%s18 + $0x568] sm:$0xff]
    %v4947 = vld [vmem:[%s18 + $0x570] sm:$0xff]
    %v4948 = vld [vmem:[%s18 + $0x578] sm:$0xff]
    %v4949 = vld [vmem:[%s18 + $0x580] sm:$0xff]
    %v4950 = vld [vmem:[%s18 + $0x588] sm:$0xff]
    %v4951 = vld [vmem:[%s18 + $0x590] sm:$0xff]
    %v4952 = vld [vmem:[%s18 + $0x598] sm:$0xff]
    %v4953 = vld [vmem:[%s18 + $0x5a0] sm:$0xff]
    %v4954 = vld [vmem:[%s18 + $0x5a8] sm:$0xff]
    %v4955 = vld [vmem:[%s18 + $0x5b0] sm:$0xff]
    %v4956 = vld [vmem:[%s18 + $0x5b8] sm:$0xff]
    %v4957 = vld [vmem:[%s18 + $0x5c0] sm:$0xff]
    %v4958 = vld [vmem:[%s18 + $0x5c8] sm:$0xff]
    %v4959 = vld [vmem:[%s18 + $0x5d0] sm:$0xff]
    %v4960 = vld [vmem:[%s18 + $0x5d8] sm:$0xff]
    %v4961 = vld [vmem:[%s18 + $0x5e0] sm:$0xff]
    %v4962 = vld [vmem:[%s18 + $0x5e8] sm:$0xff]
    %v4963 = vld [vmem:[%s18 + $0x5f0] sm:$0xff]
    %v4964 = vld [vmem:[%s18 + $0x5f8] sm:$0xff]
    %v4965 = vld [vmem:[%s18 + $0x600] sm:$0xff]
    %v4966 = vld [vmem:[%s18 + $0x608] sm:$0xff]
    %v4967 = vld [vmem:[%s18 + $0x610] sm:$0xff]
    %v4968 = vld [vmem:[%s18 + $0x618] sm:$0xff]
    %v4969 = vld [vmem:[%s18 + $0x620] sm:$0xff]
    %v4970 = vld [vmem:[%s18 + $0x628] sm:$0xff]
    %v4971 = vld [vmem:[%s18 + $0x630] sm:$0xff]
    %v4972 = vld [vmem:[%s18 + $0x638] sm:$0xff]
    %v4973 = vld [vmem:[%s18 + $0x640] sm:$0xff]
    %v4974 = vld [vmem:[%s18 + $0x648] sm:$0xff]
    %v4975 = vld [vmem:[%s18 + $0x650] sm:$0xff]
    %v4976 = vld [vmem:[%s18 + $0x658] sm:$0xff]
    %v4977 = vld [vmem:[%s18 + $0x660] sm:$0xff]
    %v4978 = vld [vmem:[%s18 + $0x668] sm:$0xff]
    %v4979 = vld [vmem:[%s18 + $0x670] sm:$0xff]
    %v4980 = vld [vmem:[%s18 + $0x678] sm:$0xff]
    %v4981 = vld [vmem:[%s18 + $0x680] sm:$0xff]
    %v4982 = vld [vmem:[%s18 + $0x688] sm:$0xff]
    %v4983 = vld [vmem:[%s18 + $0x690] sm:$0xff]
    %v4984 = vld [vmem:[%s18 + $0x698] sm:$0xff]
    %v4985 = vld [vmem:[%s18 + $0x6a0] sm:$0xff]
    %v4986 = vld [vmem:[%s18 + $0x6a8] sm:$0xff]
    %v4987 = vld [vmem:[%s18 + $0x6b0] sm:$0xff]
    %v4988 = vld [vmem:[%s18 + $0x6b8] sm:$0xff]
    %v4989 = vld [vmem:[%s18 + $0x6c0] sm:$0xff]
    %v4990 = vld [vmem:[%s18 + $0x6c8] sm:$0xff]
    %v4991 = vld [vmem:[%s18 + $0x6d0] sm:$0xff]
    %v4992 = vld [vmem:[%s18 + $0x6d8] sm:$0xff]
    %v4993 = vld [vmem:[%s18 + $0x6e0] sm:$0xff]
    %v4994 = vld [vmem:[%s18 + $0x6e8] sm:$0xff]
    %v4995 = vld [vmem:[%s18 + $0x6f0] sm:$0xff]
    %v4996 = vld [vmem:[%s18 + $0x6f8] sm:$0xff]
    %v4997 = vld [vmem:[%s18 + $0x700] sm:$0xff]
    %v4998 = vld [vmem:[%s18 + $0x708] sm:$0xff]
    %v4999 = vld [vmem:[%s18 + $0x710] sm:$0xff]
    %v5000 = vld [vmem:[%s18 + $0x718] sm:$0xff]
    %v5001 = vld [vmem:[%s18 + $0x720] sm:$0xff]
    %v5002 = vld [vmem:[%s18 + $0x728] sm:$0xff]
    %v5003 = vld [vmem:[%s18 + $0x730] sm:$0xff]
    %v5004 = vld [vmem:[%s18 + $0x738] sm:$0xff]
    %v5005 = vld [vmem:[%s18 + $0x740] sm:$0xff]
    %v5006 = vld [vmem:[%s18 + $0x748] sm:$0xff]
    %v5007 = vld [vmem:[%s18 + $0x750] sm:$0xff]
    %v5008 = vld [vmem:[%s18 + $0x758] sm:$0xff]
    %v5009 = vld [vmem:[%s18 + $0x760] sm:$0xff]
    %v5010 = vld [vmem:[%s18 + $0x768] sm:$0xff]
    %v5011 = vld [vmem:[%s18 + $0x770] sm:$0xff]
    %v5012 = vld [vmem:[%s18 + $0x778] sm:$0xff]
    %v5013 = vld [vmem:[%s18 + $0x780] sm:$0xff]
    %v5014 = vld [vmem:[%s18 + $0x788] sm:$0xff]
    %v5015 = vld [vmem:[%s18 + $0x790] sm:$0xff]
    %v5016 = vld [vmem:[%s18 + $0x798] sm:$0xff]
    %v5017 = vld [vmem:[%s18 + $0x7a0] sm:$0xff]
    %v5018 = vld [vmem:[%s18 + $0x7a8] sm:$0xff]
    %v5019 = vld [vmem:[%s18 + $0x7b0] sm:$0xff]
    %v5020 = vld [vmem:[%s18 + $0x7b8] sm:$0xff]
    %v5021 = vld [vmem:[%s18 + $0x7c0] sm:$0xff]
    %v5022 = vld [vmem:[%s18 + $0x7c8] sm:$0xff]
    %v5023 = vld [vmem:[%s18 + $0x7d0] sm:$0xff]
    %v5024 = vld [vmem:[%s18 + $0x7d8] sm:$0xff]
    %v5025 = vld [vmem:[%s18 + $0x7e0] sm:$0xff]
    %v5026 = vld [vmem:[%s18 + $0x7e8] sm:$0xff]
    %v5027 = vld [vmem:[%s18 + $0x7f0] sm:$0xff]
    %v5028 = vld [vmem:[%s18 + $0x7f8] sm:$0xff]
    %v5029 = vld [vmem:[%s18 + $0x800] sm:$0xff]
    %v5030 = vld [vmem:[%s18 + $0x808] sm:$0xff]
    %v5031 = vld [vmem:[%s18 + $0x810] sm:$0xff]
    %v5032 = vld [vmem:[%s18 + $0x818] sm:$0xff]
    %v5033 = vld [vmem:[%s18 + $0x820] sm:$0xff]
    %v5034 = vld [vmem:[%s18 + $0x828] sm:$0xff]
    %v5035 = vld [vmem:[%s18 + $0x830] sm:$0xff]
    %v5036 = vld [vmem:[%s18 + $0x838] sm:$0xff]
    %v5037 = vld [vmem:[%s18 + $0x840] sm:$0xff]
    %v5038 = vld [vmem:[%s18 + $0x848] sm:$0xff]
    %v5039 = vld [vmem:[%s18 + $0x850] sm:$0xff]
    %v5040 = vld [vmem:[%s18 + $0x858] sm:$0xff]
    %v5041 = vld [vmem:[%s18 + $0x860] sm:$0xff]
    %v5042 = vld [vmem:[%s18 + $0x868] sm:$0xff]
    %v5043 = vld [vmem:[%s18 + $0x870] sm:$0xff]
    %v5044 = vld [vmem:[%s18 + $0x878] sm:$0xff]
    %v5045 = vld [vmem:[%s18 + $0x880] sm:$0xff]
    %v5046 = vld [vmem:[%s18 + $0x888] sm:$0xff]
    %v5047 = vld [vmem:[%s18 + $0x890] sm:$0xff]
    %v5048 = vld [vmem:[%s18 + $0x898] sm:$0xff]
    %v5049 = vld [vmem:[%s18 + $0x8a0] sm:$0xff]
    %v5050 = vld [vmem:[%s18 + $0x8a8] sm:$0xff]
    %v5051 = vld [vmem:[%s18 + $0x8b0] sm:$0xff]
    %v5052 = vld [vmem:[%s18 + $0x8b8] sm:$0xff]
    %v5053 = vld [vmem:[%s18 + $0x8c0] sm:$0xff]
    %v5054 = vld [vmem:[%s18 + $0x8c8] sm:$0xff]
    %v5055 = vld [vmem:[%s18 + $0x8d0] sm:$0xff]
    %v5056 = vld [vmem:[%s18 + $0x8d8] sm:$0xff]
    %v5057 = vld [vmem:[%s18 + $0x8e0] sm:$0xff]
    %v5058 = vld [vmem:[%s18 + $0x8e8] sm:$0xff]
    %v5059 = vld [vmem:[%s18 + $0x8f0] sm:$0xff]
    %v5060 = vld [vmem:[%s18 + $0x8f8] sm:$0xff]
    %v5061 = vld [vmem:[%s18 + $0x900] sm:$0xff]
    %v5062 = vld [vmem:[%s18 + $0x908] sm:$0xff]
    %v5063 = vld [vmem:[%s18 + $0x910] sm:$0xff]
    %v5064 = vld [vmem:[%s18 + $0x918] sm:$0xff]
    %v5065 = vld [vmem:[%s18 + $0x920] sm:$0xff]
    %v5066 = vld [vmem:[%s18 + $0x928] sm:$0xff]
    %v5067 = vld [vmem:[%s18 + $0x930] sm:$0xff]
    %v5068 = vld [vmem:[%s18 + $0x938] sm:$0xff]
    %v5069 = vld [vmem:[%s18 + $0x940] sm:$0xff]
    %v5070 = vld [vmem:[%s18 + $0x948] sm:$0xff]
    %v5071 = vld [vmem:[%s18 + $0x950] sm:$0xff]
    %v5072 = vld [vmem:[%s18 + $0x958] sm:$0xff]
    %v5073 = vld [vmem:[%s18 + $0x960] sm:$0xff]
    %v5074 = vld [vmem:[%s18 + $0x968] sm:$0xff]
    %v5075 = vld [vmem:[%s18 + $0x970] sm:$0xff]
    %v5076 = vld [vmem:[%s18 + $0x978] sm:$0xff]
    %v5077 = vld [vmem:[%s18 + $0x980] sm:$0xff]
    %v5078 = vld [vmem:[%s18 + $0x988] sm:$0xff]
    %v5079 = vld [vmem:[%s18 + $0x990] sm:$0xff]
    %v5080 = vld [vmem:[%s18 + $0x998] sm:$0xff]
    %v5081 = vld [vmem:[%s18 + $0x9a0] sm:$0xff]
    %v5082 = vld [vmem:[%s18 + $0x9a8] sm:$0xff]
    %v5083 = vld [vmem:[%s18 + $0x9b0] sm:$0xff]
    %v5084 = vld [vmem:[%s18 + $0x9b8] sm:$0xff]
    %v5085 = vld [vmem:[%s18 + $0x9c0] sm:$0xff]
    %v5086 = vld [vmem:[%s18 + $0x9c8] sm:$0xff]
    %v5087 = vld [vmem:[%s18 + $0x9d0] sm:$0xff]
    %v5088 = vld [vmem:[%s18 + $0x9d8] sm:$0xff]
    %v5089 = vld [vmem:[%s18 + $0x9e0] sm:$0xff]
    %v5090 = vld [vmem:[%s18 + $0x9e8] sm:$0xff]
    %v5091 = vld [vmem:[%s18 + $0x9f0] sm:$0xff]
    %v5092 = vld [vmem:[%s18 + $0x9f8] sm:$0xff]
    %v5093 = vld [vmem:[%s18 + $0xa00] sm:$0xff]
    %v5094 = vld [vmem:[%s18 + $0xa08] sm:$0xff]
    %v5095 = vld [vmem:[%s18 + $0xa10] sm:$0xff]
    %v5096 = vld [vmem:[%s18 + $0xa18] sm:$0xff]
    %v5097 = vld [vmem:[%s18 + $0xa20] sm:$0xff]
    %v5098 = vld [vmem:[%s18 + $0xa28] sm:$0xff]
    %v5099 = vld [vmem:[%s18 + $0xa30] sm:$0xff]
    %v5100 = vld [vmem:[%s18 + $0xa38] sm:$0xff]
    %v5101 = vld [vmem:[%s18 + $0xa40] sm:$0xff]
    %v5102 = vld [vmem:[%s18 + $0xa48] sm:$0xff]
    %v5103 = vld [vmem:[%s18 + $0xa50] sm:$0xff]
    %v5104 = vld [vmem:[%s18 + $0xa58] sm:$0xff]
    %v5105 = vld [vmem:[%s18 + $0xa60] sm:$0xff]
    %v5106 = vld [vmem:[%s18 + $0xa68] sm:$0xff]
    %v5107 = vld [vmem:[%s18 + $0xa70] sm:$0xff]
    %v5108 = vld [vmem:[%s18 + $0xa78] sm:$0xff]
    %v5109 = vld [vmem:[%s18 + $0xa80] sm:$0xff]
    %v5110 = vld [vmem:[%s18 + $0xa88] sm:$0xff]
    %v5111 = vld [vmem:[%s18 + $0xa90] sm:$0xff]
    %v5112 = vld [vmem:[%s18 + $0xa98] sm:$0xff]
    %v5113 = vld [vmem:[%s18 + $0xaa0] sm:$0xff]
    %v5114 = vld [vmem:[%s18 + $0xaa8] sm:$0xff]
    %v5115 = vld [vmem:[%s18 + $0xab0] sm:$0xff]
    %v5116 = vld [vmem:[%s18 + $0xab8] sm:$0xff]
    %v5117 = vld [vmem:[%s18 + $0xac0] sm:$0xff]
    %v5118 = vld [vmem:[%s18 + $0xac8] sm:$0xff]
    %v5119 = vld [vmem:[%s18 + $0xad0] sm:$0xff]
    %v5120 = vld [vmem:[%s18 + $0xad8] sm:$0xff]
    %v5121 = vld [vmem:[%s18 + $0xae0] sm:$0xff]
    %v5122 = vld [vmem:[%s18 + $0xae8] sm:$0xff]
    %v5123 = vld [vmem:[%s18 + $0xaf0] sm:$0xff]
    %v5124 = vld [vmem:[%s18 + $0xaf8] sm:$0xff]
    %v5125 = vld [vmem:[%s18 + $0xb00] sm:$0xff]
    %v5126 = vld [vmem:[%s18 + $0xb08] sm:$0xff]
    %v5127 = vld [vmem:[%s18 + $0xb10] sm:$0xff]
    %v5128 = vld [vmem:[%s18 + $0xb18] sm:$0xff]
    %v5129 = vld [vmem:[%s18 + $0xb20] sm:$0xff]
    %v5130 = vld [vmem:[%s18 + $0xb28] sm:$0xff]
    %v5131 = vld [vmem:[%s18 + $0xb30] sm:$0xff]
    %v5132 = vld [vmem:[%s18 + $0xb38] sm:$0xff]
    %v5133 = vld [vmem:[%s18 + $0xb40] sm:$0xff]
    %v5134 = vld [vmem:[%s18 + $0xb48] sm:$0xff]
    %v5135 = vld [vmem:[%s18 + $0xb50] sm:$0xff]
    %v5136 = vld [vmem:[%s18 + $0xb58] sm:$0xff]
    %v5137 = vld [vmem:[%s18 + $0xb60] sm:$0xff]
    %v5138 = vld [vmem:[%s18 + $0xb68] sm:$0xff]
    %v5139 = vld [vmem:[%s18 + $0xb70] sm:$0xff]
    %v5140 = vld [vmem:[%s18 + $0xb78] sm:$0xff]
    %v5141 = vld [vmem:[%s18 + $0xb80] sm:$0xff]
    %v5142 = vld [vmem:[%s18 + $0xb88] sm:$0xff]
    %v5143 = vld [vmem:[%s18 + $0xb90] sm:$0xff]
    %v5144 = vld [vmem:[%s18 + $0xb98] sm:$0xff]
    %v5145 = vld [vmem:[%s18 + $0xba0] sm:$0xff]
    %v5146 = vld [vmem:[%s18 + $0xba8] sm:$0xff]
    %v5147 = vld [vmem:[%s18 + $0xbb0] sm:$0xff]
    %v5148 = vld [vmem:[%s18 + $0xbb8] sm:$0xff]
    %v5149 = vld [vmem:[%s18 + $0xbc0] sm:$0xff]
    %v5150 = vld [vmem:[%s18 + $0xbc8] sm:$0xff]
    %v5151 = vld [vmem:[%s18 + $0xbd0] sm:$0xff]
    %v5152 = vld [vmem:[%s18 + $0xbd8] sm:$0xff]
    %v5153 = vld [vmem:[%s18 + $0xbe0] sm:$0xff]
    %v5154 = vld [vmem:[%s18 + $0xbe8] sm:$0xff]
    %v5155 = vld [vmem:[%s18 + $0xbf0] sm:$0xff]
    %v5156 = vld [vmem:[%s18 + $0xbf8] sm:$0xff]
    %v5157 = vld [vmem:[%s18 + $0xc00] sm:$0xff]
    %v5158 = vld [vmem:[%s18 + $0xc08] sm:$0xff]
    %v5159 = vld [vmem:[%s18 + $0xc10] sm:$0xff]
    %v5160 = vld [vmem:[%s18 + $0xc18] sm:$0xff]
    %v5161 = vld [vmem:[%s18 + $0xc20] sm:$0xff]
    %v5162 = vld [vmem:[%s18 + $0xc28] sm:$0xff]
    %v5163 = vld [vmem:[%s18 + $0xc30] sm:$0xff]
    %v5164 = vld [vmem:[%s18 + $0xc38] sm:$0xff]
    %v5165 = vld [vmem:[%s18 + $0xc40] sm:$0xff]
    %v5166 = vld [vmem:[%s18 + $0xc48] sm:$0xff]
    %v5167 = vld [vmem:[%s18 + $0xc50] sm:$0xff]
    %v5168 = vld [vmem:[%s18 + $0xc58] sm:$0xff]
    %v5169 = vld [vmem:[%s18 + $0xc60] sm:$0xff]
    %v5170 = vld [vmem:[%s18 + $0xc68] sm:$0xff]
    %v5171 = vld [vmem:[%s18 + $0xc70] sm:$0xff]
    %v5172 = vld [vmem:[%s18 + $0xc78] sm:$0xff]
    %v5173 = vld [vmem:[%s18 + $0xc80] sm:$0xff]
    %v5174 = vld [vmem:[%s18 + $0xc88] sm:$0xff]
    %v5175 = vld [vmem:[%s18 + $0xc90] sm:$0xff]
    %v5176 = vld [vmem:[%s18 + $0xc98] sm:$0xff]
    %v5177 = vld [vmem:[%s18 + $0xca0] sm:$0xff]
    %v5178 = vld [vmem:[%s18 + $0xca8] sm:$0xff]
    %v5179 = vld [vmem:[%s18 + $0xcb0] sm:$0xff]
    %v5180 = vld [vmem:[%s18 + $0xcb8] sm:$0xff]
    %v5181 = vld [vmem:[%s18 + $0xcc0] sm:$0xff]
    %v5182 = vld [vmem:[%s18 + $0xcc8] sm:$0xff]
    %v5183 = vld [vmem:[%s18 + $0xcd0] sm:$0xff]
    %v5184 = vld [vmem:[%s18 + $0xcd8] sm:$0xff]
    %v5185 = vld [vmem:[%s18 + $0xce0] sm:$0xff]
    %v5186 = vld [vmem:[%s18 + $0xce8] sm:$0xff]
    %v5187 = vld [vmem:[%s18 + $0xcf0] sm:$0xff]
    %v5188 = vld [vmem:[%s18 + $0xcf8] sm:$0xff]
    %v5189 = vld [vmem:[%s18 + $0xd00] sm:$0xff]
    %v5190 = vld [vmem:[%s18 + $0xd08] sm:$0xff]
    %v5191 = vld [vmem:[%s18 + $0xd10] sm:$0xff]
    %v5192 = vld [vmem:[%s18 + $0xd18] sm:$0xff]
    %v5193 = vld [vmem:[%s18 + $0xd20] sm:$0xff]
    %v5194 = vld [vmem:[%s18 + $0xd28] sm:$0xff]
    %v5195 = vld [vmem:[%s18 + $0xd30] sm:$0xff]
    %v5196 = vld [vmem:[%s18 + $0xd38] sm:$0xff]
    %v5197 = vld [vmem:[%s18 + $0xd40] sm:$0xff]
    %v5198 = vld [vmem:[%s18 + $0xd48] sm:$0xff]
    %v5199 = vld [vmem:[%s18 + $0xd50] sm:$0xff]
    %v5200 = vld [vmem:[%s18 + $0xd58] sm:$0xff]
    %v5201 = vld [vmem:[%s18 + $0xd60] sm:$0xff]
    %v5202 = vld [vmem:[%s18 + $0xd68] sm:$0xff]
    %v5203 = vld [vmem:[%s18 + $0xd70] sm:$0xff]
    %v5204 = vld [vmem:[%s18 + $0xd78] sm:$0xff]
    %v5205 = vld [vmem:[%s18 + $0xd80] sm:$0xff]
    %v5206 = vld [vmem:[%s18 + $0xd88] sm:$0xff]
    %v5207 = vld [vmem:[%s18 + $0xd90] sm:$0xff]
    %v5208 = vld [vmem:[%s18 + $0xd98] sm:$0xff]
    %v5209 = vld [vmem:[%s18 + $0xda0] sm:$0xff]
    %v5210 = vld [vmem:[%s18 + $0xda8] sm:$0xff]
    %v5211 = vld [vmem:[%s18 + $0xdb0] sm:$0xff]
    %v5212 = vld [vmem:[%s18 + $0xdb8] sm:$0xff]
    %v5213 = vld [vmem:[%s18 + $0xdc0] sm:$0xff]
    %v5214 = vld [vmem:[%s18 + $0xdc8] sm:$0xff]
    %v5215 = vld [vmem:[%s18 + $0xdd0] sm:$0xff]
    %v5216 = vld [vmem:[%s18 + $0xdd8] sm:$0xff]
    %v5217 = vld [vmem:[%s18 + $0xde0] sm:$0xff]
    %v5218 = vld [vmem:[%s18 + $0xde8] sm:$0xff]
    %v5219 = vld [vmem:[%s18 + $0xdf0] sm:$0xff]
    %v5220 = vld [vmem:[%s18 + $0xdf8] sm:$0xff]
    %v5221 = vld [vmem:[%s18 + $0xe00] sm:$0xff]
    %v5222 = vld [vmem:[%s18 + $0xe08] sm:$0xff]
    %v5223 = vld [vmem:[%s18 + $0xe10] sm:$0xff]
    %v5224 = vld [vmem:[%s18 + $0xe18] sm:$0xff]
    %v5225 = vld [vmem:[%s18 + $0xe20] sm:$0xff]
    %v5226 = vld [vmem:[%s18 + $0xe28] sm:$0xff]
    %v5227 = vld [vmem:[%s18 + $0xe30] sm:$0xff]
    %v5228 = vld [vmem:[%s18 + $0xe38] sm:$0xff]
    %v5229 = vld [vmem:[%s18 + $0xe40] sm:$0xff]
    %v5230 = vld [vmem:[%s18 + $0xe48] sm:$0xff]
    %v5231 = vld [vmem:[%s18 + $0xe50] sm:$0xff]
    %v5232 = vld [vmem:[%s18 + $0xe58] sm:$0xff]
    %v5233 = vld [vmem:[%s18 + $0xe60] sm:$0xff]
    %v5234 = vld [vmem:[%s18 + $0xe68] sm:$0xff]
    %v5235 = vld [vmem:[%s18 + $0xe70] sm:$0xff]
    %v5236 = vld [vmem:[%s18 + $0xe78] sm:$0xff]
    %v5237 = vld [vmem:[%s18 + $0xe80] sm:$0xff]
    %v5238 = vld [vmem:[%s18 + $0xe88] sm:$0xff]
    %v5239 = vld [vmem:[%s18 + $0xe90] sm:$0xff]
    %v5240 = vld [vmem:[%s18 + $0xe98] sm:$0xff]
    %v5241 = vld [vmem:[%s18 + $0xea0] sm:$0xff]
    %v5242 = vld [vmem:[%s18 + $0xea8] sm:$0xff]
    %v5243 = vld [vmem:[%s18 + $0xeb0] sm:$0xff]
    %v5244 = vld [vmem:[%s18 + $0xeb8] sm:$0xff]
    %v5245 = vld [vmem:[%s18 + $0xec0] sm:$0xff]
    %v5246 = vld [vmem:[%s18 + $0xec8] sm:$0xff]
    %v5247 = vld [vmem:[%s18 + $0xed0] sm:$0xff]
    %v5248 = vld [vmem:[%s18 + $0xed8] sm:$0xff]
    %v5249 = vld [vmem:[%s18 + $0xee0] sm:$0xff]
    %v5250 = vld [vmem:[%s18 + $0xee8] sm:$0xff]
    %v5251 = vld [vmem:[%s18 + $0xef0] sm:$0xff]
    %v5252 = vld [vmem:[%s18 + $0xef8] sm:$0xff]
    %v5253 = vld [vmem:[%s18 + $0xf00] sm:$0xff]
    %v5254 = vld [vmem:[%s18 + $0xf08] sm:$0xff]
    %v5255 = vld [vmem:[%s18 + $0xf10] sm:$0xff]
    %v5256 = vld [vmem:[%s18 + $0xf18] sm:$0xff]
    %v5257 = vld [vmem:[%s18 + $0xf20] sm:$0xff]
    %v5258 = vld [vmem:[%s18 + $0xf28] sm:$0xff]
    %v5259 = vld [vmem:[%s18 + $0xf30] sm:$0xff]
    %v5260 = vld [vmem:[%s18 + $0xf38] sm:$0xff]
    %v5261 = vld [vmem:[%s18 + $0xf40] sm:$0xff]
    %v5262 = vld [vmem:[%s18 + $0xf48] sm:$0xff]
    %v5263 = vld [vmem:[%s18 + $0xf50] sm:$0xff]
    %v5264 = vld [vmem:[%s18 + $0xf58] sm:$0xff]
    %v5265 = vld [vmem:[%s18 + $0xf60] sm:$0xff]
    %v5266 = vld [vmem:[%s18 + $0xf68] sm:$0xff]
    %v5267 = vld [vmem:[%s18 + $0xf70] sm:$0xff]
    %v5268 = vld [vmem:[%s18 + $0xf78] sm:$0xff]
    %v5269 = vld [vmem:[%s18 + $0xf80] sm:$0xff]
    %v5270 = vld [vmem:[%s18 + $0xf88] sm:$0xff]
    %v5271 = vld [vmem:[%s18 + $0xf90] sm:$0xff]
    %v5272 = vld [vmem:[%s18 + $0xf98] sm:$0xff]
    %v5273 = vld [vmem:[%s18 + $0xfa0] sm:$0xff]
    %v5274 = vld [vmem:[%s18 + $0xfa8] sm:$0xff]
    %v5275 = vld [vmem:[%s18 + $0xfb0] sm:$0xff]
    %v5276 = vld [vmem:[%s18 + $0xfb8] sm:$0xff]
    %v5277 = vld [vmem:[%s18 + $0xfc0] sm:$0xff]
    %v5278 = vld [vmem:[%s18 + $0xfc8] sm:$0xff]
    %v5279 = vld [vmem:[%s18 + $0xfd0] sm:$0xff]
    %v5280 = vld [vmem:[%s18 + $0xfd8] sm:$0xff]
    %v5281 = vld [vmem:[%s18 + $0xfe0] sm:$0xff]
    %v5282 = vld [vmem:[%s18 + $0xfe8] sm:$0xff]
    %v5283 = vld [vmem:[%s18 + $0xff0] sm:$0xff]
    %v5284 = vld [vmem:[%s18 + $0xff8] sm:$0xff]
    %v5285 = vld [vmem:[%s19] sm:$0x3]
    %v5287 = vlaneseq
    %v5288 = vshrl.u32 %v5287, 7
    %v5289 = vsub.s32 0, %v5288
    %v5290 = vrot.slane %v5285, %v5289
    %v5291 = vlaneseq
    %v5292 = vshrl.u32 %v5291, 7
    %v5293 = vsub.s32 1, %v5292
    %v5294 = vrot.slane %v5285, %v5293
    %5297 = vmatprep.subr.mxu0 %v4774
    %5298 = vmatpush1.msra.mxu0 %v4773
    %5299 = vmatprep.subr.mxu0 %v4776
    %5300 = vmatpush1.msra.mxu0 %v4775
    %5301 = vmatprep.subr.mxu0 %v4778
    %5302 = vmatpush1.msra.mxu0 %v4777
    %5303 = vmatprep.subr.mxu0 %v4780
    %5304 = vmatpush1.msra.mxu0 %v4779
    %5305 = vmatprep.subr.mxu0 %v4782
    %5306 = vmatpush1.msra.mxu0 %v4781
    %5307 = vmatprep.subr.mxu0 %v4784
    %5308 = vmatpush1.msra.mxu0 %v4783
    %5309 = vmatprep.subr.mxu0 %v4786
    %5310 = vmatpush1.msra.mxu0 %v4785
    %5311 = vmatprep.subr.mxu0 %v4788
    %5312 = vmatpush1.msra.mxu0 %v4787
    %5313 = vmatprep.subr.mxu0 %v4790
    %5314 = vmatpush1.msra.mxu0 %v4789
    %5315 = vmatprep.subr.mxu0 %v4792
    %5316 = vmatpush1.msra.mxu0 %v4791
    %5317 = vmatprep.subr.mxu0 %v4794
    %5318 = vmatpush1.msra.mxu0 %v4793
    %5319 = vmatprep.subr.mxu0 %v4796
    %5320 = vmatpush1.msra.mxu0 %v4795
    %5321 = vmatprep.subr.mxu0 %v4798
    %5322 = vmatpush1.msra.mxu0 %v4797
    %5323 = vmatprep.subr.mxu0 %v4800
    %5324 = vmatpush1.msra.mxu0 %v4799
    %5325 = vmatprep.subr.mxu0 %v4802
    %5326 = vmatpush1.msra.mxu0 %v4801
    %5327 = vmatprep.subr.mxu0 %v4804
    %5328 = vmatpush1.msra.mxu0 %v4803
    %5329 = vmatprep.subr.mxu0 %v4806
    %5330 = vmatpush1.msra.mxu0 %v4805
    %5331 = vmatprep.subr.mxu0 %v4808
    %5332 = vmatpush1.msra.mxu0 %v4807
    %5333 = vmatprep.subr.mxu0 %v4810
    %5334 = vmatpush1.msra.mxu0 %v4809
    %5335 = vmatprep.subr.mxu0 %v4812
    %5336 = vmatpush1.msra.mxu0 %v4811
    %5337 = vmatprep.subr.mxu0 %v4814
    %5338 = vmatpush1.msra.mxu0 %v4813
    %5339 = vmatprep.subr.mxu0 %v4816
    %5340 = vmatpush1.msra.mxu0 %v4815
    %5341 = vmatprep.subr.mxu0 %v4818
    %5342 = vmatpush1.msra.mxu0 %v4817
    %5343 = vmatprep.subr.mxu0 %v4820
    %5344 = vmatpush1.msra.mxu0 %v4819
    %5345 = vmatprep.subr.mxu0 %v4822
    %5346 = vmatpush1.msra.mxu0 %v4821
    %5347 = vmatprep.subr.mxu0 %v4824
    %5348 = vmatpush1.msra.mxu0 %v4823
    %5349 = vmatprep.subr.mxu0 %v4826
    %5350 = vmatpush1.msra.mxu0 %v4825
    %5351 = vmatprep.subr.mxu0 %v4828
    %5352 = vmatpush1.msra.mxu0 %v4827
    %5353 = vmatprep.subr.mxu0 %v4830
    %5354 = vmatpush1.msra.mxu0 %v4829
    %5355 = vmatprep.subr.mxu0 %v4832
    %5356 = vmatpush1.msra.mxu0 %v4831
    %5357 = vmatprep.subr.mxu0 %v4834
    %5358 = vmatpush1.msra.mxu0 %v4833
    %5359 = vmatprep.subr.mxu0 %v4836
    %5360 = vmatpush1.msra.mxu0 %v4835
    %5361 = vmatprep.mubr.f32.mxu0 %v4710
    %5362 = vmatmul.mubr.f32.gmra.mrb[0].mxu0 %v4709
    %v5363 = vpop.f32.mrb[0].mxu0
    %v5364 = vadd.f32 %v5290, %v5363
    %v5365 = vpop.f32.mrb[0].mxu0
    %v5366 = vadd.f32 %v5294, %v5365
    %5367 = vmatprep.mubr.f32.mxu0 %v4726
    %5368 = vmatmul.mubr.f32.gmra.mrb[0].mxu0 %v4725
    %v5369 = vpop.f32.mrb[0].mxu0
    %v5370 = vpop.f32.mrb[0].mxu0
    %5371 = vmatprep.mubr.f32.mxu0 %v4742
    %5372 = vmatmul.mubr.f32.gmra.mrb[0].mxu0 %v4741
    %v5373 = vpop.f32.mrb[0].mxu0
    %v5374 = vadd.f32 %v5290, %v5373
    %v5375 = vpop.f32.mrb[0].mxu0
    %v5376 = vadd.f32 %v5294, %v5375
    %5377 = vmatprep.mubr.f32.mxu0 %v4758
    %5378 = vmatmul.mubr.f32.gmra.mrb[0].mxu0 %v4757
    %v5379 = vpop.f32.mrb[0].mxu0
    %v5380 = vpop.f32.mrb[0].mxu0
    %5381 = vdwg.mxu0
    %5382 = vmatprep.subr.mxu0 %v4838
    %5383 = vmatpush1.msra.mxu0 %v4837
    %5384 = vmatprep.subr.mxu0 %v4840
    %5385 = vmatpush1.msra.mxu0 %v4839
    %5386 = vmatprep.subr.mxu0 %v4842
    %5387 = vmatpush1.msra.mxu0 %v4841
    %5388 = vmatprep.subr.mxu0 %v4844
    %5389 = vmatpush1.msra.mxu0 %v4843
    %5390 = vmatprep.subr.mxu0 %v4846
    %5391 = vmatpush1.msra.mxu0 %v4845
    %5392 = vmatprep.subr.mxu0 %v4848
    %5393 = vmatpush1.msra.mxu0 %v4847
    %5394 = vmatprep.subr.mxu0 %v4850
    %5395 = vmatpush1.msra.mxu0 %v4849
    %5396 = vmatprep.subr.mxu0 %v4852
    %5397 = vmatpush1.msra.mxu0 %v4851
    %5398 = vmatprep.subr.mxu0 %v4854
    %5399 = vmatpush1.msra.mxu0 %v4853
    %5400 = vmatprep.subr.mxu0 %v4856
    %5401 = vmatpush1.msra.mxu0 %v4855
    %5402 = vmatprep.subr.mxu0 %v4858
    %5403 = vmatpush1.msra.mxu0 %v4857
    %5404 = vmatprep.subr.mxu0 %v4860
    %5405 = vmatpush1.msra.mxu0 %v4859
    %5406 = vmatprep.subr.mxu0 %v4862
    %5407 = vmatpush1.msra.mxu0 %v4861
    %5408 = vmatprep.subr.mxu0 %v4864
    %5409 = vmatpush1.msra.mxu0 %v4863
    %5410 = vmatprep.subr.mxu0 %v4866
    %5411 = vmatpush1.msra.mxu0 %v4865
    %5412 = vmatprep.subr.mxu0 %v4868
    %5413 = vmatpush1.msra.mxu0 %v4867
    %5414 = vmatprep.subr.mxu0 %v4870
    %5415 = vmatpush1.msra.mxu0 %v4869
    %5416 = vmatprep.subr.mxu0 %v4872
    %5417 = vmatpush1.msra.mxu0 %v4871
    %5418 = vmatprep.subr.mxu0 %v4874
    %5419 = vmatpush1.msra.mxu0 %v4873
    %5420 = vmatprep.subr.mxu0 %v4876
    %5421 = vmatpush1.msra.mxu0 %v4875
    %5422 = vmatprep.subr.mxu0 %v4878
    %5423 = vmatpush1.msra.mxu0 %v4877
    %5424 = vmatprep.subr.mxu0 %v4880
    %5425 = vmatpush1.msra.mxu0 %v4879
    %5426 = vmatprep.subr.mxu0 %v4882
    %5427 = vmatpush1.msra.mxu0 %v4881
    %5428 = vmatprep.subr.mxu0 %v4884
    %5429 = vmatpush1.msra.mxu0 %v4883
    %5430 = vmatprep.subr.mxu0 %v4886
    %5431 = vmatpush1.msra.mxu0 %v4885
    %5432 = vmatprep.subr.mxu0 %v4888
    %5433 = vmatpush1.msra.mxu0 %v4887
    %5434 = vmatprep.subr.mxu0 %v4890
    %5435 = vmatpush1.msra.mxu0 %v4889
    %5436 = vmatprep.subr.mxu0 %v4892
    %5437 = vmatpush1.msra.mxu0 %v4891
    %5438 = vmatprep.subr.mxu0 %v4894
    %5439 = vmatpush1.msra.mxu0 %v4893
    %5440 = vmatprep.subr.mxu0 %v4896
    %5441 = vmatpush1.msra.mxu0 %v4895
    %5442 = vmatprep.subr.mxu0 %v4898
    %5443 = vmatpush1.msra.mxu0 %v4897
    %5444 = vmatprep.subr.mxu0 %v4900
    %5445 = vmatpush1.msra.mxu0 %v4899
    %5446 = vmatprep.mubr.f32.mxu0 %v4712
    %5447 = vmatmul.mubr.f32.gmra.mrb[0].mxu0 %v4711
    %v5448 = vpop.f32.mrb[0].mxu0
    %v5449 = vadd.f32 %v5364, %v5448
    %v5450 = vpop.f32.mrb[0].mxu0
    %v5451 = vadd.f32 %v5366, %v5450
    %5452 = vmatprep.mubr.f32.mxu0 %v4728
    %5453 = vmatmul.mubr.f32.gmra.mrb[0].mxu0 %v4727
    %v5454 = vpop.f32.mrb[0].mxu0
    %v5455 = vpop.f32.mrb[0].mxu0
    %5456 = vmatprep.mubr.f32.mxu0 %v4744
    %5457 = vmatmul.mubr.f32.gmra.mrb[0].mxu0 %v4743
    %v5458 = vpop.f32.mrb[0].mxu0
    %v5459 = vadd.f32 %v5374, %v5458
    %v5460 = vpop.f32.mrb[0].mxu0
    %v5461 = vadd.f32 %v5376, %v5460
    %5462 = vmatprep.mubr.f32.mxu0 %v4760
    %5463 = vmatmul.mubr.f32.gmra.mrb[0].mxu0 %v4759
    %v5464 = vpop.f32.mrb[0].mxu0
    %v5465 = vpop.f32.mrb[0].mxu0
    %5466 = vdwg.mxu0
    %5467 = vmatprep.subr.mxu0 %v4902
    %5468 = vmatpush1.msra.mxu0 %v4901
    %5469 = vmatprep.subr.mxu0 %v4904
    %5470 = vmatpush1.msra.mxu0 %v4903
    %5471 = vmatprep.subr.mxu0 %v4906
    %5472 = vmatpush1.msra.mxu0 %v4905
    %5473 = vmatprep.subr.mxu0 %v4908
    %5474 = vmatpush1.msra.mxu0 %v4907
    %5475 = vmatprep.subr.mxu0 %v4910
    %5476 = vmatpush1.msra.mxu0 %v4909
    %5477 = vmatprep.subr.mxu0 %v4912
    %5478 = vmatpush1.msra.mxu0 %v4911
    %5479 = vmatprep.subr.mxu0 %v4914
    %5480 = vmatpush1.msra.mxu0 %v4913
    %5481 = vmatprep.subr.mxu0 %v4916
    %5482 = vmatpush1.msra.mxu0 %v4915
    %5483 = vmatprep.subr.mxu0 %v4918
    %5484 = vmatpush1.msra.mxu0 %v4917
    %5485 = vmatprep.subr.mxu0 %v4920
    %5486 = vmatpush1.msra.mxu0 %v4919
    %5487 = vmatprep.subr.mxu0 %v4922
    %5488 = vmatpush1.msra.mxu0 %v4921
    %5489 = vmatprep.subr.mxu0 %v4924
    %5490 = vmatpush1.msra.mxu0 %v4923
    %5491 = vmatprep.subr.mxu0 %v4926
    %5492 = vmatpush1.msra.mxu0 %v4925
    %5493 = vmatprep.subr.mxu0 %v4928
    %5494 = vmatpush1.msra.mxu0 %v4927
    %5495 = vmatprep.subr.mxu0 %v4930
    %5496 = vmatpush1.msra.mxu0 %v4929
    %5497 = vmatprep.subr.mxu0 %v4932
    %5498 = vmatpush1.msra.mxu0 %v4931
    %5499 = vmatprep.subr.mxu0 %v4934
    %5500 = vmatpush1.msra.mxu0 %v4933
    %5501 = vmatprep.subr.mxu0 %v4936
    %5502 = vmatpush1.msra.mxu0 %v4935
    %5503 = vmatprep.subr.mxu0 %v4938
    %5504 = vmatpush1.msra.mxu0 %v4937
    %5505 = vmatprep.subr.mxu0 %v4940
    %5506 = vmatpush1.msra.mxu0 %v4939
    %5507 = vmatprep.subr.mxu0 %v4942
    %5508 = vmatpush1.msra.mxu0 %v4941
    %5509 = vmatprep.subr.mxu0 %v4944
    %5510 = vmatpush1.msra.mxu0 %v4943
    %5511 = vmatprep.subr.mxu0 %v4946
    %5512 = vmatpush1.msra.mxu0 %v4945
    %5513 = vmatprep.subr.mxu0 %v4948
    %5514 = vmatpush1.msra.mxu0 %v4947
    %5515 = vmatprep.subr.mxu0 %v4950
    %5516 = vmatpush1.msra.mxu0 %v4949
    %5517 = vmatprep.subr.mxu0 %v4952
    %5518 = vmatpush1.msra.mxu0 %v4951
    %5519 = vmatprep.subr.mxu0 %v4954
    %5520 = vmatpush1.msra.mxu0 %v4953
    %5521 = vmatprep.subr.mxu0 %v4956
    %5522 = vmatpush1.msra.mxu0 %v4955
    %5523 = vmatprep.subr.mxu0 %v4958
    %5524 = vmatpush1.msra.mxu0 %v4957
    %5525 = vmatprep.subr.mxu0 %v4960
    %5526 = vmatpush1.msra.mxu0 %v4959
    %5527 = vmatprep.subr.mxu0 %v4962
    %5528 = vmatpush1.msra.mxu0 %v4961
    %5529 = vmatprep.subr.mxu0 %v4964
    %5530 = vmatpush1.msra.mxu0 %v4963
    %5531 = vmatprep.mubr.f32.mxu0 %v4714
    %5532 = vmatmul.mubr.f32.gmra.mrb[0].mxu0 %v4713
    %v5533 = vpop.f32.mrb[0].mxu0
    %v5534 = vadd.f32 %v5449, %v5533
    %v5535 = vpop.f32.mrb[0].mxu0
    %v5536 = vadd.f32 %v5451, %v5535
    %5537 = vmatprep.mubr.f32.mxu0 %v4730
    %5538 = vmatmul.mubr.f32.gmra.mrb[0].mxu0 %v4729
    %v5539 = vpop.f32.mrb[0].mxu0
    %v5540 = vpop.f32.mrb[0].mxu0
    %5541 = vmatprep.mubr.f32.mxu0 %v4746
    %5542 = vmatmul.mubr.f32.gmra.mrb[0].mxu0 %v4745
    %v5543 = vpop.f32.mrb[0].mxu0
    %v5544 = vadd.f32 %v5459, %v5543
    %v5545 = vpop.f32.mrb[0].mxu0
    %v5546 = vadd.f32 %v5461, %v5545
    %5547 = vmatprep.mubr.f32.mxu0 %v4762
    %5548 = vmatmul.mubr.f32.gmra.mrb[0].mxu0 %v4761
    %v5549 = vpop.f32.mrb[0].mxu0
    %v5550 = vpop.f32.mrb[0].mxu0
    %5551 = vdwg.mxu0
    %5552 = vmatprep.subr.mxu0 %v4966
    %5553 = vmatpush1.msra.mxu0 %v4965
    %5554 = vmatprep.subr.mxu0 %v4968
    %5555 = vmatpush1.msra.mxu0 %v4967
    %5556 = vmatprep.subr.mxu0 %v4970
    %5557 = vmatpush1.msra.mxu0 %v4969
    %5558 = vmatprep.subr.mxu0 %v4972
    %5559 = vmatpush1.msra.mxu0 %v4971
    %5560 = vmatprep.subr.mxu0 %v4974
    %5561 = vmatpush1.msra.mxu0 %v4973
    %5562 = vmatprep.subr.mxu0 %v4976
    %5563 = vmatpush1.msra.mxu0 %v4975
    %5564 = vmatprep.subr.mxu0 %v4978
    %5565 = vmatpush1.msra.mxu0 %v4977
    %5566 = vmatprep.subr.mxu0 %v4980
    %5567 = vmatpush1.msra.mxu0 %v4979
    %5568 = vmatprep.subr.mxu0 %v4982
    %5569 = vmatpush1.msra.mxu0 %v4981
    %5570 = vmatprep.subr.mxu0 %v4984
    %5571 = vmatpush1.msra.mxu0 %v4983
    %5572 = vmatprep.subr.mxu0 %v4986
    %5573 = vmatpush1.msra.mxu0 %v4985
    %5574 = vmatprep.subr.mxu0 %v4988
    %5575 = vmatpush1.msra.mxu0 %v4987
    %5576 = vmatprep.subr.mxu0 %v4990
    %5577 = vmatpush1.msra.mxu0 %v4989
    %5578 = vmatprep.subr.mxu0 %v4992
    %5579 = vmatpush1.msra.mxu0 %v4991
    %5580 = vmatprep.subr.mxu0 %v4994
    %5581 = vmatpush1.msra.mxu0 %v4993
    %5582 = vmatprep.subr.mxu0 %v4996
    %5583 = vmatpush1.msra.mxu0 %v4995
    %5584 = vmatprep.subr.mxu0 %v4998
    %5585 = vmatpush1.msra.mxu0 %v4997
    %5586 = vmatprep.subr.mxu0 %v5000
    %5587 = vmatpush1.msra.mxu0 %v4999
    %5588 = vmatprep.subr.mxu0 %v5002
    %5589 = vmatpush1.msra.mxu0 %v5001
    %5590 = vmatprep.subr.mxu0 %v5004
    %5591 = vmatpush1.msra.mxu0 %v5003
    %5592 = vmatprep.subr.mxu0 %v5006
    %5593 = vmatpush1.msra.mxu0 %v5005
    %5594 = vmatprep.subr.mxu0 %v5008
    %5595 = vmatpush1.msra.mxu0 %v5007
    %5596 = vmatprep.subr.mxu0 %v5010
    %5597 = vmatpush1.msra.mxu0 %v5009
    %5598 = vmatprep.subr.mxu0 %v5012
    %5599 = vmatpush1.msra.mxu0 %v5011
    %5600 = vmatprep.subr.mxu0 %v5014
    %5601 = vmatpush1.msra.mxu0 %v5013
    %5602 = vmatprep.subr.mxu0 %v5016
    %5603 = vmatpush1.msra.mxu0 %v5015
    %5604 = vmatprep.subr.mxu0 %v5018
    %5605 = vmatpush1.msra.mxu0 %v5017
    %5606 = vmatprep.subr.mxu0 %v5020
    %5607 = vmatpush1.msra.mxu0 %v5019
    %5608 = vmatprep.subr.mxu0 %v5022
    %5609 = vmatpush1.msra.mxu0 %v5021
    %5610 = vmatprep.subr.mxu0 %v5024
    %5611 = vmatpush1.msra.mxu0 %v5023
    %5612 = vmatprep.subr.mxu0 %v5026
    %5613 = vmatpush1.msra.mxu0 %v5025
    %5614 = vmatprep.subr.mxu0 %v5028
    %5615 = vmatpush1.msra.mxu0 %v5027
    %5616 = vmatprep.mubr.f32.mxu0 %v4716
    %5617 = vmatmul.mubr.f32.gmra.mrb[0].mxu0 %v4715
    %v5618 = vpop.f32.mrb[0].mxu0
    %v5619 = vadd.f32 %v5534, %v5618
    %v5620 = vpop.f32.mrb[0].mxu0
    %v5621 = vadd.f32 %v5536, %v5620
    %5622 = vmatprep.mubr.f32.mxu0 %v4732
    %5623 = vmatmul.mubr.f32.gmra.mrb[0].mxu0 %v4731
    %v5624 = vpop.f32.mrb[0].mxu0
    %v5625 = vpop.f32.mrb[0].mxu0
    %5626 = vmatprep.mubr.f32.mxu0 %v4748
    %5627 = vmatmul.mubr.f32.gmra.mrb[0].mxu0 %v4747
    %v5628 = vpop.f32.mrb[0].mxu0
    %v5629 = vadd.f32 %v5544, %v5628
    %v5630 = vpop.f32.mrb[0].mxu0
    %v5631 = vadd.f32 %v5546, %v5630
    %5632 = vmatprep.mubr.f32.mxu0 %v4764
    %5633 = vmatmul.mubr.f32.gmra.mrb[0].mxu0 %v4763
    %v5634 = vpop.f32.mrb[0].mxu0
    %v5635 = vpop.f32.mrb[0].mxu0
    %5636 = vdwg.mxu0
    %5637 = vmatprep.subr.mxu0 %v5030
    %5638 = vmatpush1.msra.mxu0 %v5029
    %5639 = vmatprep.subr.mxu0 %v5032
    %5640 = vmatpush1.msra.mxu0 %v5031
    %5641 = vmatprep.subr.mxu0 %v5034
    %5642 = vmatpush1.msra.mxu0 %v5033
    %5643 = vmatprep.subr.mxu0 %v5036
    %5644 = vmatpush1.msra.mxu0 %v5035
    %5645 = vmatprep.subr.mxu0 %v5038
    %5646 = vmatpush1.msra.mxu0 %v5037
    %5647 = vmatprep.subr.mxu0 %v5040
    %5648 = vmatpush1.msra.mxu0 %v5039
    %5649 = vmatprep.subr.mxu0 %v5042
    %5650 = vmatpush1.msra.mxu0 %v5041
    %5651 = vmatprep.subr.mxu0 %v5044
    %5652 = vmatpush1.msra.mxu0 %v5043
    %5653 = vmatprep.subr.mxu0 %v5046
    %5654 = vmatpush1.msra.mxu0 %v5045
    %5655 = vmatprep.subr.mxu0 %v5048
    %5656 = vmatpush1.msra.mxu0 %v5047
    %5657 = vmatprep.subr.mxu0 %v5050
    %5658 = vmatpush1.msra.mxu0 %v5049
    %5659 = vmatprep.subr.mxu0 %v5052
    %5660 = vmatpush1.msra.mxu0 %v5051
    %5661 = vmatprep.subr.mxu0 %v5054
    %5662 = vmatpush1.msra.mxu0 %v5053
    %5663 = vmatprep.subr.mxu0 %v5056
    %5664 = vmatpush1.msra.mxu0 %v5055
    %5665 = vmatprep.subr.mxu0 %v5058
    %5666 = vmatpush1.msra.mxu0 %v5057
    %5667 = vmatprep.subr.mxu0 %v5060
    %5668 = vmatpush1.msra.mxu0 %v5059
    %5669 = vmatprep.subr.mxu0 %v5062
    %5670 = vmatpush1.msra.mxu0 %v5061
    %5671 = vmatprep.subr.mxu0 %v5064
    %5672 = vmatpush1.msra.mxu0 %v5063
    %5673 = vmatprep.subr.mxu0 %v5066
    %5674 = vmatpush1.msra.mxu0 %v5065
    %5675 = vmatprep.subr.mxu0 %v5068
    %5676 = vmatpush1.msra.mxu0 %v5067
    %5677 = vmatprep.subr.mxu0 %v5070
    %5678 = vmatpush1.msra.mxu0 %v5069
    %5679 = vmatprep.subr.mxu0 %v5072
    %5680 = vmatpush1.msra.mxu0 %v5071
    %5681 = vmatprep.subr.mxu0 %v5074
    %5682 = vmatpush1.msra.mxu0 %v5073
    %5683 = vmatprep.subr.mxu0 %v5076
    %5684 = vmatpush1.msra.mxu0 %v5075
    %5685 = vmatprep.subr.mxu0 %v5078
    %5686 = vmatpush1.msra.mxu0 %v5077
    %5687 = vmatprep.subr.mxu0 %v5080
    %5688 = vmatpush1.msra.mxu0 %v5079
    %5689 = vmatprep.subr.mxu0 %v5082
    %5690 = vmatpush1.msra.mxu0 %v5081
    %5691 = vmatprep.subr.mxu0 %v5084
    %5692 = vmatpush1.msra.mxu0 %v5083
    %5693 = vmatprep.subr.mxu0 %v5086
    %5694 = vmatpush1.msra.mxu0 %v5085
    %5695 = vmatprep.subr.mxu0 %v5088
    %5696 = vmatpush1.msra.mxu0 %v5087
    %5697 = vmatprep.subr.mxu0 %v5090
    %5698 = vmatpush1.msra.mxu0 %v5089
    %5699 = vmatprep.subr.mxu0 %v5092
    %5700 = vmatpush1.msra.mxu0 %v5091
    %5701 = vmatprep.mubr.f32.mxu0 %v4718
    %5702 = vmatmul.mubr.f32.gmra.mrb[0].mxu0 %v4717
    %v5703 = vpop.f32.mrb[0].mxu0
    %v5704 = vadd.f32 %v5619, %v5703
    %v5705 = vpop.f32.mrb[0].mxu0
    %v5706 = vadd.f32 %v5621, %v5705
    %5707 = vmatprep.mubr.f32.mxu0 %v4734
    %5708 = vmatmul.mubr.f32.gmra.mrb[0].mxu0 %v4733
    %v5709 = vpop.f32.mrb[0].mxu0
    %v5710 = vpop.f32.mrb[0].mxu0
    %5711 = vmatprep.mubr.f32.mxu0 %v4750
    %5712 = vmatmul.mubr.f32.gmra.mrb[0].mxu0 %v4749
    %v5713 = vpop.f32.mrb[0].mxu0
    %v5714 = vadd.f32 %v5629, %v5713
    %v5715 = vpop.f32.mrb[0].mxu0
    %v5716 = vadd.f32 %v5631, %v5715
    %5717 = vmatprep.mubr.f32.mxu0 %v4766
    %5718 = vmatmul.mubr.f32.gmra.mrb[0].mxu0 %v4765
    %v5719 = vpop.f32.mrb[0].mxu0
    %v5720 = vpop.f32.mrb[0].mxu0
    %5721 = vdwg.mxu0
    %5722 = vmatprep.subr.mxu0 %v5094
    %5723 = vmatpush1.msra.mxu0 %v5093
    %5724 = vmatprep.subr.mxu0 %v5096
    %5725 = vmatpush1.msra.mxu0 %v5095
    %5726 = vmatprep.subr.mxu0 %v5098
    %5727 = vmatpush1.msra.mxu0 %v5097
    %5728 = vmatprep.subr.mxu0 %v5100
    %5729 = vmatpush1.msra.mxu0 %v5099
    %5730 = vmatprep.subr.mxu0 %v5102
    %5731 = vmatpush1.msra.mxu0 %v5101
    %5732 = vmatprep.subr.mxu0 %v5104
    %5733 = vmatpush1.msra.mxu0 %v5103
    %5734 = vmatprep.subr.mxu0 %v5106
    %5735 = vmatpush1.msra.mxu0 %v5105
    %5736 = vmatprep.subr.mxu0 %v5108
    %5737 = vmatpush1.msra.mxu0 %v5107
    %5738 = vmatprep.subr.mxu0 %v5110
    %5739 = vmatpush1.msra.mxu0 %v5109
    %5740 = vmatprep.subr.mxu0 %v5112
    %5741 = vmatpush1.msra.mxu0 %v5111
    %5742 = vmatprep.subr.mxu0 %v5114
    %5743 = vmatpush1.msra.mxu0 %v5113
    %5744 = vmatprep.subr.mxu0 %v5116
    %5745 = vmatpush1.msra.mxu0 %v5115
    %5746 = vmatprep.subr.mxu0 %v5118
    %5747 = vmatpush1.msra.mxu0 %v5117
    %5748 = vmatprep.subr.mxu0 %v5120
    %5749 = vmatpush1.msra.mxu0 %v5119
    %5750 = vmatprep.subr.mxu0 %v5122
    %5751 = vmatpush1.msra.mxu0 %v5121
    %5752 = vmatprep.subr.mxu0 %v5124
    %5753 = vmatpush1.msra.mxu0 %v5123
    %5754 = vmatprep.subr.mxu0 %v5126
    %5755 = vmatpush1.msra.mxu0 %v5125
    %5756 = vmatprep.subr.mxu0 %v5128
    %5757 = vmatpush1.msra.mxu0 %v5127
    %5758 = vmatprep.subr.mxu0 %v5130
    %5759 = vmatpush1.msra.mxu0 %v5129
    %5760 = vmatprep.subr.mxu0 %v5132
    %5761 = vmatpush1.msra.mxu0 %v5131
    %5762 = vmatprep.subr.mxu0 %v5134
    %5763 = vmatpush1.msra.mxu0 %v5133
    %5764 = vmatprep.subr.mxu0 %v5136
    %5765 = vmatpush1.msra.mxu0 %v5135
    %5766 = vmatprep.subr.mxu0 %v5138
    %5767 = vmatpush1.msra.mxu0 %v5137
    %5768 = vmatprep.subr.mxu0 %v5140
    %5769 = vmatpush1.msra.mxu0 %v5139
    %5770 = vmatprep.subr.mxu0 %v5142
    %5771 = vmatpush1.msra.mxu0 %v5141
    %5772 = vmatprep.subr.mxu0 %v5144
    %5773 = vmatpush1.msra.mxu0 %v5143
    %5774 = vmatprep.subr.mxu0 %v5146
    %5775 = vmatpush1.msra.mxu0 %v5145
    %5776 = vmatprep.subr.mxu0 %v5148
    %5777 = vmatpush1.msra.mxu0 %v5147
    %5778 = vmatprep.subr.mxu0 %v5150
    %5779 = vmatpush1.msra.mxu0 %v5149
    %5780 = vmatprep.subr.mxu0 %v5152
    %5781 = vmatpush1.msra.mxu0 %v5151
    %5782 = vmatprep.subr.mxu0 %v5154
    %5783 = vmatpush1.msra.mxu0 %v5153
    %5784 = vmatprep.subr.mxu0 %v5156
    %5785 = vmatpush1.msra.mxu0 %v5155
    %5786 = vmatprep.mubr.f32.mxu0 %v4720
    %5787 = vmatmul.mubr.f32.gmra.mrb[0].mxu0 %v4719
    %v5788 = vpop.f32.mrb[0].mxu0
    %v5789 = vadd.f32 %v5704, %v5788
    %v5790 = vpop.f32.mrb[0].mxu0
    %v5791 = vadd.f32 %v5706, %v5790
    %5792 = vmatprep.mubr.f32.mxu0 %v4736
    %5793 = vmatmul.mubr.f32.gmra.mrb[0].mxu0 %v4735
    %v5794 = vpop.f32.mrb[0].mxu0
    %v5795 = vpop.f32.mrb[0].mxu0
    %5796 = vmatprep.mubr.f32.mxu0 %v4752
    %5797 = vmatmul.mubr.f32.gmra.mrb[0].mxu0 %v4751
    %v5798 = vpop.f32.mrb[0].mxu0
    %v5799 = vadd.f32 %v5714, %v5798
    %v5800 = vpop.f32.mrb[0].mxu0
    %v5801 = vadd.f32 %v5716, %v5800
    %5802 = vmatprep.mubr.f32.mxu0 %v4768
    %5803 = vmatmul.mubr.f32.gmra.mrb[0].mxu0 %v4767
    %v5804 = vpop.f32.mrb[0].mxu0
    %v5805 = vpop.f32.mrb[0].mxu0
    %5806 = vdwg.mxu0
    %5807 = vmatprep.subr.mxu0 %v5158
    %5808 = vmatpush1.msra.mxu0 %v5157
    %5809 = vmatprep.subr.mxu0 %v5160
    %5810 = vmatpush1.msra.mxu0 %v5159
    %5811 = vmatprep.subr.mxu0 %v5162
    %5812 = vmatpush1.msra.mxu0 %v5161
    %5813 = vmatprep.subr.mxu0 %v5164
    %5814 = vmatpush1.msra.mxu0 %v5163
    %5815 = vmatprep.subr.mxu0 %v5166
    %5816 = vmatpush1.msra.mxu0 %v5165
    %5817 = vmatprep.subr.mxu0 %v5168
    %5818 = vmatpush1.msra.mxu0 %v5167
    %5819 = vmatprep.subr.mxu0 %v5170
    %5820 = vmatpush1.msra.mxu0 %v5169
    %5821 = vmatprep.subr.mxu0 %v5172
    %5822 = vmatpush1.msra.mxu0 %v5171
    %5823 = vmatprep.subr.mxu0 %v5174
    %5824 = vmatpush1.msra.mxu0 %v5173
    %5825 = vmatprep.subr.mxu0 %v5176
    %5826 = vmatpush1.msra.mxu0 %v5175
    %5827 = vmatprep.subr.mxu0 %v5178
    %5828 = vmatpush1.msra.mxu0 %v5177
    %5829 = vmatprep.subr.mxu0 %v5180
    %5830 = vmatpush1.msra.mxu0 %v5179
    %5831 = vmatprep.subr.mxu0 %v5182
    %5832 = vmatpush1.msra.mxu0 %v5181
    %5833 = vmatprep.subr.mxu0 %v5184
    %5834 = vmatpush1.msra.mxu0 %v5183
    %5835 = vmatprep.subr.mxu0 %v5186
    %5836 = vmatpush1.msra.mxu0 %v5185
    %5837 = vmatprep.subr.mxu0 %v5188
    %5838 = vmatpush1.msra.mxu0 %v5187
    %5839 = vmatprep.subr.mxu0 %v5190
    %5840 = vmatpush1.msra.mxu0 %v5189
    %5841 = vmatprep.subr.mxu0 %v5192
    %5842 = vmatpush1.msra.mxu0 %v5191
    %5843 = vmatprep.subr.mxu0 %v5194
    %5844 = vmatpush1.msra.mxu0 %v5193
    %5845 = vmatprep.subr.mxu0 %v5196
    %5846 = vmatpush1.msra.mxu0 %v5195
    %5847 = vmatprep.subr.mxu0 %v5198
    %5848 = vmatpush1.msra.mxu0 %v5197
    %5849 = vmatprep.subr.mxu0 %v5200
    %5850 = vmatpush1.msra.mxu0 %v5199
    %5851 = vmatprep.subr.mxu0 %v5202
    %5852 = vmatpush1.msra.mxu0 %v5201
    %5853 = vmatprep.subr.mxu0 %v5204
    %5854 = vmatpush1.msra.mxu0 %v5203
    %5855 = vmatprep.subr.mxu0 %v5206
    %5856 = vmatpush1.msra.mxu0 %v5205
    %5857 = vmatprep.subr.mxu0 %v5208
    %5858 = vmatpush1.msra.mxu0 %v5207
    %5859 = vmatprep.subr.mxu0 %v5210
    %5860 = vmatpush1.msra.mxu0 %v5209
    %5861 = vmatprep.subr.mxu0 %v5212
    %5862 = vmatpush1.msra.mxu0 %v5211
    %5863 = vmatprep.subr.mxu0 %v5214
    %5864 = vmatpush1.msra.mxu0 %v5213
    %5865 = vmatprep.subr.mxu0 %v5216
    %5866 = vmatpush1.msra.mxu0 %v5215
    %5867 = vmatprep.subr.mxu0 %v5218
    %5868 = vmatpush1.msra.mxu0 %v5217
    %5869 = vmatprep.subr.mxu0 %v5220
    %5870 = vmatpush1.msra.mxu0 %v5219
    %5871 = vmatprep.mubr.f32.mxu0 %v4722
    %5872 = vmatmul.mubr.f32.gmra.mrb[0].mxu0 %v4721
    %v5873 = vpop.f32.mrb[0].mxu0
    %v5874 = vadd.f32 %v5789, %v5873
    %v5875 = vpop.f32.mrb[0].mxu0
    %v5876 = vadd.f32 %v5791, %v5875
    %5877 = vmatprep.mubr.f32.mxu0 %v4738
    %5878 = vmatmul.mubr.f32.gmra.mrb[0].mxu0 %v4737
    %v5879 = vpop.f32.mrb[0].mxu0
    %v5880 = vpop.f32.mrb[0].mxu0
    %5881 = vmatprep.mubr.f32.mxu0 %v4754
    %5882 = vmatmul.mubr.f32.gmra.mrb[0].mxu0 %v4753
    %v5883 = vpop.f32.mrb[0].mxu0
    %v5884 = vadd.f32 %v5799, %v5883
    %v5885 = vpop.f32.mrb[0].mxu0
    %v5886 = vadd.f32 %v5801, %v5885
    %5887 = vmatprep.mubr.f32.mxu0 %v4770
    %5888 = vmatmul.mubr.f32.gmra.mrb[0].mxu0 %v4769
    %v5889 = vpop.f32.mrb[0].mxu0
    %v5890 = vpop.f32.mrb[0].mxu0
    %5891 = vdwg.mxu0
    %5892 = vmatprep.subr.mxu0 %v5222
    %5893 = vmatpush1.msra.mxu0 %v5221
    %5894 = vmatprep.subr.mxu0 %v5224
    %5895 = vmatpush1.msra.mxu0 %v5223
    %5896 = vmatprep.subr.mxu0 %v5226
    %5897 = vmatpush1.msra.mxu0 %v5225
    %5898 = vmatprep.subr.mxu0 %v5228
    %5899 = vmatpush1.msra.mxu0 %v5227
    %5900 = vmatprep.subr.mxu0 %v5230
    %5901 = vmatpush1.msra.mxu0 %v5229
    %5902 = vmatprep.subr.mxu0 %v5232
    %5903 = vmatpush1.msra.mxu0 %v5231
    %5904 = vmatprep.subr.mxu0 %v5234
    %5905 = vmatpush1.msra.mxu0 %v5233
    %5906 = vmatprep.subr.mxu0 %v5236
    %5907 = vmatpush1.msra.mxu0 %v5235
    %5908 = vmatprep.subr.mxu0 %v5238
    %5909 = vmatpush1.msra.mxu0 %v5237
    %5910 = vmatprep.subr.mxu0 %v5240
    %5911 = vmatpush1.msra.mxu0 %v5239
    %5912 = vmatprep.subr.mxu0 %v5242
    %5913 = vmatpush1.msra.mxu0 %v5241
    %5914 = vmatprep.subr.mxu0 %v5244
    %5915 = vmatpush1.msra.mxu0 %v5243
    %5916 = vmatprep.subr.mxu0 %v5246
    %5917 = vmatpush1.msra.mxu0 %v5245
    %5918 = vmatprep.subr.mxu0 %v5248
    %5919 = vmatpush1.msra.mxu0 %v5247
    %5920 = vmatprep.subr.mxu0 %v5250
    %5921 = vmatpush1.msra.mxu0 %v5249
    %5922 = vmatprep.subr.mxu0 %v5252
    %5923 = vmatpush1.msra.mxu0 %v5251
    %5924 = vmatprep.subr.mxu0 %v5254
    %5925 = vmatpush1.msra.mxu0 %v5253
    %5926 = vmatprep.subr.mxu0 %v5256
    %5927 = vmatpush1.msra.mxu0 %v5255
    %5928 = vmatprep.subr.mxu0 %v5258
    %5929 = vmatpush1.msra.mxu0 %v5257
    %5930 = vmatprep.subr.mxu0 %v5260
    %5931 = vmatpush1.msra.mxu0 %v5259
    %5932 = vmatprep.subr.mxu0 %v5262
    %5933 = vmatpush1.msra.mxu0 %v5261
    %5934 = vmatprep.subr.mxu0 %v5264
    %5935 = vmatpush1.msra.mxu0 %v5263
    %5936 = vmatprep.subr.mxu0 %v5266
    %5937 = vmatpush1.msra.mxu0 %v5265
    %5938 = vmatprep.subr.mxu0 %v5268
    %5939 = vmatpush1.msra.mxu0 %v5267
    %5940 = vmatprep.subr.mxu0 %v5270
    %5941 = vmatpush1.msra.mxu0 %v5269
    %5942 = vmatprep.subr.mxu0 %v5272
    %5943 = vmatpush1.msra.mxu0 %v5271
    %5944 = vmatprep.subr.mxu0 %v5274
    %5945 = vmatpush1.msra.mxu0 %v5273
    %5946 = vmatprep.subr.mxu0 %v5276
    %5947 = vmatpush1.msra.mxu0 %v5275
    %5948 = vmatprep.subr.mxu0 %v5278
    %5949 = vmatpush1.msra.mxu0 %v5277
    %5950 = vmatprep.subr.mxu0 %v5280
    %5951 = vmatpush1.msra.mxu0 %v5279
    %5952 = vmatprep.subr.mxu0 %v5282
    %5953 = vmatpush1.msra.mxu0 %v5281
    %5954 = vmatprep.subr.mxu0 %v5284
    %5955 = vmatpush1.msra.mxu0 %v5283
    %5956 = vmatprep.mubr.f32.mxu0 %v4724
    %5957 = vmatmul.mubr.f32.gmra.mrb[0].mxu0 %v4723
    %v5958 = vpop.f32.mrb[0].mxu0
    %v5959 = vadd.f32 %v5874, %v5958
    %v5960 = vpop.f32.mrb[0].mxu0
    %v5961 = vadd.f32 %v5876, %v5960
    %5962 = vmatprep.mubr.f32.mxu0 %v4740
    %5963 = vmatmul.mubr.f32.gmra.mrb[0].mxu0 %v4739
    %v5964 = vpop.f32.mrb[0].mxu0
    %v5965 = vpop.f32.mrb[0].mxu0
    %5966 = vmatprep.mubr.f32.mxu0 %v4756
    %5967 = vmatmul.mubr.f32.gmra.mrb[0].mxu0 %v4755
    %v5968 = vpop.f32.mrb[0].mxu0
    %v5969 = vadd.f32 %v5884, %v5968
    %v5970 = vpop.f32.mrb[0].mxu0
    %v5971 = vadd.f32 %v5886, %v5970
    %5972 = vmatprep.mubr.f32.mxu0 %v4772
    %5973 = vmatmul.mubr.f32.gmra.mrb[0].mxu0 %v4771
    %v5974 = vpop.f32.mrb[0].mxu0
    %v5975 = vpop.f32.mrb[0].mxu0
    %5976 = vdwg.mxu0
    %v5977 = vadd.f32 %v3573, %v5959
    %v5978 = vadd.f32 %v3574, %v5961
    %v5979 = vadd.f32 %v3577, %v5969
    %v5980 = vadd.f32 %v3578, %v5971
    %v5981 = vld [vmem:[%s20] sm:$0x3]
    %v5982 = vld [vmem:[%s21] sm:$0x3]
    %v5983 = vsel %vm1090, %v5978, 0.0
    %v5984 = vadd.f32 %v5977, %v5983
    %5985 = vadd.xlane.f32.xlu0 %v5984
    %v5986 = vpop.xlane.xlu0 %5985
    %v5987 = vsel %vm1090, %v5980, 0.0
    %v5988 = vadd.f32 %v5979, %v5987
    %5989 = vadd.xlane.f32.xlu0 %v5988
    %v5990 = vpop.xlane.xlu0 %5989
    %v5991 = vmul.f32 %v5986, %v3486
    %v5992 = vmul.f32 %v5990, %v3486
    %v5993 = vsub.f32 %v5977, %v5991
    %v5994 = vsub.f32 %v5978, %v5991
    %v5995 = vsub.f32 %v5979, %v5992
    %v5996 = vsub.f32 %v5980, %v5992
    %v5997 = vmul.f32 %v5993, %v5993
    %v5998 = vmul.f32 %v5994, %v5994
    %v5999 = vmul.f32 %v5995, %v5995
    %v6000 = vmul.f32 %v5996, %v5996
    %v6001 = vsel %vm1090, %v5998, 0.0
    %v6002 = vadd.f32 %v5997, %v6001
    %6003 = vadd.xlane.f32.xlu0 %v6002
    %v6004 = vpop.xlane.xlu0 %6003
    %v6005 = vsel %vm1090, %v6000, 0.0
    %v6006 = vadd.f32 %v5999, %v6005
    %6007 = vadd.xlane.f32.xlu0 %v6006
    %v6008 = vpop.xlane.xlu0 %6007
    %v6009 = vmul.f32 %v6004, %v3486
    %v6010 = vmul.f32 %v6008, %v3486
    %v6011 = vadd.f32 %v6009, 1e-05
    %v6012 = vadd.f32 %v6010, 1e-05
    %v6013 = vrsqrt.pop %v6011
    %v6014 = vrsqrt.pop %v6012
    %v6015 = vmul.f32 %v5993, %v6013
    %v6016 = vmul.f32 %v5994, %v6013
    %v6017 = vmul.f32 %v5995, %v6014
    %v6018 = vmul.f32 %v5996, %v6014
    %v6020 = vlaneseq
    %v6021 = vshrl.u32 %v6020, 7
    %v6022 = vsub.s32 0, %v6021
    %v6023 = vrot.slane %v5981, %v6022
    %v6024 = vlaneseq
    %v6025 = vshrl.u32 %v6024, 7
    %v6026 = vsub.s32 1, %v6025
    %v6027 = vrot.slane %v5981, %v6026
    %v6030 = vmul.f32 %v6015, %v6023
    %v6031 = vmul.f32 %v6016, %v6027
    %v6032 = vmul.f32 %v6017, %v6023
    %v6033 = vmul.f32 %v6018, %v6027
    %v6035 = vlaneseq
    %v6036 = vshrl.u32 %v6035, 7
    %v6037 = vsub.s32 0, %v6036
    %v6038 = vrot.slane %v5982, %v6037
    %v6039 = vlaneseq
    %v6040 = vshrl.u32 %v6039, 7
    %v6041 = vsub.s32 1, %v6040
    %v6042 = vrot.slane %v5982, %v6041
    %v6045 = vadd.f32 %v6030, %v6038
    %v6046 = vadd.f32 %v6031, %v6042
    %v6047 = vadd.f32 %v6032, %v6038
    %v6048 = vadd.f32 %v6033, %v6042
    %v6049 = vld [vmem:[%s22] sm:$0xff]
    %v6050 = vld [vmem:[%s22 + $0x8] sm:$0xff]
    %v6051 = vld [vmem:[%s22 + $0x10] sm:$0xff]
    %v6052 = vld [vmem:[%s22 + $0x18] sm:$0xff]
    %v6053 = vld [vmem:[%s22 + $0x20] sm:$0xff]
    %v6054 = vld [vmem:[%s22 + $0x28] sm:$0xff]
    %v6055 = vld [vmem:[%s22 + $0x30] sm:$0xff]
    %v6056 = vld [vmem:[%s22 + $0x38] sm:$0xff]
    %v6057 = vld [vmem:[%s22 + $0x40] sm:$0xff]
    %v6058 = vld [vmem:[%s22 + $0x48] sm:$0xff]
    %v6059 = vld [vmem:[%s22 + $0x50] sm:$0xff]
    %v6060 = vld [vmem:[%s22 + $0x58] sm:$0xff]
    %v6061 = vld [vmem:[%s22 + $0x60] sm:$0xff]
    %v6062 = vld [vmem:[%s22 + $0x68] sm:$0xff]
    %v6063 = vld [vmem:[%s22 + $0x70] sm:$0xff]
    %v6064 = vld [vmem:[%s22 + $0x78] sm:$0xff]
    %v6065 = vld [vmem:[%s22 + $0x80] sm:$0xff]
    %v6066 = vld [vmem:[%s22 + $0x88] sm:$0xff]
    %v6067 = vld [vmem:[%s22 + $0x90] sm:$0xff]
    %v6068 = vld [vmem:[%s22 + $0x98] sm:$0xff]
    %v6069 = vld [vmem:[%s23] sm:$0x1]
    %v6071 = vlaneseq
    %v6072 = vshrl.u32 %v6071, 7
    %v6073 = vsub.s32 0, %v6072
    %v6074 = vrot.slane %v6069, %v6073
    %v6080 = vrot.slane %v6047, 7
    %vm6081 = vcmask 1041409
    %v6082 = vsel %vm6081, %v6080, %v6045
    %v6083 = vrot.slane %v6048, 7
    %v6084 = vsel %vm6081, %v6083, %v6046
    %v6086 = vsel %vm1090, %v6084, 0
    %6088 = vmatprep.subr.mxu0 0.0
    %6089 = vmatpush1.msra.mxu0 %v6049
    %6090 = vmatprep.subr.mxu0 0.0
    %6091 = vmatpush1.msra.mxu0 %v6050
    %6092 = vmatprep.subr.mxu0 0.0
    %6093 = vmatpush1.msra.mxu0 %v6051
    %6094 = vmatprep.subr.mxu0 0.0
    %6095 = vmatpush1.msra.mxu0 %v6052
    %6096 = vmatprep.subr.mxu0 0.0
    %6097 = vmatpush1.msra.mxu0 %v6053
    %6098 = vmatprep.subr.mxu0 0.0
    %6099 = vmatpush1.msra.mxu0 %v6054
    %6100 = vmatprep.subr.mxu0 0.0
    %6101 = vmatpush1.msra.mxu0 %v6055
    %6102 = vmatprep.subr.mxu0 0.0
    %6103 = vmatpush1.msra.mxu0 %v6056
    %6104 = vmatprep.subr.mxu0 0.0
    %6105 = vmatpush1.msra.mxu0 %v6057
    %6106 = vmatprep.subr.mxu0 0.0
    %6107 = vmatpush1.msra.mxu0 %v6058
    %6108 = vmatprep.subr.mxu0 0.0
    %6109 = vmatpush1.msra.mxu0 %v6059
    %6110 = vmatprep.subr.mxu0 0.0
    %6111 = vmatpush1.msra.mxu0 %v6060
    %6112 = vmatprep.subr.mxu0 0.0
    %6113 = vmatpush1.msra.mxu0 %v6061
    %6114 = vmatprep.subr.mxu0 0.0
    %6115 = vmatpush1.msra.mxu0 %v6062
    %6116 = vmatprep.subr.mxu0 0.0
    %6117 = vmatpush1.msra.mxu0 %v6063
    %6118 = vmatprep.subr.mxu0 0.0
    %6119 = vmatpush1.msra.mxu0 %v6064
    %6120 = vmatprep.subr.mxu0 0.0
    %6121 = vmatpush1.msra.mxu0 %v6065
    %6122 = vmatprep.subr.mxu0 0.0
    %6123 = vmatpush1.msra.mxu0 %v6066
    %6124 = vmatprep.subr.mxu0 0.0
    %6125 = vmatpush1.msra.mxu0 %v6067
    %6126 = vmatprep.subr.mxu0 0.0
    %6127 = vmatpush1.msra.mxu0 %v6068
    %6128 = vmatprep.subr.mxu0 0.0
    %6129 = vmatpush1.msra.mxu0 0.0
    %6130 = vmatprep.subr.mxu0 0.0
    %6131 = vmatpush1.msra.mxu0 0.0
    %6132 = vmatprep.subr.mxu0 0.0
    %6133 = vmatpush1.msra.mxu0 0.0
    %6134 = vmatprep.subr.mxu0 0.0
    %6135 = vmatpush1.msra.mxu0 0.0
    %6136 = vmatprep.subr.mxu0 0.0
    %6137 = vmatpush1.msra.mxu0 0.0
    %6138 = vmatprep.subr.mxu0 0.0
    %6139 = vmatpush1.msra.mxu0 0.0
    %6140 = vmatprep.subr.mxu0 0.0
    %6141 = vmatpush1.msra.mxu0 0.0
    %6142 = vmatprep.subr.mxu0 0.0
    %6143 = vmatpush1.msra.mxu0 0.0
    %6144 = vmatprep.subr.mxu0 0.0
    %6145 = vmatpush1.msra.mxu0 0.0
    %6146 = vmatprep.subr.mxu0 0.0
    %6147 = vmatpush1.msra.mxu0 0.0
    %6148 = vmatprep.subr.mxu0 0.0
    %6149 = vmatpush1.msra.mxu0 0.0
    %6150 = vmatprep.subr.mxu0 0.0
    %6151 = vmatpush1.msra.mxu0 0.0
    %6152 = vmatprep.mubr.f32.mxu0 %v6086
    %6153 = vmatmul.mubr.f32.gmra.mrb[0].mxu0 %v6082
    %v6154 = vpop.f32.mrb[0].mxu0
    %v6155 = vadd.f32 %v6074, %v6154
    %v6156 = vpop.f32.mrb[0].mxu0
    %6157 = vdwg.mxu0
    %v6158 = vld [vmem:[%s24] sm:$0xff]
    %v6159 = vld [vmem:[%s24 + $0x8] sm:$0xff]
    %v6160 = vld [vmem:[%s24 + $0x10] sm:$0xff]
    %v6161 = vld [vmem:[%s24 + $0x18] sm:$0xff]
    %v6162 = vld [vmem:[%s24 + $0x20] sm:$0xff]
    %v6163 = vld [vmem:[%s24 + $0x28] sm:$0xff]
    %v6164 = vld [vmem:[%s24 + $0x30] sm:$0xff]
    %v6165 = vld [vmem:[%s24 + $0x38] sm:$0xff]
    %v6166 = vld [vmem:[%s24 + $0x40] sm:$0xff]
    %v6167 = vld [vmem:[%s24 + $0x48] sm:$0xff]
    %v6168 = vld [vmem:[%s25] sm:$0x1]
    %v6170 = vlaneseq
    %v6171 = vshrl.u32 %v6170, 7
    %v6172 = vsub.s32 0, %v6171
    %v6173 = vrot.slane %v6168, %v6172
    %vm6175 = vcmask 654336
    %v6177 = vsel %vm6175, %v6155, 0
    %6179 = vmatprep.subr.mxu0 0.0
    %6180 = vmatpush1.msra.mxu0 %v6158
    %6181 = vmatprep.subr.mxu0 0.0
    %6182 = vmatpush1.msra.mxu0 %v6159
    %6183 = vmatprep.subr.mxu0 0.0
    %6184 = vmatpush1.msra.mxu0 %v6160
    %6185 = vmatprep.subr.mxu0 0.0
    %6186 = vmatpush1.msra.mxu0 %v6161
    %6187 = vmatprep.subr.mxu0 0.0
    %6188 = vmatpush1.msra.mxu0 %v6162
    %6189 = vmatprep.subr.mxu0 0.0
    %6190 = vmatpush1.msra.mxu0 %v6163
    %6191 = vmatprep.subr.mxu0 0.0
    %6192 = vmatpush1.msra.mxu0 %v6164
    %6193 = vmatprep.subr.mxu0 0.0
    %6194 = vmatpush1.msra.mxu0 %v6165
    %6195 = vmatprep.subr.mxu0 0.0
    %6196 = vmatpush1.msra.mxu0 %v6166
    %6197 = vmatprep.subr.mxu0 0.0
    %6198 = vmatpush1.msra.mxu0 %v6167
    %6199 = vmatprep.subr.mxu0 0.0
    %6200 = vmatpush1.msra.mxu0 0.0
    %6201 = vmatprep.subr.mxu0 0.0
    %6202 = vmatpush1.msra.mxu0 0.0
    %6203 = vmatprep.subr.mxu0 0.0
    %6204 = vmatpush1.msra.mxu0 0.0
    %6205 = vmatprep.subr.mxu0 0.0
    %6206 = vmatpush1.msra.mxu0 0.0
    %6207 = vmatprep.subr.mxu0 0.0
    %6208 = vmatpush1.msra.mxu0 0.0
    %6209 = vmatprep.subr.mxu0 0.0
    %6210 = vmatpush1.msra.mxu0 0.0
    %6211 = vmatprep.subr.mxu0 0.0
    %6212 = vmatpush1.msra.mxu0 0.0
    %6213 = vmatprep.subr.mxu0 0.0
    %6214 = vmatpush1.msra.mxu0 0.0
    %6215 = vmatprep.subr.mxu0 0.0
    %6216 = vmatpush1.msra.mxu0 0.0
    %6217 = vmatprep.subr.mxu0 0.0
    %6218 = vmatpush1.msra.mxu0 0.0
    %6219 = vmatprep.subr.mxu0 0.0
    %6220 = vmatpush1.msra.mxu0 0.0
    %6221 = vmatprep.subr.mxu0 0.0
    %6222 = vmatpush1.msra.mxu0 0.0
    %6223 = vmatprep.subr.mxu0 0.0
    %6224 = vmatpush1.msra.mxu0 0.0
    %6225 = vmatprep.subr.mxu0 0.0
    %6226 = vmatpush1.msra.mxu0 0.0
    %6227 = vmatprep.subr.mxu0 0.0
    %6228 = vmatpush1.msra.mxu0 0.0
    %6229 = vmatprep.subr.mxu0 0.0
    %6230 = vmatpush1.msra.mxu0 0.0
    %6231 = vmatprep.subr.mxu0 0.0
    %6232 = vmatpush1.msra.mxu0 0.0
    %6233 = vmatprep.subr.mxu0 0.0
    %6234 = vmatpush1.msra.mxu0 0.0
    %6235 = vmatprep.subr.mxu0 0.0
    %6236 = vmatpush1.msra.mxu0 0.0
    %6237 = vmatprep.subr.mxu0 0.0
    %6238 = vmatpush1.msra.mxu0 0.0
    %6239 = vmatprep.subr.mxu0 0.0
    %6240 = vmatpush1.msra.mxu0 0.0
    %6241 = vmatprep.subr.mxu0 0.0
    %6242 = vmatpush1.msra.mxu0 0.0
    %6243 = vmatprep.mubr.f32.mxu0 0.0
    %6244 = vmatmul.mubr.f32.gmra.mrb[0].mxu0 %v6177
    %v6245 = vpop.f32.mrb[0].mxu0
    %v6246 = vadd.f32 %v6173, %v6245
    %v6247 = vpop.f32.mrb[0].mxu0
    %6248 = vdwg.mxu0
    %6249 = vst [vmem:[#allocation3] sm:$0x3] %v6246
    // Predicated region
    $region106: #{tpu_custom_call.1} parent=1 // pred_check
      _
    $region107: #{tpu_custom_call.1} parent=1 // pred_check_branch
      %6251 = sbr.rel (0) target = $region109
    $region108: #{tpu_custom_call.1} parent=1 // pred_region
      %s6253 = ssub.s32 32, 32
      %6254 = vsyncadd [#allocation4], %s6253
      %s6256 = sshll.u32 [#allocation3], 4
      %s6257 = int_to_ptr.vmem [resolvable:$true] %s6256
      %6259 = dma.vmem_to_hbm [thread:$0]  %s6257, 32, %s26, [#allocation4]
    $region109: #{tpu_custom_call.1} parent=1 // pred_fallthru
      _
    // Predicated region
    $region110: #{tpu_custom_call.1} parent=1 // pred_check
      _
    $region111: #{tpu_custom_call.1} parent=1 // pred_check_branch
      %6261 = sbr.rel (0) target = $region113
    $region112: #{tpu_custom_call.1} parent=1 // pred_region
      %6262 = dma.done [#allocation4], 32
    $region113: #{tpu_custom_call.1} parent=1 // pred_fallthru
      _
    %6263 = vsyncpa [#allocation4], 1

</llo_original>
